<compile_context>
chip_gen: v7x
topology: tpu7x:2x2x1
jax: 0.10.0
libtpu: 0.0.40
codegen_flags: <defaults>
</compile_context>

<pallas_src>
import numpy as np
import jax
import jax.numpy as jnp
from jax.experimental import pallas as pl
from jax.experimental.pallas import tpu as pltpu

_EPS = 1e-5


# -----------------------------------------------------------------------------
# Fused Pallas kernel: one batch sample per grid step, (C, HW) layout.
# -----------------------------------------------------------------------------
def _make_kernel(h, w):
    hw = h * w

    def kernel(x_ref, aff_ref, mask_ref, w1_ref, w2_ref, w4_ref,
               out_ref, taps_ref):
        c = x_ref.shape[1]
        x = x_ref[0]                                       # (C, HW) f32

        # Shared InstanceNorm statistics: norm1 and norm2 both normalize x.
        mean = jnp.mean(x, axis=1, keepdims=True)          # (C, 1)
        xc = x - mean
        var = jnp.mean(xc * xc, axis=1, keepdims=True)     # biased, PyTorch IN
        xhat = xc * jax.lax.rsqrt(var + _EPS)

        aff = aff_ref[...]                                 # (C, 8) f32 packed
        g1, b1 = aff[:, 0:1], aff[:, 1:2]
        g2, b2 = aff[:, 2:3], aff[:, 3:4]
        g4, b4 = aff[:, 4:5], aff[:, 5:6]
        masks = mask_ref[...]                              # (9, HW) f32 {0,1}

        # Branch 1: IN1 + ReLU + 1x1 conv == one bf16 MXU matmul.
        y1 = jnp.maximum(xhat * g1 + b1, 0.0).astype(jnp.bfloat16)
        o1 = jnp.dot(w1_ref[...], y1, preferred_element_type=jnp.float32)

        def conv3x3(y, wref):
            # 3x3 / stride-1 / pad-1 conv: the 9 taps are lane rolls of the
            # (C, HW) activation with a boundary-mask multiply, staged in the
            # aligned (9C, HW) bf16 scratch, then ONE K=9*C MXU contraction.
            for kh in range(3):
                for kw in range(3):
                    t = kh * 3 + kw
                    d = (kh - 1) * w + (kw - 1)
                    tap = pltpu.roll(y, shift=(-d) % hw, axis=1) if d != 0 else y
                    if not (kh == 1 and kw == 1):          # center tap: all-valid
                        tap = tap * masks[t:t + 1, :]
                    taps_ref[t * c:(t + 1) * c, :] = tap.astype(jnp.bfloat16)
            return jnp.dot(wref[...], taps_ref[...],
                           preferred_element_type=jnp.float32)

        # Branch 2: IN2 + ReLU + conv2 (3x3), then IN4 + ReLU + conv4 (3x3).
        y2 = jnp.maximum(xhat * g2 + b2, 0.0)
        t2 = conv3x3(y2, w2_ref)                           # (C, HW) f32

        m4 = jnp.mean(t2, axis=1, keepdims=True)
        c4 = t2 - m4
        v4 = jnp.mean(c4 * c4, axis=1, keepdims=True)
        y4 = jnp.maximum(c4 * jax.lax.rsqrt(v4 + _EPS) * g4 + b4, 0.0)
        o2 = conv3x3(y4, w4_ref)                           # (C, HW) f32

        # Residual add fused into the same kernel.
        out_ref[0] = x + o1 + o2

    return kernel


# -----------------------------------------------------------------------------
# Wrapper: NCHW in/out, channel-major (N, C, HW) inside (reshape only, no
# transpose -> no HBM relayout around the kernel).
# -----------------------------------------------------------------------------
@jax.jit
def four_conv_res_block_in(x, p):
    n, c, h, w = x.shape
    hw = h * w
    x_rows = x.reshape(n, c, hw)                           # free reshape

    # Precompute the nine 3x3 tap validity masks (tap = kh*3 + kw) once;
    # they are compile-time constants shared by conv2 and conv4.
    msk = np.zeros((9, hw), np.float32)
    for kh in range(3):
        for kw in range(3):
            m2d = np.zeros((h, w), np.float32)
            m2d[max(0, 1 - kh):min(h, h + 1 - kh),
                max(0, 1 - kw):min(w, w + 1 - kw)] = 1.0
            msk[kh * 3 + kw] = m2d.reshape(hw)
    masks = jnp.asarray(msk)

    out = pl.pallas_call(
        _make_kernel(h, w),
        out_shape=jax.ShapeDtypeStruct((n, c, hw), jnp.float32),
        grid=(n,),
        in_specs=[
            pl.BlockSpec((1, c, hw), lambda i: (i, 0, 0)),   # x sample (C, HW)
            pl.BlockSpec((c, 8), lambda i: (0, 0)),          # packed gamma/beta
            pl.BlockSpec((9, hw), lambda i: (0, 0)),         # 3x3 tap masks
            pl.BlockSpec((c, c), lambda i: (0, 0)),          # w1 (Cout, Cin) bf16
            pl.BlockSpec((c, 9 * c), lambda i: (0, 0)),      # w2 (Cout, 9*Cin) bf16
            pl.BlockSpec((c, 9 * c), lambda i: (0, 0)),      # w4 (Cout, 9*Cin) bf16
        ],
        out_specs=pl.BlockSpec((1, c, hw), lambda i: (i, 0, 0)),
        scratch_shapes=[pltpu.VMEM((9 * c, hw), jnp.bfloat16)],   # tap staging
        compiler_params=pltpu.CompilerParams(
            dimension_semantics=("parallel",)),
    )(x_rows, p["aff"], masks, p["w1"], p["w2"], p["w4"])

    return out.reshape(n, c, h, w)


# -----------------------------------------------------------------------------
# Parameters (PyTorch layout) + one-time MXU-friendly relayout.
# -----------------------------------------------------------------------------
def init_raw_params(channels, seed=0):
    """SVD orthogonal conv init (as _get_orthogonal_init_weights) + IN affine."""
    rng = np.random.RandomState(seed)

    def orth_conv(cout, cin, k):
        fan_in = cin * k * k
        a = rng.normal(0.0, 1.0, (cout, fan_in))
        u, _, v = np.linalg.svd(a, full_matrices=False)
        m = u if u.shape == (cout, fan_in) else v
        return jnp.asarray(m.reshape(cout, cin, k, k), dtype=jnp.float32)

    def affine(cn):
        # InstanceNorm2d(affine=True) defaults are gamma=1 / beta=0; perturb so
        # the affine math is actually exercised by the self-check.
        g = 1.0 + 0.1 * rng.normal(size=(cn,))
        b = 0.1 * rng.normal(size=(cn,))
        return jnp.asarray(g, jnp.float32), jnp.asarray(b, jnp.float32)

    g1, b1 = affine(channels)
    g2, b2 = affine(channels)
    g4, b4 = affine(channels)
    return dict(g1=g1, b1=b1, g2=g2, b2=b2, g4=g4, b4=b4,
                w1=orth_conv(channels, channels, 1),
                w2=orth_conv(channels, channels, 3),
                w4=orth_conv(channels, channels, 3))


def prep_params(raw):
    """One-time (outside jit) relayout into the kernel's expected shapes."""
    c = raw["w1"].shape[0]
    zeros = jnp.zeros((c,), jnp.float32)
    # Packed affine params: columns [g1, b1, g2, b2, g4, b4, 0, 0] -> (C, 8).
    aff = jnp.stack([raw["g1"], raw["b1"], raw["g2"], raw["b2"],
                     raw["g4"], raw["b4"], zeros, zeros], axis=1)

    w1 = raw["w1"].reshape(c, c).astype(jnp.bfloat16)                # (Cout, Cin)

    def flat3(wt):
        # (Cout, Cin, 3, 3) -> (Cout, 3, 3, Cin) -> (Cout, 9*Cin), bf16,
        # K index = (kh*3 + kw) * Cin + ci  (matches the taps scratch layout).
        return jnp.transpose(wt, (0, 2, 3, 1)).reshape(c, 9 * c).astype(jnp.bfloat16)

    return dict(aff=aff, w1=w1, w2=flat3(raw["w2"]), w4=flat3(raw["w4"]))


# -----------------------------------------------------------------------------
# Pure-JAX reference (PyTorch FourConvResBlockIN semantics) for the self-check.
# -----------------------------------------------------------------------------
def ref_forward(x, raw):
    def in_relu(t, g, b):
        m = jnp.mean(t, axis=(2, 3), keepdims=True)
        v = jnp.mean((t - m) ** 2, axis=(2, 3), keepdims=True)
        y = (t - m) * jax.lax.rsqrt(v + _EPS)
        y = y * g[None, :, None, None] + b[None, :, None, None]
        return jnp.maximum(y, 0.0)

    def conv(t, wgt, pad):
        return jax.lax.conv_general_dilated(
            t, wgt, window_strides=(1, 1), padding=[(pad, pad), (pad, pad)],
            dimension_numbers=("NCHW", "OIHW", "NCHW"))

    o1 = conv(in_relu(x, raw["g1"], raw["b1"]), raw["w1"], 0)
    o2 = conv(in_relu(x, raw["g2"], raw["b2"]), raw["w2"], 1)
    o2 = conv(in_relu(o2, raw["g4"], raw["b4"]), raw["w4"], 1)
    return x + o1 + o2


# -----------------------------------------------------------------------------
# Main
# -----------------------------------------------------------------------------
if __name__ == "__main__":
    # in_channels == out_channels (required by the residual add in the module).
    N, C, H, W = 2, 128, 16, 16
    key = jax.random.PRNGKey(0)
    x = jax.random.normal(key, (N, C, H, W), jnp.float32)

    raw = init_raw_params(C, seed=0)
    params = prep_params(raw)          # one-time weight relayout, outside jit

    out = four_conv_res_block_in(x, params)
    out = jax.block_until_ready(out)

    ref = jax.jit(ref_forward)(x, raw)
    ref = jax.block_until_ready(ref)

    assert out.shape == (N, C, H, W)
    assert bool(jnp.all(jnp.isfinite(out)))
    err = float(jnp.max(jnp.abs(out - ref)))
    assert bool(jnp.allclose(out, ref, rtol=2e-2, atol=2e-2)), err
    print("KERNEL_OK")
</pallas_src>

<mosaic_0001>
module attributes {stable_mosaic.version = 11 : i64} {
  func.func @kernel(%arg0: i32, %arg1: memref<1x128x256xf32, #tpu.memory_space<vmem>>, %arg2: memref<128x8xf32, #tpu.memory_space<vmem>>, %arg3: memref<9x256xf32, #tpu.memory_space<vmem>>, %arg4: memref<128x128xbf16, #tpu.memory_space<vmem>>, %arg5: memref<128x1152xbf16, #tpu.memory_space<vmem>>, %arg6: memref<128x1152xbf16, #tpu.memory_space<vmem>>, %arg7: memref<1x128x256xf32, #tpu.memory_space<vmem>>, %arg8: memref<1152x256xbf16, #tpu.memory_space<vmem>>) attributes {dimension_semantics = [#tpu.dimension_semantics<parallel>], iteration_bounds = array<i64: 2>, scalar_prefetch = 0 : i64, scratch_operands = 1 : i64, tpu.core_type = #tpu.core_type<tc>, window_params = [{transform_indices = @transform_0, window_bounds = array<i64: 1, 128, 256>}, {pipeline_mode = #tpu.pipeline_mode<synchronous>, transform_indices = @transform_1, window_bounds = array<i64: 128, 8>}, {pipeline_mode = #tpu.pipeline_mode<synchronous>, transform_indices = @transform_2, window_bounds = array<i64: 9, 256>}, {pipeline_mode = #tpu.pipeline_mode<synchronous>, transform_indices = @transform_3, window_bounds = array<i64: 128, 128>}, {pipeline_mode = #tpu.pipeline_mode<synchronous>, transform_indices = @transform_4, window_bounds = array<i64: 128, 1152>}, {pipeline_mode = #tpu.pipeline_mode<synchronous>, transform_indices = @transform_5, window_bounds = array<i64: 128, 1152>}, {transform_indices = @transform_6, window_bounds = array<i64: 1, 128, 256>}]} {
    %c0 = arith.constant 0 : index
    %c0_0 = arith.constant 0 : index
    %c0_1 = arith.constant 0 : index
    %0 = vector.load %arg1[%c0, %c0_0, %c0_1] : memref<1x128x256xf32, #tpu.memory_space<vmem>>, vector<1x128x256xf32>
    %1 = vector.shape_cast %0 : vector<1x128x256xf32> to vector<128x256xf32>
    %cst = arith.constant dense<0.000000e+00> : vector<128xf32>
    %2 = vector.multi_reduction <add>, %1, %cst [1] : vector<128x256xf32> to vector<128xf32>
    %3 = vector.shape_cast %2 : vector<128xf32> to vector<128x1xf32>
    %cst_2 = arith.constant 2.560000e+02 : f32
    %4 = vector.broadcast %cst_2 : f32 to vector<128x1xf32>
    %5 = arith.divf %3, %4 : vector<128x1xf32>
    %6 = vector.broadcast %5 : vector<128x1xf32> to vector<128x256xf32>
    %7 = arith.subf %1, %6 : vector<128x256xf32>
    %8 = arith.mulf %7, %7 : vector<128x256xf32>
    %cst_3 = arith.constant dense<0.000000e+00> : vector<128xf32>
    %9 = vector.multi_reduction <add>, %8, %cst_3 [1] : vector<128x256xf32> to vector<128xf32>
    %10 = vector.shape_cast %9 : vector<128xf32> to vector<128x1xf32>
    %cst_4 = arith.constant 2.560000e+02 : f32
    %11 = vector.broadcast %cst_4 : f32 to vector<128x1xf32>
    %12 = arith.divf %10, %11 : vector<128x1xf32>
    %cst_5 = arith.constant 9.99999974E-6 : f32
    %13 = vector.broadcast %cst_5 : f32 to vector<128x1xf32>
    %14 = arith.addf %12, %13 : vector<128x1xf32>
    %15 = math.rsqrt %14 : vector<128x1xf32>
    %16 = vector.broadcast %15 : vector<128x1xf32> to vector<128x256xf32>
    %17 = arith.mulf %7, %16 : vector<128x256xf32>
    %c0_6 = arith.constant 0 : index
    %c0_7 = arith.constant 0 : index
    %18 = vector.load %arg2[%c0_6, %c0_7] : memref<128x8xf32, #tpu.memory_space<vmem>>, vector<128x8xf32>
    %19 = vector.extract_strided_slice %18 {offsets = [0, 0], sizes = [128, 1], strides = [1, 1]} : vector<128x8xf32> to vector<128x1xf32>
    %20 = vector.extract_strided_slice %18 {offsets = [0, 1], sizes = [128, 1], strides = [1, 1]} : vector<128x8xf32> to vector<128x1xf32>
    %21 = vector.extract_strided_slice %18 {offsets = [0, 2], sizes = [128, 1], strides = [1, 1]} : vector<128x8xf32> to vector<128x1xf32>
    %22 = vector.extract_strided_slice %18 {offsets = [0, 3], sizes = [128, 1], strides = [1, 1]} : vector<128x8xf32> to vector<128x1xf32>
    %23 = vector.extract_strided_slice %18 {offsets = [0, 4], sizes = [128, 1], strides = [1, 1]} : vector<128x8xf32> to vector<128x1xf32>
    %24 = vector.extract_strided_slice %18 {offsets = [0, 5], sizes = [128, 1], strides = [1, 1]} : vector<128x8xf32> to vector<128x1xf32>
    %c0_8 = arith.constant 0 : index
    %c0_9 = arith.constant 0 : index
    %25 = vector.load %arg3[%c0_8, %c0_9] : memref<9x256xf32, #tpu.memory_space<vmem>>, vector<9x256xf32>
    %26 = vector.broadcast %19 : vector<128x1xf32> to vector<128x256xf32>
    %27 = arith.mulf %17, %26 : vector<128x256xf32>
    %28 = vector.broadcast %20 : vector<128x1xf32> to vector<128x256xf32>
    %29 = arith.addf %27, %28 : vector<128x256xf32>
    %cst_10 = arith.constant 0.000000e+00 : f32
    %30 = vector.broadcast %cst_10 : f32 to vector<128x256xf32>
    %31 = arith.maximumf %29, %30 : vector<128x256xf32>
    %32 = arith.truncf %31 : vector<128x256xf32> to vector<128x256xbf16>
    %c0_11 = arith.constant 0 : index
    %c0_12 = arith.constant 0 : index
    %33 = vector.load %arg4[%c0_11, %c0_12] : memref<128x128xbf16, #tpu.memory_space<vmem>>, vector<128x128xbf16>
    %cst_13 = arith.constant dense<0.000000e+00> : vector<128x256xf32>
    %34 = tpu.matmul %33, %32, %cst_13 {dimension_numbers = #tpu.dot_dimension_numbers<[1], [0], [0], [1], [0, 0, 1, 1], [], []>} : vector<128x128xbf16>, vector<128x256xbf16>, vector<128x256xf32> -> vector<128x256xf32>
    %35 = vector.broadcast %21 : vector<128x1xf32> to vector<128x256xf32>
    %36 = arith.mulf %17, %35 : vector<128x256xf32>
    %37 = vector.broadcast %22 : vector<128x1xf32> to vector<128x256xf32>
    %38 = arith.addf %36, %37 : vector<128x256xf32>
    %cst_14 = arith.constant 0.000000e+00 : f32
    %39 = vector.broadcast %cst_14 : f32 to vector<128x256xf32>
    %40 = arith.maximumf %38, %39 : vector<128x256xf32>
    %c17_i32 = arith.constant 17 : i32
    %41 = tpu.dynamic_rotate %40 by %c17_i32 dim 1 : vector<128x256xf32>, i32 -> vector<128x256xf32>
    %42 = vector.extract_strided_slice %25 {offsets = [0, 0], sizes = [1, 256], strides = [1, 1]} : vector<9x256xf32> to vector<1x256xf32>
    %43 = vector.broadcast %42 : vector<1x256xf32> to vector<128x256xf32>
    %44 = arith.mulf %41, %43 : vector<128x256xf32>
    %45 = arith.truncf %44 : vector<128x256xf32> to vector<128x256xbf16>
    %c0_15 = arith.constant 0 : index
    %c0_16 = arith.constant 0 : index
    %46 = vector.load %arg8[%c0_15, %c0_16] : memref<1152x256xbf16, #tpu.memory_space<vmem>>, vector<128x256xbf16>
    tpu.vector_store %arg8[%c0_15, %c0_16], %45 {strides = array<i32>} : memref<1152x256xbf16, #tpu.memory_space<vmem>>, vector<128x256xbf16>,
    %c16_i32 = arith.constant 16 : i32
    %47 = tpu.dynamic_rotate %40 by %c16_i32 dim 1 : vector<128x256xf32>, i32 -> vector<128x256xf32>
    %48 = vector.extract_strided_slice %25 {offsets = [1, 0], sizes = [1, 256], strides = [1, 1]} : vector<9x256xf32> to vector<1x256xf32>
    %49 = vector.broadcast %48 : vector<1x256xf32> to vector<128x256xf32>
    %50 = arith.mulf %47, %49 : vector<128x256xf32>
    %51 = arith.truncf %50 : vector<128x256xf32> to vector<128x256xbf16>
    %c128 = arith.constant 128 : index
    %c0_17 = arith.constant 0 : index
    %52 = vector.load %arg8[%c128, %c0_17] : memref<1152x256xbf16, #tpu.memory_space<vmem>>, vector<128x256xbf16>
    tpu.vector_store %arg8[%c128, %c0_17], %51 {strides = array<i32>} : memref<1152x256xbf16, #tpu.memory_space<vmem>>, vector<128x256xbf16>,
    %c15_i32 = arith.constant 15 : i32
    %53 = tpu.dynamic_rotate %40 by %c15_i32 dim 1 : vector<128x256xf32>, i32 -> vector<128x256xf32>
    %54 = vector.extract_strided_slice %25 {offsets = [2, 0], sizes = [1, 256], strides = [1, 1]} : vector<9x256xf32> to vector<1x256xf32>
    %55 = vector.broadcast %54 : vector<1x256xf32> to vector<128x256xf32>
    %56 = arith.mulf %53, %55 : vector<128x256xf32>
    %57 = arith.truncf %56 : vector<128x256xf32> to vector<128x256xbf16>
    %c256 = arith.constant 256 : index
    %c0_18 = arith.constant 0 : index
    %58 = vector.load %arg8[%c256, %c0_18] : memref<1152x256xbf16, #tpu.memory_space<vmem>>, vector<128x256xbf16>
    tpu.vector_store %arg8[%c256, %c0_18], %57 {strides = array<i32>} : memref<1152x256xbf16, #tpu.memory_space<vmem>>, vector<128x256xbf16>,
    %c1_i32 = arith.constant 1 : i32
    %59 = tpu.dynamic_rotate %40 by %c1_i32 dim 1 : vector<128x256xf32>, i32 -> vector<128x256xf32>
    %60 = vector.extract_strided_slice %25 {offsets = [3, 0], sizes = [1, 256], strides = [1, 1]} : vector<9x256xf32> to vector<1x256xf32>
    %61 = vector.broadcast %60 : vector<1x256xf32> to vector<128x256xf32>
    %62 = arith.mulf %59, %61 : vector<128x256xf32>
    %63 = arith.truncf %62 : vector<128x256xf32> to vector<128x256xbf16>
    %c384 = arith.constant 384 : index
    %c0_19 = arith.constant 0 : index
    %64 = vector.load %arg8[%c384, %c0_19] : memref<1152x256xbf16, #tpu.memory_space<vmem>>, vector<128x256xbf16>
    tpu.vector_store %arg8[%c384, %c0_19], %63 {strides = array<i32>} : memref<1152x256xbf16, #tpu.memory_space<vmem>>, vector<128x256xbf16>,
    %65 = arith.truncf %40 : vector<128x256xf32> to vector<128x256xbf16>
    %c512 = arith.constant 512 : index
    %c0_20 = arith.constant 0 : index
    %66 = vector.load %arg8[%c512, %c0_20] : memref<1152x256xbf16, #tpu.memory_space<vmem>>, vector<128x256xbf16>
    tpu.vector_store %arg8[%c512, %c0_20], %65 {strides = array<i32>} : memref<1152x256xbf16, #tpu.memory_space<vmem>>, vector<128x256xbf16>,
    %c255_i32 = arith.constant 255 : i32
    %67 = tpu.dynamic_rotate %40 by %c255_i32 dim 1 : vector<128x256xf32>, i32 -> vector<128x256xf32>
    %68 = vector.extract_strided_slice %25 {offsets = [5, 0], sizes = [1, 256], strides = [1, 1]} : vector<9x256xf32> to vector<1x256xf32>
    %69 = vector.broadcast %68 : vector<1x256xf32> to vector<128x256xf32>
    %70 = arith.mulf %67, %69 : vector<128x256xf32>
    %71 = arith.truncf %70 : vector<128x256xf32> to vector<128x256xbf16>
    %c640 = arith.constant 640 : index
    %c0_21 = arith.constant 0 : index
    %72 = vector.load %arg8[%c640, %c0_21] : memref<1152x256xbf16, #tpu.memory_space<vmem>>, vector<128x256xbf16>
    tpu.vector_store %arg8[%c640, %c0_21], %71 {strides = array<i32>} : memref<1152x256xbf16, #tpu.memory_space<vmem>>, vector<128x256xbf16>,
    %c241_i32 = arith.constant 241 : i32
    %73 = tpu.dynamic_rotate %40 by %c241_i32 dim 1 : vector<128x256xf32>, i32 -> vector<128x256xf32>
    %74 = vector.extract_strided_slice %25 {offsets = [6, 0], sizes = [1, 256], strides = [1, 1]} : vector<9x256xf32> to vector<1x256xf32>
    %75 = vector.broadcast %74 : vector<1x256xf32> to vector<128x256xf32>
    %76 = arith.mulf %73, %75 : vector<128x256xf32>
    %77 = arith.truncf %76 : vector<128x256xf32> to vector<128x256xbf16>
    %c768 = arith.constant 768 : index
    %c0_22 = arith.constant 0 : index
    %78 = vector.load %arg8[%c768, %c0_22] : memref<1152x256xbf16, #tpu.memory_space<vmem>>, vector<128x256xbf16>
    tpu.vector_store %arg8[%c768, %c0_22], %77 {strides = array<i32>} : memref<1152x256xbf16, #tpu.memory_space<vmem>>, vector<128x256xbf16>,
    %c240_i32 = arith.constant 240 : i32
    %79 = tpu.dynamic_rotate %40 by %c240_i32 dim 1 : vector<128x256xf32>, i32 -> vector<128x256xf32>
    %80 = vector.extract_strided_slice %25 {offsets = [7, 0], sizes = [1, 256], strides = [1, 1]} : vector<9x256xf32> to vector<1x256xf32>
    %81 = vector.broadcast %80 : vector<1x256xf32> to vector<128x256xf32>
    %82 = arith.mulf %79, %81 : vector<128x256xf32>
    %83 = arith.truncf %82 : vector<128x256xf32> to vector<128x256xbf16>
    %c896 = arith.constant 896 : index
    %c0_23 = arith.constant 0 : index
    %84 = vector.load %arg8[%c896, %c0_23] : memref<1152x256xbf16, #tpu.memory_space<vmem>>, vector<128x256xbf16>
    tpu.vector_store %arg8[%c896, %c0_23], %83 {strides = array<i32>} : memref<1152x256xbf16, #tpu.memory_space<vmem>>, vector<128x256xbf16>,
    %c239_i32 = arith.constant 239 : i32
    %85 = tpu.dynamic_rotate %40 by %c239_i32 dim 1 : vector<128x256xf32>, i32 -> vector<128x256xf32>
    %86 = vector.extract_strided_slice %25 {offsets = [8, 0], sizes = [1, 256], strides = [1, 1]} : vector<9x256xf32> to vector<1x256xf32>
    %87 = vector.broadcast %86 : vector<1x256xf32> to vector<128x256xf32>
    %88 = arith.mulf %85, %87 : vector<128x256xf32>
    %89 = arith.truncf %88 : vector<128x256xf32> to vector<128x256xbf16>
    %c1024 = arith.constant 1024 : index
    %c0_24 = arith.constant 0 : index
    %90 = vector.load %arg8[%c1024, %c0_24] : memref<1152x256xbf16, #tpu.memory_space<vmem>>, vector<128x256xbf16>
    tpu.vector_store %arg8[%c1024, %c0_24], %89 {strides = array<i32>} : memref<1152x256xbf16, #tpu.memory_space<vmem>>, vector<128x256xbf16>,
    %c0_25 = arith.constant 0 : index
    %c0_26 = arith.constant 0 : index
    %91 = vector.load %arg5[%c0_25, %c0_26] : memref<128x1152xbf16, #tpu.memory_space<vmem>>, vector<128x1152xbf16>
    %c0_27 = arith.constant 0 : index
    %c0_28 = arith.constant 0 : index
    %92 = vector.load %arg8[%c0_27, %c0_28] : memref<1152x256xbf16, #tpu.memory_space<vmem>>, vector<1152x256xbf16>
    %cst_29 = arith.constant dense<0.000000e+00> : vector<128x256xf32>
    %93 = tpu.matmul %91, %92, %cst_29 {dimension_numbers = #tpu.dot_dimension_numbers<[1], [0], [0], [1], [0, 0, 1, 1], [], []>} : vector<128x1152xbf16>, vector<1152x256xbf16>, vector<128x256xf32> -> vector<128x256xf32>
    %cst_30 = arith.constant dense<0.000000e+00> : vector<128xf32>
    %94 = vector.multi_reduction <add>, %93, %cst_30 [1] : vector<128x256xf32> to vector<128xf32>
    %95 = vector.shape_cast %94 : vector<128xf32> to vector<128x1xf32>
    %cst_31 = arith.constant 2.560000e+02 : f32
    %96 = vector.broadcast %cst_31 : f32 to vector<128x1xf32>
    %97 = arith.divf %95, %96 : vector<128x1xf32>
    %98 = vector.broadcast %97 : vector<128x1xf32> to vector<128x256xf32>
    %99 = arith.subf %93, %98 : vector<128x256xf32>
    %100 = arith.mulf %99, %99 : vector<128x256xf32>
    %cst_32 = arith.constant dense<0.000000e+00> : vector<128xf32>
    %101 = vector.multi_reduction <add>, %100, %cst_32 [1] : vector<128x256xf32> to vector<128xf32>
    %102 = vector.shape_cast %101 : vector<128xf32> to vector<128x1xf32>
    %cst_33 = arith.constant 2.560000e+02 : f32
    %103 = vector.broadcast %cst_33 : f32 to vector<128x1xf32>
    %104 = arith.divf %102, %103 : vector<128x1xf32>
    %cst_34 = arith.constant 9.99999974E-6 : f32
    %105 = vector.broadcast %cst_34 : f32 to vector<128x1xf32>
    %106 = arith.addf %104, %105 : vector<128x1xf32>
    %107 = math.rsqrt %106 : vector<128x1xf32>
    %108 = vector.broadcast %107 : vector<128x1xf32> to vector<128x256xf32>
    %109 = arith.mulf %99, %108 : vector<128x256xf32>
    %110 = vector.broadcast %23 : vector<128x1xf32> to vector<128x256xf32>
    %111 = arith.mulf %109, %110 : vector<128x256xf32>
    %112 = vector.broadcast %24 : vector<128x1xf32> to vector<128x256xf32>
    %113 = arith.addf %111, %112 : vector<128x256xf32>
    %cst_35 = arith.constant 0.000000e+00 : f32
    %114 = vector.broadcast %cst_35 : f32 to vector<128x256xf32>
    %115 = arith.maximumf %113, %114 : vector<128x256xf32>
    %c17_i32_36 = arith.constant 17 : i32
    %116 = tpu.dynamic_rotate %115 by %c17_i32_36 dim 1 : vector<128x256xf32>, i32 -> vector<128x256xf32>
    %117 = vector.extract_strided_slice %25 {offsets = [0, 0], sizes = [1, 256], strides = [1, 1]} : vector<9x256xf32> to vector<1x256xf32>
    %118 = vector.broadcast %117 : vector<1x256xf32> to vector<128x256xf32>
    %119 = arith.mulf %116, %118 : vector<128x256xf32>
    %120 = arith.truncf %119 : vector<128x256xf32> to vector<128x256xbf16>
    %c0_37 = arith.constant 0 : index
    %c0_38 = arith.constant 0 : index
    %121 = vector.load %arg8[%c0_37, %c0_38] : memref<1152x256xbf16, #tpu.memory_space<vmem>>, vector<128x256xbf16>
    tpu.vector_store %arg8[%c0_37, %c0_38], %120 {strides = array<i32>} : memref<1152x256xbf16, #tpu.memory_space<vmem>>, vector<128x256xbf16>,
    %c16_i32_39 = arith.constant 16 : i32
    %122 = tpu.dynamic_rotate %115 by %c16_i32_39 dim 1 : vector<128x256xf32>, i32 -> vector<128x256xf32>
    %123 = vector.extract_strided_slice %25 {offsets = [1, 0], sizes = [1, 256], strides = [1, 1]} : vector<9x256xf32> to vector<1x256xf32>
    %124 = vector.broadcast %123 : vector<1x256xf32> to vector<128x256xf32>
    %125 = arith.mulf %122, %124 : vector<128x256xf32>
    %126 = arith.truncf %125 : vector<128x256xf32> to vector<128x256xbf16>
    %c128_40 = arith.constant 128 : index
    %c0_41 = arith.constant 0 : index
    %127 = vector.load %arg8[%c128_40, %c0_41] : memref<1152x256xbf16, #tpu.memory_space<vmem>>, vector<128x256xbf16>
    tpu.vector_store %arg8[%c128_40, %c0_41], %126 {strides = array<i32>} : memref<1152x256xbf16, #tpu.memory_space<vmem>>, vector<128x256xbf16>,
    %c15_i32_42 = arith.constant 15 : i32
    %128 = tpu.dynamic_rotate %115 by %c15_i32_42 dim 1 : vector<128x256xf32>, i32 -> vector<128x256xf32>
    %129 = vector.extract_strided_slice %25 {offsets = [2, 0], sizes = [1, 256], strides = [1, 1]} : vector<9x256xf32> to vector<1x256xf32>
    %130 = vector.broadcast %129 : vector<1x256xf32> to vector<128x256xf32>
    %131 = arith.mulf %128, %130 : vector<128x256xf32>
    %132 = arith.truncf %131 : vector<128x256xf32> to vector<128x256xbf16>
    %c256_43 = arith.constant 256 : index
    %c0_44 = arith.constant 0 : index
    %133 = vector.load %arg8[%c256_43, %c0_44] : memref<1152x256xbf16, #tpu.memory_space<vmem>>, vector<128x256xbf16>
    tpu.vector_store %arg8[%c256_43, %c0_44], %132 {strides = array<i32>} : memref<1152x256xbf16, #tpu.memory_space<vmem>>, vector<128x256xbf16>,
    %c1_i32_45 = arith.constant 1 : i32
    %134 = tpu.dynamic_rotate %115 by %c1_i32_45 dim 1 : vector<128x256xf32>, i32 -> vector<128x256xf32>
    %135 = vector.extract_strided_slice %25 {offsets = [3, 0], sizes = [1, 256], strides = [1, 1]} : vector<9x256xf32> to vector<1x256xf32>
    %136 = vector.broadcast %135 : vector<1x256xf32> to vector<128x256xf32>
    %137 = arith.mulf %134, %136 : vector<128x256xf32>
    %138 = arith.truncf %137 : vector<128x256xf32> to vector<128x256xbf16>
    %c384_46 = arith.constant 384 : index
    %c0_47 = arith.constant 0 : index
    %139 = vector.load %arg8[%c384_46, %c0_47] : memref<1152x256xbf16, #tpu.memory_space<vmem>>, vector<128x256xbf16>
    tpu.vector_store %arg8[%c384_46, %c0_47], %138 {strides = array<i32>} : memref<1152x256xbf16, #tpu.memory_space<vmem>>, vector<128x256xbf16>,
    %140 = arith.truncf %115 : vector<128x256xf32> to vector<128x256xbf16>
    %c512_48 = arith.constant 512 : index
    %c0_49 = arith.constant 0 : index
    %141 = vector.load %arg8[%c512_48, %c0_49] : memref<1152x256xbf16, #tpu.memory_space<vmem>>, vector<128x256xbf16>
    tpu.vector_store %arg8[%c512_48, %c0_49], %140 {strides = array<i32>} : memref<1152x256xbf16, #tpu.memory_space<vmem>>, vector<128x256xbf16>,
    %c255_i32_50 = arith.constant 255 : i32
    %142 = tpu.dynamic_rotate %115 by %c255_i32_50 dim 1 : vector<128x256xf32>, i32 -> vector<128x256xf32>
    %143 = vector.extract_strided_slice %25 {offsets = [5, 0], sizes = [1, 256], strides = [1, 1]} : vector<9x256xf32> to vector<1x256xf32>
    %144 = vector.broadcast %143 : vector<1x256xf32> to vector<128x256xf32>
    %145 = arith.mulf %142, %144 : vector<128x256xf32>
    %146 = arith.truncf %145 : vector<128x256xf32> to vector<128x256xbf16>
    %c640_51 = arith.constant 640 : index
    %c0_52 = arith.constant 0 : index
    %147 = vector.load %arg8[%c640_51, %c0_52] : memref<1152x256xbf16, #tpu.memory_space<vmem>>, vector<128x256xbf16>
    tpu.vector_store %arg8[%c640_51, %c0_52], %146 {strides = array<i32>} : memref<1152x256xbf16, #tpu.memory_space<vmem>>, vector<128x256xbf16>,
    %c241_i32_53 = arith.constant 241 : i32
    %148 = tpu.dynamic_rotate %115 by %c241_i32_53 dim 1 : vector<128x256xf32>, i32 -> vector<128x256xf32>
    %149 = vector.extract_strided_slice %25 {offsets = [6, 0], sizes = [1, 256], strides = [1, 1]} : vector<9x256xf32> to vector<1x256xf32>
    %150 = vector.broadcast %149 : vector<1x256xf32> to vector<128x256xf32>
    %151 = arith.mulf %148, %150 : vector<128x256xf32>
    %152 = arith.truncf %151 : vector<128x256xf32> to vector<128x256xbf16>
    %c768_54 = arith.constant 768 : index
    %c0_55 = arith.constant 0 : index
    %153 = vector.load %arg8[%c768_54, %c0_55] : memref<1152x256xbf16, #tpu.memory_space<vmem>>, vector<128x256xbf16>
    tpu.vector_store %arg8[%c768_54, %c0_55], %152 {strides = array<i32>} : memref<1152x256xbf16, #tpu.memory_space<vmem>>, vector<128x256xbf16>,
    %c240_i32_56 = arith.constant 240 : i32
    %154 = tpu.dynamic_rotate %115 by %c240_i32_56 dim 1 : vector<128x256xf32>, i32 -> vector<128x256xf32>
    %155 = vector.extract_strided_slice %25 {offsets = [7, 0], sizes = [1, 256], strides = [1, 1]} : vector<9x256xf32> to vector<1x256xf32>
    %156 = vector.broadcast %155 : vector<1x256xf32> to vector<128x256xf32>
    %157 = arith.mulf %154, %156 : vector<128x256xf32>
    %158 = arith.truncf %157 : vector<128x256xf32> to vector<128x256xbf16>
    %c896_57 = arith.constant 896 : index
    %c0_58 = arith.constant 0 : index
    %159 = vector.load %arg8[%c896_57, %c0_58] : memref<1152x256xbf16, #tpu.memory_space<vmem>>, vector<128x256xbf16>
    tpu.vector_store %arg8[%c896_57, %c0_58], %158 {strides = array<i32>} : memref<1152x256xbf16, #tpu.memory_space<vmem>>, vector<128x256xbf16>,
    %c239_i32_59 = arith.constant 239 : i32
    %160 = tpu.dynamic_rotate %115 by %c239_i32_59 dim 1 : vector<128x256xf32>, i32 -> vector<128x256xf32>
    %161 = vector.extract_strided_slice %25 {offsets = [8, 0], sizes = [1, 256], strides = [1, 1]} : vector<9x256xf32> to vector<1x256xf32>
    %162 = vector.broadcast %161 : vector<1x256xf32> to vector<128x256xf32>
    %163 = arith.mulf %160, %162 : vector<128x256xf32>
    %164 = arith.truncf %163 : vector<128x256xf32> to vector<128x256xbf16>
    %c1024_60 = arith.constant 1024 : index
    %c0_61 = arith.constant 0 : index
    %165 = vector.load %arg8[%c1024_60, %c0_61] : memref<1152x256xbf16, #tpu.memory_space<vmem>>, vector<128x256xbf16>
    tpu.vector_store %arg8[%c1024_60, %c0_61], %164 {strides = array<i32>} : memref<1152x256xbf16, #tpu.memory_space<vmem>>, vector<128x256xbf16>,
    %c0_62 = arith.constant 0 : index
    %c0_63 = arith.constant 0 : index
    %166 = vector.load %arg6[%c0_62, %c0_63] : memref<128x1152xbf16, #tpu.memory_space<vmem>>, vector<128x1152xbf16>
    %c0_64 = arith.constant 0 : index
    %c0_65 = arith.constant 0 : index
    %167 = vector.load %arg8[%c0_64, %c0_65] : memref<1152x256xbf16, #tpu.memory_space<vmem>>, vector<1152x256xbf16>
    %cst_66 = arith.constant dense<0.000000e+00> : vector<128x256xf32>
    %168 = tpu.matmul %166, %167, %cst_66 {dimension_numbers = #tpu.dot_dimension_numbers<[1], [0], [0], [1], [0, 0, 1, 1], [], []>} : vector<128x1152xbf16>, vector<1152x256xbf16>, vector<128x256xf32> -> vector<128x256xf32>
    %169 = arith.addf %1, %34 : vector<128x256xf32>
    %170 = arith.addf %169, %168 : vector<128x256xf32>
    %c0_67 = arith.constant 0 : index
    %c0_68 = arith.constant 0 : index
    %c0_69 = arith.constant 0 : index
    %171 = vector.load %arg7[%c0_67, %c0_68, %c0_69] : memref<1x128x256xf32, #tpu.memory_space<vmem>>, vector<1x128x256xf32>
    %172 = vector.shape_cast %171 : vector<1x128x256xf32> to vector<128x256xf32>
    %173 = vector.shape_cast %170 : vector<128x256xf32> to vector<1x128x256xf32>
    tpu.vector_store %arg7[%c0_67, %c0_68, %c0_69], %173 {strides = array<i32>} : memref<1x128x256xf32, #tpu.memory_space<vmem>>, vector<1x128x256xf32>,
    return
  }
  func.func @transform_0(%arg0: i32) -> (i32, i32, i32) {
    %c0_i32 = arith.constant 0 : i32
    %c0_i32_0 = arith.constant 0 : i32
    %c0_i32_1 = arith.constant 0 : i32
    return %arg0, %c0_i32, %c0_i32_0 : i32, i32, i32
  }
  func.func @transform_1(%arg0: i32) -> (i32, i32) {
    %c0_i32 = arith.constant 0 : i32
    %c0_i32_0 = arith.constant 0 : i32
    %c0_i32_1 = arith.constant 0 : i32
    return %c0_i32, %c0_i32_0 : i32, i32
  }
  func.func @transform_2(%arg0: i32) -> (i32, i32) {
    %c0_i32 = arith.constant 0 : i32
    %c0_i32_0 = arith.constant 0 : i32
    %c0_i32_1 = arith.constant 0 : i32
    return %c0_i32, %c0_i32_0 : i32, i32
  }
  func.func @transform_3(%arg0: i32) -> (i32, i32) {
    %c0_i32 = arith.constant 0 : i32
    %c0_i32_0 = arith.constant 0 : i32
    %c0_i32_1 = arith.constant 0 : i32
    return %c0_i32, %c0_i32_0 : i32, i32
  }
  func.func @transform_4(%arg0: i32) -> (i32, i32) {
    %c0_i32 = arith.constant 0 : i32
    %c0_i32_0 = arith.constant 0 : i32
    %c0_i32_1 = arith.constant 0 : i32
    return %c0_i32, %c0_i32_0 : i32, i32
  }
  func.func @transform_5(%arg0: i32) -> (i32, i32) {
    %c0_i32 = arith.constant 0 : i32
    %c0_i32_0 = arith.constant 0 : i32
    %c0_i32_1 = arith.constant 0 : i32
    return %c0_i32, %c0_i32_0 : i32, i32
  }
  func.func @transform_6(%arg0: i32) -> (i32, i32, i32) {
    %c0_i32 = arith.constant 0 : i32
    %c0_i32_0 = arith.constant 0 : i32
    %c0_i32_1 = arith.constant 0 : i32
    return %arg0, %c0_i32, %c0_i32_0 : i32, i32, i32
  }
}

</mosaic_0001>

<llo_original>
// kernel: four_conv_res_block_in.1
$region0: #{four_conv_res_block_in.1}
  #allocation0 [shape = 'u32[]', space=smem, size = 0x4, offset = 0x4, fixed_abs, tag = 'smem constant byte address 0x4 - core index']
  #allocation1 [shape = 'u32[144,128]{1,0:T(1,128)}', space=vmem, size = 0x12000, scoped, tag = 'internal scratch']
  #allocation2 [shape = 'bf16[1152,256]{1,0:T(16,128)(2,1)}', space=vmem, size = 0x90000, scoped, tag = 'scratch operand']
  %s0 = inlined_call_operand.vmem [shape: f32[2,128,256], index: 0, kind: input, shape index: {}]
  %s1 = inlined_call_operand.vmem [shape: f32[128,8], index: 1, kind: input, shape index: {}]
  %s2 = inlined_call_operand.hbm [shape: f32[9,256], index: 2, kind: input, shape index: {}]
  %s3 = inlined_call_operand.hbm [shape: bf16[128,128], index: 3, kind: input, shape index: {}]
  %s4 = inlined_call_operand.vmem [shape: bf16[128,1152], index: 4, kind: input, shape index: {}]
  %s5 = inlined_call_operand.vmem [shape: bf16[128,1152], index: 5, kind: input, shape index: {}]
  %s6 = inlined_call_operand.vmem [shape: f32[2,128,256], index: 6, kind: output, shape index: {}]
  %s7 = sld [smem:[#allocation0]]
  $region65: #{four_conv_res_block_in.1} parent=0
    _
  %s9 = ssub.s32 1, %s7
  %s10 = scalar_select 0, %s9, %s7
  $region1: #{four_conv_res_block_in.1} parent=0
    #allocation3 [shape = 'u8[16384]{0}', space=vmem, size = 0x4000, scoped, tag = 'input window, operand 2, single buffered']
    #allocation4 [shape = 's32[2]{0}', space=sflag, size = 0x8, scoped, tag = 'scoped memory for four_conv_res_block_in.1']
    #allocation5 [shape = 'u8[32768]{0}', space=vmem, size = 0x8000, scoped, tag = 'input window, operand 3, single buffered']
    #allocation6 [shape = 's32[1]{0}', space=sflag, size = 0x4, scoped, tag = 'scoped memory for four_conv_res_block_in.1']
    %11 = vsyncpa [#allocation4], 0
    %12 = vsyncpa [#allocation6], 0
    loop: start=0, step=1, limit=4
    $region2: #{four_conv_res_block_in.1} parent=1 // loop_pre_header
      _
    $region3: #{four_conv_res_block_in.1} parent=1 // loop_header
      %s14 = sphi 0, %s18
      %p15 = scmp.ge.s32.totalorder %s14, 4
      %s24 = sphi 0, %s26
      %s27 = sphi 0, %s24
      %s28 = sphi 0, %s27
      %s44 = sphi 0, %s28
      %s48 = sphi 0, %s48
      %s50 = sphi 0, %s48
      %s51 = sphi 0, %s50
      %s65 = sphi 0, %s51
      %s69 = sphi 0, %s69
      %s71 = sphi 0, %s69
      %s72 = sphi 0, %s71
      %s86 = sphi 0, %s72
      %s90 = sphi 0, %s90
      %s92 = sphi 0, %s90
      %s93 = sphi 0, %s92
      %s107 = sphi 0, %s93
      %s111 = sphi 0, %s111
      %s113 = sphi 0, %s111
      %s114 = sphi 0, %s113
      %s128 = sphi 0, %s114
      %s132 = sphi 0, %s132
      %s134 = sphi 0, %s132
      %s135 = sphi 0, %s134
      %s149 = sphi 0, %s135
      %s155 = sphi 0, %s157
      %s158 = sphi 0, %s155
      %s159 = sphi 0, %s158
      %s175 = sphi 0, %s159
    $region4: #{four_conv_res_block_in.1} parent=1 // loop_header_branch
      %17 = sbr.rel (%p15) target = $region8
    $region5: #{four_conv_res_block_in.1} parent=1 // loop_body
      %s19 = ssub.s32 %s14, 1
      %s20 = ssub.s32 %s14, 2
      %s21 = sadd.s32 %s14, 1
      %s22 = ssub.s32 %s14, %s21
      %p23 = scmp.eq.s32.totalorder %s22, 0
      %s25 = sadd.s32 %s24, 1
      %s26 = scalar_select %p23, %s24, %s25
      %p29 = pneg %p23
      %p30 = scmp.eq.s32.totalorder %s14, 1
      %p31 = por %p29, %p30
      %p32 = scmp.ne.s32.totalorder %s24, %s27
      %p33 = scmp.eq.s32.totalorder %s14, 0
      %p34 = por %p32, %p33
      %p35 = scmp.ne.s32.totalorder %s24, %s27
      %p36 = scmp.eq.s32.totalorder %s19, 1
      %p37 = por %p35, %p36
      %p38 = scmp.ne.s32.totalorder %s27, %s28
      %p39 = scmp.eq.s32.totalorder %s19, 0
      %p40 = por %p38, %p39
      %p41 = scmp.ne.s32.totalorder %s27, %s28
      %p42 = scmp.eq.s32.totalorder %s20, 1
      %p43 = por %p41, %p42
      %p45 = scmp.ne.s32.totalorder %s28, %s44
      %p46 = scmp.eq.s32.totalorder %s20, 0
      %p47 = por %p45, %p46
      %s49 = sadd.s32 %s48, 1
      %p52 = scmp.eq.s32.totalorder %s14, 1
      %p53 = scmp.ne.s32.totalorder %s48, %s50
      %p54 = scmp.eq.s32.totalorder %s14, 0
      %p55 = por %p53, %p54
      %p56 = scmp.ne.s32.totalorder %s48, %s50
      %p57 = scmp.eq.s32.totalorder %s19, 1
      %p58 = por %p56, %p57
      %p59 = scmp.ne.s32.totalorder %s50, %s51
      %p60 = scmp.eq.s32.totalorder %s19, 0
      %p61 = por %p59, %p60
      %p62 = scmp.ne.s32.totalorder %s50, %s51
      %p63 = scmp.eq.s32.totalorder %s20, 1
      %p64 = por %p62, %p63
      %p66 = scmp.ne.s32.totalorder %s51, %s65
      %p67 = scmp.eq.s32.totalorder %s20, 0
      %p68 = por %p66, %p67
      %s70 = sadd.s32 %s69, 1
      %p73 = scmp.eq.s32.totalorder %s14, 1
      %p74 = scmp.ne.s32.totalorder %s69, %s71
      %p75 = scmp.eq.s32.totalorder %s14, 0
      %p76 = por %p74, %p75
      %p77 = scmp.ne.s32.totalorder %s69, %s71
      %p78 = scmp.eq.s32.totalorder %s19, 1
      %p79 = por %p77, %p78
      %p80 = scmp.ne.s32.totalorder %s71, %s72
      %p81 = scmp.eq.s32.totalorder %s19, 0
      %p82 = por %p80, %p81
      %p83 = scmp.ne.s32.totalorder %s71, %s72
      %p84 = scmp.eq.s32.totalorder %s20, 1
      %p85 = por %p83, %p84
      %p87 = scmp.ne.s32.totalorder %s72, %s86
      %p88 = scmp.eq.s32.totalorder %s20, 0
      %p89 = por %p87, %p88
      %s91 = sadd.s32 %s90, 1
      %p94 = scmp.eq.s32.totalorder %s14, 1
      %p95 = scmp.ne.s32.totalorder %s90, %s92
      %p96 = scmp.eq.s32.totalorder %s14, 0
      %p97 = por %p95, %p96
      %p98 = scmp.ne.s32.totalorder %s90, %s92
      %p99 = scmp.eq.s32.totalorder %s19, 1
      %p100 = por %p98, %p99
      %p101 = scmp.ne.s32.totalorder %s92, %s93
      %p102 = scmp.eq.s32.totalorder %s19, 0
      %p103 = por %p101, %p102
      %p104 = scmp.ne.s32.totalorder %s92, %s93
      %p105 = scmp.eq.s32.totalorder %s20, 1
      %p106 = por %p104, %p105
      %p108 = scmp.ne.s32.totalorder %s93, %s107
      %p109 = scmp.eq.s32.totalorder %s20, 0
      %p110 = por %p108, %p109
      %s112 = sadd.s32 %s111, 1
      %p115 = scmp.eq.s32.totalorder %s14, 1
      %p116 = scmp.ne.s32.totalorder %s111, %s113
      %p117 = scmp.eq.s32.totalorder %s14, 0
      %p118 = por %p116, %p117
      %p119 = scmp.ne.s32.totalorder %s111, %s113
      %p120 = scmp.eq.s32.totalorder %s19, 1
      %p121 = por %p119, %p120
      %p122 = scmp.ne.s32.totalorder %s113, %s114
      %p123 = scmp.eq.s32.totalorder %s19, 0
      %p124 = por %p122, %p123
      %p125 = scmp.ne.s32.totalorder %s113, %s114
      %p126 = scmp.eq.s32.totalorder %s20, 1
      %p127 = por %p125, %p126
      %p129 = scmp.ne.s32.totalorder %s114, %s128
      %p130 = scmp.eq.s32.totalorder %s20, 0
      %p131 = por %p129, %p130
      %s133 = sadd.s32 %s132, 1
      %p136 = scmp.eq.s32.totalorder %s14, 1
      %p137 = scmp.ne.s32.totalorder %s132, %s134
      %p138 = scmp.eq.s32.totalorder %s14, 0
      %p139 = por %p137, %p138
      %p140 = scmp.ne.s32.totalorder %s132, %s134
      %p141 = scmp.eq.s32.totalorder %s19, 1
      %p142 = por %p140, %p141
      %p143 = scmp.ne.s32.totalorder %s134, %s135
      %p144 = scmp.eq.s32.totalorder %s19, 0
      %p145 = por %p143, %p144
      %p146 = scmp.ne.s32.totalorder %s134, %s135
      %p147 = scmp.eq.s32.totalorder %s20, 1
      %p148 = por %p146, %p147
      %p150 = scmp.ne.s32.totalorder %s135, %s149
      %p151 = scmp.eq.s32.totalorder %s20, 0
      %p152 = por %p150, %p151
      %s153 = ssub.s32 %s14, %s21
      %p154 = scmp.eq.s32.totalorder %s153, 0
      %s156 = sadd.s32 %s155, 1
      %s157 = scalar_select %p154, %s155, %s156
      %p160 = pneg %p154
      %p161 = scmp.eq.s32.totalorder %s14, 1
      %p162 = por %p160, %p161
      %p163 = scmp.ne.s32.totalorder %s155, %s158
      %p164 = scmp.eq.s32.totalorder %s14, 0
      %p165 = por %p163, %p164
      %p166 = scmp.ne.s32.totalorder %s155, %s158
      %p167 = scmp.eq.s32.totalorder %s19, 1
      %p168 = por %p166, %p167
      %p169 = scmp.ne.s32.totalorder %s158, %s159
      %p170 = scmp.eq.s32.totalorder %s19, 0
      %p171 = por %p169, %p170
      %p172 = scmp.ne.s32.totalorder %s158, %s159
      %p173 = scmp.eq.s32.totalorder %s20, 1
      %p174 = por %p172, %p173
      %p176 = scmp.ne.s32.totalorder %s159, %s175
      %p177 = scmp.eq.s32.totalorder %s20, 0
      %p178 = por %p176, %p177
      %p179 = scmp.le.s32.totalorder 1, %s14
      %p180 = scmp.lt.s32.totalorder %s14, 3
      %p181 = pnand %p179, %p180
      %p182 = pneg %p181
      // Predicated region
      $region9: #{four_conv_res_block_in.1} parent=5 // pred_check
        _
      $region10: #{four_conv_res_block_in.1} parent=5 // pred_check_branch
        %184 = sbr.rel (%p181) target = $region12
      $region11: #{four_conv_res_block_in.1} parent=5 // pred_region
        %s185 = ssub.s32 %s14, 1
        // Predicated region
        $region13: #{four_conv_res_block_in.1} parent=11 // pred_check
          %p186 = pneg %p61
        $region14: #{four_conv_res_block_in.1} parent=11 // pred_check_branch
          %188 = sbr.rel (%p186) target = $region16
        $region15: #{four_conv_res_block_in.1} parent=11 // pred_region
          _
        $region16: #{four_conv_res_block_in.1} parent=11 // pred_fallthru
          _
        // Predicated region
        $region17: #{four_conv_res_block_in.1} parent=11 // pred_check
          %p189 = pneg %p82
        $region18: #{four_conv_res_block_in.1} parent=11 // pred_check_branch
          %191 = sbr.rel (%p189) target = $region20
        $region19: #{four_conv_res_block_in.1} parent=11 // pred_region
          %s193 = ssub.s32 512, 512
          %194 = vsyncadd [#allocation4], %s193
          %s195 = sshll.u32 [#allocation3], 4
          %s196 = int_to_ptr.vmem [resolvable:$true] %s195
          %201 = dma.hbm_to_vmem [thread:$0]  %s2, 512, %s196, [#allocation4], 256, 256, 16
        $region20: #{four_conv_res_block_in.1} parent=11 // pred_fallthru
          _
        // Predicated region
        $region21: #{four_conv_res_block_in.1} parent=11 // pred_check
          %p202 = pneg %p103
        $region22: #{four_conv_res_block_in.1} parent=11 // pred_check_branch
          %204 = sbr.rel (%p202) target = $region24
        $region23: #{four_conv_res_block_in.1} parent=11 // pred_region
          %s206 = ssub.s32 1024, 1024
          %207 = vsyncadd [#allocation6], %s206
          %s208 = sshll.u32 [#allocation5], 4
          %s209 = int_to_ptr.vmem [resolvable:$true] %s208
          %214 = dma.hbm_to_vmem [thread:$0]  %s3, 1024, %s209, [#allocation6], 64, 64, 4
        $region24: #{four_conv_res_block_in.1} parent=11 // pred_fallthru
          _
        // Predicated region
        $region25: #{four_conv_res_block_in.1} parent=11 // pred_check
          %p215 = pneg %p124
        $region26: #{four_conv_res_block_in.1} parent=11 // pred_check_branch
          %217 = sbr.rel (%p215) target = $region28
        $region27: #{four_conv_res_block_in.1} parent=11 // pred_region
          _
        $region28: #{four_conv_res_block_in.1} parent=11 // pred_fallthru
          _
        // Predicated region
        $region29: #{four_conv_res_block_in.1} parent=11 // pred_check
          %p218 = pneg %p145
        $region30: #{four_conv_res_block_in.1} parent=11 // pred_check_branch
          %220 = sbr.rel (%p218) target = $region32
        $region31: #{four_conv_res_block_in.1} parent=11 // pred_region
          _
        $region32: #{four_conv_res_block_in.1} parent=11 // pred_fallthru
          _
      $region12: #{four_conv_res_block_in.1} parent=5 // pred_fallthru
        _
      %p221 = scmp.lt.s32.totalorder %s14, 2
      // Predicated region
      $region33: #{four_conv_res_block_in.1} parent=5 // pred_check
        %p222 = pneg %p221
      $region34: #{four_conv_res_block_in.1} parent=5 // pred_check_branch
        %224 = sbr.rel (%p222) target = $region36
      $region35: #{four_conv_res_block_in.1} parent=5 // pred_region
        // Predicated region
        $region37: #{four_conv_res_block_in.1} parent=35 // pred_check
          %p225 = pneg %p34
        $region38: #{four_conv_res_block_in.1} parent=35 // pred_check_branch
          %227 = sbr.rel (%p225) target = $region40
        $region39: #{four_conv_res_block_in.1} parent=35 // pred_region
          %p228 = scmp.lt.s32.totalorder %s14, 1
          %s229 = scalar_select %p228, %s14, 1
          %s230 = smul.addr %s229, 32
          %s231 = smul.addr %s230, 8
          %s232 = scalar_lea.vmem %s0, %s231
        $region40: #{four_conv_res_block_in.1} parent=35 // pred_fallthru
          _
      $region36: #{four_conv_res_block_in.1} parent=5 // pred_fallthru
        _
      %p233 = scmp.le.s32.totalorder 1, %s14
      %p234 = scmp.lt.s32.totalorder %s14, 3
      %p235 = pnand %p233, %p234
      %p236 = pneg %p235
      // Predicated region
      $region41: #{four_conv_res_block_in.1} parent=5 // pred_check
        _
      $region42: #{four_conv_res_block_in.1} parent=5 // pred_check_branch
        %238 = sbr.rel (%p235) target = $region44
      $region43: #{four_conv_res_block_in.1} parent=5 // pred_region
        %s239 = ssub.s32 %s14, 1
        // Predicated region
        $region45: #{four_conv_res_block_in.1} parent=43 // pred_check
          %p240 = pneg %p82
        $region46: #{four_conv_res_block_in.1} parent=43 // pred_check_branch
          %242 = sbr.rel (%p240) target = $region48
        $region47: #{four_conv_res_block_in.1} parent=43 // pred_region
          %243 = dma.done [#allocation4], 512
        $region48: #{four_conv_res_block_in.1} parent=43 // pred_fallthru
          _
        // Predicated region
        $region49: #{four_conv_res_block_in.1} parent=43 // pred_check
          %p244 = pneg %p103
        $region50: #{four_conv_res_block_in.1} parent=43 // pred_check_branch
          %246 = sbr.rel (%p244) target = $region52
        $region51: #{four_conv_res_block_in.1} parent=43 // pred_region
          %247 = dma.done [#allocation6], 1024
        $region52: #{four_conv_res_block_in.1} parent=43 // pred_fallthru
          _
        %p248 = scmp.lt.s32.totalorder %s19, 1
        %s249 = scalar_select %p248, %s19, 1
        %s250 = smul.addr %s249, 32
        %s251 = smul.addr %s250, 8
        %s252 = scalar_lea.vmem %s0, %s251
        %p253 = pneg %p40
        %p254 = pneg %p37
        %p255 = pneg %p61
        %p256 = pneg %p58
        %p257 = pneg %p82
        %p258 = pneg %p79
        %p259 = pneg %p103
        %p260 = pneg %p100
        %p261 = pneg %p124
        %p262 = pneg %p121
        %p263 = pneg %p145
        %p264 = pneg %p142
        %p265 = pneg %p171
        %p266 = pneg %p168
        %p267 = scmp.lt.s32.totalorder %s19, 1
        %s268 = scalar_select %p267, %s19, 1
        %s269 = smul.addr %s268, 32
        %s270 = smul.addr %s269, 8
        %s271 = scalar_lea.vmem %s6, %s270
        %p272 = scmp.lt.s32.totalorder %s19, 1
        %s273 = scalar_select %p272, %s19, 1
        %s274 = smul.addr %s273, 32
        %s275 = smul.addr %s274, 8
        %s276 = scalar_lea.vmem %s0, %s275
        %p277 = scmp.lt.s32.totalorder %s19, 1
        %s278 = scalar_select %p277, %s19, 1
        %s279 = smul.addr %s278, 32
        %s280 = smul.addr %s279, 8
        %s281 = scalar_lea.vmem %s6, %s280
        %v283 = vld [vmem:[%s276] sm:$0xff]
        %v284 = vld [vmem:[%s276 + $0x8] sm:$0xff]
        %v285 = vld [vmem:[%s276 + $0x10] sm:$0xff]
        %v286 = vld [vmem:[%s276 + $0x18] sm:$0xff]
        %v287 = vld [vmem:[%s276 + $0x20] sm:$0xff]
        %v288 = vld [vmem:[%s276 + $0x28] sm:$0xff]
        %v289 = vld [vmem:[%s276 + $0x30] sm:$0xff]
        %v290 = vld [vmem:[%s276 + $0x38] sm:$0xff]
        %v291 = vld [vmem:[%s276 + $0x40] sm:$0xff]
        %v292 = vld [vmem:[%s276 + $0x48] sm:$0xff]
        %v293 = vld [vmem:[%s276 + $0x50] sm:$0xff]
        %v294 = vld [vmem:[%s276 + $0x58] sm:$0xff]
        %v295 = vld [vmem:[%s276 + $0x60] sm:$0xff]
        %v296 = vld [vmem:[%s276 + $0x68] sm:$0xff]
        %v297 = vld [vmem:[%s276 + $0x70] sm:$0xff]
        %v298 = vld [vmem:[%s276 + $0x78] sm:$0xff]
        %v299 = vld [vmem:[%s276 + $0x80] sm:$0xff]
        %v300 = vld [vmem:[%s276 + $0x88] sm:$0xff]
        %v301 = vld [vmem:[%s276 + $0x90] sm:$0xff]
        %v302 = vld [vmem:[%s276 + $0x98] sm:$0xff]
        %v303 = vld [vmem:[%s276 + $0xa0] sm:$0xff]
        %v304 = vld [vmem:[%s276 + $0xa8] sm:$0xff]
        %v305 = vld [vmem:[%s276 + $0xb0] sm:$0xff]
        %v306 = vld [vmem:[%s276 + $0xb8] sm:$0xff]
        %v307 = vld [vmem:[%s276 + $0xc0] sm:$0xff]
        %v308 = vld [vmem:[%s276 + $0xc8] sm:$0xff]
        %v309 = vld [vmem:[%s276 + $0xd0] sm:$0xff]
        %v310 = vld [vmem:[%s276 + $0xd8] sm:$0xff]
        %v311 = vld [vmem:[%s276 + $0xe0] sm:$0xff]
        %v312 = vld [vmem:[%s276 + $0xe8] sm:$0xff]
        %v313 = vld [vmem:[%s276 + $0xf0] sm:$0xff]
        %v314 = vld [vmem:[%s276 + $0xf8] sm:$0xff]
        %v315 = vadd.f32 %v283, %v284
        %316 = vadd.xlane.f32.xlu0 %v315
        %v317 = vpop.xlane.xlu0 %316
        %v318 = vadd.f32 %v285, %v286
        %319 = vadd.xlane.f32.xlu0 %v318
        %v320 = vpop.xlane.xlu0 %319
        %v321 = vadd.f32 %v287, %v288
        %322 = vadd.xlane.f32.xlu0 %v321
        %v323 = vpop.xlane.xlu0 %322
        %v324 = vadd.f32 %v289, %v290
        %325 = vadd.xlane.f32.xlu0 %v324
        %v326 = vpop.xlane.xlu0 %325
        %v327 = vadd.f32 %v291, %v292
        %328 = vadd.xlane.f32.xlu0 %v327
        %v329 = vpop.xlane.xlu0 %328
        %v330 = vadd.f32 %v293, %v294
        %331 = vadd.xlane.f32.xlu0 %v330
        %v332 = vpop.xlane.xlu0 %331
        %v333 = vadd.f32 %v295, %v296
        %334 = vadd.xlane.f32.xlu0 %v333
        %v335 = vpop.xlane.xlu0 %334
        %v336 = vadd.f32 %v297, %v298
        %337 = vadd.xlane.f32.xlu0 %v336
        %v338 = vpop.xlane.xlu0 %337
        %v339 = vadd.f32 %v299, %v300
        %340 = vadd.xlane.f32.xlu0 %v339
        %v341 = vpop.xlane.xlu0 %340
        %v342 = vadd.f32 %v301, %v302
        %343 = vadd.xlane.f32.xlu0 %v342
        %v344 = vpop.xlane.xlu0 %343
        %v345 = vadd.f32 %v303, %v304
        %346 = vadd.xlane.f32.xlu0 %v345
        %v347 = vpop.xlane.xlu0 %346
        %v348 = vadd.f32 %v305, %v306
        %349 = vadd.xlane.f32.xlu0 %v348
        %v350 = vpop.xlane.xlu0 %349
        %v351 = vadd.f32 %v307, %v308
        %352 = vadd.xlane.f32.xlu0 %v351
        %v353 = vpop.xlane.xlu0 %352
        %v354 = vadd.f32 %v309, %v310
        %355 = vadd.xlane.f32.xlu0 %v354
        %v356 = vpop.xlane.xlu0 %355
        %v357 = vadd.f32 %v311, %v312
        %358 = vadd.xlane.f32.xlu0 %v357
        %v359 = vpop.xlane.xlu0 %358
        %v360 = vadd.f32 %v313, %v314
        %361 = vadd.xlane.f32.xlu0 %v360
        %v362 = vpop.xlane.xlu0 %361
        %v363 = vrcp.pop 256.0
        %v364 = vmul.f32 %v317, %v363
        %v365 = vmul.f32 %v320, %v363
        %v366 = vmul.f32 %v323, %v363
        %v367 = vmul.f32 %v326, %v363
        %v368 = vmul.f32 %v329, %v363
        %v369 = vmul.f32 %v332, %v363
        %v370 = vmul.f32 %v335, %v363
        %v371 = vmul.f32 %v338, %v363
        %v372 = vmul.f32 %v341, %v363
        %v373 = vmul.f32 %v344, %v363
        %v374 = vmul.f32 %v347, %v363
        %v375 = vmul.f32 %v350, %v363
        %v376 = vmul.f32 %v353, %v363
        %v377 = vmul.f32 %v356, %v363
        %v378 = vmul.f32 %v359, %v363
        %v379 = vmul.f32 %v362, %v363
        %v380 = vsub.f32 %v283, %v364
        %v381 = vsub.f32 %v284, %v364
        %v382 = vsub.f32 %v285, %v365
        %v383 = vsub.f32 %v286, %v365
        %v384 = vsub.f32 %v287, %v366
        %v385 = vsub.f32 %v288, %v366
        %v386 = vsub.f32 %v289, %v367
        %v387 = vsub.f32 %v290, %v367
        %v388 = vsub.f32 %v291, %v368
        %v389 = vsub.f32 %v292, %v368
        %v390 = vsub.f32 %v293, %v369
        %v391 = vsub.f32 %v294, %v369
        %v392 = vsub.f32 %v295, %v370
        %v393 = vsub.f32 %v296, %v370
        %v394 = vsub.f32 %v297, %v371
        %v395 = vsub.f32 %v298, %v371
        %v396 = vsub.f32 %v299, %v372
        %v397 = vsub.f32 %v300, %v372
        %v398 = vsub.f32 %v301, %v373
        %v399 = vsub.f32 %v302, %v373
        %v400 = vsub.f32 %v303, %v374
        %v401 = vsub.f32 %v304, %v374
        %v402 = vsub.f32 %v305, %v375
        %v403 = vsub.f32 %v306, %v375
        %v404 = vsub.f32 %v307, %v376
        %v405 = vsub.f32 %v308, %v376
        %v406 = vsub.f32 %v309, %v377
        %v407 = vsub.f32 %v310, %v377
        %v408 = vsub.f32 %v311, %v378
        %v409 = vsub.f32 %v312, %v378
        %v410 = vsub.f32 %v313, %v379
        %v411 = vsub.f32 %v314, %v379
        %v412 = vmul.f32 %v380, %v380
        %v413 = vmul.f32 %v381, %v381
        %v414 = vmul.f32 %v382, %v382
        %v415 = vmul.f32 %v383, %v383
        %v416 = vmul.f32 %v384, %v384
        %v417 = vmul.f32 %v385, %v385
        %v418 = vmul.f32 %v386, %v386
        %v419 = vmul.f32 %v387, %v387
        %v420 = vmul.f32 %v388, %v388
        %v421 = vmul.f32 %v389, %v389
        %v422 = vmul.f32 %v390, %v390
        %v423 = vmul.f32 %v391, %v391
        %v424 = vmul.f32 %v392, %v392
        %v425 = vmul.f32 %v393, %v393
        %v426 = vmul.f32 %v394, %v394
        %v427 = vmul.f32 %v395, %v395
        %v428 = vmul.f32 %v396, %v396
        %v429 = vmul.f32 %v397, %v397
        %v430 = vmul.f32 %v398, %v398
        %v431 = vmul.f32 %v399, %v399
        %v432 = vmul.f32 %v400, %v400
        %v433 = vmul.f32 %v401, %v401
        %v434 = vmul.f32 %v402, %v402
        %v435 = vmul.f32 %v403, %v403
        %v436 = vmul.f32 %v404, %v404
        %v437 = vmul.f32 %v405, %v405
        %v438 = vmul.f32 %v406, %v406
        %v439 = vmul.f32 %v407, %v407
        %v440 = vmul.f32 %v408, %v408
        %v441 = vmul.f32 %v409, %v409
        %v442 = vmul.f32 %v410, %v410
        %v443 = vmul.f32 %v411, %v411
        %v444 = vadd.f32 %v412, %v413
        %445 = vadd.xlane.f32.xlu0 %v444
        %v446 = vpop.xlane.xlu0 %445
        %v447 = vadd.f32 %v414, %v415
        %448 = vadd.xlane.f32.xlu0 %v447
        %v449 = vpop.xlane.xlu0 %448
        %v450 = vadd.f32 %v416, %v417
        %451 = vadd.xlane.f32.xlu0 %v450
        %v452 = vpop.xlane.xlu0 %451
        %v453 = vadd.f32 %v418, %v419
        %454 = vadd.xlane.f32.xlu0 %v453
        %v455 = vpop.xlane.xlu0 %454
        %v456 = vadd.f32 %v420, %v421
        %457 = vadd.xlane.f32.xlu0 %v456
        %v458 = vpop.xlane.xlu0 %457
        %v459 = vadd.f32 %v422, %v423
        %460 = vadd.xlane.f32.xlu0 %v459
        %v461 = vpop.xlane.xlu0 %460
        %v462 = vadd.f32 %v424, %v425
        %463 = vadd.xlane.f32.xlu0 %v462
        %v464 = vpop.xlane.xlu0 %463
        %v465 = vadd.f32 %v426, %v427
        %466 = vadd.xlane.f32.xlu0 %v465
        %v467 = vpop.xlane.xlu0 %466
        %v468 = vadd.f32 %v428, %v429
        %469 = vadd.xlane.f32.xlu0 %v468
        %v470 = vpop.xlane.xlu0 %469
        %v471 = vadd.f32 %v430, %v431
        %472 = vadd.xlane.f32.xlu0 %v471
        %v473 = vpop.xlane.xlu0 %472
        %v474 = vadd.f32 %v432, %v433
        %475 = vadd.xlane.f32.xlu0 %v474
        %v476 = vpop.xlane.xlu0 %475
        %v477 = vadd.f32 %v434, %v435
        %478 = vadd.xlane.f32.xlu0 %v477
        %v479 = vpop.xlane.xlu0 %478
        %v480 = vadd.f32 %v436, %v437
        %481 = vadd.xlane.f32.xlu0 %v480
        %v482 = vpop.xlane.xlu0 %481
        %v483 = vadd.f32 %v438, %v439
        %484 = vadd.xlane.f32.xlu0 %v483
        %v485 = vpop.xlane.xlu0 %484
        %v486 = vadd.f32 %v440, %v441
        %487 = vadd.xlane.f32.xlu0 %v486
        %v488 = vpop.xlane.xlu0 %487
        %v489 = vadd.f32 %v442, %v443
        %490 = vadd.xlane.f32.xlu0 %v489
        %v491 = vpop.xlane.xlu0 %490
        %v492 = vmul.f32 %v446, %v363
        %v493 = vmul.f32 %v449, %v363
        %v494 = vmul.f32 %v452, %v363
        %v495 = vmul.f32 %v455, %v363
        %v496 = vmul.f32 %v458, %v363
        %v497 = vmul.f32 %v461, %v363
        %v498 = vmul.f32 %v464, %v363
        %v499 = vmul.f32 %v467, %v363
        %v500 = vmul.f32 %v470, %v363
        %v501 = vmul.f32 %v473, %v363
        %v502 = vmul.f32 %v476, %v363
        %v503 = vmul.f32 %v479, %v363
        %v504 = vmul.f32 %v482, %v363
        %v505 = vmul.f32 %v485, %v363
        %v506 = vmul.f32 %v488, %v363
        %v507 = vmul.f32 %v491, %v363
        %v508 = vadd.f32 %v492, 1e-05
        %v509 = vadd.f32 %v493, 1e-05
        %v510 = vadd.f32 %v494, 1e-05
        %v511 = vadd.f32 %v495, 1e-05
        %v512 = vadd.f32 %v496, 1e-05
        %v513 = vadd.f32 %v497, 1e-05
        %v514 = vadd.f32 %v498, 1e-05
        %v515 = vadd.f32 %v499, 1e-05
        %v516 = vadd.f32 %v500, 1e-05
        %v517 = vadd.f32 %v501, 1e-05
        %v518 = vadd.f32 %v502, 1e-05
        %v519 = vadd.f32 %v503, 1e-05
        %v520 = vadd.f32 %v504, 1e-05
        %v521 = vadd.f32 %v505, 1e-05
        %v522 = vadd.f32 %v506, 1e-05
        %v523 = vadd.f32 %v507, 1e-05
        %v524 = vrsqrt.pop %v508
        %v525 = vrsqrt.pop %v509
        %v526 = vrsqrt.pop %v510
        %v527 = vrsqrt.pop %v511
        %v528 = vrsqrt.pop %v512
        %v529 = vrsqrt.pop %v513
        %v530 = vrsqrt.pop %v514
        %v531 = vrsqrt.pop %v515
        %v532 = vrsqrt.pop %v516
        %v533 = vrsqrt.pop %v517
        %v534 = vrsqrt.pop %v518
        %v535 = vrsqrt.pop %v519
        %v536 = vrsqrt.pop %v520
        %v537 = vrsqrt.pop %v521
        %v538 = vrsqrt.pop %v522
        %v539 = vrsqrt.pop %v523
        %v540 = vmul.f32 %v380, %v524
        %v541 = vmul.f32 %v381, %v524
        %v542 = vmul.f32 %v382, %v525
        %v543 = vmul.f32 %v383, %v525
        %v544 = vmul.f32 %v384, %v526
        %v545 = vmul.f32 %v385, %v526
        %v546 = vmul.f32 %v386, %v527
        %v547 = vmul.f32 %v387, %v527
        %v548 = vmul.f32 %v388, %v528
        %v549 = vmul.f32 %v389, %v528
        %v550 = vmul.f32 %v390, %v529
        %v551 = vmul.f32 %v391, %v529
        %v552 = vmul.f32 %v392, %v530
        %v553 = vmul.f32 %v393, %v530
        %v554 = vmul.f32 %v394, %v531
        %v555 = vmul.f32 %v395, %v531
        %v556 = vmul.f32 %v396, %v532
        %v557 = vmul.f32 %v397, %v532
        %v558 = vmul.f32 %v398, %v533
        %v559 = vmul.f32 %v399, %v533
        %v560 = vmul.f32 %v400, %v534
        %v561 = vmul.f32 %v401, %v534
        %v562 = vmul.f32 %v402, %v535
        %v563 = vmul.f32 %v403, %v535
        %v564 = vmul.f32 %v404, %v536
        %v565 = vmul.f32 %v405, %v536
        %v566 = vmul.f32 %v406, %v537
        %v567 = vmul.f32 %v407, %v537
        %v568 = vmul.f32 %v408, %v538
        %v569 = vmul.f32 %v409, %v538
        %v570 = vmul.f32 %v410, %v539
        %v571 = vmul.f32 %v411, %v539
        %v572 = vld [vmem:[%s1] sm:$0xff]
        %v573 = vld [vmem:[%s1 + $0x8] sm:$0xff]
        %v574 = vld [vmem:[%s1 + $0x10] sm:$0xff]
        %v575 = vld [vmem:[%s1 + $0x18] sm:$0xff]
        %v576 = vld [vmem:[%s1 + $0x20] sm:$0xff]
        %v577 = vld [vmem:[%s1 + $0x28] sm:$0xff]
        %v578 = vld [vmem:[%s1 + $0x30] sm:$0xff]
        %v579 = vld [vmem:[%s1 + $0x38] sm:$0xff]
        %v580 = vld [vmem:[%s1 + $0x40] sm:$0xff]
        %v581 = vld [vmem:[%s1 + $0x48] sm:$0xff]
        %v582 = vld [vmem:[%s1 + $0x50] sm:$0xff]
        %v583 = vld [vmem:[%s1 + $0x58] sm:$0xff]
        %v584 = vld [vmem:[%s1 + $0x60] sm:$0xff]
        %v585 = vld [vmem:[%s1 + $0x68] sm:$0xff]
        %v586 = vld [vmem:[%s1 + $0x70] sm:$0xff]
        %v587 = vld [vmem:[%s1 + $0x78] sm:$0xff]
        %v588 = vld [vmem:[#allocation3] sm:$0xff]
        %v589 = vld [vmem:[#allocation3 + $0x8] sm:$0xff]
        %v590 = vld [vmem:[#allocation3 + $0x10] sm:$0x1]
        %v591 = vld [vmem:[#allocation3 + $0x18] sm:$0x1]
        %593 = vset.pattern.permute.xlu0 0
        %594 = vperm.xlu0 %593, %v572
        %v595 = vpop.permute.xlu0 %594
        %598 = vset.pattern.permute.xlu0 0
        %599 = vperm.xlu0 %598, %v573
        %v600 = vpop.permute.xlu0 %599
        %603 = vset.pattern.permute.xlu0 0
        %604 = vperm.xlu0 %603, %v574
        %v605 = vpop.permute.xlu0 %604
        %608 = vset.pattern.permute.xlu0 0
        %609 = vperm.xlu0 %608, %v575
        %v610 = vpop.permute.xlu0 %609
        %613 = vset.pattern.permute.xlu0 0
        %614 = vperm.xlu0 %613, %v576
        %v615 = vpop.permute.xlu0 %614
        %618 = vset.pattern.permute.xlu0 0
        %619 = vperm.xlu0 %618, %v577
        %v620 = vpop.permute.xlu0 %619
        %623 = vset.pattern.permute.xlu0 0
        %624 = vperm.xlu0 %623, %v578
        %v625 = vpop.permute.xlu0 %624
        %628 = vset.pattern.permute.xlu0 0
        %629 = vperm.xlu0 %628, %v579
        %v630 = vpop.permute.xlu0 %629
        %633 = vset.pattern.permute.xlu0 0
        %634 = vperm.xlu0 %633, %v580
        %v635 = vpop.permute.xlu0 %634
        %638 = vset.pattern.permute.xlu0 0
        %639 = vperm.xlu0 %638, %v581
        %v640 = vpop.permute.xlu0 %639
        %643 = vset.pattern.permute.xlu0 0
        %644 = vperm.xlu0 %643, %v582
        %v645 = vpop.permute.xlu0 %644
        %648 = vset.pattern.permute.xlu0 0
        %649 = vperm.xlu0 %648, %v583
        %v650 = vpop.permute.xlu0 %649
        %653 = vset.pattern.permute.xlu0 0
        %654 = vperm.xlu0 %653, %v584
        %v655 = vpop.permute.xlu0 %654
        %658 = vset.pattern.permute.xlu0 0
        %659 = vperm.xlu0 %658, %v585
        %v660 = vpop.permute.xlu0 %659
        %663 = vset.pattern.permute.xlu0 0
        %664 = vperm.xlu0 %663, %v586
        %v665 = vpop.permute.xlu0 %664
        %668 = vset.pattern.permute.xlu0 0
        %669 = vperm.xlu0 %668, %v587
        %v670 = vpop.permute.xlu0 %669
        %v672 = vmul.f32 %v540, %v595
        %v673 = vmul.f32 %v541, %v595
        %v674 = vmul.f32 %v542, %v600
        %v675 = vmul.f32 %v543, %v600
        %v676 = vmul.f32 %v544, %v605
        %v677 = vmul.f32 %v545, %v605
        %v678 = vmul.f32 %v546, %v610
        %v679 = vmul.f32 %v547, %v610
        %v680 = vmul.f32 %v548, %v615
        %v681 = vmul.f32 %v549, %v615
        %v682 = vmul.f32 %v550, %v620
        %v683 = vmul.f32 %v551, %v620
        %v684 = vmul.f32 %v552, %v625
        %v685 = vmul.f32 %v553, %v625
        %v686 = vmul.f32 %v554, %v630
        %v687 = vmul.f32 %v555, %v630
        %v688 = vmul.f32 %v556, %v635
        %v689 = vmul.f32 %v557, %v635
        %v690 = vmul.f32 %v558, %v640
        %v691 = vmul.f32 %v559, %v640
        %v692 = vmul.f32 %v560, %v645
        %v693 = vmul.f32 %v561, %v645
        %v694 = vmul.f32 %v562, %v650
        %v695 = vmul.f32 %v563, %v650
        %v696 = vmul.f32 %v564, %v655
        %v697 = vmul.f32 %v565, %v655
        %v698 = vmul.f32 %v566, %v660
        %v699 = vmul.f32 %v567, %v660
        %v700 = vmul.f32 %v568, %v665
        %v701 = vmul.f32 %v569, %v665
        %v702 = vmul.f32 %v570, %v670
        %v703 = vmul.f32 %v571, %v670
        %704 = vset.pattern.permute.xlu0 1
        %705 = vperm.xlu0 %704, %v572
        %v706 = vpop.permute.xlu0 %705
        %708 = vset.pattern.permute.xlu0 1
        %709 = vperm.xlu0 %708, %v573
        %v710 = vpop.permute.xlu0 %709
        %712 = vset.pattern.permute.xlu0 1
        %713 = vperm.xlu0 %712, %v574
        %v714 = vpop.permute.xlu0 %713
        %716 = vset.pattern.permute.xlu0 1
        %717 = vperm.xlu0 %716, %v575
        %v718 = vpop.permute.xlu0 %717
        %720 = vset.pattern.permute.xlu0 1
        %721 = vperm.xlu0 %720, %v576
        %v722 = vpop.permute.xlu0 %721
        %724 = vset.pattern.permute.xlu0 1
        %725 = vperm.xlu0 %724, %v577
        %v726 = vpop.permute.xlu0 %725
        %728 = vset.pattern.permute.xlu0 1
        %729 = vperm.xlu0 %728, %v578
        %v730 = vpop.permute.xlu0 %729
        %732 = vset.pattern.permute.xlu0 1
        %733 = vperm.xlu0 %732, %v579
        %v734 = vpop.permute.xlu0 %733
        %736 = vset.pattern.permute.xlu0 1
        %737 = vperm.xlu0 %736, %v580
        %v738 = vpop.permute.xlu0 %737
        %740 = vset.pattern.permute.xlu0 1
        %741 = vperm.xlu0 %740, %v581
        %v742 = vpop.permute.xlu0 %741
        %744 = vset.pattern.permute.xlu0 1
        %745 = vperm.xlu0 %744, %v582
        %v746 = vpop.permute.xlu0 %745
        %748 = vset.pattern.permute.xlu0 1
        %749 = vperm.xlu0 %748, %v583
        %v750 = vpop.permute.xlu0 %749
        %752 = vset.pattern.permute.xlu0 1
        %753 = vperm.xlu0 %752, %v584
        %v754 = vpop.permute.xlu0 %753
        %756 = vset.pattern.permute.xlu0 1
        %757 = vperm.xlu0 %756, %v585
        %v758 = vpop.permute.xlu0 %757
        %760 = vset.pattern.permute.xlu0 1
        %761 = vperm.xlu0 %760, %v586
        %v762 = vpop.permute.xlu0 %761
        %764 = vset.pattern.permute.xlu0 1
        %765 = vperm.xlu0 %764, %v587
        %v766 = vpop.permute.xlu0 %765
        %v768 = vadd.f32 %v672, %v706
        %v769 = vadd.f32 %v673, %v706
        %v770 = vadd.f32 %v674, %v710
        %v771 = vadd.f32 %v675, %v710
        %v772 = vadd.f32 %v676, %v714
        %v773 = vadd.f32 %v677, %v714
        %v774 = vadd.f32 %v678, %v718
        %v775 = vadd.f32 %v679, %v718
        %v776 = vadd.f32 %v680, %v722
        %v777 = vadd.f32 %v681, %v722
        %v778 = vadd.f32 %v682, %v726
        %v779 = vadd.f32 %v683, %v726
        %v780 = vadd.f32 %v684, %v730
        %v781 = vadd.f32 %v685, %v730
        %v782 = vadd.f32 %v686, %v734
        %v783 = vadd.f32 %v687, %v734
        %v784 = vadd.f32 %v688, %v738
        %v785 = vadd.f32 %v689, %v738
        %v786 = vadd.f32 %v690, %v742
        %v787 = vadd.f32 %v691, %v742
        %v788 = vadd.f32 %v692, %v746
        %v789 = vadd.f32 %v693, %v746
        %v790 = vadd.f32 %v694, %v750
        %v791 = vadd.f32 %v695, %v750
        %v792 = vadd.f32 %v696, %v754
        %v793 = vadd.f32 %v697, %v754
        %v794 = vadd.f32 %v698, %v758
        %v795 = vadd.f32 %v699, %v758
        %v796 = vadd.f32 %v700, %v762
        %v797 = vadd.f32 %v701, %v762
        %v798 = vadd.f32 %v702, %v766
        %v799 = vadd.f32 %v703, %v766
        %v800 = vmax.f32 %v768, 0.0
        %v801 = vmax.f32 %v769, 0.0
        %v802 = vmax.f32 %v770, 0.0
        %v803 = vmax.f32 %v771, 0.0
        %v804 = vmax.f32 %v772, 0.0
        %v805 = vmax.f32 %v773, 0.0
        %v806 = vmax.f32 %v774, 0.0
        %v807 = vmax.f32 %v775, 0.0
        %v808 = vmax.f32 %v776, 0.0
        %v809 = vmax.f32 %v777, 0.0
        %v810 = vmax.f32 %v778, 0.0
        %v811 = vmax.f32 %v779, 0.0
        %v812 = vmax.f32 %v780, 0.0
        %v813 = vmax.f32 %v781, 0.0
        %v814 = vmax.f32 %v782, 0.0
        %v815 = vmax.f32 %v783, 0.0
        %v816 = vmax.f32 %v784, 0.0
        %v817 = vmax.f32 %v785, 0.0
        %v818 = vmax.f32 %v786, 0.0
        %v819 = vmax.f32 %v787, 0.0
        %v820 = vmax.f32 %v788, 0.0
        %v821 = vmax.f32 %v789, 0.0
        %v822 = vmax.f32 %v790, 0.0
        %v823 = vmax.f32 %v791, 0.0
        %v824 = vmax.f32 %v792, 0.0
        %v825 = vmax.f32 %v793, 0.0
        %v826 = vmax.f32 %v794, 0.0
        %v827 = vmax.f32 %v795, 0.0
        %v828 = vmax.f32 %v796, 0.0
        %v829 = vmax.f32 %v797, 0.0
        %v830 = vmax.f32 %v798, 0.0
        %v831 = vmax.f32 %v799, 0.0
        %v832 = vpack.c.bf16 %v802, %v800
        %v833 = vpack.c.bf16 %v803, %v801
        %v834 = vpack.c.bf16 %v806, %v804
        %v835 = vpack.c.bf16 %v807, %v805
        %v836 = vpack.c.bf16 %v810, %v808
        %v837 = vpack.c.bf16 %v811, %v809
        %v838 = vpack.c.bf16 %v814, %v812
        %v839 = vpack.c.bf16 %v815, %v813
        %v840 = vpack.c.bf16 %v818, %v816
        %v841 = vpack.c.bf16 %v819, %v817
        %v842 = vpack.c.bf16 %v822, %v820
        %v843 = vpack.c.bf16 %v823, %v821
        %v844 = vpack.c.bf16 %v826, %v824
        %v845 = vpack.c.bf16 %v827, %v825
        %v846 = vpack.c.bf16 %v830, %v828
        %v847 = vpack.c.bf16 %v831, %v829
        %v848 = vld [vmem:[#allocation5] sm:$0xf]
        %v849 = vld [vmem:[#allocation5 + $0x4] sm:$0xf]
        %v850 = vld [vmem:[#allocation5 + $0x8] sm:$0xf]
        %v851 = vld [vmem:[#allocation5 + $0xc] sm:$0xf]
        %v852 = vld [vmem:[#allocation5 + $0x10] sm:$0xf]
        %v853 = vld [vmem:[#allocation5 + $0x14] sm:$0xf]
        %v854 = vld [vmem:[#allocation5 + $0x18] sm:$0xf]
        %v855 = vld [vmem:[#allocation5 + $0x1c] sm:$0xf]
        %v856 = vld [vmem:[#allocation5 + $0x20] sm:$0xf]
        %v857 = vld [vmem:[#allocation5 + $0x24] sm:$0xf]
        %v858 = vld [vmem:[#allocation5 + $0x28] sm:$0xf]
        %v859 = vld [vmem:[#allocation5 + $0x2c] sm:$0xf]
        %v860 = vld [vmem:[#allocation5 + $0x30] sm:$0xf]
        %v861 = vld [vmem:[#allocation5 + $0x34] sm:$0xf]
        %v862 = vld [vmem:[#allocation5 + $0x38] sm:$0xf]
        %v863 = vld [vmem:[#allocation5 + $0x3c] sm:$0xf]
        %v880 = vunpack.c.l.b16 %v848
        %v881 = vunpack.c.l.b16 %v849
        %v882 = vunpack.c.l.b16 %v850
        %v883 = vunpack.c.l.b16 %v851
        %v884 = vunpack.c.l.b16 %v852
        %v885 = vunpack.c.l.b16 %v853
        %v886 = vunpack.c.l.b16 %v854
        %v887 = vunpack.c.l.b16 %v855
        %v888 = vunpack.c.l.b16 %v856
        %v889 = vunpack.c.l.b16 %v857
        %v890 = vunpack.c.l.b16 %v858
        %v891 = vunpack.c.l.b16 %v859
        %v892 = vunpack.c.l.b16 %v860
        %v893 = vunpack.c.l.b16 %v861
        %v894 = vunpack.c.l.b16 %v862
        %v895 = vunpack.c.l.b16 %v863
        %v896 = vpack.c.b16 %v881, %v880
        %v897 = vpack.c.b16 %v883, %v882
        %v898 = vpack.c.b16 %v885, %v884
        %v899 = vpack.c.b16 %v887, %v886
        %v900 = vpack.c.b16 %v889, %v888
        %v901 = vpack.c.b16 %v891, %v890
        %v902 = vpack.c.b16 %v893, %v892
        %v903 = vpack.c.b16 %v895, %v894
        %912 = vmatprep.subr.bf16.mxu0 %v833
        %913 = vmatpush1.bf16.msra.mxu0 %v832
        %914 = vmatprep.subr.bf16.mxu0 %v835
        %915 = vmatpush1.bf16.msra.mxu0 %v834
        %916 = vmatprep.subr.bf16.mxu0 %v837
        %917 = vmatpush1.bf16.msra.mxu0 %v836
        %918 = vmatprep.subr.bf16.mxu0 %v839
        %919 = vmatpush1.bf16.msra.mxu0 %v838
        %920 = vmatprep.subr.bf16.mxu0 %v841
        %921 = vmatpush1.bf16.msra.mxu0 %v840
        %922 = vmatprep.subr.bf16.mxu0 %v843
        %923 = vmatpush1.bf16.msra.mxu0 %v842
        %924 = vmatprep.subr.bf16.mxu0 %v845
        %925 = vmatpush1.bf16.msra.mxu0 %v844
        %926 = vmatprep.subr.bf16.mxu0 %v847
        %927 = vmatpush1.bf16.msra.mxu0 %v846
        %928 = vmatprep.subr.bf16.mxu0 0
        %929 = vmatpush1.bf16.msra.mxu0 0
        %930 = vmatprep.subr.bf16.mxu0 0
        %931 = vmatpush1.bf16.msra.mxu0 0
        %932 = vmatprep.subr.bf16.mxu0 0
        %933 = vmatpush1.bf16.msra.mxu0 0
        %934 = vmatprep.subr.bf16.mxu0 0
        %935 = vmatpush1.bf16.msra.mxu0 0
        %936 = vmatprep.subr.bf16.mxu0 0
        %937 = vmatpush1.bf16.msra.mxu0 0
        %938 = vmatprep.subr.bf16.mxu0 0
        %939 = vmatpush1.bf16.msra.mxu0 0
        %940 = vmatprep.subr.bf16.mxu0 0
        %941 = vmatpush1.bf16.msra.mxu0 0
        %942 = vmatprep.subr.bf16.mxu0 0
        %943 = vmatpush1.bf16.msra.mxu0 0
        %944 = vmatprep.mubr.bf16.mxu0 0
        %945 = vmatmul.mubr.bf16.gmra.mrb[0].mxu0 %v896
        %v946 = vpop.f32.mrb[0].mxu0
        %v947 = vadd.f32 0.0, %v946
        %v948 = vpop.f32.mrb[0].mxu0
        %v949 = vadd.f32 0.0, %v948
        %v950 = vpop.f32.mrb[0].mxu0
        %v951 = vadd.f32 0.0, %v950
        %v952 = vpop.f32.mrb[0].mxu0
        %v953 = vadd.f32 0.0, %v952
        %954 = vmatprep.mubr.bf16.mxu0 0
        %955 = vmatmul.mubr.bf16.gmra.mrb[0].mxu0 %v897
        %v956 = vpop.f32.mrb[0].mxu0
        %v957 = vadd.f32 0.0, %v956
        %v958 = vpop.f32.mrb[0].mxu0
        %v959 = vadd.f32 0.0, %v958
        %v960 = vpop.f32.mrb[0].mxu0
        %v961 = vadd.f32 0.0, %v960
        %v962 = vpop.f32.mrb[0].mxu0
        %v963 = vadd.f32 0.0, %v962
        %964 = vmatprep.mubr.bf16.mxu0 0
        %965 = vmatmul.mubr.bf16.gmra.mrb[0].mxu0 %v898
        %v966 = vpop.f32.mrb[0].mxu0
        %v967 = vadd.f32 0.0, %v966
        %v968 = vpop.f32.mrb[0].mxu0
        %v969 = vadd.f32 0.0, %v968
        %v970 = vpop.f32.mrb[0].mxu0
        %v971 = vadd.f32 0.0, %v970
        %v972 = vpop.f32.mrb[0].mxu0
        %v973 = vadd.f32 0.0, %v972
        %974 = vmatprep.mubr.bf16.mxu0 0
        %975 = vmatmul.mubr.bf16.gmra.mrb[0].mxu0 %v899
        %v976 = vpop.f32.mrb[0].mxu0
        %v977 = vadd.f32 0.0, %v976
        %v978 = vpop.f32.mrb[0].mxu0
        %v979 = vadd.f32 0.0, %v978
        %v980 = vpop.f32.mrb[0].mxu0
        %v981 = vadd.f32 0.0, %v980
        %v982 = vpop.f32.mrb[0].mxu0
        %v983 = vadd.f32 0.0, %v982
        %984 = vmatprep.mubr.bf16.mxu0 0
        %985 = vmatmul.mubr.bf16.gmra.mrb[0].mxu0 %v900
        %v986 = vpop.f32.mrb[0].mxu0
        %v987 = vadd.f32 0.0, %v986
        %v988 = vpop.f32.mrb[0].mxu0
        %v989 = vadd.f32 0.0, %v988
        %v990 = vpop.f32.mrb[0].mxu0
        %v991 = vadd.f32 0.0, %v990
        %v992 = vpop.f32.mrb[0].mxu0
        %v993 = vadd.f32 0.0, %v992
        %994 = vmatprep.mubr.bf16.mxu0 0
        %995 = vmatmul.mubr.bf16.gmra.mrb[0].mxu0 %v901
        %v996 = vpop.f32.mrb[0].mxu0
        %v997 = vadd.f32 0.0, %v996
        %v998 = vpop.f32.mrb[0].mxu0
        %v999 = vadd.f32 0.0, %v998
        %v1000 = vpop.f32.mrb[0].mxu0
        %v1001 = vadd.f32 0.0, %v1000
        %v1002 = vpop.f32.mrb[0].mxu0
        %v1003 = vadd.f32 0.0, %v1002
        %1004 = vmatprep.mubr.bf16.mxu0 0
        %1005 = vmatmul.mubr.bf16.gmra.mrb[0].mxu0 %v902
        %v1006 = vpop.f32.mrb[0].mxu0
        %v1007 = vadd.f32 0.0, %v1006
        %v1008 = vpop.f32.mrb[0].mxu0
        %v1009 = vadd.f32 0.0, %v1008
        %v1010 = vpop.f32.mrb[0].mxu0
        %v1011 = vadd.f32 0.0, %v1010
        %v1012 = vpop.f32.mrb[0].mxu0
        %v1013 = vadd.f32 0.0, %v1012
        %1014 = vmatprep.mubr.bf16.mxu0 0
        %1015 = vmatmul.mubr.bf16.gmra.mrb[0].mxu0 %v903
        %v1016 = vpop.f32.mrb[0].mxu0
        %v1017 = vadd.f32 0.0, %v1016
        %v1018 = vpop.f32.mrb[0].mxu0
        %v1019 = vadd.f32 0.0, %v1018
        %v1020 = vpop.f32.mrb[0].mxu0
        %v1021 = vadd.f32 0.0, %v1020
        %v1022 = vpop.f32.mrb[0].mxu0
        %v1023 = vadd.f32 0.0, %v1022
        %1024 = vdwg.mxu0
        %1025 = vset.pattern.permute.xlu0 2
        %1026 = vperm.xlu0 %1025, %v572
        %v1027 = vpop.permute.xlu0 %1026
        %1029 = vset.pattern.permute.xlu0 2
        %1030 = vperm.xlu0 %1029, %v573
        %v1031 = vpop.permute.xlu0 %1030
        %1033 = vset.pattern.permute.xlu0 2
        %1034 = vperm.xlu0 %1033, %v574
        %v1035 = vpop.permute.xlu0 %1034
        %1037 = vset.pattern.permute.xlu0 2
        %1038 = vperm.xlu0 %1037, %v575
        %v1039 = vpop.permute.xlu0 %1038
        %1041 = vset.pattern.permute.xlu0 2
        %1042 = vperm.xlu0 %1041, %v576
        %v1043 = vpop.permute.xlu0 %1042
        %1045 = vset.pattern.permute.xlu0 2
        %1046 = vperm.xlu0 %1045, %v577
        %v1047 = vpop.permute.xlu0 %1046
        %1049 = vset.pattern.permute.xlu0 2
        %1050 = vperm.xlu0 %1049, %v578
        %v1051 = vpop.permute.xlu0 %1050
        %1053 = vset.pattern.permute.xlu0 2
        %1054 = vperm.xlu0 %1053, %v579
        %v1055 = vpop.permute.xlu0 %1054
        %1057 = vset.pattern.permute.xlu0 2
        %1058 = vperm.xlu0 %1057, %v580
        %v1059 = vpop.permute.xlu0 %1058
        %1061 = vset.pattern.permute.xlu0 2
        %1062 = vperm.xlu0 %1061, %v581
        %v1063 = vpop.permute.xlu0 %1062
        %1065 = vset.pattern.permute.xlu0 2
        %1066 = vperm.xlu0 %1065, %v582
        %v1067 = vpop.permute.xlu0 %1066
        %1069 = vset.pattern.permute.xlu0 2
        %1070 = vperm.xlu0 %1069, %v583
        %v1071 = vpop.permute.xlu0 %1070
        %1073 = vset.pattern.permute.xlu0 2
        %1074 = vperm.xlu0 %1073, %v584
        %v1075 = vpop.permute.xlu0 %1074
        %1077 = vset.pattern.permute.xlu0 2
        %1078 = vperm.xlu0 %1077, %v585
        %v1079 = vpop.permute.xlu0 %1078
        %1081 = vset.pattern.permute.xlu0 2
        %1082 = vperm.xlu0 %1081, %v586
        %v1083 = vpop.permute.xlu0 %1082
        %1085 = vset.pattern.permute.xlu0 2
        %1086 = vperm.xlu0 %1085, %v587
        %v1087 = vpop.permute.xlu0 %1086
        %v1089 = vmul.f32 %v540, %v1027
        %v1090 = vmul.f32 %v541, %v1027
        %v1091 = vmul.f32 %v542, %v1031
        %v1092 = vmul.f32 %v543, %v1031
        %v1093 = vmul.f32 %v544, %v1035
        %v1094 = vmul.f32 %v545, %v1035
        %v1095 = vmul.f32 %v546, %v1039
        %v1096 = vmul.f32 %v547, %v1039
        %v1097 = vmul.f32 %v548, %v1043
        %v1098 = vmul.f32 %v549, %v1043
        %v1099 = vmul.f32 %v550, %v1047
        %v1100 = vmul.f32 %v551, %v1047
        %v1101 = vmul.f32 %v552, %v1051
        %v1102 = vmul.f32 %v553, %v1051
        %v1103 = vmul.f32 %v554, %v1055
        %v1104 = vmul.f32 %v555, %v1055
        %v1105 = vmul.f32 %v556, %v1059
        %v1106 = vmul.f32 %v557, %v1059
        %v1107 = vmul.f32 %v558, %v1063
        %v1108 = vmul.f32 %v559, %v1063
        %v1109 = vmul.f32 %v560, %v1067
        %v1110 = vmul.f32 %v561, %v1067
        %v1111 = vmul.f32 %v562, %v1071
        %v1112 = vmul.f32 %v563, %v1071
        %v1113 = vmul.f32 %v564, %v1075
        %v1114 = vmul.f32 %v565, %v1075
        %v1115 = vmul.f32 %v566, %v1079
        %v1116 = vmul.f32 %v567, %v1079
        %v1117 = vmul.f32 %v568, %v1083
        %v1118 = vmul.f32 %v569, %v1083
        %v1119 = vmul.f32 %v570, %v1087
        %v1120 = vmul.f32 %v571, %v1087
        %1121 = vset.pattern.permute.xlu0 3
        %1122 = vperm.xlu0 %1121, %v572
        %v1123 = vpop.permute.xlu0 %1122
        %1125 = vset.pattern.permute.xlu0 3
        %1126 = vperm.xlu0 %1125, %v573
        %v1127 = vpop.permute.xlu0 %1126
        %1129 = vset.pattern.permute.xlu0 3
        %1130 = vperm.xlu0 %1129, %v574
        %v1131 = vpop.permute.xlu0 %1130
        %1133 = vset.pattern.permute.xlu0 3
        %1134 = vperm.xlu0 %1133, %v575
        %v1135 = vpop.permute.xlu0 %1134
        %1137 = vset.pattern.permute.xlu0 3
        %1138 = vperm.xlu0 %1137, %v576
        %v1139 = vpop.permute.xlu0 %1138
        %1141 = vset.pattern.permute.xlu0 3
        %1142 = vperm.xlu0 %1141, %v577
        %v1143 = vpop.permute.xlu0 %1142
        %1145 = vset.pattern.permute.xlu0 3
        %1146 = vperm.xlu0 %1145, %v578
        %v1147 = vpop.permute.xlu0 %1146
        %1149 = vset.pattern.permute.xlu0 3
        %1150 = vperm.xlu0 %1149, %v579
        %v1151 = vpop.permute.xlu0 %1150
        %1153 = vset.pattern.permute.xlu0 3
        %1154 = vperm.xlu0 %1153, %v580
        %v1155 = vpop.permute.xlu0 %1154
        %1157 = vset.pattern.permute.xlu0 3
        %1158 = vperm.xlu0 %1157, %v581
        %v1159 = vpop.permute.xlu0 %1158
        %1161 = vset.pattern.permute.xlu0 3
        %1162 = vperm.xlu0 %1161, %v582
        %v1163 = vpop.permute.xlu0 %1162
        %1165 = vset.pattern.permute.xlu0 3
        %1166 = vperm.xlu0 %1165, %v583
        %v1167 = vpop.permute.xlu0 %1166
        %1169 = vset.pattern.permute.xlu0 3
        %1170 = vperm.xlu0 %1169, %v584
        %v1171 = vpop.permute.xlu0 %1170
        %1173 = vset.pattern.permute.xlu0 3
        %1174 = vperm.xlu0 %1173, %v585
        %v1175 = vpop.permute.xlu0 %1174
        %1177 = vset.pattern.permute.xlu0 3
        %1178 = vperm.xlu0 %1177, %v586
        %v1179 = vpop.permute.xlu0 %1178
        %1181 = vset.pattern.permute.xlu0 3
        %1182 = vperm.xlu0 %1181, %v587
        %v1183 = vpop.permute.xlu0 %1182
        %v1185 = vadd.f32 %v1089, %v1123
        %v1186 = vadd.f32 %v1090, %v1123
        %v1187 = vadd.f32 %v1091, %v1127
        %v1188 = vadd.f32 %v1092, %v1127
        %v1189 = vadd.f32 %v1093, %v1131
        %v1190 = vadd.f32 %v1094, %v1131
        %v1191 = vadd.f32 %v1095, %v1135
        %v1192 = vadd.f32 %v1096, %v1135
        %v1193 = vadd.f32 %v1097, %v1139
        %v1194 = vadd.f32 %v1098, %v1139
        %v1195 = vadd.f32 %v1099, %v1143
        %v1196 = vadd.f32 %v1100, %v1143
        %v1197 = vadd.f32 %v1101, %v1147
        %v1198 = vadd.f32 %v1102, %v1147
        %v1199 = vadd.f32 %v1103, %v1151
        %v1200 = vadd.f32 %v1104, %v1151
        %v1201 = vadd.f32 %v1105, %v1155
        %v1202 = vadd.f32 %v1106, %v1155
        %v1203 = vadd.f32 %v1107, %v1159
        %v1204 = vadd.f32 %v1108, %v1159
        %v1205 = vadd.f32 %v1109, %v1163
        %v1206 = vadd.f32 %v1110, %v1163
        %v1207 = vadd.f32 %v1111, %v1167
        %v1208 = vadd.f32 %v1112, %v1167
        %v1209 = vadd.f32 %v1113, %v1171
        %v1210 = vadd.f32 %v1114, %v1171
        %v1211 = vadd.f32 %v1115, %v1175
        %v1212 = vadd.f32 %v1116, %v1175
        %v1213 = vadd.f32 %v1117, %v1179
        %v1214 = vadd.f32 %v1118, %v1179
        %v1215 = vadd.f32 %v1119, %v1183
        %v1216 = vadd.f32 %v1120, %v1183
        %v1217 = vmax.f32 %v1185, 0.0
        %v1218 = vmax.f32 %v1186, 0.0
        %v1219 = vmax.f32 %v1187, 0.0
        %v1220 = vmax.f32 %v1188, 0.0
        %v1221 = vmax.f32 %v1189, 0.0
        %v1222 = vmax.f32 %v1190, 0.0
        %v1223 = vmax.f32 %v1191, 0.0
        %v1224 = vmax.f32 %v1192, 0.0
        %v1225 = vmax.f32 %v1193, 0.0
        %v1226 = vmax.f32 %v1194, 0.0
        %v1227 = vmax.f32 %v1195, 0.0
        %v1228 = vmax.f32 %v1196, 0.0
        %v1229 = vmax.f32 %v1197, 0.0
        %v1230 = vmax.f32 %v1198, 0.0
        %v1231 = vmax.f32 %v1199, 0.0
        %v1232 = vmax.f32 %v1200, 0.0
        %v1233 = vmax.f32 %v1201, 0.0
        %v1234 = vmax.f32 %v1202, 0.0
        %v1235 = vmax.f32 %v1203, 0.0
        %v1236 = vmax.f32 %v1204, 0.0
        %v1237 = vmax.f32 %v1205, 0.0
        %v1238 = vmax.f32 %v1206, 0.0
        %v1239 = vmax.f32 %v1207, 0.0
        %v1240 = vmax.f32 %v1208, 0.0
        %v1241 = vmax.f32 %v1209, 0.0
        %v1242 = vmax.f32 %v1210, 0.0
        %v1243 = vmax.f32 %v1211, 0.0
        %v1244 = vmax.f32 %v1212, 0.0
        %v1245 = vmax.f32 %v1213, 0.0
        %v1246 = vmax.f32 %v1214, 0.0
        %v1247 = vmax.f32 %v1215, 0.0
        %v1248 = vmax.f32 %v1216, 0.0
        %1249 = vrot.lane.b32.xlu0 %v1217, 17
        %v1250 = vpop.permute.xlu0 %1249
        %1251 = vrot.lane.b32.xlu0 %v1219, 17
        %v1252 = vpop.permute.xlu0 %1251
        %1253 = vrot.lane.b32.xlu0 %v1221, 17
        %v1254 = vpop.permute.xlu0 %1253
        %1255 = vrot.lane.b32.xlu0 %v1223, 17
        %v1256 = vpop.permute.xlu0 %1255
        %1257 = vrot.lane.b32.xlu0 %v1225, 17
        %v1258 = vpop.permute.xlu0 %1257
        %1259 = vrot.lane.b32.xlu0 %v1227, 17
        %v1260 = vpop.permute.xlu0 %1259
        %1261 = vrot.lane.b32.xlu0 %v1229, 17
        %v1262 = vpop.permute.xlu0 %1261
        %1263 = vrot.lane.b32.xlu0 %v1231, 17
        %v1264 = vpop.permute.xlu0 %1263
        %1265 = vrot.lane.b32.xlu0 %v1233, 17
        %v1266 = vpop.permute.xlu0 %1265
        %1267 = vrot.lane.b32.xlu0 %v1235, 17
        %v1268 = vpop.permute.xlu0 %1267
        %1269 = vrot.lane.b32.xlu0 %v1237, 17
        %v1270 = vpop.permute.xlu0 %1269
        %1271 = vrot.lane.b32.xlu0 %v1239, 17
        %v1272 = vpop.permute.xlu0 %1271
        %1273 = vrot.lane.b32.xlu0 %v1241, 17
        %v1274 = vpop.permute.xlu0 %1273
        %1275 = vrot.lane.b32.xlu0 %v1243, 17
        %v1276 = vpop.permute.xlu0 %1275
        %1277 = vrot.lane.b32.xlu0 %v1245, 17
        %v1278 = vpop.permute.xlu0 %1277
        %1279 = vrot.lane.b32.xlu0 %v1247, 17
        %v1280 = vpop.permute.xlu0 %1279
        %1281 = vrot.lane.b32.xlu0 %v1218, 17
        %v1282 = vpop.permute.xlu0 %1281
        %1283 = vrot.lane.b32.xlu0 %v1220, 17
        %v1284 = vpop.permute.xlu0 %1283
        %1285 = vrot.lane.b32.xlu0 %v1222, 17
        %v1286 = vpop.permute.xlu0 %1285
        %1287 = vrot.lane.b32.xlu0 %v1224, 17
        %v1288 = vpop.permute.xlu0 %1287
        %1289 = vrot.lane.b32.xlu0 %v1226, 17
        %v1290 = vpop.permute.xlu0 %1289
        %1291 = vrot.lane.b32.xlu0 %v1228, 17
        %v1292 = vpop.permute.xlu0 %1291
        %1293 = vrot.lane.b32.xlu0 %v1230, 17
        %v1294 = vpop.permute.xlu0 %1293
        %1295 = vrot.lane.b32.xlu0 %v1232, 17
        %v1296 = vpop.permute.xlu0 %1295
        %1297 = vrot.lane.b32.xlu0 %v1234, 17
        %v1298 = vpop.permute.xlu0 %1297
        %1299 = vrot.lane.b32.xlu0 %v1236, 17
        %v1300 = vpop.permute.xlu0 %1299
        %1301 = vrot.lane.b32.xlu0 %v1238, 17
        %v1302 = vpop.permute.xlu0 %1301
        %1303 = vrot.lane.b32.xlu0 %v1240, 17
        %v1304 = vpop.permute.xlu0 %1303
        %1305 = vrot.lane.b32.xlu0 %v1242, 17
        %v1306 = vpop.permute.xlu0 %1305
        %1307 = vrot.lane.b32.xlu0 %v1244, 17
        %v1308 = vpop.permute.xlu0 %1307
        %1309 = vrot.lane.b32.xlu0 %v1246, 17
        %v1310 = vpop.permute.xlu0 %1309
        %1311 = vrot.lane.b32.xlu0 %v1248, 17
        %v1312 = vpop.permute.xlu0 %1311
        %v1313 = vlaneseq
        %v1314 = vand.u32 %v1313, 127
        %vm1315 = vcmp.lt.s32.totalorder %v1314, 17
        %v1316 = vsel %vm1315, %v1250, %v1282
        %v1317 = vsel %vm1315, %v1252, %v1284
        %v1318 = vsel %vm1315, %v1254, %v1286
        %v1319 = vsel %vm1315, %v1256, %v1288
        %v1320 = vsel %vm1315, %v1258, %v1290
        %v1321 = vsel %vm1315, %v1260, %v1292
        %v1322 = vsel %vm1315, %v1262, %v1294
        %v1323 = vsel %vm1315, %v1264, %v1296
        %v1324 = vsel %vm1315, %v1266, %v1298
        %v1325 = vsel %vm1315, %v1268, %v1300
        %v1326 = vsel %vm1315, %v1270, %v1302
        %v1327 = vsel %vm1315, %v1272, %v1304
        %v1328 = vsel %vm1315, %v1274, %v1306
        %v1329 = vsel %vm1315, %v1276, %v1308
        %v1330 = vsel %vm1315, %v1278, %v1310
        %v1331 = vsel %vm1315, %v1280, %v1312
        %v1332 = vsel %vm1315, %v1282, %v1250
        %v1333 = vsel %vm1315, %v1284, %v1252
        %v1334 = vsel %vm1315, %v1286, %v1254
        %v1335 = vsel %vm1315, %v1288, %v1256
        %v1336 = vsel %vm1315, %v1290, %v1258
        %v1337 = vsel %vm1315, %v1292, %v1260
        %v1338 = vsel %vm1315, %v1294, %v1262
        %v1339 = vsel %vm1315, %v1296, %v1264
        %v1340 = vsel %vm1315, %v1298, %v1266
        %v1341 = vsel %vm1315, %v1300, %v1268
        %v1342 = vsel %vm1315, %v1302, %v1270
        %v1343 = vsel %vm1315, %v1304, %v1272
        %v1344 = vsel %vm1315, %v1306, %v1274
        %v1345 = vsel %vm1315, %v1308, %v1276
        %v1346 = vsel %vm1315, %v1310, %v1278
        %v1347 = vsel %vm1315, %v1312, %v1280
        %v1348 = vlaneseq
        %v1349 = vshrl.u32 %v1348, 7
        %v1350 = vsub.s32 0, %v1349
        %v1351 = vrot.slane %v588, %v1350
        %v1352 = vlaneseq
        %v1353 = vshrl.u32 %v1352, 7
        %v1354 = vsub.s32 0, %v1353
        %v1355 = vrot.slane %v589, %v1354
        %v1356 = vmul.f32 %v1332, %v1351
        %v1357 = vmul.f32 %v1316, %v1355
        %v1358 = vmul.f32 %v1333, %v1351
        %v1359 = vmul.f32 %v1317, %v1355
        %v1360 = vmul.f32 %v1334, %v1351
        %v1361 = vmul.f32 %v1318, %v1355
        %v1362 = vmul.f32 %v1335, %v1351
        %v1363 = vmul.f32 %v1319, %v1355
        %v1364 = vmul.f32 %v1336, %v1351
        %v1365 = vmul.f32 %v1320, %v1355
        %v1366 = vmul.f32 %v1337, %v1351
        %v1367 = vmul.f32 %v1321, %v1355
        %v1368 = vmul.f32 %v1338, %v1351
        %v1369 = vmul.f32 %v1322, %v1355
        %v1370 = vmul.f32 %v1339, %v1351
        %v1371 = vmul.f32 %v1323, %v1355
        %v1372 = vmul.f32 %v1340, %v1351
        %v1373 = vmul.f32 %v1324, %v1355
        %v1374 = vmul.f32 %v1341, %v1351
        %v1375 = vmul.f32 %v1325, %v1355
        %v1376 = vmul.f32 %v1342, %v1351
        %v1377 = vmul.f32 %v1326, %v1355
        %v1378 = vmul.f32 %v1343, %v1351
        %v1379 = vmul.f32 %v1327, %v1355
        %v1380 = vmul.f32 %v1344, %v1351
        %v1381 = vmul.f32 %v1328, %v1355
        %v1382 = vmul.f32 %v1345, %v1351
        %v1383 = vmul.f32 %v1329, %v1355
        %v1384 = vmul.f32 %v1346, %v1351
        %v1385 = vmul.f32 %v1330, %v1355
        %v1386 = vmul.f32 %v1347, %v1351
        %v1387 = vmul.f32 %v1331, %v1355
        %v1388 = vpack.c.bf16 %v1358, %v1356
        %v1389 = vpack.c.bf16 %v1359, %v1357
        %v1390 = vpack.c.bf16 %v1362, %v1360
        %v1391 = vpack.c.bf16 %v1363, %v1361
        %v1392 = vpack.c.bf16 %v1366, %v1364
        %v1393 = vpack.c.bf16 %v1367, %v1365
        %v1394 = vpack.c.bf16 %v1370, %v1368
        %v1395 = vpack.c.bf16 %v1371, %v1369
        %v1396 = vpack.c.bf16 %v1374, %v1372
        %v1397 = vpack.c.bf16 %v1375, %v1373
        %v1398 = vpack.c.bf16 %v1378, %v1376
        %v1399 = vpack.c.bf16 %v1379, %v1377
        %v1400 = vpack.c.bf16 %v1382, %v1380
        %v1401 = vpack.c.bf16 %v1383, %v1381
        %v1402 = vpack.c.bf16 %v1386, %v1384
        %v1403 = vpack.c.bf16 %v1387, %v1385
        %1404 = vst [vmem:[#allocation2] sm:$0xff] %v1388
        %1405 = vst [vmem:[#allocation2 + $0x8] sm:$0xff] %v1389
        %1406 = vst [vmem:[#allocation2 + $0x10] sm:$0xff] %v1390
        %1407 = vst [vmem:[#allocation2 + $0x18] sm:$0xff] %v1391
        %1408 = vst [vmem:[#allocation2 + $0x20] sm:$0xff] %v1392
        %1409 = vst [vmem:[#allocation2 + $0x28] sm:$0xff] %v1393
        %1410 = vst [vmem:[#allocation2 + $0x30] sm:$0xff] %v1394
        %1411 = vst [vmem:[#allocation2 + $0x38] sm:$0xff] %v1395
        %1412 = vst [vmem:[#allocation2 + $0x40] sm:$0xff] %v1396
        %1413 = vst [vmem:[#allocation2 + $0x48] sm:$0xff] %v1397
        %1414 = vst [vmem:[#allocation2 + $0x50] sm:$0xff] %v1398
        %1415 = vst [vmem:[#allocation2 + $0x58] sm:$0xff] %v1399
        %1416 = vst [vmem:[#allocation2 + $0x60] sm:$0xff] %v1400
        %1417 = vst [vmem:[#allocation2 + $0x68] sm:$0xff] %v1401
        %1418 = vst [vmem:[#allocation2 + $0x70] sm:$0xff] %v1402
        %1419 = vst [vmem:[#allocation2 + $0x78] sm:$0xff] %v1403
        %1420 = vrot.lane.b32.xlu0 %v1217, 16
        %v1421 = vpop.permute.xlu0 %1420
        %1422 = vrot.lane.b32.xlu0 %v1219, 16
        %v1423 = vpop.permute.xlu0 %1422
        %1424 = vrot.lane.b32.xlu0 %v1221, 16
        %v1425 = vpop.permute.xlu0 %1424
        %1426 = vrot.lane.b32.xlu0 %v1223, 16
        %v1427 = vpop.permute.xlu0 %1426
        %1428 = vrot.lane.b32.xlu0 %v1225, 16
        %v1429 = vpop.permute.xlu0 %1428
        %1430 = vrot.lane.b32.xlu0 %v1227, 16
        %v1431 = vpop.permute.xlu0 %1430
        %1432 = vrot.lane.b32.xlu0 %v1229, 16
        %v1433 = vpop.permute.xlu0 %1432
        %1434 = vrot.lane.b32.xlu0 %v1231, 16
        %v1435 = vpop.permute.xlu0 %1434
        %1436 = vrot.lane.b32.xlu0 %v1233, 16
        %v1437 = vpop.permute.xlu0 %1436
        %1438 = vrot.lane.b32.xlu0 %v1235, 16
        %v1439 = vpop.permute.xlu0 %1438
        %1440 = vrot.lane.b32.xlu0 %v1237, 16
        %v1441 = vpop.permute.xlu0 %1440
        %1442 = vrot.lane.b32.xlu0 %v1239, 16
        %v1443 = vpop.permute.xlu0 %1442
        %1444 = vrot.lane.b32.xlu0 %v1241, 16
        %v1445 = vpop.permute.xlu0 %1444
        %1446 = vrot.lane.b32.xlu0 %v1243, 16
        %v1447 = vpop.permute.xlu0 %1446
        %1448 = vrot.lane.b32.xlu0 %v1245, 16
        %v1449 = vpop.permute.xlu0 %1448
        %1450 = vrot.lane.b32.xlu0 %v1247, 16
        %v1451 = vpop.permute.xlu0 %1450
        %1452 = vrot.lane.b32.xlu0 %v1218, 16
        %v1453 = vpop.permute.xlu0 %1452
        %1454 = vrot.lane.b32.xlu0 %v1220, 16
        %v1455 = vpop.permute.xlu0 %1454
        %1456 = vrot.lane.b32.xlu0 %v1222, 16
        %v1457 = vpop.permute.xlu0 %1456
        %1458 = vrot.lane.b32.xlu0 %v1224, 16
        %v1459 = vpop.permute.xlu0 %1458
        %1460 = vrot.lane.b32.xlu0 %v1226, 16
        %v1461 = vpop.permute.xlu0 %1460
        %1462 = vrot.lane.b32.xlu0 %v1228, 16
        %v1463 = vpop.permute.xlu0 %1462
        %1464 = vrot.lane.b32.xlu0 %v1230, 16
        %v1465 = vpop.permute.xlu0 %1464
        %1466 = vrot.lane.b32.xlu0 %v1232, 16
        %v1467 = vpop.permute.xlu0 %1466
        %1468 = vrot.lane.b32.xlu0 %v1234, 16
        %v1469 = vpop.permute.xlu0 %1468
        %1470 = vrot.lane.b32.xlu0 %v1236, 16
        %v1471 = vpop.permute.xlu0 %1470
        %1472 = vrot.lane.b32.xlu0 %v1238, 16
        %v1473 = vpop.permute.xlu0 %1472
        %1474 = vrot.lane.b32.xlu0 %v1240, 16
        %v1475 = vpop.permute.xlu0 %1474
        %1476 = vrot.lane.b32.xlu0 %v1242, 16
        %v1477 = vpop.permute.xlu0 %1476
        %1478 = vrot.lane.b32.xlu0 %v1244, 16
        %v1479 = vpop.permute.xlu0 %1478
        %1480 = vrot.lane.b32.xlu0 %v1246, 16
        %v1481 = vpop.permute.xlu0 %1480
        %1482 = vrot.lane.b32.xlu0 %v1248, 16
        %v1483 = vpop.permute.xlu0 %1482
        %vm1484 = vcmp.lt.s32.totalorder %v1314, 16
        %v1485 = vsel %vm1484, %v1421, %v1453
        %v1486 = vsel %vm1484, %v1423, %v1455
        %v1487 = vsel %vm1484, %v1425, %v1457
        %v1488 = vsel %vm1484, %v1427, %v1459
        %v1489 = vsel %vm1484, %v1429, %v1461
        %v1490 = vsel %vm1484, %v1431, %v1463
        %v1491 = vsel %vm1484, %v1433, %v1465
        %v1492 = vsel %vm1484, %v1435, %v1467
        %v1493 = vsel %vm1484, %v1437, %v1469
        %v1494 = vsel %vm1484, %v1439, %v1471
        %v1495 = vsel %vm1484, %v1441, %v1473
        %v1496 = vsel %vm1484, %v1443, %v1475
        %v1497 = vsel %vm1484, %v1445, %v1477
        %v1498 = vsel %vm1484, %v1447, %v1479
        %v1499 = vsel %vm1484, %v1449, %v1481
        %v1500 = vsel %vm1484, %v1451, %v1483
        %v1501 = vsel %vm1484, %v1453, %v1421
        %v1502 = vsel %vm1484, %v1455, %v1423
        %v1503 = vsel %vm1484, %v1457, %v1425
        %v1504 = vsel %vm1484, %v1459, %v1427
        %v1505 = vsel %vm1484, %v1461, %v1429
        %v1506 = vsel %vm1484, %v1463, %v1431
        %v1507 = vsel %vm1484, %v1465, %v1433
        %v1508 = vsel %vm1484, %v1467, %v1435
        %v1509 = vsel %vm1484, %v1469, %v1437
        %v1510 = vsel %vm1484, %v1471, %v1439
        %v1511 = vsel %vm1484, %v1473, %v1441
        %v1512 = vsel %vm1484, %v1475, %v1443
        %v1513 = vsel %vm1484, %v1477, %v1445
        %v1514 = vsel %vm1484, %v1479, %v1447
        %v1515 = vsel %vm1484, %v1481, %v1449
        %v1516 = vsel %vm1484, %v1483, %v1451
        %v1517 = vlaneseq
        %v1518 = vshrl.u32 %v1517, 7
        %v1519 = vsub.s32 1, %v1518
        %v1520 = vrot.slane %v588, %v1519
        %v1521 = vlaneseq
        %v1522 = vshrl.u32 %v1521, 7
        %v1523 = vsub.s32 1, %v1522
        %v1524 = vrot.slane %v589, %v1523
        %v1525 = vmul.f32 %v1501, %v1520
        %v1526 = vmul.f32 %v1485, %v1524
        %v1527 = vmul.f32 %v1502, %v1520
        %v1528 = vmul.f32 %v1486, %v1524
        %v1529 = vmul.f32 %v1503, %v1520
        %v1530 = vmul.f32 %v1487, %v1524
        %v1531 = vmul.f32 %v1504, %v1520
        %v1532 = vmul.f32 %v1488, %v1524
        %v1533 = vmul.f32 %v1505, %v1520
        %v1534 = vmul.f32 %v1489, %v1524
        %v1535 = vmul.f32 %v1506, %v1520
        %v1536 = vmul.f32 %v1490, %v1524
        %v1537 = vmul.f32 %v1507, %v1520
        %v1538 = vmul.f32 %v1491, %v1524
        %v1539 = vmul.f32 %v1508, %v1520
        %v1540 = vmul.f32 %v1492, %v1524
        %v1541 = vmul.f32 %v1509, %v1520
        %v1542 = vmul.f32 %v1493, %v1524
        %v1543 = vmul.f32 %v1510, %v1520
        %v1544 = vmul.f32 %v1494, %v1524
        %v1545 = vmul.f32 %v1511, %v1520
        %v1546 = vmul.f32 %v1495, %v1524
        %v1547 = vmul.f32 %v1512, %v1520
        %v1548 = vmul.f32 %v1496, %v1524
        %v1549 = vmul.f32 %v1513, %v1520
        %v1550 = vmul.f32 %v1497, %v1524
        %v1551 = vmul.f32 %v1514, %v1520
        %v1552 = vmul.f32 %v1498, %v1524
        %v1553 = vmul.f32 %v1515, %v1520
        %v1554 = vmul.f32 %v1499, %v1524
        %v1555 = vmul.f32 %v1516, %v1520
        %v1556 = vmul.f32 %v1500, %v1524
        %v1557 = vpack.c.bf16 %v1527, %v1525
        %v1558 = vpack.c.bf16 %v1528, %v1526
        %v1559 = vpack.c.bf16 %v1531, %v1529
        %v1560 = vpack.c.bf16 %v1532, %v1530
        %v1561 = vpack.c.bf16 %v1535, %v1533
        %v1562 = vpack.c.bf16 %v1536, %v1534
        %v1563 = vpack.c.bf16 %v1539, %v1537
        %v1564 = vpack.c.bf16 %v1540, %v1538
        %v1565 = vpack.c.bf16 %v1543, %v1541
        %v1566 = vpack.c.bf16 %v1544, %v1542
        %v1567 = vpack.c.bf16 %v1547, %v1545
        %v1568 = vpack.c.bf16 %v1548, %v1546
        %v1569 = vpack.c.bf16 %v1551, %v1549
        %v1570 = vpack.c.bf16 %v1552, %v1550
        %v1571 = vpack.c.bf16 %v1555, %v1553
        %v1572 = vpack.c.bf16 %v1556, %v1554
        %1573 = vst [vmem:[#allocation2 + $0x80] sm:$0xff] %v1557
        %1574 = vst [vmem:[#allocation2 + $0x88] sm:$0xff] %v1558
        %1575 = vst [vmem:[#allocation2 + $0x90] sm:$0xff] %v1559
        %1576 = vst [vmem:[#allocation2 + $0x98] sm:$0xff] %v1560
        %1577 = vst [vmem:[#allocation2 + $0xa0] sm:$0xff] %v1561
        %1578 = vst [vmem:[#allocation2 + $0xa8] sm:$0xff] %v1562
        %1579 = vst [vmem:[#allocation2 + $0xb0] sm:$0xff] %v1563
        %1580 = vst [vmem:[#allocation2 + $0xb8] sm:$0xff] %v1564
        %1581 = vst [vmem:[#allocation2 + $0xc0] sm:$0xff] %v1565
        %1582 = vst [vmem:[#allocation2 + $0xc8] sm:$0xff] %v1566
        %1583 = vst [vmem:[#allocation2 + $0xd0] sm:$0xff] %v1567
        %1584 = vst [vmem:[#allocation2 + $0xd8] sm:$0xff] %v1568
        %1585 = vst [vmem:[#allocation2 + $0xe0] sm:$0xff] %v1569
        %1586 = vst [vmem:[#allocation2 + $0xe8] sm:$0xff] %v1570
        %1587 = vst [vmem:[#allocation2 + $0xf0] sm:$0xff] %v1571
        %1588 = vst [vmem:[#allocation2 + $0xf8] sm:$0xff] %v1572
        %1589 = vrot.lane.b32.xlu0 %v1217, 15
        %v1590 = vpop.permute.xlu0 %1589
        %1591 = vrot.lane.b32.xlu0 %v1219, 15
        %v1592 = vpop.permute.xlu0 %1591
        %1593 = vrot.lane.b32.xlu0 %v1221, 15
        %v1594 = vpop.permute.xlu0 %1593
        %1595 = vrot.lane.b32.xlu0 %v1223, 15
        %v1596 = vpop.permute.xlu0 %1595
        %1597 = vrot.lane.b32.xlu0 %v1225, 15
        %v1598 = vpop.permute.xlu0 %1597
        %1599 = vrot.lane.b32.xlu0 %v1227, 15
        %v1600 = vpop.permute.xlu0 %1599
        %1601 = vrot.lane.b32.xlu0 %v1229, 15
        %v1602 = vpop.permute.xlu0 %1601
        %1603 = vrot.lane.b32.xlu0 %v1231, 15
        %v1604 = vpop.permute.xlu0 %1603
        %1605 = vrot.lane.b32.xlu0 %v1233, 15
        %v1606 = vpop.permute.xlu0 %1605
        %1607 = vrot.lane.b32.xlu0 %v1235, 15
        %v1608 = vpop.permute.xlu0 %1607
        %1609 = vrot.lane.b32.xlu0 %v1237, 15
        %v1610 = vpop.permute.xlu0 %1609
        %1611 = vrot.lane.b32.xlu0 %v1239, 15
        %v1612 = vpop.permute.xlu0 %1611
        %1613 = vrot.lane.b32.xlu0 %v1241, 15
        %v1614 = vpop.permute.xlu0 %1613
        %1615 = vrot.lane.b32.xlu0 %v1243, 15
        %v1616 = vpop.permute.xlu0 %1615
        %1617 = vrot.lane.b32.xlu0 %v1245, 15
        %v1618 = vpop.permute.xlu0 %1617
        %1619 = vrot.lane.b32.xlu0 %v1247, 15
        %v1620 = vpop.permute.xlu0 %1619
        %1621 = vrot.lane.b32.xlu0 %v1218, 15
        %v1622 = vpop.permute.xlu0 %1621
        %1623 = vrot.lane.b32.xlu0 %v1220, 15
        %v1624 = vpop.permute.xlu0 %1623
        %1625 = vrot.lane.b32.xlu0 %v1222, 15
        %v1626 = vpop.permute.xlu0 %1625
        %1627 = vrot.lane.b32.xlu0 %v1224, 15
        %v1628 = vpop.permute.xlu0 %1627
        %1629 = vrot.lane.b32.xlu0 %v1226, 15
        %v1630 = vpop.permute.xlu0 %1629
        %1631 = vrot.lane.b32.xlu0 %v1228, 15
        %v1632 = vpop.permute.xlu0 %1631
        %1633 = vrot.lane.b32.xlu0 %v1230, 15
        %v1634 = vpop.permute.xlu0 %1633
        %1635 = vrot.lane.b32.xlu0 %v1232, 15
        %v1636 = vpop.permute.xlu0 %1635
        %1637 = vrot.lane.b32.xlu0 %v1234, 15
        %v1638 = vpop.permute.xlu0 %1637
        %1639 = vrot.lane.b32.xlu0 %v1236, 15
        %v1640 = vpop.permute.xlu0 %1639
        %1641 = vrot.lane.b32.xlu0 %v1238, 15
        %v1642 = vpop.permute.xlu0 %1641
        %1643 = vrot.lane.b32.xlu0 %v1240, 15
        %v1644 = vpop.permute.xlu0 %1643
        %1645 = vrot.lane.b32.xlu0 %v1242, 15
        %v1646 = vpop.permute.xlu0 %1645
        %1647 = vrot.lane.b32.xlu0 %v1244, 15
        %v1648 = vpop.permute.xlu0 %1647
        %1649 = vrot.lane.b32.xlu0 %v1246, 15
        %v1650 = vpop.permute.xlu0 %1649
        %1651 = vrot.lane.b32.xlu0 %v1248, 15
        %v1652 = vpop.permute.xlu0 %1651
        %vm1653 = vcmp.lt.s32.totalorder %v1314, 15
        %v1654 = vsel %vm1653, %v1590, %v1622
        %v1655 = vsel %vm1653, %v1592, %v1624
        %v1656 = vsel %vm1653, %v1594, %v1626
        %v1657 = vsel %vm1653, %v1596, %v1628
        %v1658 = vsel %vm1653, %v1598, %v1630
        %v1659 = vsel %vm1653, %v1600, %v1632
        %v1660 = vsel %vm1653, %v1602, %v1634
        %v1661 = vsel %vm1653, %v1604, %v1636
        %v1662 = vsel %vm1653, %v1606, %v1638
        %v1663 = vsel %vm1653, %v1608, %v1640
        %v1664 = vsel %vm1653, %v1610, %v1642
        %v1665 = vsel %vm1653, %v1612, %v1644
        %v1666 = vsel %vm1653, %v1614, %v1646
        %v1667 = vsel %vm1653, %v1616, %v1648
        %v1668 = vsel %vm1653, %v1618, %v1650
        %v1669 = vsel %vm1653, %v1620, %v1652
        %v1670 = vsel %vm1653, %v1622, %v1590
        %v1671 = vsel %vm1653, %v1624, %v1592
        %v1672 = vsel %vm1653, %v1626, %v1594
        %v1673 = vsel %vm1653, %v1628, %v1596
        %v1674 = vsel %vm1653, %v1630, %v1598
        %v1675 = vsel %vm1653, %v1632, %v1600
        %v1676 = vsel %vm1653, %v1634, %v1602
        %v1677 = vsel %vm1653, %v1636, %v1604
        %v1678 = vsel %vm1653, %v1638, %v1606
        %v1679 = vsel %vm1653, %v1640, %v1608
        %v1680 = vsel %vm1653, %v1642, %v1610
        %v1681 = vsel %vm1653, %v1644, %v1612
        %v1682 = vsel %vm1653, %v1646, %v1614
        %v1683 = vsel %vm1653, %v1648, %v1616
        %v1684 = vsel %vm1653, %v1650, %v1618
        %v1685 = vsel %vm1653, %v1652, %v1620
        %v1686 = vlaneseq
        %v1687 = vshrl.u32 %v1686, 7
        %v1688 = vsub.s32 2, %v1687
        %v1689 = vrot.slane %v588, %v1688
        %v1690 = vlaneseq
        %v1691 = vshrl.u32 %v1690, 7
        %v1692 = vsub.s32 2, %v1691
        %v1693 = vrot.slane %v589, %v1692
        %v1694 = vmul.f32 %v1670, %v1689
        %v1695 = vmul.f32 %v1654, %v1693
        %v1696 = vmul.f32 %v1671, %v1689
        %v1697 = vmul.f32 %v1655, %v1693
        %v1698 = vmul.f32 %v1672, %v1689
        %v1699 = vmul.f32 %v1656, %v1693
        %v1700 = vmul.f32 %v1673, %v1689
        %v1701 = vmul.f32 %v1657, %v1693
        %v1702 = vmul.f32 %v1674, %v1689
        %v1703 = vmul.f32 %v1658, %v1693
        %v1704 = vmul.f32 %v1675, %v1689
        %v1705 = vmul.f32 %v1659, %v1693
        %v1706 = vmul.f32 %v1676, %v1689
        %v1707 = vmul.f32 %v1660, %v1693
        %v1708 = vmul.f32 %v1677, %v1689
        %v1709 = vmul.f32 %v1661, %v1693
        %v1710 = vmul.f32 %v1678, %v1689
        %v1711 = vmul.f32 %v1662, %v1693
        %v1712 = vmul.f32 %v1679, %v1689
        %v1713 = vmul.f32 %v1663, %v1693
        %v1714 = vmul.f32 %v1680, %v1689
        %v1715 = vmul.f32 %v1664, %v1693
        %v1716 = vmul.f32 %v1681, %v1689
        %v1717 = vmul.f32 %v1665, %v1693
        %v1718 = vmul.f32 %v1682, %v1689
        %v1719 = vmul.f32 %v1666, %v1693
        %v1720 = vmul.f32 %v1683, %v1689
        %v1721 = vmul.f32 %v1667, %v1693
        %v1722 = vmul.f32 %v1684, %v1689
        %v1723 = vmul.f32 %v1668, %v1693
        %v1724 = vmul.f32 %v1685, %v1689
        %v1725 = vmul.f32 %v1669, %v1693
        %v1726 = vpack.c.bf16 %v1696, %v1694
        %v1727 = vpack.c.bf16 %v1697, %v1695
        %v1728 = vpack.c.bf16 %v1700, %v1698
        %v1729 = vpack.c.bf16 %v1701, %v1699
        %v1730 = vpack.c.bf16 %v1704, %v1702
        %v1731 = vpack.c.bf16 %v1705, %v1703
        %v1732 = vpack.c.bf16 %v1708, %v1706
        %v1733 = vpack.c.bf16 %v1709, %v1707
        %v1734 = vpack.c.bf16 %v1712, %v1710
        %v1735 = vpack.c.bf16 %v1713, %v1711
        %v1736 = vpack.c.bf16 %v1716, %v1714
        %v1737 = vpack.c.bf16 %v1717, %v1715
        %v1738 = vpack.c.bf16 %v1720, %v1718
        %v1739 = vpack.c.bf16 %v1721, %v1719
        %v1740 = vpack.c.bf16 %v1724, %v1722
        %v1741 = vpack.c.bf16 %v1725, %v1723
        %1742 = vst [vmem:[#allocation2 + $0x100] sm:$0xff] %v1726
        %1743 = vst [vmem:[#allocation2 + $0x108] sm:$0xff] %v1727
        %1744 = vst [vmem:[#allocation2 + $0x110] sm:$0xff] %v1728
        %1745 = vst [vmem:[#allocation2 + $0x118] sm:$0xff] %v1729
        %1746 = vst [vmem:[#allocation2 + $0x120] sm:$0xff] %v1730
        %1747 = vst [vmem:[#allocation2 + $0x128] sm:$0xff] %v1731
        %1748 = vst [vmem:[#allocation2 + $0x130] sm:$0xff] %v1732
        %1749 = vst [vmem:[#allocation2 + $0x138] sm:$0xff] %v1733
        %1750 = vst [vmem:[#allocation2 + $0x140] sm:$0xff] %v1734
        %1751 = vst [vmem:[#allocation2 + $0x148] sm:$0xff] %v1735
        %1752 = vst [vmem:[#allocation2 + $0x150] sm:$0xff] %v1736
        %1753 = vst [vmem:[#allocation2 + $0x158] sm:$0xff] %v1737
        %1754 = vst [vmem:[#allocation2 + $0x160] sm:$0xff] %v1738
        %1755 = vst [vmem:[#allocation2 + $0x168] sm:$0xff] %v1739
        %1756 = vst [vmem:[#allocation2 + $0x170] sm:$0xff] %v1740
        %1757 = vst [vmem:[#allocation2 + $0x178] sm:$0xff] %v1741
        %1758 = vrot.lane.b32.xlu0 %v1217, 1
        %v1759 = vpop.permute.xlu0 %1758
        %1760 = vrot.lane.b32.xlu0 %v1219, 1
        %v1761 = vpop.permute.xlu0 %1760
        %1762 = vrot.lane.b32.xlu0 %v1221, 1
        %v1763 = vpop.permute.xlu0 %1762
        %1764 = vrot.lane.b32.xlu0 %v1223, 1
        %v1765 = vpop.permute.xlu0 %1764
        %1766 = vrot.lane.b32.xlu0 %v1225, 1
        %v1767 = vpop.permute.xlu0 %1766
        %1768 = vrot.lane.b32.xlu0 %v1227, 1
        %v1769 = vpop.permute.xlu0 %1768
        %1770 = vrot.lane.b32.xlu0 %v1229, 1
        %v1771 = vpop.permute.xlu0 %1770
        %1772 = vrot.lane.b32.xlu0 %v1231, 1
        %v1773 = vpop.permute.xlu0 %1772
        %1774 = vrot.lane.b32.xlu0 %v1233, 1
        %v1775 = vpop.permute.xlu0 %1774
        %1776 = vrot.lane.b32.xlu0 %v1235, 1
        %v1777 = vpop.permute.xlu0 %1776
        %1778 = vrot.lane.b32.xlu0 %v1237, 1
        %v1779 = vpop.permute.xlu0 %1778
        %1780 = vrot.lane.b32.xlu0 %v1239, 1
        %v1781 = vpop.permute.xlu0 %1780
        %1782 = vrot.lane.b32.xlu0 %v1241, 1
        %v1783 = vpop.permute.xlu0 %1782
        %1784 = vrot.lane.b32.xlu0 %v1243, 1
        %v1785 = vpop.permute.xlu0 %1784
        %1786 = vrot.lane.b32.xlu0 %v1245, 1
        %v1787 = vpop.permute.xlu0 %1786
        %1788 = vrot.lane.b32.xlu0 %v1247, 1
        %v1789 = vpop.permute.xlu0 %1788
        %1790 = vrot.lane.b32.xlu0 %v1218, 1
        %v1791 = vpop.permute.xlu0 %1790
        %1792 = vrot.lane.b32.xlu0 %v1220, 1
        %v1793 = vpop.permute.xlu0 %1792
        %1794 = vrot.lane.b32.xlu0 %v1222, 1
        %v1795 = vpop.permute.xlu0 %1794
        %1796 = vrot.lane.b32.xlu0 %v1224, 1
        %v1797 = vpop.permute.xlu0 %1796
        %1798 = vrot.lane.b32.xlu0 %v1226, 1
        %v1799 = vpop.permute.xlu0 %1798
        %1800 = vrot.lane.b32.xlu0 %v1228, 1
        %v1801 = vpop.permute.xlu0 %1800
        %1802 = vrot.lane.b32.xlu0 %v1230, 1
        %v1803 = vpop.permute.xlu0 %1802
        %1804 = vrot.lane.b32.xlu0 %v1232, 1
        %v1805 = vpop.permute.xlu0 %1804
        %1806 = vrot.lane.b32.xlu0 %v1234, 1
        %v1807 = vpop.permute.xlu0 %1806
        %1808 = vrot.lane.b32.xlu0 %v1236, 1
        %v1809 = vpop.permute.xlu0 %1808
        %1810 = vrot.lane.b32.xlu0 %v1238, 1
        %v1811 = vpop.permute.xlu0 %1810
        %1812 = vrot.lane.b32.xlu0 %v1240, 1
        %v1813 = vpop.permute.xlu0 %1812
        %1814 = vrot.lane.b32.xlu0 %v1242, 1
        %v1815 = vpop.permute.xlu0 %1814
        %1816 = vrot.lane.b32.xlu0 %v1244, 1
        %v1817 = vpop.permute.xlu0 %1816
        %1818 = vrot.lane.b32.xlu0 %v1246, 1
        %v1819 = vpop.permute.xlu0 %1818
        %1820 = vrot.lane.b32.xlu0 %v1248, 1
        %v1821 = vpop.permute.xlu0 %1820
        %vm1822 = vcmp.lt.s32.totalorder %v1314, 1
        %v1823 = vsel %vm1822, %v1759, %v1791
        %v1824 = vsel %vm1822, %v1761, %v1793
        %v1825 = vsel %vm1822, %v1763, %v1795
        %v1826 = vsel %vm1822, %v1765, %v1797
        %v1827 = vsel %vm1822, %v1767, %v1799
        %v1828 = vsel %vm1822, %v1769, %v1801
        %v1829 = vsel %vm1822, %v1771, %v1803
        %v1830 = vsel %vm1822, %v1773, %v1805
        %v1831 = vsel %vm1822, %v1775, %v1807
        %v1832 = vsel %vm1822, %v1777, %v1809
        %v1833 = vsel %vm1822, %v1779, %v1811
        %v1834 = vsel %vm1822, %v1781, %v1813
        %v1835 = vsel %vm1822, %v1783, %v1815
        %v1836 = vsel %vm1822, %v1785, %v1817
        %v1837 = vsel %vm1822, %v1787, %v1819
        %v1838 = vsel %vm1822, %v1789, %v1821
        %v1839 = vsel %vm1822, %v1791, %v1759
        %v1840 = vsel %vm1822, %v1793, %v1761
        %v1841 = vsel %vm1822, %v1795, %v1763
        %v1842 = vsel %vm1822, %v1797, %v1765
        %v1843 = vsel %vm1822, %v1799, %v1767
        %v1844 = vsel %vm1822, %v1801, %v1769
        %v1845 = vsel %vm1822, %v1803, %v1771
        %v1846 = vsel %vm1822, %v1805, %v1773
        %v1847 = vsel %vm1822, %v1807, %v1775
        %v1848 = vsel %vm1822, %v1809, %v1777
        %v1849 = vsel %vm1822, %v1811, %v1779
        %v1850 = vsel %vm1822, %v1813, %v1781
        %v1851 = vsel %vm1822, %v1815, %v1783
        %v1852 = vsel %vm1822, %v1817, %v1785
        %v1853 = vsel %vm1822, %v1819, %v1787
        %v1854 = vsel %vm1822, %v1821, %v1789
        %v1855 = vlaneseq
        %v1856 = vshrl.u32 %v1855, 7
        %v1857 = vsub.s32 3, %v1856
        %v1858 = vrot.slane %v588, %v1857
        %v1859 = vlaneseq
        %v1860 = vshrl.u32 %v1859, 7
        %v1861 = vsub.s32 3, %v1860
        %v1862 = vrot.slane %v589, %v1861
        %v1863 = vmul.f32 %v1839, %v1858
        %v1864 = vmul.f32 %v1823, %v1862
        %v1865 = vmul.f32 %v1840, %v1858
        %v1866 = vmul.f32 %v1824, %v1862
        %v1867 = vmul.f32 %v1841, %v1858
        %v1868 = vmul.f32 %v1825, %v1862
        %v1869 = vmul.f32 %v1842, %v1858
        %v1870 = vmul.f32 %v1826, %v1862
        %v1871 = vmul.f32 %v1843, %v1858
        %v1872 = vmul.f32 %v1827, %v1862
        %v1873 = vmul.f32 %v1844, %v1858
        %v1874 = vmul.f32 %v1828, %v1862
        %v1875 = vmul.f32 %v1845, %v1858
        %v1876 = vmul.f32 %v1829, %v1862
        %v1877 = vmul.f32 %v1846, %v1858
        %v1878 = vmul.f32 %v1830, %v1862
        %v1879 = vmul.f32 %v1847, %v1858
        %v1880 = vmul.f32 %v1831, %v1862
        %v1881 = vmul.f32 %v1848, %v1858
        %v1882 = vmul.f32 %v1832, %v1862
        %v1883 = vmul.f32 %v1849, %v1858
        %v1884 = vmul.f32 %v1833, %v1862
        %v1885 = vmul.f32 %v1850, %v1858
        %v1886 = vmul.f32 %v1834, %v1862
        %v1887 = vmul.f32 %v1851, %v1858
        %v1888 = vmul.f32 %v1835, %v1862
        %v1889 = vmul.f32 %v1852, %v1858
        %v1890 = vmul.f32 %v1836, %v1862
        %v1891 = vmul.f32 %v1853, %v1858
        %v1892 = vmul.f32 %v1837, %v1862
        %v1893 = vmul.f32 %v1854, %v1858
        %v1894 = vmul.f32 %v1838, %v1862
        %v1895 = vpack.c.bf16 %v1865, %v1863
        %v1896 = vpack.c.bf16 %v1866, %v1864
        %v1897 = vpack.c.bf16 %v1869, %v1867
        %v1898 = vpack.c.bf16 %v1870, %v1868
        %v1899 = vpack.c.bf16 %v1873, %v1871
        %v1900 = vpack.c.bf16 %v1874, %v1872
        %v1901 = vpack.c.bf16 %v1877, %v1875
        %v1902 = vpack.c.bf16 %v1878, %v1876
        %v1903 = vpack.c.bf16 %v1881, %v1879
        %v1904 = vpack.c.bf16 %v1882, %v1880
        %v1905 = vpack.c.bf16 %v1885, %v1883
        %v1906 = vpack.c.bf16 %v1886, %v1884
        %v1907 = vpack.c.bf16 %v1889, %v1887
        %v1908 = vpack.c.bf16 %v1890, %v1888
        %v1909 = vpack.c.bf16 %v1893, %v1891
        %v1910 = vpack.c.bf16 %v1894, %v1892
        %1911 = vst [vmem:[#allocation2 + $0x180] sm:$0xff] %v1895
        %1912 = vst [vmem:[#allocation2 + $0x188] sm:$0xff] %v1896
        %1913 = vst [vmem:[#allocation2 + $0x190] sm:$0xff] %v1897
        %1914 = vst [vmem:[#allocation2 + $0x198] sm:$0xff] %v1898
        %1915 = vst [vmem:[#allocation2 + $0x1a0] sm:$0xff] %v1899
        %1916 = vst [vmem:[#allocation2 + $0x1a8] sm:$0xff] %v1900
        %1917 = vst [vmem:[#allocation2 + $0x1b0] sm:$0xff] %v1901
        %1918 = vst [vmem:[#allocation2 + $0x1b8] sm:$0xff] %v1902
        %1919 = vst [vmem:[#allocation2 + $0x1c0] sm:$0xff] %v1903
        %1920 = vst [vmem:[#allocation2 + $0x1c8] sm:$0xff] %v1904
        %1921 = vst [vmem:[#allocation2 + $0x1d0] sm:$0xff] %v1905
        %1922 = vst [vmem:[#allocation2 + $0x1d8] sm:$0xff] %v1906
        %1923 = vst [vmem:[#allocation2 + $0x1e0] sm:$0xff] %v1907
        %1924 = vst [vmem:[#allocation2 + $0x1e8] sm:$0xff] %v1908
        %1925 = vst [vmem:[#allocation2 + $0x1f0] sm:$0xff] %v1909
        %1926 = vst [vmem:[#allocation2 + $0x1f8] sm:$0xff] %v1910
        %v1927 = vpack.c.bf16 %v1219, %v1217
        %v1928 = vpack.c.bf16 %v1220, %v1218
        %v1929 = vpack.c.bf16 %v1223, %v1221
        %v1930 = vpack.c.bf16 %v1224, %v1222
        %v1931 = vpack.c.bf16 %v1227, %v1225
        %v1932 = vpack.c.bf16 %v1228, %v1226
        %v1933 = vpack.c.bf16 %v1231, %v1229
        %v1934 = vpack.c.bf16 %v1232, %v1230
        %v1935 = vpack.c.bf16 %v1235, %v1233
        %v1936 = vpack.c.bf16 %v1236, %v1234
        %v1937 = vpack.c.bf16 %v1239, %v1237
        %v1938 = vpack.c.bf16 %v1240, %v1238
        %v1939 = vpack.c.bf16 %v1243, %v1241
        %v1940 = vpack.c.bf16 %v1244, %v1242
        %v1941 = vpack.c.bf16 %v1247, %v1245
        %v1942 = vpack.c.bf16 %v1248, %v1246
        %1943 = vst [vmem:[#allocation2 + $0x200] sm:$0xff] %v1927
        %1944 = vst [vmem:[#allocation2 + $0x208] sm:$0xff] %v1928
        %1945 = vst [vmem:[#allocation2 + $0x210] sm:$0xff] %v1929
        %1946 = vst [vmem:[#allocation2 + $0x218] sm:$0xff] %v1930
        %1947 = vst [vmem:[#allocation2 + $0x220] sm:$0xff] %v1931
        %1948 = vst [vmem:[#allocation2 + $0x228] sm:$0xff] %v1932
        %1949 = vst [vmem:[#allocation2 + $0x230] sm:$0xff] %v1933
        %1950 = vst [vmem:[#allocation2 + $0x238] sm:$0xff] %v1934
        %1951 = vst [vmem:[#allocation2 + $0x240] sm:$0xff] %v1935
        %1952 = vst [vmem:[#allocation2 + $0x248] sm:$0xff] %v1936
        %1953 = vst [vmem:[#allocation2 + $0x250] sm:$0xff] %v1937
        %1954 = vst [vmem:[#allocation2 + $0x258] sm:$0xff] %v1938
        %1955 = vst [vmem:[#allocation2 + $0x260] sm:$0xff] %v1939
        %1956 = vst [vmem:[#allocation2 + $0x268] sm:$0xff] %v1940
        %1957 = vst [vmem:[#allocation2 + $0x270] sm:$0xff] %v1941
        %1958 = vst [vmem:[#allocation2 + $0x278] sm:$0xff] %v1942
        %1959 = vrot.lane.b32.xlu0 %v1217, 127
        %v1960 = vpop.permute.xlu0 %1959
        %1961 = vrot.lane.b32.xlu0 %v1219, 127
        %v1962 = vpop.permute.xlu0 %1961
        %1963 = vrot.lane.b32.xlu0 %v1221, 127
        %v1964 = vpop.permute.xlu0 %1963
        %1965 = vrot.lane.b32.xlu0 %v1223, 127
        %v1966 = vpop.permute.xlu0 %1965
        %1967 = vrot.lane.b32.xlu0 %v1225, 127
        %v1968 = vpop.permute.xlu0 %1967
        %1969 = vrot.lane.b32.xlu0 %v1227, 127
        %v1970 = vpop.permute.xlu0 %1969
        %1971 = vrot.lane.b32.xlu0 %v1229, 127
        %v1972 = vpop.permute.xlu0 %1971
        %1973 = vrot.lane.b32.xlu0 %v1231, 127
        %v1974 = vpop.permute.xlu0 %1973
        %1975 = vrot.lane.b32.xlu0 %v1233, 127
        %v1976 = vpop.permute.xlu0 %1975
        %1977 = vrot.lane.b32.xlu0 %v1235, 127
        %v1978 = vpop.permute.xlu0 %1977
        %1979 = vrot.lane.b32.xlu0 %v1237, 127
        %v1980 = vpop.permute.xlu0 %1979
        %1981 = vrot.lane.b32.xlu0 %v1239, 127
        %v1982 = vpop.permute.xlu0 %1981
        %1983 = vrot.lane.b32.xlu0 %v1241, 127
        %v1984 = vpop.permute.xlu0 %1983
        %1985 = vrot.lane.b32.xlu0 %v1243, 127
        %v1986 = vpop.permute.xlu0 %1985
        %1987 = vrot.lane.b32.xlu0 %v1245, 127
        %v1988 = vpop.permute.xlu0 %1987
        %1989 = vrot.lane.b32.xlu0 %v1247, 127
        %v1990 = vpop.permute.xlu0 %1989
        %1991 = vrot.lane.b32.xlu0 %v1218, 127
        %v1992 = vpop.permute.xlu0 %1991
        %1993 = vrot.lane.b32.xlu0 %v1220, 127
        %v1994 = vpop.permute.xlu0 %1993
        %1995 = vrot.lane.b32.xlu0 %v1222, 127
        %v1996 = vpop.permute.xlu0 %1995
        %1997 = vrot.lane.b32.xlu0 %v1224, 127
        %v1998 = vpop.permute.xlu0 %1997
        %1999 = vrot.lane.b32.xlu0 %v1226, 127
        %v2000 = vpop.permute.xlu0 %1999
        %2001 = vrot.lane.b32.xlu0 %v1228, 127
        %v2002 = vpop.permute.xlu0 %2001
        %2003 = vrot.lane.b32.xlu0 %v1230, 127
        %v2004 = vpop.permute.xlu0 %2003
        %2005 = vrot.lane.b32.xlu0 %v1232, 127
        %v2006 = vpop.permute.xlu0 %2005
        %2007 = vrot.lane.b32.xlu0 %v1234, 127
        %v2008 = vpop.permute.xlu0 %2007
        %2009 = vrot.lane.b32.xlu0 %v1236, 127
        %v2010 = vpop.permute.xlu0 %2009
        %2011 = vrot.lane.b32.xlu0 %v1238, 127
        %v2012 = vpop.permute.xlu0 %2011
        %2013 = vrot.lane.b32.xlu0 %v1240, 127
        %v2014 = vpop.permute.xlu0 %2013
        %2015 = vrot.lane.b32.xlu0 %v1242, 127
        %v2016 = vpop.permute.xlu0 %2015
        %2017 = vrot.lane.b32.xlu0 %v1244, 127
        %v2018 = vpop.permute.xlu0 %2017
        %2019 = vrot.lane.b32.xlu0 %v1246, 127
        %v2020 = vpop.permute.xlu0 %2019
        %2021 = vrot.lane.b32.xlu0 %v1248, 127
        %v2022 = vpop.permute.xlu0 %2021
        %vm2023 = vcmp.lt.s32.totalorder %v1314, 127
        %v2024 = vsel %vm2023, %v1960, %v1992
        %v2025 = vsel %vm2023, %v1962, %v1994
        %v2026 = vsel %vm2023, %v1964, %v1996
        %v2027 = vsel %vm2023, %v1966, %v1998
        %v2028 = vsel %vm2023, %v1968, %v2000
        %v2029 = vsel %vm2023, %v1970, %v2002
        %v2030 = vsel %vm2023, %v1972, %v2004
        %v2031 = vsel %vm2023, %v1974, %v2006
        %v2032 = vsel %vm2023, %v1976, %v2008
        %v2033 = vsel %vm2023, %v1978, %v2010
        %v2034 = vsel %vm2023, %v1980, %v2012
        %v2035 = vsel %vm2023, %v1982, %v2014
        %v2036 = vsel %vm2023, %v1984, %v2016
        %v2037 = vsel %vm2023, %v1986, %v2018
        %v2038 = vsel %vm2023, %v1988, %v2020
        %v2039 = vsel %vm2023, %v1990, %v2022
        %v2040 = vsel %vm2023, %v1992, %v1960
        %v2041 = vsel %vm2023, %v1994, %v1962
        %v2042 = vsel %vm2023, %v1996, %v1964
        %v2043 = vsel %vm2023, %v1998, %v1966
        %v2044 = vsel %vm2023, %v2000, %v1968
        %v2045 = vsel %vm2023, %v2002, %v1970
        %v2046 = vsel %vm2023, %v2004, %v1972
        %v2047 = vsel %vm2023, %v2006, %v1974
        %v2048 = vsel %vm2023, %v2008, %v1976
        %v2049 = vsel %vm2023, %v2010, %v1978
        %v2050 = vsel %vm2023, %v2012, %v1980
        %v2051 = vsel %vm2023, %v2014, %v1982
        %v2052 = vsel %vm2023, %v2016, %v1984
        %v2053 = vsel %vm2023, %v2018, %v1986
        %v2054 = vsel %vm2023, %v2020, %v1988
        %v2055 = vsel %vm2023, %v2022, %v1990
        %v2056 = vlaneseq
        %v2057 = vshrl.u32 %v2056, 7
        %v2058 = vsub.s32 5, %v2057
        %v2059 = vrot.slane %v588, %v2058
        %v2060 = vlaneseq
        %v2061 = vshrl.u32 %v2060, 7
        %v2062 = vsub.s32 5, %v2061
        %v2063 = vrot.slane %v589, %v2062
        %v2064 = vmul.f32 %v2024, %v2059
        %v2065 = vmul.f32 %v2040, %v2063
        %v2066 = vmul.f32 %v2025, %v2059
        %v2067 = vmul.f32 %v2041, %v2063
        %v2068 = vmul.f32 %v2026, %v2059
        %v2069 = vmul.f32 %v2042, %v2063
        %v2070 = vmul.f32 %v2027, %v2059
        %v2071 = vmul.f32 %v2043, %v2063
        %v2072 = vmul.f32 %v2028, %v2059
        %v2073 = vmul.f32 %v2044, %v2063
        %v2074 = vmul.f32 %v2029, %v2059
        %v2075 = vmul.f32 %v2045, %v2063
        %v2076 = vmul.f32 %v2030, %v2059
        %v2077 = vmul.f32 %v2046, %v2063
        %v2078 = vmul.f32 %v2031, %v2059
        %v2079 = vmul.f32 %v2047, %v2063
        %v2080 = vmul.f32 %v2032, %v2059
        %v2081 = vmul.f32 %v2048, %v2063
        %v2082 = vmul.f32 %v2033, %v2059
        %v2083 = vmul.f32 %v2049, %v2063
        %v2084 = vmul.f32 %v2034, %v2059
        %v2085 = vmul.f32 %v2050, %v2063
        %v2086 = vmul.f32 %v2035, %v2059
        %v2087 = vmul.f32 %v2051, %v2063
        %v2088 = vmul.f32 %v2036, %v2059
        %v2089 = vmul.f32 %v2052, %v2063
        %v2090 = vmul.f32 %v2037, %v2059
        %v2091 = vmul.f32 %v2053, %v2063
        %v2092 = vmul.f32 %v2038, %v2059
        %v2093 = vmul.f32 %v2054, %v2063
        %v2094 = vmul.f32 %v2039, %v2059
        %v2095 = vmul.f32 %v2055, %v2063
        %v2096 = vpack.c.bf16 %v2066, %v2064
        %v2097 = vpack.c.bf16 %v2067, %v2065
        %v2098 = vpack.c.bf16 %v2070, %v2068
        %v2099 = vpack.c.bf16 %v2071, %v2069
        %v2100 = vpack.c.bf16 %v2074, %v2072
        %v2101 = vpack.c.bf16 %v2075, %v2073
        %v2102 = vpack.c.bf16 %v2078, %v2076
        %v2103 = vpack.c.bf16 %v2079, %v2077
        %v2104 = vpack.c.bf16 %v2082, %v2080
        %v2105 = vpack.c.bf16 %v2083, %v2081
        %v2106 = vpack.c.bf16 %v2086, %v2084
        %v2107 = vpack.c.bf16 %v2087, %v2085
        %v2108 = vpack.c.bf16 %v2090, %v2088
        %v2109 = vpack.c.bf16 %v2091, %v2089
        %v2110 = vpack.c.bf16 %v2094, %v2092
        %v2111 = vpack.c.bf16 %v2095, %v2093
        %2112 = vst [vmem:[#allocation2 + $0x280] sm:$0xff] %v2096
        %2113 = vst [vmem:[#allocation2 + $0x288] sm:$0xff] %v2097
        %2114 = vst [vmem:[#allocation2 + $0x290] sm:$0xff] %v2098
        %2115 = vst [vmem:[#allocation2 + $0x298] sm:$0xff] %v2099
        %2116 = vst [vmem:[#allocation2 + $0x2a0] sm:$0xff] %v2100
        %2117 = vst [vmem:[#allocation2 + $0x2a8] sm:$0xff] %v2101
        %2118 = vst [vmem:[#allocation2 + $0x2b0] sm:$0xff] %v2102
        %2119 = vst [vmem:[#allocation2 + $0x2b8] sm:$0xff] %v2103
        %2120 = vst [vmem:[#allocation2 + $0x2c0] sm:$0xff] %v2104
        %2121 = vst [vmem:[#allocation2 + $0x2c8] sm:$0xff] %v2105
        %2122 = vst [vmem:[#allocation2 + $0x2d0] sm:$0xff] %v2106
        %2123 = vst [vmem:[#allocation2 + $0x2d8] sm:$0xff] %v2107
        %2124 = vst [vmem:[#allocation2 + $0x2e0] sm:$0xff] %v2108
        %2125 = vst [vmem:[#allocation2 + $0x2e8] sm:$0xff] %v2109
        %2126 = vst [vmem:[#allocation2 + $0x2f0] sm:$0xff] %v2110
        %2127 = vst [vmem:[#allocation2 + $0x2f8] sm:$0xff] %v2111
        %2128 = vrot.lane.b32.xlu0 %v1217, 113
        %v2129 = vpop.permute.xlu0 %2128
        %2130 = vrot.lane.b32.xlu0 %v1219, 113
        %v2131 = vpop.permute.xlu0 %2130
        %2132 = vrot.lane.b32.xlu0 %v1221, 113
        %v2133 = vpop.permute.xlu0 %2132
        %2134 = vrot.lane.b32.xlu0 %v1223, 113
        %v2135 = vpop.permute.xlu0 %2134
        %2136 = vrot.lane.b32.xlu0 %v1225, 113
        %v2137 = vpop.permute.xlu0 %2136
        %2138 = vrot.lane.b32.xlu0 %v1227, 113
        %v2139 = vpop.permute.xlu0 %2138
        %2140 = vrot.lane.b32.xlu0 %v1229, 113
        %v2141 = vpop.permute.xlu0 %2140
        %2142 = vrot.lane.b32.xlu0 %v1231, 113
        %v2143 = vpop.permute.xlu0 %2142
        %2144 = vrot.lane.b32.xlu0 %v1233, 113
        %v2145 = vpop.permute.xlu0 %2144
        %2146 = vrot.lane.b32.xlu0 %v1235, 113
        %v2147 = vpop.permute.xlu0 %2146
        %2148 = vrot.lane.b32.xlu0 %v1237, 113
        %v2149 = vpop.permute.xlu0 %2148
        %2150 = vrot.lane.b32.xlu0 %v1239, 113
        %v2151 = vpop.permute.xlu0 %2150
        %2152 = vrot.lane.b32.xlu0 %v1241, 113
        %v2153 = vpop.permute.xlu0 %2152
        %2154 = vrot.lane.b32.xlu0 %v1243, 113
        %v2155 = vpop.permute.xlu0 %2154
        %2156 = vrot.lane.b32.xlu0 %v1245, 113
        %v2157 = vpop.permute.xlu0 %2156
        %2158 = vrot.lane.b32.xlu0 %v1247, 113
        %v2159 = vpop.permute.xlu0 %2158
        %2160 = vrot.lane.b32.xlu0 %v1218, 113
        %v2161 = vpop.permute.xlu0 %2160
        %2162 = vrot.lane.b32.xlu0 %v1220, 113
        %v2163 = vpop.permute.xlu0 %2162
        %2164 = vrot.lane.b32.xlu0 %v1222, 113
        %v2165 = vpop.permute.xlu0 %2164
        %2166 = vrot.lane.b32.xlu0 %v1224, 113
        %v2167 = vpop.permute.xlu0 %2166
        %2168 = vrot.lane.b32.xlu0 %v1226, 113
        %v2169 = vpop.permute.xlu0 %2168
        %2170 = vrot.lane.b32.xlu0 %v1228, 113
        %v2171 = vpop.permute.xlu0 %2170
        %2172 = vrot.lane.b32.xlu0 %v1230, 113
        %v2173 = vpop.permute.xlu0 %2172
        %2174 = vrot.lane.b32.xlu0 %v1232, 113
        %v2175 = vpop.permute.xlu0 %2174
        %2176 = vrot.lane.b32.xlu0 %v1234, 113
        %v2177 = vpop.permute.xlu0 %2176
        %2178 = vrot.lane.b32.xlu0 %v1236, 113
        %v2179 = vpop.permute.xlu0 %2178
        %2180 = vrot.lane.b32.xlu0 %v1238, 113
        %v2181 = vpop.permute.xlu0 %2180
        %2182 = vrot.lane.b32.xlu0 %v1240, 113
        %v2183 = vpop.permute.xlu0 %2182
        %2184 = vrot.lane.b32.xlu0 %v1242, 113
        %v2185 = vpop.permute.xlu0 %2184
        %2186 = vrot.lane.b32.xlu0 %v1244, 113
        %v2187 = vpop.permute.xlu0 %2186
        %2188 = vrot.lane.b32.xlu0 %v1246, 113
        %v2189 = vpop.permute.xlu0 %2188
        %2190 = vrot.lane.b32.xlu0 %v1248, 113
        %v2191 = vpop.permute.xlu0 %2190
        %vm2192 = vcmp.lt.s32.totalorder %v1314, 113
        %v2193 = vsel %vm2192, %v2129, %v2161
        %v2194 = vsel %vm2192, %v2131, %v2163
        %v2195 = vsel %vm2192, %v2133, %v2165
        %v2196 = vsel %vm2192, %v2135, %v2167
        %v2197 = vsel %vm2192, %v2137, %v2169
        %v2198 = vsel %vm2192, %v2139, %v2171
        %v2199 = vsel %vm2192, %v2141, %v2173
        %v2200 = vsel %vm2192, %v2143, %v2175
        %v2201 = vsel %vm2192, %v2145, %v2177
        %v2202 = vsel %vm2192, %v2147, %v2179
        %v2203 = vsel %vm2192, %v2149, %v2181
        %v2204 = vsel %vm2192, %v2151, %v2183
        %v2205 = vsel %vm2192, %v2153, %v2185
        %v2206 = vsel %vm2192, %v2155, %v2187
        %v2207 = vsel %vm2192, %v2157, %v2189
        %v2208 = vsel %vm2192, %v2159, %v2191
        %v2209 = vsel %vm2192, %v2161, %v2129
        %v2210 = vsel %vm2192, %v2163, %v2131
        %v2211 = vsel %vm2192, %v2165, %v2133
        %v2212 = vsel %vm2192, %v2167, %v2135
        %v2213 = vsel %vm2192, %v2169, %v2137
        %v2214 = vsel %vm2192, %v2171, %v2139
        %v2215 = vsel %vm2192, %v2173, %v2141
        %v2216 = vsel %vm2192, %v2175, %v2143
        %v2217 = vsel %vm2192, %v2177, %v2145
        %v2218 = vsel %vm2192, %v2179, %v2147
        %v2219 = vsel %vm2192, %v2181, %v2149
        %v2220 = vsel %vm2192, %v2183, %v2151
        %v2221 = vsel %vm2192, %v2185, %v2153
        %v2222 = vsel %vm2192, %v2187, %v2155
        %v2223 = vsel %vm2192, %v2189, %v2157
        %v2224 = vsel %vm2192, %v2191, %v2159
        %v2225 = vlaneseq
        %v2226 = vshrl.u32 %v2225, 7
        %v2227 = vsub.s32 6, %v2226
        %v2228 = vrot.slane %v588, %v2227
        %v2229 = vlaneseq
        %v2230 = vshrl.u32 %v2229, 7
        %v2231 = vsub.s32 6, %v2230
        %v2232 = vrot.slane %v589, %v2231
        %v2233 = vmul.f32 %v2193, %v2228
        %v2234 = vmul.f32 %v2209, %v2232
        %v2235 = vmul.f32 %v2194, %v2228
        %v2236 = vmul.f32 %v2210, %v2232
        %v2237 = vmul.f32 %v2195, %v2228
        %v2238 = vmul.f32 %v2211, %v2232
        %v2239 = vmul.f32 %v2196, %v2228
        %v2240 = vmul.f32 %v2212, %v2232
        %v2241 = vmul.f32 %v2197, %v2228
        %v2242 = vmul.f32 %v2213, %v2232
        %v2243 = vmul.f32 %v2198, %v2228
        %v2244 = vmul.f32 %v2214, %v2232
        %v2245 = vmul.f32 %v2199, %v2228
        %v2246 = vmul.f32 %v2215, %v2232
        %v2247 = vmul.f32 %v2200, %v2228
        %v2248 = vmul.f32 %v2216, %v2232
        %v2249 = vmul.f32 %v2201, %v2228
        %v2250 = vmul.f32 %v2217, %v2232
        %v2251 = vmul.f32 %v2202, %v2228
        %v2252 = vmul.f32 %v2218, %v2232
        %v2253 = vmul.f32 %v2203, %v2228
        %v2254 = vmul.f32 %v2219, %v2232
        %v2255 = vmul.f32 %v2204, %v2228
        %v2256 = vmul.f32 %v2220, %v2232
        %v2257 = vmul.f32 %v2205, %v2228
        %v2258 = vmul.f32 %v2221, %v2232
        %v2259 = vmul.f32 %v2206, %v2228
        %v2260 = vmul.f32 %v2222, %v2232
        %v2261 = vmul.f32 %v2207, %v2228
        %v2262 = vmul.f32 %v2223, %v2232
        %v2263 = vmul.f32 %v2208, %v2228
        %v2264 = vmul.f32 %v2224, %v2232
        %v2265 = vpack.c.bf16 %v2235, %v2233
        %v2266 = vpack.c.bf16 %v2236, %v2234
        %v2267 = vpack.c.bf16 %v2239, %v2237
        %v2268 = vpack.c.bf16 %v2240, %v2238
        %v2269 = vpack.c.bf16 %v2243, %v2241
        %v2270 = vpack.c.bf16 %v2244, %v2242
        %v2271 = vpack.c.bf16 %v2247, %v2245
        %v2272 = vpack.c.bf16 %v2248, %v2246
        %v2273 = vpack.c.bf16 %v2251, %v2249
        %v2274 = vpack.c.bf16 %v2252, %v2250
        %v2275 = vpack.c.bf16 %v2255, %v2253
        %v2276 = vpack.c.bf16 %v2256, %v2254
        %v2277 = vpack.c.bf16 %v2259, %v2257
        %v2278 = vpack.c.bf16 %v2260, %v2258
        %v2279 = vpack.c.bf16 %v2263, %v2261
        %v2280 = vpack.c.bf16 %v2264, %v2262
        %2281 = vst [vmem:[#allocation2 + $0x300] sm:$0xff] %v2265
        %2282 = vst [vmem:[#allocation2 + $0x308] sm:$0xff] %v2266
        %2283 = vst [vmem:[#allocation2 + $0x310] sm:$0xff] %v2267
        %2284 = vst [vmem:[#allocation2 + $0x318] sm:$0xff] %v2268
        %2285 = vst [vmem:[#allocation2 + $0x320] sm:$0xff] %v2269
        %2286 = vst [vmem:[#allocation2 + $0x328] sm:$0xff] %v2270
        %2287 = vst [vmem:[#allocation2 + $0x330] sm:$0xff] %v2271
        %2288 = vst [vmem:[#allocation2 + $0x338] sm:$0xff] %v2272
        %2289 = vst [vmem:[#allocation2 + $0x340] sm:$0xff] %v2273
        %2290 = vst [vmem:[#allocation2 + $0x348] sm:$0xff] %v2274
        %2291 = vst [vmem:[#allocation2 + $0x350] sm:$0xff] %v2275
        %2292 = vst [vmem:[#allocation2 + $0x358] sm:$0xff] %v2276
        %2293 = vst [vmem:[#allocation2 + $0x360] sm:$0xff] %v2277
        %2294 = vst [vmem:[#allocation2 + $0x368] sm:$0xff] %v2278
        %2295 = vst [vmem:[#allocation2 + $0x370] sm:$0xff] %v2279
        %2296 = vst [vmem:[#allocation2 + $0x378] sm:$0xff] %v2280
        %2297 = vrot.lane.b32.xlu0 %v1217, 112
        %v2298 = vpop.permute.xlu0 %2297
        %2299 = vrot.lane.b32.xlu0 %v1219, 112
        %v2300 = vpop.permute.xlu0 %2299
        %2301 = vrot.lane.b32.xlu0 %v1221, 112
        %v2302 = vpop.permute.xlu0 %2301
        %2303 = vrot.lane.b32.xlu0 %v1223, 112
        %v2304 = vpop.permute.xlu0 %2303
        %2305 = vrot.lane.b32.xlu0 %v1225, 112
        %v2306 = vpop.permute.xlu0 %2305
        %2307 = vrot.lane.b32.xlu0 %v1227, 112
        %v2308 = vpop.permute.xlu0 %2307
        %2309 = vrot.lane.b32.xlu0 %v1229, 112
        %v2310 = vpop.permute.xlu0 %2309
        %2311 = vrot.lane.b32.xlu0 %v1231, 112
        %v2312 = vpop.permute.xlu0 %2311
        %2313 = vrot.lane.b32.xlu0 %v1233, 112
        %v2314 = vpop.permute.xlu0 %2313
        %2315 = vrot.lane.b32.xlu0 %v1235, 112
        %v2316 = vpop.permute.xlu0 %2315
        %2317 = vrot.lane.b32.xlu0 %v1237, 112
        %v2318 = vpop.permute.xlu0 %2317
        %2319 = vrot.lane.b32.xlu0 %v1239, 112
        %v2320 = vpop.permute.xlu0 %2319
        %2321 = vrot.lane.b32.xlu0 %v1241, 112
        %v2322 = vpop.permute.xlu0 %2321
        %2323 = vrot.lane.b32.xlu0 %v1243, 112
        %v2324 = vpop.permute.xlu0 %2323
        %2325 = vrot.lane.b32.xlu0 %v1245, 112
        %v2326 = vpop.permute.xlu0 %2325
        %2327 = vrot.lane.b32.xlu0 %v1247, 112
        %v2328 = vpop.permute.xlu0 %2327
        %2329 = vrot.lane.b32.xlu0 %v1218, 112
        %v2330 = vpop.permute.xlu0 %2329
        %2331 = vrot.lane.b32.xlu0 %v1220, 112
        %v2332 = vpop.permute.xlu0 %2331
        %2333 = vrot.lane.b32.xlu0 %v1222, 112
        %v2334 = vpop.permute.xlu0 %2333
        %2335 = vrot.lane.b32.xlu0 %v1224, 112
        %v2336 = vpop.permute.xlu0 %2335
        %2337 = vrot.lane.b32.xlu0 %v1226, 112
        %v2338 = vpop.permute.xlu0 %2337
        %2339 = vrot.lane.b32.xlu0 %v1228, 112
        %v2340 = vpop.permute.xlu0 %2339
        %2341 = vrot.lane.b32.xlu0 %v1230, 112
        %v2342 = vpop.permute.xlu0 %2341
        %2343 = vrot.lane.b32.xlu0 %v1232, 112
        %v2344 = vpop.permute.xlu0 %2343
        %2345 = vrot.lane.b32.xlu0 %v1234, 112
        %v2346 = vpop.permute.xlu0 %2345
        %2347 = vrot.lane.b32.xlu0 %v1236, 112
        %v2348 = vpop.permute.xlu0 %2347
        %2349 = vrot.lane.b32.xlu0 %v1238, 112
        %v2350 = vpop.permute.xlu0 %2349
        %2351 = vrot.lane.b32.xlu0 %v1240, 112
        %v2352 = vpop.permute.xlu0 %2351
        %2353 = vrot.lane.b32.xlu0 %v1242, 112
        %v2354 = vpop.permute.xlu0 %2353
        %2355 = vrot.lane.b32.xlu0 %v1244, 112
        %v2356 = vpop.permute.xlu0 %2355
        %2357 = vrot.lane.b32.xlu0 %v1246, 112
        %v2358 = vpop.permute.xlu0 %2357
        %2359 = vrot.lane.b32.xlu0 %v1248, 112
        %v2360 = vpop.permute.xlu0 %2359
        %vm2361 = vcmp.lt.s32.totalorder %v1314, 112
        %v2362 = vsel %vm2361, %v2298, %v2330
        %v2363 = vsel %vm2361, %v2300, %v2332
        %v2364 = vsel %vm2361, %v2302, %v2334
        %v2365 = vsel %vm2361, %v2304, %v2336
        %v2366 = vsel %vm2361, %v2306, %v2338
        %v2367 = vsel %vm2361, %v2308, %v2340
        %v2368 = vsel %vm2361, %v2310, %v2342
        %v2369 = vsel %vm2361, %v2312, %v2344
        %v2370 = vsel %vm2361, %v2314, %v2346
        %v2371 = vsel %vm2361, %v2316, %v2348
        %v2372 = vsel %vm2361, %v2318, %v2350
        %v2373 = vsel %vm2361, %v2320, %v2352
        %v2374 = vsel %vm2361, %v2322, %v2354
        %v2375 = vsel %vm2361, %v2324, %v2356
        %v2376 = vsel %vm2361, %v2326, %v2358
        %v2377 = vsel %vm2361, %v2328, %v2360
        %v2378 = vsel %vm2361, %v2330, %v2298
        %v2379 = vsel %vm2361, %v2332, %v2300
        %v2380 = vsel %vm2361, %v2334, %v2302
        %v2381 = vsel %vm2361, %v2336, %v2304
        %v2382 = vsel %vm2361, %v2338, %v2306
        %v2383 = vsel %vm2361, %v2340, %v2308
        %v2384 = vsel %vm2361, %v2342, %v2310
        %v2385 = vsel %vm2361, %v2344, %v2312
        %v2386 = vsel %vm2361, %v2346, %v2314
        %v2387 = vsel %vm2361, %v2348, %v2316
        %v2388 = vsel %vm2361, %v2350, %v2318
        %v2389 = vsel %vm2361, %v2352, %v2320
        %v2390 = vsel %vm2361, %v2354, %v2322
        %v2391 = vsel %vm2361, %v2356, %v2324
        %v2392 = vsel %vm2361, %v2358, %v2326
        %v2393 = vsel %vm2361, %v2360, %v2328
        %v2394 = vlaneseq
        %v2395 = vshrl.u32 %v2394, 7
        %v2396 = vsub.s32 7, %v2395
        %v2397 = vrot.slane %v588, %v2396
        %v2398 = vlaneseq
        %v2399 = vshrl.u32 %v2398, 7
        %v2400 = vsub.s32 7, %v2399
        %v2401 = vrot.slane %v589, %v2400
        %v2402 = vmul.f32 %v2362, %v2397
        %v2403 = vmul.f32 %v2378, %v2401
        %v2404 = vmul.f32 %v2363, %v2397
        %v2405 = vmul.f32 %v2379, %v2401
        %v2406 = vmul.f32 %v2364, %v2397
        %v2407 = vmul.f32 %v2380, %v2401
        %v2408 = vmul.f32 %v2365, %v2397
        %v2409 = vmul.f32 %v2381, %v2401
        %v2410 = vmul.f32 %v2366, %v2397
        %v2411 = vmul.f32 %v2382, %v2401
        %v2412 = vmul.f32 %v2367, %v2397
        %v2413 = vmul.f32 %v2383, %v2401
        %v2414 = vmul.f32 %v2368, %v2397
        %v2415 = vmul.f32 %v2384, %v2401
        %v2416 = vmul.f32 %v2369, %v2397
        %v2417 = vmul.f32 %v2385, %v2401
        %v2418 = vmul.f32 %v2370, %v2397
        %v2419 = vmul.f32 %v2386, %v2401
        %v2420 = vmul.f32 %v2371, %v2397
        %v2421 = vmul.f32 %v2387, %v2401
        %v2422 = vmul.f32 %v2372, %v2397
        %v2423 = vmul.f32 %v2388, %v2401
        %v2424 = vmul.f32 %v2373, %v2397
        %v2425 = vmul.f32 %v2389, %v2401
        %v2426 = vmul.f32 %v2374, %v2397
        %v2427 = vmul.f32 %v2390, %v2401
        %v2428 = vmul.f32 %v2375, %v2397
        %v2429 = vmul.f32 %v2391, %v2401
        %v2430 = vmul.f32 %v2376, %v2397
        %v2431 = vmul.f32 %v2392, %v2401
        %v2432 = vmul.f32 %v2377, %v2397
        %v2433 = vmul.f32 %v2393, %v2401
        %v2434 = vpack.c.bf16 %v2404, %v2402
        %v2435 = vpack.c.bf16 %v2405, %v2403
        %v2436 = vpack.c.bf16 %v2408, %v2406
        %v2437 = vpack.c.bf16 %v2409, %v2407
        %v2438 = vpack.c.bf16 %v2412, %v2410
        %v2439 = vpack.c.bf16 %v2413, %v2411
        %v2440 = vpack.c.bf16 %v2416, %v2414
        %v2441 = vpack.c.bf16 %v2417, %v2415
        %v2442 = vpack.c.bf16 %v2420, %v2418
        %v2443 = vpack.c.bf16 %v2421, %v2419
        %v2444 = vpack.c.bf16 %v2424, %v2422
        %v2445 = vpack.c.bf16 %v2425, %v2423
        %v2446 = vpack.c.bf16 %v2428, %v2426
        %v2447 = vpack.c.bf16 %v2429, %v2427
        %v2448 = vpack.c.bf16 %v2432, %v2430
        %v2449 = vpack.c.bf16 %v2433, %v2431
        %2450 = vst [vmem:[#allocation2 + $0x380] sm:$0xff] %v2434
        %2451 = vst [vmem:[#allocation2 + $0x388] sm:$0xff] %v2435
        %2452 = vst [vmem:[#allocation2 + $0x390] sm:$0xff] %v2436
        %2453 = vst [vmem:[#allocation2 + $0x398] sm:$0xff] %v2437
        %2454 = vst [vmem:[#allocation2 + $0x3a0] sm:$0xff] %v2438
        %2455 = vst [vmem:[#allocation2 + $0x3a8] sm:$0xff] %v2439
        %2456 = vst [vmem:[#allocation2 + $0x3b0] sm:$0xff] %v2440
        %2457 = vst [vmem:[#allocation2 + $0x3b8] sm:$0xff] %v2441
        %2458 = vst [vmem:[#allocation2 + $0x3c0] sm:$0xff] %v2442
        %2459 = vst [vmem:[#allocation2 + $0x3c8] sm:$0xff] %v2443
        %2460 = vst [vmem:[#allocation2 + $0x3d0] sm:$0xff] %v2444
        %2461 = vst [vmem:[#allocation2 + $0x3d8] sm:$0xff] %v2445
        %2462 = vst [vmem:[#allocation2 + $0x3e0] sm:$0xff] %v2446
        %2463 = vst [vmem:[#allocation2 + $0x3e8] sm:$0xff] %v2447
        %2464 = vst [vmem:[#allocation2 + $0x3f0] sm:$0xff] %v2448
        %2465 = vst [vmem:[#allocation2 + $0x3f8] sm:$0xff] %v2449
        %2466 = vrot.lane.b32.xlu0 %v1217, 111
        %v2467 = vpop.permute.xlu0 %2466
        %2468 = vrot.lane.b32.xlu0 %v1219, 111
        %v2469 = vpop.permute.xlu0 %2468
        %2470 = vrot.lane.b32.xlu0 %v1221, 111
        %v2471 = vpop.permute.xlu0 %2470
        %2472 = vrot.lane.b32.xlu0 %v1223, 111
        %v2473 = vpop.permute.xlu0 %2472
        %2474 = vrot.lane.b32.xlu0 %v1225, 111
        %v2475 = vpop.permute.xlu0 %2474
        %2476 = vrot.lane.b32.xlu0 %v1227, 111
        %v2477 = vpop.permute.xlu0 %2476
        %2478 = vrot.lane.b32.xlu0 %v1229, 111
        %v2479 = vpop.permute.xlu0 %2478
        %2480 = vrot.lane.b32.xlu0 %v1231, 111
        %v2481 = vpop.permute.xlu0 %2480
        %2482 = vrot.lane.b32.xlu0 %v1233, 111
        %v2483 = vpop.permute.xlu0 %2482
        %2484 = vrot.lane.b32.xlu0 %v1235, 111
        %v2485 = vpop.permute.xlu0 %2484
        %2486 = vrot.lane.b32.xlu0 %v1237, 111
        %v2487 = vpop.permute.xlu0 %2486
        %2488 = vrot.lane.b32.xlu0 %v1239, 111
        %v2489 = vpop.permute.xlu0 %2488
        %2490 = vrot.lane.b32.xlu0 %v1241, 111
        %v2491 = vpop.permute.xlu0 %2490
        %2492 = vrot.lane.b32.xlu0 %v1243, 111
        %v2493 = vpop.permute.xlu0 %2492
        %2494 = vrot.lane.b32.xlu0 %v1245, 111
        %v2495 = vpop.permute.xlu0 %2494
        %2496 = vrot.lane.b32.xlu0 %v1247, 111
        %v2497 = vpop.permute.xlu0 %2496
        %2498 = vrot.lane.b32.xlu0 %v1218, 111
        %v2499 = vpop.permute.xlu0 %2498
        %2500 = vrot.lane.b32.xlu0 %v1220, 111
        %v2501 = vpop.permute.xlu0 %2500
        %2502 = vrot.lane.b32.xlu0 %v1222, 111
        %v2503 = vpop.permute.xlu0 %2502
        %2504 = vrot.lane.b32.xlu0 %v1224, 111
        %v2505 = vpop.permute.xlu0 %2504
        %2506 = vrot.lane.b32.xlu0 %v1226, 111
        %v2507 = vpop.permute.xlu0 %2506
        %2508 = vrot.lane.b32.xlu0 %v1228, 111
        %v2509 = vpop.permute.xlu0 %2508
        %2510 = vrot.lane.b32.xlu0 %v1230, 111
        %v2511 = vpop.permute.xlu0 %2510
        %2512 = vrot.lane.b32.xlu0 %v1232, 111
        %v2513 = vpop.permute.xlu0 %2512
        %2514 = vrot.lane.b32.xlu0 %v1234, 111
        %v2515 = vpop.permute.xlu0 %2514
        %2516 = vrot.lane.b32.xlu0 %v1236, 111
        %v2517 = vpop.permute.xlu0 %2516
        %2518 = vrot.lane.b32.xlu0 %v1238, 111
        %v2519 = vpop.permute.xlu0 %2518
        %2520 = vrot.lane.b32.xlu0 %v1240, 111
        %v2521 = vpop.permute.xlu0 %2520
        %2522 = vrot.lane.b32.xlu0 %v1242, 111
        %v2523 = vpop.permute.xlu0 %2522
        %2524 = vrot.lane.b32.xlu0 %v1244, 111
        %v2525 = vpop.permute.xlu0 %2524
        %2526 = vrot.lane.b32.xlu0 %v1246, 111
        %v2527 = vpop.permute.xlu0 %2526
        %2528 = vrot.lane.b32.xlu0 %v1248, 111
        %v2529 = vpop.permute.xlu0 %2528
        %vm2530 = vcmp.lt.s32.totalorder %v1314, 111
        %v2531 = vsel %vm2530, %v2467, %v2499
        %v2532 = vsel %vm2530, %v2469, %v2501
        %v2533 = vsel %vm2530, %v2471, %v2503
        %v2534 = vsel %vm2530, %v2473, %v2505
        %v2535 = vsel %vm2530, %v2475, %v2507
        %v2536 = vsel %vm2530, %v2477, %v2509
        %v2537 = vsel %vm2530, %v2479, %v2511
        %v2538 = vsel %vm2530, %v2481, %v2513
        %v2539 = vsel %vm2530, %v2483, %v2515
        %v2540 = vsel %vm2530, %v2485, %v2517
        %v2541 = vsel %vm2530, %v2487, %v2519
        %v2542 = vsel %vm2530, %v2489, %v2521
        %v2543 = vsel %vm2530, %v2491, %v2523
        %v2544 = vsel %vm2530, %v2493, %v2525
        %v2545 = vsel %vm2530, %v2495, %v2527
        %v2546 = vsel %vm2530, %v2497, %v2529
        %v2547 = vsel %vm2530, %v2499, %v2467
        %v2548 = vsel %vm2530, %v2501, %v2469
        %v2549 = vsel %vm2530, %v2503, %v2471
        %v2550 = vsel %vm2530, %v2505, %v2473
        %v2551 = vsel %vm2530, %v2507, %v2475
        %v2552 = vsel %vm2530, %v2509, %v2477
        %v2553 = vsel %vm2530, %v2511, %v2479
        %v2554 = vsel %vm2530, %v2513, %v2481
        %v2555 = vsel %vm2530, %v2515, %v2483
        %v2556 = vsel %vm2530, %v2517, %v2485
        %v2557 = vsel %vm2530, %v2519, %v2487
        %v2558 = vsel %vm2530, %v2521, %v2489
        %v2559 = vsel %vm2530, %v2523, %v2491
        %v2560 = vsel %vm2530, %v2525, %v2493
        %v2561 = vsel %vm2530, %v2527, %v2495
        %v2562 = vsel %vm2530, %v2529, %v2497
        %v2563 = vlaneseq
        %v2564 = vshrl.u32 %v2563, 7
        %v2565 = vsub.s32 0, %v2564
        %v2566 = vrot.slane %v590, %v2565
        %v2567 = vlaneseq
        %v2568 = vshrl.u32 %v2567, 7
        %v2569 = vsub.s32 0, %v2568
        %v2570 = vrot.slane %v591, %v2569
        %v2571 = vmul.f32 %v2531, %v2566
        %v2572 = vmul.f32 %v2547, %v2570
        %v2573 = vmul.f32 %v2532, %v2566
        %v2574 = vmul.f32 %v2548, %v2570
        %v2575 = vmul.f32 %v2533, %v2566
        %v2576 = vmul.f32 %v2549, %v2570
        %v2577 = vmul.f32 %v2534, %v2566
        %v2578 = vmul.f32 %v2550, %v2570
        %v2579 = vmul.f32 %v2535, %v2566
        %v2580 = vmul.f32 %v2551, %v2570
        %v2581 = vmul.f32 %v2536, %v2566
        %v2582 = vmul.f32 %v2552, %v2570
        %v2583 = vmul.f32 %v2537, %v2566
        %v2584 = vmul.f32 %v2553, %v2570
        %v2585 = vmul.f32 %v2538, %v2566
        %v2586 = vmul.f32 %v2554, %v2570
        %v2587 = vmul.f32 %v2539, %v2566
        %v2588 = vmul.f32 %v2555, %v2570
        %v2589 = vmul.f32 %v2540, %v2566
        %v2590 = vmul.f32 %v2556, %v2570
        %v2591 = vmul.f32 %v2541, %v2566
        %v2592 = vmul.f32 %v2557, %v2570
        %v2593 = vmul.f32 %v2542, %v2566
        %v2594 = vmul.f32 %v2558, %v2570
        %v2595 = vmul.f32 %v2543, %v2566
        %v2596 = vmul.f32 %v2559, %v2570
        %v2597 = vmul.f32 %v2544, %v2566
        %v2598 = vmul.f32 %v2560, %v2570
        %v2599 = vmul.f32 %v2545, %v2566
        %v2600 = vmul.f32 %v2561, %v2570
        %v2601 = vmul.f32 %v2546, %v2566
        %v2602 = vmul.f32 %v2562, %v2570
        %v2603 = vpack.c.bf16 %v2573, %v2571
        %v2604 = vpack.c.bf16 %v2574, %v2572
        %v2605 = vpack.c.bf16 %v2577, %v2575
        %v2606 = vpack.c.bf16 %v2578, %v2576
        %v2607 = vpack.c.bf16 %v2581, %v2579
        %v2608 = vpack.c.bf16 %v2582, %v2580
        %v2609 = vpack.c.bf16 %v2585, %v2583
        %v2610 = vpack.c.bf16 %v2586, %v2584
        %v2611 = vpack.c.bf16 %v2589, %v2587
        %v2612 = vpack.c.bf16 %v2590, %v2588
        %v2613 = vpack.c.bf16 %v2593, %v2591
        %v2614 = vpack.c.bf16 %v2594, %v2592
        %v2615 = vpack.c.bf16 %v2597, %v2595
        %v2616 = vpack.c.bf16 %v2598, %v2596
        %v2617 = vpack.c.bf16 %v2601, %v2599
        %v2618 = vpack.c.bf16 %v2602, %v2600
        %2619 = vst [vmem:[#allocation2 + $0x400] sm:$0xff] %v2603
        %2620 = vst [vmem:[#allocation2 + $0x408] sm:$0xff] %v2604
        %2621 = vst [vmem:[#allocation2 + $0x410] sm:$0xff] %v2605
        %2622 = vst [vmem:[#allocation2 + $0x418] sm:$0xff] %v2606
        %2623 = vst [vmem:[#allocation2 + $0x420] sm:$0xff] %v2607
        %2624 = vst [vmem:[#allocation2 + $0x428] sm:$0xff] %v2608
        %2625 = vst [vmem:[#allocation2 + $0x430] sm:$0xff] %v2609
        %2626 = vst [vmem:[#allocation2 + $0x438] sm:$0xff] %v2610
        %2627 = vst [vmem:[#allocation2 + $0x440] sm:$0xff] %v2611
        %2628 = vst [vmem:[#allocation2 + $0x448] sm:$0xff] %v2612
        %2629 = vst [vmem:[#allocation2 + $0x450] sm:$0xff] %v2613
        %2630 = vst [vmem:[#allocation2 + $0x458] sm:$0xff] %v2614
        %2631 = vst [vmem:[#allocation2 + $0x460] sm:$0xff] %v2615
        %2632 = vst [vmem:[#allocation2 + $0x468] sm:$0xff] %v2616
        %2633 = vst [vmem:[#allocation2 + $0x470] sm:$0xff] %v2617
        %2634 = vst [vmem:[#allocation2 + $0x478] sm:$0xff] %v2618
        %v2635 = vld [vmem:[%s4] sm:$0xff]
        %v2636 = vld [vmem:[%s4 + $0x8] sm:$0xff]
        %v2637 = vld [vmem:[%s4 + $0x10] sm:$0xff]
        %v2638 = vld [vmem:[%s4 + $0x18] sm:$0xff]
        %v2639 = vld [vmem:[%s4 + $0x20] sm:$0xf]
        %v2640 = vld [vmem:[%s4 + $0x24] sm:$0xff]
        %v2641 = vld [vmem:[%s4 + $0x2c] sm:$0xff]
        %v2642 = vld [vmem:[%s4 + $0x34] sm:$0xff]
        %v2643 = vld [vmem:[%s4 + $0x3c] sm:$0xff]
        %v2644 = vld [vmem:[%s4 + $0x44] sm:$0xf]
        %v2645 = vld [vmem:[%s4 + $0x48] sm:$0xff]
        %v2646 = vld [vmem:[%s4 + $0x50] sm:$0xff]
        %v2647 = vld [vmem:[%s4 + $0x58] sm:$0xff]
        %v2648 = vld [vmem:[%s4 + $0x60] sm:$0xff]
        %v2649 = vld [vmem:[%s4 + $0x68] sm:$0xf]
        %v2650 = vld [vmem:[%s4 + $0x6c] sm:$0xff]
        %v2651 = vld [vmem:[%s4 + $0x74] sm:$0xff]
        %v2652 = vld [vmem:[%s4 + $0x7c] sm:$0xff]
        %v2653 = vld [vmem:[%s4 + $0x84] sm:$0xff]
        %v2654 = vld [vmem:[%s4 + $0x8c] sm:$0xf]
        %v2655 = vld [vmem:[%s4 + $0x90] sm:$0xff]
        %v2656 = vld [vmem:[%s4 + $0x98] sm:$0xff]
        %v2657 = vld [vmem:[%s4 + $0xa0] sm:$0xff]
        %v2658 = vld [vmem:[%s4 + $0xa8] sm:$0xff]
        %v2659 = vld [vmem:[%s4 + $0xb0] sm:$0xf]
        %v2660 = vld [vmem:[%s4 + $0xb4] sm:$0xff]
        %v2661 = vld [vmem:[%s4 + $0xbc] sm:$0xff]
        %v2662 = vld [vmem:[%s4 + $0xc4] sm:$0xff]
        %v2663 = vld [vmem:[%s4 + $0xcc] sm:$0xff]
        %v2664 = vld [vmem:[%s4 + $0xd4] sm:$0xf]
        %v2665 = vld [vmem:[%s4 + $0xd8] sm:$0xff]
        %v2666 = vld [vmem:[%s4 + $0xe0] sm:$0xff]
        %v2667 = vld [vmem:[%s4 + $0xe8] sm:$0xff]
        %v2668 = vld [vmem:[%s4 + $0xf0] sm:$0xff]
        %v2669 = vld [vmem:[%s4 + $0xf8] sm:$0xf]
        %v2670 = vld [vmem:[%s4 + $0xfc] sm:$0xff]
        %v2671 = vld [vmem:[%s4 + $0x104] sm:$0xff]
        %v2672 = vld [vmem:[%s4 + $0x10c] sm:$0xff]
        %v2673 = vld [vmem:[%s4 + $0x114] sm:$0xff]
        %v2674 = vld [vmem:[%s4 + $0x11c] sm:$0xf]
        %v2675 = vld [vmem:[%s4 + $0x120] sm:$0xff]
        %v2676 = vld [vmem:[%s4 + $0x128] sm:$0xff]
        %v2677 = vld [vmem:[%s4 + $0x130] sm:$0xff]
        %v2678 = vld [vmem:[%s4 + $0x138] sm:$0xff]
        %v2679 = vld [vmem:[%s4 + $0x140] sm:$0xf]
        %v2680 = vld [vmem:[%s4 + $0x144] sm:$0xff]
        %v2681 = vld [vmem:[%s4 + $0x14c] sm:$0xff]
        %v2682 = vld [vmem:[%s4 + $0x154] sm:$0xff]
        %v2683 = vld [vmem:[%s4 + $0x15c] sm:$0xff]
        %v2684 = vld [vmem:[%s4 + $0x164] sm:$0xf]
        %v2685 = vld [vmem:[%s4 + $0x168] sm:$0xff]
        %v2686 = vld [vmem:[%s4 + $0x170] sm:$0xff]
        %v2687 = vld [vmem:[%s4 + $0x178] sm:$0xff]
        %v2688 = vld [vmem:[%s4 + $0x180] sm:$0xff]
        %v2689 = vld [vmem:[%s4 + $0x188] sm:$0xf]
        %v2690 = vld [vmem:[%s4 + $0x18c] sm:$0xff]
        %v2691 = vld [vmem:[%s4 + $0x194] sm:$0xff]
        %v2692 = vld [vmem:[%s4 + $0x19c] sm:$0xff]
        %v2693 = vld [vmem:[%s4 + $0x1a4] sm:$0xff]
        %v2694 = vld [vmem:[%s4 + $0x1ac] sm:$0xf]
        %v2695 = vld [vmem:[%s4 + $0x1b0] sm:$0xff]
        %v2696 = vld [vmem:[%s4 + $0x1b8] sm:$0xff]
        %v2697 = vld [vmem:[%s4 + $0x1c0] sm:$0xff]
        %v2698 = vld [vmem:[%s4 + $0x1c8] sm:$0xff]
        %v2699 = vld [vmem:[%s4 + $0x1d0] sm:$0xf]
        %v2700 = vld [vmem:[%s4 + $0x1d4] sm:$0xff]
        %v2701 = vld [vmem:[%s4 + $0x1dc] sm:$0xff]
        %v2702 = vld [vmem:[%s4 + $0x1e4] sm:$0xff]
        %v2703 = vld [vmem:[%s4 + $0x1ec] sm:$0xff]
        %v2704 = vld [vmem:[%s4 + $0x1f4] sm:$0xf]
        %v2705 = vld [vmem:[%s4 + $0x1f8] sm:$0xff]
        %v2706 = vld [vmem:[%s4 + $0x200] sm:$0xff]
        %v2707 = vld [vmem:[%s4 + $0x208] sm:$0xff]
        %v2708 = vld [vmem:[%s4 + $0x210] sm:$0xff]
        %v2709 = vld [vmem:[%s4 + $0x218] sm:$0xf]
        %v2710 = vld [vmem:[%s4 + $0x21c] sm:$0xff]
        %v2711 = vld [vmem:[%s4 + $0x224] sm:$0xff]
        %v2712 = vld [vmem:[%s4 + $0x22c] sm:$0xff]
        %v2713 = vld [vmem:[%s4 + $0x234] sm:$0xff]
        %v2714 = vld [vmem:[%s4 + $0x23c] sm:$0xf]
        %v2715 = vld [vmem:[#allocation2] sm:$0xff]
        %v2716 = vld [vmem:[#allocation2 + $0x8] sm:$0xff]
        %v2717 = vld [vmem:[#allocation2 + $0x10] sm:$0xff]
        %v2718 = vld [vmem:[#allocation2 + $0x18] sm:$0xff]
        %v2719 = vld [vmem:[#allocation2 + $0x20] sm:$0xff]
        %v2720 = vld [vmem:[#allocation2 + $0x28] sm:$0xff]
        %v2721 = vld [vmem:[#allocation2 + $0x30] sm:$0xff]
        %v2722 = vld [vmem:[#allocation2 + $0x38] sm:$0xff]
        %v2723 = vld [vmem:[#allocation2 + $0x40] sm:$0xff]
        %v2724 = vld [vmem:[#allocation2 + $0x48] sm:$0xff]
        %v2725 = vld [vmem:[#allocation2 + $0x50] sm:$0xff]
        %v2726 = vld [vmem:[#allocation2 + $0x58] sm:$0xff]
        %v2727 = vld [vmem:[#allocation2 + $0x60] sm:$0xff]
        %v2728 = vld [vmem:[#allocation2 + $0x68] sm:$0xff]
        %v2729 = vld [vmem:[#allocation2 + $0x70] sm:$0xff]
        %v2730 = vld [vmem:[#allocation2 + $0x78] sm:$0xff]
        %v2731 = vld [vmem:[#allocation2 + $0x80] sm:$0xff]
        %v2732 = vld [vmem:[#allocation2 + $0x88] sm:$0xff]
        %v2733 = vld [vmem:[#allocation2 + $0x90] sm:$0xff]
        %v2734 = vld [vmem:[#allocation2 + $0x98] sm:$0xff]
        %v2735 = vld [vmem:[#allocation2 + $0xa0] sm:$0xff]
        %v2736 = vld [vmem:[#allocation2 + $0xa8] sm:$0xff]
        %v2737 = vld [vmem:[#allocation2 + $0xb0] sm:$0xff]
        %v2738 = vld [vmem:[#allocation2 + $0xb8] sm:$0xff]
        %v2739 = vld [vmem:[#allocation2 + $0xc0] sm:$0xff]
        %v2740 = vld [vmem:[#allocation2 + $0xc8] sm:$0xff]
        %v2741 = vld [vmem:[#allocation2 + $0xd0] sm:$0xff]
        %v2742 = vld [vmem:[#allocation2 + $0xd8] sm:$0xff]
        %v2743 = vld [vmem:[#allocation2 + $0xe0] sm:$0xff]
        %v2744 = vld [vmem:[#allocation2 + $0xe8] sm:$0xff]
        %v2745 = vld [vmem:[#allocation2 + $0xf0] sm:$0xff]
        %v2746 = vld [vmem:[#allocation2 + $0xf8] sm:$0xff]
        %v2747 = vld [vmem:[#allocation2 + $0x100] sm:$0xff]
        %v2748 = vld [vmem:[#allocation2 + $0x108] sm:$0xff]
        %v2749 = vld [vmem:[#allocation2 + $0x110] sm:$0xff]
        %v2750 = vld [vmem:[#allocation2 + $0x118] sm:$0xff]
        %v2751 = vld [vmem:[#allocation2 + $0x120] sm:$0xff]
        %v2752 = vld [vmem:[#allocation2 + $0x128] sm:$0xff]
        %v2753 = vld [vmem:[#allocation2 + $0x130] sm:$0xff]
        %v2754 = vld [vmem:[#allocation2 + $0x138] sm:$0xff]
        %v2755 = vld [vmem:[#allocation2 + $0x140] sm:$0xff]
        %v2756 = vld [vmem:[#allocation2 + $0x148] sm:$0xff]
        %v2757 = vld [vmem:[#allocation2 + $0x150] sm:$0xff]
        %v2758 = vld [vmem:[#allocation2 + $0x158] sm:$0xff]
        %v2759 = vld [vmem:[#allocation2 + $0x160] sm:$0xff]
        %v2760 = vld [vmem:[#allocation2 + $0x168] sm:$0xff]
        %v2761 = vld [vmem:[#allocation2 + $0x170] sm:$0xff]
        %v2762 = vld [vmem:[#allocation2 + $0x178] sm:$0xff]
        %v2763 = vld [vmem:[#allocation2 + $0x180] sm:$0xff]
        %v2764 = vld [vmem:[#allocation2 + $0x188] sm:$0xff]
        %v2765 = vld [vmem:[#allocation2 + $0x190] sm:$0xff]
        %v2766 = vld [vmem:[#allocation2 + $0x198] sm:$0xff]
        %v2767 = vld [vmem:[#allocation2 + $0x1a0] sm:$0xff]
        %v2768 = vld [vmem:[#allocation2 + $0x1a8] sm:$0xff]
        %v2769 = vld [vmem:[#allocation2 + $0x1b0] sm:$0xff]
        %v2770 = vld [vmem:[#allocation2 + $0x1b8] sm:$0xff]
        %v2771 = vld [vmem:[#allocation2 + $0x1c0] sm:$0xff]
        %v2772 = vld [vmem:[#allocation2 + $0x1c8] sm:$0xff]
        %v2773 = vld [vmem:[#allocation2 + $0x1d0] sm:$0xff]
        %v2774 = vld [vmem:[#allocation2 + $0x1d8] sm:$0xff]
        %v2775 = vld [vmem:[#allocation2 + $0x1e0] sm:$0xff]
        %v2776 = vld [vmem:[#allocation2 + $0x1e8] sm:$0xff]
        %v2777 = vld [vmem:[#allocation2 + $0x1f0] sm:$0xff]
        %v2778 = vld [vmem:[#allocation2 + $0x1f8] sm:$0xff]
        %v2779 = vld [vmem:[#allocation2 + $0x200] sm:$0xff]
        %v2780 = vld [vmem:[#allocation2 + $0x208] sm:$0xff]
        %v2781 = vld [vmem:[#allocation2 + $0x210] sm:$0xff]
        %v2782 = vld [vmem:[#allocation2 + $0x218] sm:$0xff]
        %v2783 = vld [vmem:[#allocation2 + $0x220] sm:$0xff]
        %v2784 = vld [vmem:[#allocation2 + $0x228] sm:$0xff]
        %v2785 = vld [vmem:[#allocation2 + $0x230] sm:$0xff]
        %v2786 = vld [vmem:[#allocation2 + $0x238] sm:$0xff]
        %v2787 = vld [vmem:[#allocation2 + $0x240] sm:$0xff]
        %v2788 = vld [vmem:[#allocation2 + $0x248] sm:$0xff]
        %v2789 = vld [vmem:[#allocation2 + $0x250] sm:$0xff]
        %v2790 = vld [vmem:[#allocation2 + $0x258] sm:$0xff]
        %v2791 = vld [vmem:[#allocation2 + $0x260] sm:$0xff]
        %v2792 = vld [vmem:[#allocation2 + $0x268] sm:$0xff]
        %v2793 = vld [vmem:[#allocation2 + $0x270] sm:$0xff]
        %v2794 = vld [vmem:[#allocation2 + $0x278] sm:$0xff]
        %v2795 = vld [vmem:[#allocation2 + $0x280] sm:$0xff]
        %v2796 = vld [vmem:[#allocation2 + $0x288] sm:$0xff]
        %v2797 = vld [vmem:[#allocation2 + $0x290] sm:$0xff]
        %v2798 = vld [vmem:[#allocation2 + $0x298] sm:$0xff]
        %v2799 = vld [vmem:[#allocation2 + $0x2a0] sm:$0xff]
        %v2800 = vld [vmem:[#allocation2 + $0x2a8] sm:$0xff]
        %v2801 = vld [vmem:[#allocation2 + $0x2b0] sm:$0xff]
        %v2802 = vld [vmem:[#allocation2 + $0x2b8] sm:$0xff]
        %v2803 = vld [vmem:[#allocation2 + $0x2c0] sm:$0xff]
        %v2804 = vld [vmem:[#allocation2 + $0x2c8] sm:$0xff]
        %v2805 = vld [vmem:[#allocation2 + $0x2d0] sm:$0xff]
        %v2806 = vld [vmem:[#allocation2 + $0x2d8] sm:$0xff]
        %v2807 = vld [vmem:[#allocation2 + $0x2e0] sm:$0xff]
        %v2808 = vld [vmem:[#allocation2 + $0x2e8] sm:$0xff]
        %v2809 = vld [vmem:[#allocation2 + $0x2f0] sm:$0xff]
        %v2810 = vld [vmem:[#allocation2 + $0x2f8] sm:$0xff]
        %v2811 = vld [vmem:[#allocation2 + $0x300] sm:$0xff]
        %v2812 = vld [vmem:[#allocation2 + $0x308] sm:$0xff]
        %v2813 = vld [vmem:[#allocation2 + $0x310] sm:$0xff]
        %v2814 = vld [vmem:[#allocation2 + $0x318] sm:$0xff]
        %v2815 = vld [vmem:[#allocation2 + $0x320] sm:$0xff]
        %v2816 = vld [vmem:[#allocation2 + $0x328] sm:$0xff]
        %v2817 = vld [vmem:[#allocation2 + $0x330] sm:$0xff]
        %v2818 = vld [vmem:[#allocation2 + $0x338] sm:$0xff]
        %v2819 = vld [vmem:[#allocation2 + $0x340] sm:$0xff]
        %v2820 = vld [vmem:[#allocation2 + $0x348] sm:$0xff]
        %v2821 = vld [vmem:[#allocation2 + $0x350] sm:$0xff]
        %v2822 = vld [vmem:[#allocation2 + $0x358] sm:$0xff]
        %v2823 = vld [vmem:[#allocation2 + $0x360] sm:$0xff]
        %v2824 = vld [vmem:[#allocation2 + $0x368] sm:$0xff]
        %v2825 = vld [vmem:[#allocation2 + $0x370] sm:$0xff]
        %v2826 = vld [vmem:[#allocation2 + $0x378] sm:$0xff]
        %v2827 = vld [vmem:[#allocation2 + $0x380] sm:$0xff]
        %v2828 = vld [vmem:[#allocation2 + $0x388] sm:$0xff]
        %v2829 = vld [vmem:[#allocation2 + $0x390] sm:$0xff]
        %v2830 = vld [vmem:[#allocation2 + $0x398] sm:$0xff]
        %v2831 = vld [vmem:[#allocation2 + $0x3a0] sm:$0xff]
        %v2832 = vld [vmem:[#allocation2 + $0x3a8] sm:$0xff]
        %v2833 = vld [vmem:[#allocation2 + $0x3b0] sm:$0xff]
        %v2834 = vld [vmem:[#allocation2 + $0x3b8] sm:$0xff]
        %v2835 = vld [vmem:[#allocation2 + $0x3c0] sm:$0xff]
        %v2836 = vld [vmem:[#allocation2 + $0x3c8] sm:$0xff]
        %v2837 = vld [vmem:[#allocation2 + $0x3d0] sm:$0xff]
        %v2838 = vld [vmem:[#allocation2 + $0x3d8] sm:$0xff]
        %v2839 = vld [vmem:[#allocation2 + $0x3e0] sm:$0xff]
        %v2840 = vld [vmem:[#allocation2 + $0x3e8] sm:$0xff]
        %v2841 = vld [vmem:[#allocation2 + $0x3f0] sm:$0xff]
        %v2842 = vld [vmem:[#allocation2 + $0x3f8] sm:$0xff]
        %v2843 = vld [vmem:[#allocation2 + $0x400] sm:$0xff]
        %v2844 = vld [vmem:[#allocation2 + $0x408] sm:$0xff]
        %v2845 = vld [vmem:[#allocation2 + $0x410] sm:$0xff]
        %v2846 = vld [vmem:[#allocation2 + $0x418] sm:$0xff]
        %v2847 = vld [vmem:[#allocation2 + $0x420] sm:$0xff]
        %v2848 = vld [vmem:[#allocation2 + $0x428] sm:$0xff]
        %v2849 = vld [vmem:[#allocation2 + $0x430] sm:$0xff]
        %v2850 = vld [vmem:[#allocation2 + $0x438] sm:$0xff]
        %v2851 = vld [vmem:[#allocation2 + $0x440] sm:$0xff]
        %v2852 = vld [vmem:[#allocation2 + $0x448] sm:$0xff]
        %v2853 = vld [vmem:[#allocation2 + $0x450] sm:$0xff]
        %v2854 = vld [vmem:[#allocation2 + $0x458] sm:$0xff]
        %v2855 = vld [vmem:[#allocation2 + $0x460] sm:$0xff]
        %v2856 = vld [vmem:[#allocation2 + $0x468] sm:$0xff]
        %v2857 = vld [vmem:[#allocation2 + $0x470] sm:$0xff]
        %v2858 = vld [vmem:[#allocation2 + $0x478] sm:$0xff]
        %v2939 = vunpack.c.l.b16 %v2635
        %v2940 = vunpack.c.h.b16 %v2635
        %v2941 = vunpack.c.l.b16 %v2636
        %v2942 = vunpack.c.h.b16 %v2636
        %v2943 = vunpack.c.l.b16 %v2637
        %v2944 = vunpack.c.h.b16 %v2637
        %v2945 = vunpack.c.l.b16 %v2638
        %v2946 = vunpack.c.h.b16 %v2638
        %v2947 = vunpack.c.l.b16 %v2639
        %v2948 = vunpack.c.l.b16 %v2640
        %v2949 = vunpack.c.h.b16 %v2640
        %v2950 = vunpack.c.l.b16 %v2641
        %v2951 = vunpack.c.h.b16 %v2641
        %v2952 = vunpack.c.l.b16 %v2642
        %v2953 = vunpack.c.h.b16 %v2642
        %v2954 = vunpack.c.l.b16 %v2643
        %v2955 = vunpack.c.h.b16 %v2643
        %v2956 = vunpack.c.l.b16 %v2644
        %v2957 = vunpack.c.l.b16 %v2645
        %v2958 = vunpack.c.h.b16 %v2645
        %v2959 = vunpack.c.l.b16 %v2646
        %v2960 = vunpack.c.h.b16 %v2646
        %v2961 = vunpack.c.l.b16 %v2647
        %v2962 = vunpack.c.h.b16 %v2647
        %v2963 = vunpack.c.l.b16 %v2648
        %v2964 = vunpack.c.h.b16 %v2648
        %v2965 = vunpack.c.l.b16 %v2649
        %v2966 = vunpack.c.l.b16 %v2650
        %v2967 = vunpack.c.h.b16 %v2650
        %v2968 = vunpack.c.l.b16 %v2651
        %v2969 = vunpack.c.h.b16 %v2651
        %v2970 = vunpack.c.l.b16 %v2652
        %v2971 = vunpack.c.h.b16 %v2652
        %v2972 = vunpack.c.l.b16 %v2653
        %v2973 = vunpack.c.h.b16 %v2653
        %v2974 = vunpack.c.l.b16 %v2654
        %v2975 = vunpack.c.l.b16 %v2655
        %v2976 = vunpack.c.h.b16 %v2655
        %v2977 = vunpack.c.l.b16 %v2656
        %v2978 = vunpack.c.h.b16 %v2656
        %v2979 = vunpack.c.l.b16 %v2657
        %v2980 = vunpack.c.h.b16 %v2657
        %v2981 = vunpack.c.l.b16 %v2658
        %v2982 = vunpack.c.h.b16 %v2658
        %v2983 = vunpack.c.l.b16 %v2659
        %v2984 = vunpack.c.l.b16 %v2660
        %v2985 = vunpack.c.h.b16 %v2660
        %v2986 = vunpack.c.l.b16 %v2661
        %v2987 = vunpack.c.h.b16 %v2661
        %v2988 = vunpack.c.l.b16 %v2662
        %v2989 = vunpack.c.h.b16 %v2662
        %v2990 = vunpack.c.l.b16 %v2663
        %v2991 = vunpack.c.h.b16 %v2663
        %v2992 = vunpack.c.l.b16 %v2664
        %v2993 = vunpack.c.l.b16 %v2665
        %v2994 = vunpack.c.h.b16 %v2665
        %v2995 = vunpack.c.l.b16 %v2666
        %v2996 = vunpack.c.h.b16 %v2666
        %v2997 = vunpack.c.l.b16 %v2667
        %v2998 = vunpack.c.h.b16 %v2667
        %v2999 = vunpack.c.l.b16 %v2668
        %v3000 = vunpack.c.h.b16 %v2668
        %v3001 = vunpack.c.l.b16 %v2669
        %v3002 = vunpack.c.l.b16 %v2670
        %v3003 = vunpack.c.h.b16 %v2670
        %v3004 = vunpack.c.l.b16 %v2671
        %v3005 = vunpack.c.h.b16 %v2671
        %v3006 = vunpack.c.l.b16 %v2672
        %v3007 = vunpack.c.h.b16 %v2672
        %v3008 = vunpack.c.l.b16 %v2673
        %v3009 = vunpack.c.h.b16 %v2673
        %v3010 = vunpack.c.l.b16 %v2674
        %v3011 = vunpack.c.l.b16 %v2675
        %v3012 = vunpack.c.h.b16 %v2675
        %v3013 = vunpack.c.l.b16 %v2676
        %v3014 = vunpack.c.h.b16 %v2676
        %v3015 = vunpack.c.l.b16 %v2677
        %v3016 = vunpack.c.h.b16 %v2677
        %v3017 = vunpack.c.l.b16 %v2678
        %v3018 = vunpack.c.h.b16 %v2678
        %v3019 = vunpack.c.l.b16 %v2679
        %v3020 = vunpack.c.l.b16 %v2680
        %v3021 = vunpack.c.h.b16 %v2680
        %v3022 = vunpack.c.l.b16 %v2681
        %v3023 = vunpack.c.h.b16 %v2681
        %v3024 = vunpack.c.l.b16 %v2682
        %v3025 = vunpack.c.h.b16 %v2682
        %v3026 = vunpack.c.l.b16 %v2683
        %v3027 = vunpack.c.h.b16 %v2683
        %v3028 = vunpack.c.l.b16 %v2684
        %v3029 = vunpack.c.l.b16 %v2685
        %v3030 = vunpack.c.h.b16 %v2685
        %v3031 = vunpack.c.l.b16 %v2686
        %v3032 = vunpack.c.h.b16 %v2686
        %v3033 = vunpack.c.l.b16 %v2687
        %v3034 = vunpack.c.h.b16 %v2687
        %v3035 = vunpack.c.l.b16 %v2688
        %v3036 = vunpack.c.h.b16 %v2688
        %v3037 = vunpack.c.l.b16 %v2689
        %v3038 = vunpack.c.l.b16 %v2690
        %v3039 = vunpack.c.h.b16 %v2690
        %v3040 = vunpack.c.l.b16 %v2691
        %v3041 = vunpack.c.h.b16 %v2691
        %v3042 = vunpack.c.l.b16 %v2692
        %v3043 = vunpack.c.h.b16 %v2692
        %v3044 = vunpack.c.l.b16 %v2693
        %v3045 = vunpack.c.h.b16 %v2693
        %v3046 = vunpack.c.l.b16 %v2694
        %v3047 = vunpack.c.l.b16 %v2695
        %v3048 = vunpack.c.h.b16 %v2695
        %v3049 = vunpack.c.l.b16 %v2696
        %v3050 = vunpack.c.h.b16 %v2696
        %v3051 = vunpack.c.l.b16 %v2697
        %v3052 = vunpack.c.h.b16 %v2697
        %v3053 = vunpack.c.l.b16 %v2698
        %v3054 = vunpack.c.h.b16 %v2698
        %v3055 = vunpack.c.l.b16 %v2699
        %v3056 = vunpack.c.l.b16 %v2700
        %v3057 = vunpack.c.h.b16 %v2700
        %v3058 = vunpack.c.l.b16 %v2701
        %v3059 = vunpack.c.h.b16 %v2701
        %v3060 = vunpack.c.l.b16 %v2702
        %v3061 = vunpack.c.h.b16 %v2702
        %v3062 = vunpack.c.l.b16 %v2703
        %v3063 = vunpack.c.h.b16 %v2703
        %v3064 = vunpack.c.l.b16 %v2704
        %v3065 = vunpack.c.l.b16 %v2705
        %v3066 = vunpack.c.h.b16 %v2705
        %v3067 = vunpack.c.l.b16 %v2706
        %v3068 = vunpack.c.h.b16 %v2706
        %v3069 = vunpack.c.l.b16 %v2707
        %v3070 = vunpack.c.h.b16 %v2707
        %v3071 = vunpack.c.l.b16 %v2708
        %v3072 = vunpack.c.h.b16 %v2708
        %v3073 = vunpack.c.l.b16 %v2709
        %v3074 = vunpack.c.l.b16 %v2710
        %v3075 = vunpack.c.h.b16 %v2710
        %v3076 = vunpack.c.l.b16 %v2711
        %v3077 = vunpack.c.h.b16 %v2711
        %v3078 = vunpack.c.l.b16 %v2712
        %v3079 = vunpack.c.h.b16 %v2712
        %v3080 = vunpack.c.l.b16 %v2713
        %v3081 = vunpack.c.h.b16 %v2713
        %v3082 = vunpack.c.l.b16 %v2714
        %v3083 = vpack.c.b16 %v2948, %v2939
        %v3084 = vpack.c.b16 %v2949, %v2940
        %v3085 = vpack.c.b16 %v2950, %v2941
        %v3086 = vpack.c.b16 %v2951, %v2942
        %v3087 = vpack.c.b16 %v2952, %v2943
        %v3088 = vpack.c.b16 %v2953, %v2944
        %v3089 = vpack.c.b16 %v2954, %v2945
        %v3090 = vpack.c.b16 %v2955, %v2946
        %v3091 = vpack.c.b16 %v2956, %v2947
        %v3092 = vpack.c.b16 %v2966, %v2957
        %v3093 = vpack.c.b16 %v2967, %v2958
        %v3094 = vpack.c.b16 %v2968, %v2959
        %v3095 = vpack.c.b16 %v2969, %v2960
        %v3096 = vpack.c.b16 %v2970, %v2961
        %v3097 = vpack.c.b16 %v2971, %v2962
        %v3098 = vpack.c.b16 %v2972, %v2963
        %v3099 = vpack.c.b16 %v2973, %v2964
        %v3100 = vpack.c.b16 %v2974, %v2965
        %v3101 = vpack.c.b16 %v2984, %v2975
        %v3102 = vpack.c.b16 %v2985, %v2976
        %v3103 = vpack.c.b16 %v2986, %v2977
        %v3104 = vpack.c.b16 %v2987, %v2978
        %v3105 = vpack.c.b16 %v2988, %v2979
        %v3106 = vpack.c.b16 %v2989, %v2980
        %v3107 = vpack.c.b16 %v2990, %v2981
        %v3108 = vpack.c.b16 %v2991, %v2982
        %v3109 = vpack.c.b16 %v2992, %v2983
        %v3110 = vpack.c.b16 %v3002, %v2993
        %v3111 = vpack.c.b16 %v3003, %v2994
        %v3112 = vpack.c.b16 %v3004, %v2995
        %v3113 = vpack.c.b16 %v3005, %v2996
        %v3114 = vpack.c.b16 %v3006, %v2997
        %v3115 = vpack.c.b16 %v3007, %v2998
        %v3116 = vpack.c.b16 %v3008, %v2999
        %v3117 = vpack.c.b16 %v3009, %v3000
        %v3118 = vpack.c.b16 %v3010, %v3001
        %v3119 = vpack.c.b16 %v3020, %v3011
        %v3120 = vpack.c.b16 %v3021, %v3012
        %v3121 = vpack.c.b16 %v3022, %v3013
        %v3122 = vpack.c.b16 %v3023, %v3014
        %v3123 = vpack.c.b16 %v3024, %v3015
        %v3124 = vpack.c.b16 %v3025, %v3016
        %v3125 = vpack.c.b16 %v3026, %v3017
        %v3126 = vpack.c.b16 %v3027, %v3018
        %v3127 = vpack.c.b16 %v3028, %v3019
        %v3128 = vpack.c.b16 %v3038, %v3029
        %v3129 = vpack.c.b16 %v3039, %v3030
        %v3130 = vpack.c.b16 %v3040, %v3031
        %v3131 = vpack.c.b16 %v3041, %v3032
        %v3132 = vpack.c.b16 %v3042, %v3033
        %v3133 = vpack.c.b16 %v3043, %v3034
        %v3134 = vpack.c.b16 %v3044, %v3035
        %v3135 = vpack.c.b16 %v3045, %v3036
        %v3136 = vpack.c.b16 %v3046, %v3037
        %v3137 = vpack.c.b16 %v3056, %v3047
        %v3138 = vpack.c.b16 %v3057, %v3048
        %v3139 = vpack.c.b16 %v3058, %v3049
        %v3140 = vpack.c.b16 %v3059, %v3050
        %v3141 = vpack.c.b16 %v3060, %v3051
        %v3142 = vpack.c.b16 %v3061, %v3052
        %v3143 = vpack.c.b16 %v3062, %v3053
        %v3144 = vpack.c.b16 %v3063, %v3054
        %v3145 = vpack.c.b16 %v3064, %v3055
        %v3146 = vpack.c.b16 %v3074, %v3065
        %v3147 = vpack.c.b16 %v3075, %v3066
        %v3148 = vpack.c.b16 %v3076, %v3067
        %v3149 = vpack.c.b16 %v3077, %v3068
        %v3150 = vpack.c.b16 %v3078, %v3069
        %v3151 = vpack.c.b16 %v3079, %v3070
        %v3152 = vpack.c.b16 %v3080, %v3071
        %v3153 = vpack.c.b16 %v3081, %v3072
        %v3154 = vpack.c.b16 %v3082, %v3073
        %3227 = vmatprep.subr.bf16.mxu0 %v2716
        %3228 = vmatpush1.bf16.msra.mxu0 %v2715
        %3229 = vmatprep.subr.bf16.mxu0 %v2718
        %3230 = vmatpush1.bf16.msra.mxu0 %v2717
        %3231 = vmatprep.subr.bf16.mxu0 %v2720
        %3232 = vmatpush1.bf16.msra.mxu0 %v2719
        %3233 = vmatprep.subr.bf16.mxu0 %v2722
        %3234 = vmatpush1.bf16.msra.mxu0 %v2721
        %3235 = vmatprep.subr.bf16.mxu0 %v2724
        %3236 = vmatpush1.bf16.msra.mxu0 %v2723
        %3237 = vmatprep.subr.bf16.mxu0 %v2726
        %3238 = vmatpush1.bf16.msra.mxu0 %v2725
        %3239 = vmatprep.subr.bf16.mxu0 %v2728
        %3240 = vmatpush1.bf16.msra.mxu0 %v2727
        %3241 = vmatprep.subr.bf16.mxu0 %v2730
        %3242 = vmatpush1.bf16.msra.mxu0 %v2729
        %3243 = vmatprep.subr.bf16.mxu0 %v2732
        %3244 = vmatpush1.bf16.msra.mxu0 %v2731
        %3245 = vmatprep.subr.bf16.mxu0 %v2734
        %3246 = vmatpush1.bf16.msra.mxu0 %v2733
        %3247 = vmatprep.subr.bf16.mxu0 %v2736
        %3248 = vmatpush1.bf16.msra.mxu0 %v2735
        %3249 = vmatprep.subr.bf16.mxu0 %v2738
        %3250 = vmatpush1.bf16.msra.mxu0 %v2737
        %3251 = vmatprep.subr.bf16.mxu0 %v2740
        %3252 = vmatpush1.bf16.msra.mxu0 %v2739
        %3253 = vmatprep.subr.bf16.mxu0 %v2742
        %3254 = vmatpush1.bf16.msra.mxu0 %v2741
        %3255 = vmatprep.subr.bf16.mxu0 %v2744
        %3256 = vmatpush1.bf16.msra.mxu0 %v2743
        %3257 = vmatprep.subr.bf16.mxu0 %v2746
        %3258 = vmatpush1.bf16.msra.mxu0 %v2745
        %3259 = vmatprep.mubr.bf16.mxu0 %v3084
        %3260 = vmatmul.mubr.bf16.gmra.mrb[0].mxu0 %v3083
        %v3261 = vpop.f32.mrb[0].mxu0
        %v3262 = vadd.f32 0.0, %v3261
        %v3263 = vpop.f32.mrb[0].mxu0
        %v3264 = vadd.f32 0.0, %v3263
        %v3265 = vpop.f32.mrb[0].mxu0
        %v3266 = vadd.f32 0.0, %v3265
        %v3267 = vpop.f32.mrb[0].mxu0
        %v3268 = vadd.f32 0.0, %v3267
        %3269 = vmatprep.mubr.bf16.mxu0 %v3093
        %3270 = vmatmul.mubr.bf16.gmra.mrb[0].mxu0 %v3092
        %v3271 = vpop.f32.mrb[0].mxu0
        %v3272 = vadd.f32 0.0, %v3271
        %v3273 = vpop.f32.mrb[0].mxu0
        %v3274 = vadd.f32 0.0, %v3273
        %v3275 = vpop.f32.mrb[0].mxu0
        %v3276 = vadd.f32 0.0, %v3275
        %v3277 = vpop.f32.mrb[0].mxu0
        %v3278 = vadd.f32 0.0, %v3277
        %3279 = vmatprep.mubr.bf16.mxu0 %v3102
        %3280 = vmatmul.mubr.bf16.gmra.mrb[0].mxu0 %v3101
        %v3281 = vpop.f32.mrb[0].mxu0
        %v3282 = vadd.f32 0.0, %v3281
        %v3283 = vpop.f32.mrb[0].mxu0
        %v3284 = vadd.f32 0.0, %v3283
        %v3285 = vpop.f32.mrb[0].mxu0
        %v3286 = vadd.f32 0.0, %v3285
        %v3287 = vpop.f32.mrb[0].mxu0
        %v3288 = vadd.f32 0.0, %v3287
        %3289 = vmatprep.mubr.bf16.mxu0 %v3111
        %3290 = vmatmul.mubr.bf16.gmra.mrb[0].mxu0 %v3110
        %v3291 = vpop.f32.mrb[0].mxu0
        %v3292 = vadd.f32 0.0, %v3291
        %v3293 = vpop.f32.mrb[0].mxu0
        %v3294 = vadd.f32 0.0, %v3293
        %v3295 = vpop.f32.mrb[0].mxu0
        %v3296 = vadd.f32 0.0, %v3295
        %v3297 = vpop.f32.mrb[0].mxu0
        %v3298 = vadd.f32 0.0, %v3297
        %3299 = vmatprep.mubr.bf16.mxu0 %v3120
        %3300 = vmatmul.mubr.bf16.gmra.mrb[0].mxu0 %v3119
        %v3301 = vpop.f32.mrb[0].mxu0
        %v3302 = vadd.f32 0.0, %v3301
        %v3303 = vpop.f32.mrb[0].mxu0
        %v3304 = vadd.f32 0.0, %v3303
        %v3305 = vpop.f32.mrb[0].mxu0
        %v3306 = vadd.f32 0.0, %v3305
        %v3307 = vpop.f32.mrb[0].mxu0
        %v3308 = vadd.f32 0.0, %v3307
        %3309 = vmatprep.mubr.bf16.mxu0 %v3129
        %3310 = vmatmul.mubr.bf16.gmra.mrb[0].mxu0 %v3128
        %v3311 = vpop.f32.mrb[0].mxu0
        %v3312 = vadd.f32 0.0, %v3311
        %v3313 = vpop.f32.mrb[0].mxu0
        %v3314 = vadd.f32 0.0, %v3313
        %v3315 = vpop.f32.mrb[0].mxu0
        %v3316 = vadd.f32 0.0, %v3315
        %v3317 = vpop.f32.mrb[0].mxu0
        %v3318 = vadd.f32 0.0, %v3317
        %3319 = vmatprep.mubr.bf16.mxu0 %v3138
        %3320 = vmatmul.mubr.bf16.gmra.mrb[0].mxu0 %v3137
        %v3321 = vpop.f32.mrb[0].mxu0
        %v3322 = vadd.f32 0.0, %v3321
        %v3323 = vpop.f32.mrb[0].mxu0
        %v3324 = vadd.f32 0.0, %v3323
        %v3325 = vpop.f32.mrb[0].mxu0
        %v3326 = vadd.f32 0.0, %v3325
        %v3327 = vpop.f32.mrb[0].mxu0
        %v3328 = vadd.f32 0.0, %v3327
        %3329 = vmatprep.mubr.bf16.mxu0 %v3147
        %3330 = vmatmul.mubr.bf16.gmra.mrb[0].mxu0 %v3146
        %v3331 = vpop.f32.mrb[0].mxu0
        %v3332 = vadd.f32 0.0, %v3331
        %v3333 = vpop.f32.mrb[0].mxu0
        %v3334 = vadd.f32 0.0, %v3333
        %v3335 = vpop.f32.mrb[0].mxu0
        %v3336 = vadd.f32 0.0, %v3335
        %v3337 = vpop.f32.mrb[0].mxu0
        %v3338 = vadd.f32 0.0, %v3337
        %3339 = vdwg.mxu0
        %3340 = vmatprep.subr.bf16.mxu0 %v2748
        %3341 = vmatpush1.bf16.msra.mxu0 %v2747
        %3342 = vmatprep.subr.bf16.mxu0 %v2750
        %3343 = vmatpush1.bf16.msra.mxu0 %v2749
        %3344 = vmatprep.subr.bf16.mxu0 %v2752
        %3345 = vmatpush1.bf16.msra.mxu0 %v2751
        %3346 = vmatprep.subr.bf16.mxu0 %v2754
        %3347 = vmatpush1.bf16.msra.mxu0 %v2753
        %3348 = vmatprep.subr.bf16.mxu0 %v2756
        %3349 = vmatpush1.bf16.msra.mxu0 %v2755
        %3350 = vmatprep.subr.bf16.mxu0 %v2758
        %3351 = vmatpush1.bf16.msra.mxu0 %v2757
        %3352 = vmatprep.subr.bf16.mxu0 %v2760
        %3353 = vmatpush1.bf16.msra.mxu0 %v2759
        %3354 = vmatprep.subr.bf16.mxu0 %v2762
        %3355 = vmatpush1.bf16.msra.mxu0 %v2761
        %3356 = vmatprep.subr.bf16.mxu0 %v2764
        %3357 = vmatpush1.bf16.msra.mxu0 %v2763
        %3358 = vmatprep.subr.bf16.mxu0 %v2766
        %3359 = vmatpush1.bf16.msra.mxu0 %v2765
        %3360 = vmatprep.subr.bf16.mxu0 %v2768
        %3361 = vmatpush1.bf16.msra.mxu0 %v2767
        %3362 = vmatprep.subr.bf16.mxu0 %v2770
        %3363 = vmatpush1.bf16.msra.mxu0 %v2769
        %3364 = vmatprep.subr.bf16.mxu0 %v2772
        %3365 = vmatpush1.bf16.msra.mxu0 %v2771
        %3366 = vmatprep.subr.bf16.mxu0 %v2774
        %3367 = vmatpush1.bf16.msra.mxu0 %v2773
        %3368 = vmatprep.subr.bf16.mxu0 %v2776
        %3369 = vmatpush1.bf16.msra.mxu0 %v2775
        %3370 = vmatprep.subr.bf16.mxu0 %v2778
        %3371 = vmatpush1.bf16.msra.mxu0 %v2777
        %3372 = vmatprep.mubr.bf16.mxu0 %v3086
        %3373 = vmatmul.mubr.bf16.gmra.mrb[0].mxu0 %v3085
        %v3374 = vpop.f32.mrb[0].mxu0
        %v3375 = vadd.f32 %v3262, %v3374
        %v3376 = vpop.f32.mrb[0].mxu0
        %v3377 = vadd.f32 %v3264, %v3376
        %v3378 = vpop.f32.mrb[0].mxu0
        %v3379 = vadd.f32 %v3266, %v3378
        %v3380 = vpop.f32.mrb[0].mxu0
        %v3381 = vadd.f32 %v3268, %v3380
        %3382 = vmatprep.mubr.bf16.mxu0 %v3095
        %3383 = vmatmul.mubr.bf16.gmra.mrb[0].mxu0 %v3094
        %v3384 = vpop.f32.mrb[0].mxu0
        %v3385 = vadd.f32 %v3272, %v3384
        %v3386 = vpop.f32.mrb[0].mxu0
        %v3387 = vadd.f32 %v3274, %v3386
        %v3388 = vpop.f32.mrb[0].mxu0
        %v3389 = vadd.f32 %v3276, %v3388
        %v3390 = vpop.f32.mrb[0].mxu0
        %v3391 = vadd.f32 %v3278, %v3390
        %3392 = vmatprep.mubr.bf16.mxu0 %v3104
        %3393 = vmatmul.mubr.bf16.gmra.mrb[0].mxu0 %v3103
        %v3394 = vpop.f32.mrb[0].mxu0
        %v3395 = vadd.f32 %v3282, %v3394
        %v3396 = vpop.f32.mrb[0].mxu0
        %v3397 = vadd.f32 %v3284, %v3396
        %v3398 = vpop.f32.mrb[0].mxu0
        %v3399 = vadd.f32 %v3286, %v3398
        %v3400 = vpop.f32.mrb[0].mxu0
        %v3401 = vadd.f32 %v3288, %v3400
        %3402 = vmatprep.mubr.bf16.mxu0 %v3113
        %3403 = vmatmul.mubr.bf16.gmra.mrb[0].mxu0 %v3112
        %v3404 = vpop.f32.mrb[0].mxu0
        %v3405 = vadd.f32 %v3292, %v3404
        %v3406 = vpop.f32.mrb[0].mxu0
        %v3407 = vadd.f32 %v3294, %v3406
        %v3408 = vpop.f32.mrb[0].mxu0
        %v3409 = vadd.f32 %v3296, %v3408
        %v3410 = vpop.f32.mrb[0].mxu0
        %v3411 = vadd.f32 %v3298, %v3410
        %3412 = vmatprep.mubr.bf16.mxu0 %v3122
        %3413 = vmatmul.mubr.bf16.gmra.mrb[0].mxu0 %v3121
        %v3414 = vpop.f32.mrb[0].mxu0
        %v3415 = vadd.f32 %v3302, %v3414
        %v3416 = vpop.f32.mrb[0].mxu0
        %v3417 = vadd.f32 %v3304, %v3416
        %v3418 = vpop.f32.mrb[0].mxu0
        %v3419 = vadd.f32 %v3306, %v3418
        %v3420 = vpop.f32.mrb[0].mxu0
        %v3421 = vadd.f32 %v3308, %v3420
        %3422 = vmatprep.mubr.bf16.mxu0 %v3131
        %3423 = vmatmul.mubr.bf16.gmra.mrb[0].mxu0 %v3130
        %v3424 = vpop.f32.mrb[0].mxu0
        %v3425 = vadd.f32 %v3312, %v3424
        %v3426 = vpop.f32.mrb[0].mxu0
        %v3427 = vadd.f32 %v3314, %v3426
        %v3428 = vpop.f32.mrb[0].mxu0
        %v3429 = vadd.f32 %v3316, %v3428
        %v3430 = vpop.f32.mrb[0].mxu0
        %v3431 = vadd.f32 %v3318, %v3430
        %3432 = vmatprep.mubr.bf16.mxu0 %v3140
        %3433 = vmatmul.mubr.bf16.gmra.mrb[0].mxu0 %v3139
        %v3434 = vpop.f32.mrb[0].mxu0
        %v3435 = vadd.f32 %v3322, %v3434
        %v3436 = vpop.f32.mrb[0].mxu0
        %v3437 = vadd.f32 %v3324, %v3436
        %v3438 = vpop.f32.mrb[0].mxu0
        %v3439 = vadd.f32 %v3326, %v3438
        %v3440 = vpop.f32.mrb[0].mxu0
        %v3441 = vadd.f32 %v3328, %v3440
        %3442 = vmatprep.mubr.bf16.mxu0 %v3149
        %3443 = vmatmul.mubr.bf16.gmra.mrb[0].mxu0 %v3148
        %v3444 = vpop.f32.mrb[0].mxu0
        %v3445 = vadd.f32 %v3332, %v3444
        %v3446 = vpop.f32.mrb[0].mxu0
        %v3447 = vadd.f32 %v3334, %v3446
        %v3448 = vpop.f32.mrb[0].mxu0
        %v3449 = vadd.f32 %v3336, %v3448
        %v3450 = vpop.f32.mrb[0].mxu0
        %v3451 = vadd.f32 %v3338, %v3450
        %3452 = vdwg.mxu0
        %3453 = vmatprep.subr.bf16.mxu0 %v2780
        %3454 = vmatpush1.bf16.msra.mxu0 %v2779
        %3455 = vmatprep.subr.bf16.mxu0 %v2782
        %3456 = vmatpush1.bf16.msra.mxu0 %v2781
        %3457 = vmatprep.subr.bf16.mxu0 %v2784
        %3458 = vmatpush1.bf16.msra.mxu0 %v2783
        %3459 = vmatprep.subr.bf16.mxu0 %v2786
        %3460 = vmatpush1.bf16.msra.mxu0 %v2785
        %3461 = vmatprep.subr.bf16.mxu0 %v2788
        %3462 = vmatpush1.bf16.msra.mxu0 %v2787
        %3463 = vmatprep.subr.bf16.mxu0 %v2790
        %3464 = vmatpush1.bf16.msra.mxu0 %v2789
        %3465 = vmatprep.subr.bf16.mxu0 %v2792
        %3466 = vmatpush1.bf16.msra.mxu0 %v2791
        %3467 = vmatprep.subr.bf16.mxu0 %v2794
        %3468 = vmatpush1.bf16.msra.mxu0 %v2793
        %3469 = vmatprep.subr.bf16.mxu0 %v2796
        %3470 = vmatpush1.bf16.msra.mxu0 %v2795
        %3471 = vmatprep.subr.bf16.mxu0 %v2798
        %3472 = vmatpush1.bf16.msra.mxu0 %v2797
        %3473 = vmatprep.subr.bf16.mxu0 %v2800
        %3474 = vmatpush1.bf16.msra.mxu0 %v2799
        %3475 = vmatprep.subr.bf16.mxu0 %v2802
        %3476 = vmatpush1.bf16.msra.mxu0 %v2801
        %3477 = vmatprep.subr.bf16.mxu0 %v2804
        %3478 = vmatpush1.bf16.msra.mxu0 %v2803
        %3479 = vmatprep.subr.bf16.mxu0 %v2806
        %3480 = vmatpush1.bf16.msra.mxu0 %v2805
        %3481 = vmatprep.subr.bf16.mxu0 %v2808
        %3482 = vmatpush1.bf16.msra.mxu0 %v2807
        %3483 = vmatprep.subr.bf16.mxu0 %v2810
        %3484 = vmatpush1.bf16.msra.mxu0 %v2809
        %3485 = vmatprep.mubr.bf16.mxu0 %v3088
        %3486 = vmatmul.mubr.bf16.gmra.mrb[0].mxu0 %v3087
        %v3487 = vpop.f32.mrb[0].mxu0
        %v3488 = vadd.f32 %v3375, %v3487
        %v3489 = vpop.f32.mrb[0].mxu0
        %v3490 = vadd.f32 %v3377, %v3489
        %v3491 = vpop.f32.mrb[0].mxu0
        %v3492 = vadd.f32 %v3379, %v3491
        %v3493 = vpop.f32.mrb[0].mxu0
        %v3494 = vadd.f32 %v3381, %v3493
        %3495 = vmatprep.mubr.bf16.mxu0 %v3097
        %3496 = vmatmul.mubr.bf16.gmra.mrb[0].mxu0 %v3096
        %v3497 = vpop.f32.mrb[0].mxu0
        %v3498 = vadd.f32 %v3385, %v3497
        %v3499 = vpop.f32.mrb[0].mxu0
        %v3500 = vadd.f32 %v3387, %v3499
        %v3501 = vpop.f32.mrb[0].mxu0
        %v3502 = vadd.f32 %v3389, %v3501
        %v3503 = vpop.f32.mrb[0].mxu0
        %v3504 = vadd.f32 %v3391, %v3503
        %3505 = vmatprep.mubr.bf16.mxu0 %v3106
        %3506 = vmatmul.mubr.bf16.gmra.mrb[0].mxu0 %v3105
        %v3507 = vpop.f32.mrb[0].mxu0
        %v3508 = vadd.f32 %v3395, %v3507
        %v3509 = vpop.f32.mrb[0].mxu0
        %v3510 = vadd.f32 %v3397, %v3509
        %v3511 = vpop.f32.mrb[0].mxu0
        %v3512 = vadd.f32 %v3399, %v3511
        %v3513 = vpop.f32.mrb[0].mxu0
        %v3514 = vadd.f32 %v3401, %v3513
        %3515 = vmatprep.mubr.bf16.mxu0 %v3115
        %3516 = vmatmul.mubr.bf16.gmra.mrb[0].mxu0 %v3114
        %v3517 = vpop.f32.mrb[0].mxu0
        %v3518 = vadd.f32 %v3405, %v3517
        %v3519 = vpop.f32.mrb[0].mxu0
        %v3520 = vadd.f32 %v3407, %v3519
        %v3521 = vpop.f32.mrb[0].mxu0
        %v3522 = vadd.f32 %v3409, %v3521
        %v3523 = vpop.f32.mrb[0].mxu0
        %v3524 = vadd.f32 %v3411, %v3523
        %3525 = vmatprep.mubr.bf16.mxu0 %v3124
        %3526 = vmatmul.mubr.bf16.gmra.mrb[0].mxu0 %v3123
        %v3527 = vpop.f32.mrb[0].mxu0
        %v3528 = vadd.f32 %v3415, %v3527
        %v3529 = vpop.f32.mrb[0].mxu0
        %v3530 = vadd.f32 %v3417, %v3529
        %v3531 = vpop.f32.mrb[0].mxu0
        %v3532 = vadd.f32 %v3419, %v3531
        %v3533 = vpop.f32.mrb[0].mxu0
        %v3534 = vadd.f32 %v3421, %v3533
        %3535 = vmatprep.mubr.bf16.mxu0 %v3133
        %3536 = vmatmul.mubr.bf16.gmra.mrb[0].mxu0 %v3132
        %v3537 = vpop.f32.mrb[0].mxu0
        %v3538 = vadd.f32 %v3425, %v3537
        %v3539 = vpop.f32.mrb[0].mxu0
        %v3540 = vadd.f32 %v3427, %v3539
        %v3541 = vpop.f32.mrb[0].mxu0
        %v3542 = vadd.f32 %v3429, %v3541
        %v3543 = vpop.f32.mrb[0].mxu0
        %v3544 = vadd.f32 %v3431, %v3543
        %3545 = vmatprep.mubr.bf16.mxu0 %v3142
        %3546 = vmatmul.mubr.bf16.gmra.mrb[0].mxu0 %v3141
        %v3547 = vpop.f32.mrb[0].mxu0
        %v3548 = vadd.f32 %v3435, %v3547
        %v3549 = vpop.f32.mrb[0].mxu0
        %v3550 = vadd.f32 %v3437, %v3549
        %v3551 = vpop.f32.mrb[0].mxu0
        %v3552 = vadd.f32 %v3439, %v3551
        %v3553 = vpop.f32.mrb[0].mxu0
        %v3554 = vadd.f32 %v3441, %v3553
        %3555 = vmatprep.mubr.bf16.mxu0 %v3151
        %3556 = vmatmul.mubr.bf16.gmra.mrb[0].mxu0 %v3150
        %v3557 = vpop.f32.mrb[0].mxu0
        %v3558 = vadd.f32 %v3445, %v3557
        %v3559 = vpop.f32.mrb[0].mxu0
        %v3560 = vadd.f32 %v3447, %v3559
        %v3561 = vpop.f32.mrb[0].mxu0
        %v3562 = vadd.f32 %v3449, %v3561
        %v3563 = vpop.f32.mrb[0].mxu0
        %v3564 = vadd.f32 %v3451, %v3563
        %3565 = vdwg.mxu0
        %3566 = vmatprep.subr.bf16.mxu0 %v2812
        %3567 = vmatpush1.bf16.msra.mxu0 %v2811
        %3568 = vmatprep.subr.bf16.mxu0 %v2814
        %3569 = vmatpush1.bf16.msra.mxu0 %v2813
        %3570 = vmatprep.subr.bf16.mxu0 %v2816
        %3571 = vmatpush1.bf16.msra.mxu0 %v2815
        %3572 = vmatprep.subr.bf16.mxu0 %v2818
        %3573 = vmatpush1.bf16.msra.mxu0 %v2817
        %3574 = vmatprep.subr.bf16.mxu0 %v2820
        %3575 = vmatpush1.bf16.msra.mxu0 %v2819
        %3576 = vmatprep.subr.bf16.mxu0 %v2822
        %3577 = vmatpush1.bf16.msra.mxu0 %v2821
        %3578 = vmatprep.subr.bf16.mxu0 %v2824
        %3579 = vmatpush1.bf16.msra.mxu0 %v2823
        %3580 = vmatprep.subr.bf16.mxu0 %v2826
        %3581 = vmatpush1.bf16.msra.mxu0 %v2825
        %3582 = vmatprep.subr.bf16.mxu0 %v2828
        %3583 = vmatpush1.bf16.msra.mxu0 %v2827
        %3584 = vmatprep.subr.bf16.mxu0 %v2830
        %3585 = vmatpush1.bf16.msra.mxu0 %v2829
        %3586 = vmatprep.subr.bf16.mxu0 %v2832
        %3587 = vmatpush1.bf16.msra.mxu0 %v2831
        %3588 = vmatprep.subr.bf16.mxu0 %v2834
        %3589 = vmatpush1.bf16.msra.mxu0 %v2833
        %3590 = vmatprep.subr.bf16.mxu0 %v2836
        %3591 = vmatpush1.bf16.msra.mxu0 %v2835
        %3592 = vmatprep.subr.bf16.mxu0 %v2838
        %3593 = vmatpush1.bf16.msra.mxu0 %v2837
        %3594 = vmatprep.subr.bf16.mxu0 %v2840
        %3595 = vmatpush1.bf16.msra.mxu0 %v2839
        %3596 = vmatprep.subr.bf16.mxu0 %v2842
        %3597 = vmatpush1.bf16.msra.mxu0 %v2841
        %3598 = vmatprep.mubr.bf16.mxu0 %v3090
        %3599 = vmatmul.mubr.bf16.gmra.mrb[0].mxu0 %v3089
        %v3600 = vpop.f32.mrb[0].mxu0
        %v3601 = vadd.f32 %v3488, %v3600
        %v3602 = vpop.f32.mrb[0].mxu0
        %v3603 = vadd.f32 %v3490, %v3602
        %v3604 = vpop.f32.mrb[0].mxu0
        %v3605 = vadd.f32 %v3492, %v3604
        %v3606 = vpop.f32.mrb[0].mxu0
        %v3607 = vadd.f32 %v3494, %v3606
        %3608 = vmatprep.mubr.bf16.mxu0 %v3099
        %3609 = vmatmul.mubr.bf16.gmra.mrb[0].mxu0 %v3098
        %v3610 = vpop.f32.mrb[0].mxu0
        %v3611 = vadd.f32 %v3498, %v3610
        %v3612 = vpop.f32.mrb[0].mxu0
        %v3613 = vadd.f32 %v3500, %v3612
        %v3614 = vpop.f32.mrb[0].mxu0
        %v3615 = vadd.f32 %v3502, %v3614
        %v3616 = vpop.f32.mrb[0].mxu0
        %v3617 = vadd.f32 %v3504, %v3616
        %3618 = vmatprep.mubr.bf16.mxu0 %v3108
        %3619 = vmatmul.mubr.bf16.gmra.mrb[0].mxu0 %v3107
        %v3620 = vpop.f32.mrb[0].mxu0
        %v3621 = vadd.f32 %v3508, %v3620
        %v3622 = vpop.f32.mrb[0].mxu0
        %v3623 = vadd.f32 %v3510, %v3622
        %v3624 = vpop.f32.mrb[0].mxu0
        %v3625 = vadd.f32 %v3512, %v3624
        %v3626 = vpop.f32.mrb[0].mxu0
        %v3627 = vadd.f32 %v3514, %v3626
        %3628 = vmatprep.mubr.bf16.mxu0 %v3117
        %3629 = vmatmul.mubr.bf16.gmra.mrb[0].mxu0 %v3116
        %v3630 = vpop.f32.mrb[0].mxu0
        %v3631 = vadd.f32 %v3518, %v3630
        %v3632 = vpop.f32.mrb[0].mxu0
        %v3633 = vadd.f32 %v3520, %v3632
        %v3634 = vpop.f32.mrb[0].mxu0
        %v3635 = vadd.f32 %v3522, %v3634
        %v3636 = vpop.f32.mrb[0].mxu0
        %v3637 = vadd.f32 %v3524, %v3636
        %3638 = vmatprep.mubr.bf16.mxu0 %v3126
        %3639 = vmatmul.mubr.bf16.gmra.mrb[0].mxu0 %v3125
        %v3640 = vpop.f32.mrb[0].mxu0
        %v3641 = vadd.f32 %v3528, %v3640
        %v3642 = vpop.f32.mrb[0].mxu0
        %v3643 = vadd.f32 %v3530, %v3642
        %v3644 = vpop.f32.mrb[0].mxu0
        %v3645 = vadd.f32 %v3532, %v3644
        %v3646 = vpop.f32.mrb[0].mxu0
        %v3647 = vadd.f32 %v3534, %v3646
        %3648 = vmatprep.mubr.bf16.mxu0 %v3135
        %3649 = vmatmul.mubr.bf16.gmra.mrb[0].mxu0 %v3134
        %v3650 = vpop.f32.mrb[0].mxu0
        %v3651 = vadd.f32 %v3538, %v3650
        %v3652 = vpop.f32.mrb[0].mxu0
        %v3653 = vadd.f32 %v3540, %v3652
        %v3654 = vpop.f32.mrb[0].mxu0
        %v3655 = vadd.f32 %v3542, %v3654
        %v3656 = vpop.f32.mrb[0].mxu0
        %v3657 = vadd.f32 %v3544, %v3656
        %3658 = vmatprep.mubr.bf16.mxu0 %v3144
        %3659 = vmatmul.mubr.bf16.gmra.mrb[0].mxu0 %v3143
        %v3660 = vpop.f32.mrb[0].mxu0
        %v3661 = vadd.f32 %v3548, %v3660
        %v3662 = vpop.f32.mrb[0].mxu0
        %v3663 = vadd.f32 %v3550, %v3662
        %v3664 = vpop.f32.mrb[0].mxu0
        %v3665 = vadd.f32 %v3552, %v3664
        %v3666 = vpop.f32.mrb[0].mxu0
        %v3667 = vadd.f32 %v3554, %v3666
        %3668 = vmatprep.mubr.bf16.mxu0 %v3153
        %3669 = vmatmul.mubr.bf16.gmra.mrb[0].mxu0 %v3152
        %v3670 = vpop.f32.mrb[0].mxu0
        %v3671 = vadd.f32 %v3558, %v3670
        %v3672 = vpop.f32.mrb[0].mxu0
        %v3673 = vadd.f32 %v3560, %v3672
        %v3674 = vpop.f32.mrb[0].mxu0
        %v3675 = vadd.f32 %v3562, %v3674
        %v3676 = vpop.f32.mrb[0].mxu0
        %v3677 = vadd.f32 %v3564, %v3676
        %3678 = vdwg.mxu0
        %3679 = vmatprep.subr.bf16.mxu0 %v2844
        %3680 = vmatpush1.bf16.msra.mxu0 %v2843
        %3681 = vmatprep.subr.bf16.mxu0 %v2846
        %3682 = vmatpush1.bf16.msra.mxu0 %v2845
        %3683 = vmatprep.subr.bf16.mxu0 %v2848
        %3684 = vmatpush1.bf16.msra.mxu0 %v2847
        %3685 = vmatprep.subr.bf16.mxu0 %v2850
        %3686 = vmatpush1.bf16.msra.mxu0 %v2849
        %3687 = vmatprep.subr.bf16.mxu0 %v2852
        %3688 = vmatpush1.bf16.msra.mxu0 %v2851
        %3689 = vmatprep.subr.bf16.mxu0 %v2854
        %3690 = vmatpush1.bf16.msra.mxu0 %v2853
        %3691 = vmatprep.subr.bf16.mxu0 %v2856
        %3692 = vmatpush1.bf16.msra.mxu0 %v2855
        %3693 = vmatprep.subr.bf16.mxu0 %v2858
        %3694 = vmatpush1.bf16.msra.mxu0 %v2857
        %3695 = vmatprep.subr.bf16.mxu0 0
        %3696 = vmatpush1.bf16.msra.mxu0 0
        %3697 = vmatprep.subr.bf16.mxu0 0
        %3698 = vmatpush1.bf16.msra.mxu0 0
        %3699 = vmatprep.subr.bf16.mxu0 0
        %3700 = vmatpush1.bf16.msra.mxu0 0
        %3701 = vmatprep.subr.bf16.mxu0 0
        %3702 = vmatpush1.bf16.msra.mxu0 0
        %3703 = vmatprep.subr.bf16.mxu0 0
        %3704 = vmatpush1.bf16.msra.mxu0 0
        %3705 = vmatprep.subr.bf16.mxu0 0
        %3706 = vmatpush1.bf16.msra.mxu0 0
        %3707 = vmatprep.subr.bf16.mxu0 0
        %3708 = vmatpush1.bf16.msra.mxu0 0
        %3709 = vmatprep.subr.bf16.mxu0 0
        %3710 = vmatpush1.bf16.msra.mxu0 0
        %3711 = vmatprep.mubr.bf16.mxu0 0
        %3712 = vmatmul.mubr.bf16.gmra.mrb[0].mxu0 %v3091
        %v3713 = vpop.f32.mrb[0].mxu0
        %v3714 = vadd.f32 %v3601, %v3713
        %v3715 = vpop.f32.mrb[0].mxu0
        %v3716 = vadd.f32 %v3603, %v3715
        %v3717 = vpop.f32.mrb[0].mxu0
        %v3718 = vadd.f32 %v3605, %v3717
        %v3719 = vpop.f32.mrb[0].mxu0
        %v3720 = vadd.f32 %v3607, %v3719
        %3721 = vmatprep.mubr.bf16.mxu0 0
        %3722 = vmatmul.mubr.bf16.gmra.mrb[0].mxu0 %v3100
        %v3723 = vpop.f32.mrb[0].mxu0
        %v3724 = vadd.f32 %v3611, %v3723
        %v3725 = vpop.f32.mrb[0].mxu0
        %v3726 = vadd.f32 %v3613, %v3725
        %v3727 = vpop.f32.mrb[0].mxu0
        %v3728 = vadd.f32 %v3615, %v3727
        %v3729 = vpop.f32.mrb[0].mxu0
        %v3730 = vadd.f32 %v3617, %v3729
        %3731 = vmatprep.mubr.bf16.mxu0 0
        %3732 = vmatmul.mubr.bf16.gmra.mrb[0].mxu0 %v3109
        %v3733 = vpop.f32.mrb[0].mxu0
        %v3734 = vadd.f32 %v3621, %v3733
        %v3735 = vpop.f32.mrb[0].mxu0
        %v3736 = vadd.f32 %v3623, %v3735
        %v3737 = vpop.f32.mrb[0].mxu0
        %v3738 = vadd.f32 %v3625, %v3737
        %v3739 = vpop.f32.mrb[0].mxu0
        %v3740 = vadd.f32 %v3627, %v3739
        %3741 = vmatprep.mubr.bf16.mxu0 0
        %3742 = vmatmul.mubr.bf16.gmra.mrb[0].mxu0 %v3118
        %v3743 = vpop.f32.mrb[0].mxu0
        %v3744 = vadd.f32 %v3631, %v3743
        %v3745 = vpop.f32.mrb[0].mxu0
        %v3746 = vadd.f32 %v3633, %v3745
        %v3747 = vpop.f32.mrb[0].mxu0
        %v3748 = vadd.f32 %v3635, %v3747
        %v3749 = vpop.f32.mrb[0].mxu0
        %v3750 = vadd.f32 %v3637, %v3749
        %3751 = vmatprep.mubr.bf16.mxu0 0
        %3752 = vmatmul.mubr.bf16.gmra.mrb[0].mxu0 %v3127
        %v3753 = vpop.f32.mrb[0].mxu0
        %v3754 = vadd.f32 %v3641, %v3753
        %v3755 = vpop.f32.mrb[0].mxu0
        %v3756 = vadd.f32 %v3643, %v3755
        %v3757 = vpop.f32.mrb[0].mxu0
        %v3758 = vadd.f32 %v3645, %v3757
        %v3759 = vpop.f32.mrb[0].mxu0
        %v3760 = vadd.f32 %v3647, %v3759
        %3761 = vmatprep.mubr.bf16.mxu0 0
        %3762 = vmatmul.mubr.bf16.gmra.mrb[0].mxu0 %v3136
        %v3763 = vpop.f32.mrb[0].mxu0
        %v3764 = vadd.f32 %v3651, %v3763
        %v3765 = vpop.f32.mrb[0].mxu0
        %v3766 = vadd.f32 %v3653, %v3765
        %v3767 = vpop.f32.mrb[0].mxu0
        %v3768 = vadd.f32 %v3655, %v3767
        %v3769 = vpop.f32.mrb[0].mxu0
        %v3770 = vadd.f32 %v3657, %v3769
        %3771 = vmatprep.mubr.bf16.mxu0 0
        %3772 = vmatmul.mubr.bf16.gmra.mrb[0].mxu0 %v3145
        %v3773 = vpop.f32.mrb[0].mxu0
        %v3774 = vadd.f32 %v3661, %v3773
        %v3775 = vpop.f32.mrb[0].mxu0
        %v3776 = vadd.f32 %v3663, %v3775
        %v3777 = vpop.f32.mrb[0].mxu0
        %v3778 = vadd.f32 %v3665, %v3777
        %v3779 = vpop.f32.mrb[0].mxu0
        %v3780 = vadd.f32 %v3667, %v3779
        %3781 = vmatprep.mubr.bf16.mxu0 0
        %3782 = vmatmul.mubr.bf16.gmra.mrb[0].mxu0 %v3154
        %v3783 = vpop.f32.mrb[0].mxu0
        %v3784 = vadd.f32 %v3671, %v3783
        %v3785 = vpop.f32.mrb[0].mxu0
        %v3786 = vadd.f32 %v3673, %v3785
        %v3787 = vpop.f32.mrb[0].mxu0
        %v3788 = vadd.f32 %v3675, %v3787
        %v3789 = vpop.f32.mrb[0].mxu0
        %v3790 = vadd.f32 %v3677, %v3789
        %3791 = vdwg.mxu0
        %v3792 = vadd.f32 %v3714, %v3716
        %3793 = vadd.xlane.f32.xlu0 %v3792
        %v3794 = vpop.xlane.xlu0 %3793
        %v3795 = vadd.f32 %v3718, %v3720
        %3796 = vadd.xlane.f32.xlu0 %v3795
        %v3797 = vpop.xlane.xlu0 %3796
        %v3798 = vadd.f32 %v3724, %v3726
        %3799 = vadd.xlane.f32.xlu0 %v3798
        %v3800 = vpop.xlane.xlu0 %3799
        %v3801 = vadd.f32 %v3728, %v3730
        %3802 = vadd.xlane.f32.xlu0 %v3801
        %v3803 = vpop.xlane.xlu0 %3802
        %v3804 = vadd.f32 %v3734, %v3736
        %3805 = vadd.xlane.f32.xlu0 %v3804
        %v3806 = vpop.xlane.xlu0 %3805
        %v3807 = vadd.f32 %v3738, %v3740
        %3808 = vadd.xlane.f32.xlu0 %v3807
        %v3809 = vpop.xlane.xlu0 %3808
        %v3810 = vadd.f32 %v3744, %v3746
        %3811 = vadd.xlane.f32.xlu0 %v3810
        %v3812 = vpop.xlane.xlu0 %3811
        %v3813 = vadd.f32 %v3748, %v3750
        %3814 = vadd.xlane.f32.xlu0 %v3813
        %v3815 = vpop.xlane.xlu0 %3814
        %v3816 = vadd.f32 %v3754, %v3756
        %3817 = vadd.xlane.f32.xlu0 %v3816
        %v3818 = vpop.xlane.xlu0 %3817
        %v3819 = vadd.f32 %v3758, %v3760
        %3820 = vadd.xlane.f32.xlu0 %v3819
        %v3821 = vpop.xlane.xlu0 %3820
        %v3822 = vadd.f32 %v3764, %v3766
        %3823 = vadd.xlane.f32.xlu0 %v3822
        %v3824 = vpop.xlane.xlu0 %3823
        %v3825 = vadd.f32 %v3768, %v3770
        %3826 = vadd.xlane.f32.xlu0 %v3825
        %v3827 = vpop.xlane.xlu0 %3826
        %v3828 = vadd.f32 %v3774, %v3776
        %3829 = vadd.xlane.f32.xlu0 %v3828
        %v3830 = vpop.xlane.xlu0 %3829
        %v3831 = vadd.f32 %v3778, %v3780
        %3832 = vadd.xlane.f32.xlu0 %v3831
        %v3833 = vpop.xlane.xlu0 %3832
        %v3834 = vadd.f32 %v3784, %v3786
        %3835 = vadd.xlane.f32.xlu0 %v3834
        %v3836 = vpop.xlane.xlu0 %3835
        %v3837 = vadd.f32 %v3788, %v3790
        %3838 = vadd.xlane.f32.xlu0 %v3837
        %v3839 = vpop.xlane.xlu0 %3838
        %v3840 = vmul.f32 %v3794, %v363
        %v3841 = vmul.f32 %v3797, %v363
        %v3842 = vmul.f32 %v3800, %v363
        %v3843 = vmul.f32 %v3803, %v363
        %v3844 = vmul.f32 %v3806, %v363
        %v3845 = vmul.f32 %v3809, %v363
        %v3846 = vmul.f32 %v3812, %v363
        %v3847 = vmul.f32 %v3815, %v363
        %v3848 = vmul.f32 %v3818, %v363
        %v3849 = vmul.f32 %v3821, %v363
        %v3850 = vmul.f32 %v3824, %v363
        %v3851 = vmul.f32 %v3827, %v363
        %v3852 = vmul.f32 %v3830, %v363
        %v3853 = vmul.f32 %v3833, %v363
        %v3854 = vmul.f32 %v3836, %v363
        %v3855 = vmul.f32 %v3839, %v363
        %v3856 = vsub.f32 %v3714, %v3840
        %v3857 = vsub.f32 %v3716, %v3840
        %v3858 = vsub.f32 %v3718, %v3841
        %v3859 = vsub.f32 %v3720, %v3841
        %v3860 = vsub.f32 %v3724, %v3842
        %v3861 = vsub.f32 %v3726, %v3842
        %v3862 = vsub.f32 %v3728, %v3843
        %v3863 = vsub.f32 %v3730, %v3843
        %v3864 = vsub.f32 %v3734, %v3844
        %v3865 = vsub.f32 %v3736, %v3844
        %v3866 = vsub.f32 %v3738, %v3845
        %v3867 = vsub.f32 %v3740, %v3845
        %v3868 = vsub.f32 %v3744, %v3846
        %v3869 = vsub.f32 %v3746, %v3846
        %v3870 = vsub.f32 %v3748, %v3847
        %v3871 = vsub.f32 %v3750, %v3847
        %v3872 = vsub.f32 %v3754, %v3848
        %v3873 = vsub.f32 %v3756, %v3848
        %v3874 = vsub.f32 %v3758, %v3849
        %v3875 = vsub.f32 %v3760, %v3849
        %v3876 = vsub.f32 %v3764, %v3850
        %v3877 = vsub.f32 %v3766, %v3850
        %v3878 = vsub.f32 %v3768, %v3851
        %v3879 = vsub.f32 %v3770, %v3851
        %v3880 = vsub.f32 %v3774, %v3852
        %v3881 = vsub.f32 %v3776, %v3852
        %v3882 = vsub.f32 %v3778, %v3853
        %v3883 = vsub.f32 %v3780, %v3853
        %v3884 = vsub.f32 %v3784, %v3854
        %v3885 = vsub.f32 %v3786, %v3854
        %v3886 = vsub.f32 %v3788, %v3855
        %v3887 = vsub.f32 %v3790, %v3855
        %v3888 = vmul.f32 %v3856, %v3856
        %v3889 = vmul.f32 %v3857, %v3857
        %v3890 = vmul.f32 %v3858, %v3858
        %v3891 = vmul.f32 %v3859, %v3859
        %v3892 = vmul.f32 %v3860, %v3860
        %v3893 = vmul.f32 %v3861, %v3861
        %v3894 = vmul.f32 %v3862, %v3862
        %v3895 = vmul.f32 %v3863, %v3863
        %v3896 = vmul.f32 %v3864, %v3864
        %v3897 = vmul.f32 %v3865, %v3865
        %v3898 = vmul.f32 %v3866, %v3866
        %v3899 = vmul.f32 %v3867, %v3867
        %v3900 = vmul.f32 %v3868, %v3868
        %v3901 = vmul.f32 %v3869, %v3869
        %v3902 = vmul.f32 %v3870, %v3870
        %v3903 = vmul.f32 %v3871, %v3871
        %v3904 = vmul.f32 %v3872, %v3872
        %v3905 = vmul.f32 %v3873, %v3873
        %v3906 = vmul.f32 %v3874, %v3874
        %v3907 = vmul.f32 %v3875, %v3875
        %v3908 = vmul.f32 %v3876, %v3876
        %v3909 = vmul.f32 %v3877, %v3877
        %v3910 = vmul.f32 %v3878, %v3878
        %v3911 = vmul.f32 %v3879, %v3879
        %v3912 = vmul.f32 %v3880, %v3880
        %v3913 = vmul.f32 %v3881, %v3881
        %v3914 = vmul.f32 %v3882, %v3882
        %v3915 = vmul.f32 %v3883, %v3883
        %v3916 = vmul.f32 %v3884, %v3884
        %v3917 = vmul.f32 %v3885, %v3885
        %v3918 = vmul.f32 %v3886, %v3886
        %v3919 = vmul.f32 %v3887, %v3887
        %v3920 = vadd.f32 %v3888, %v3889
        %3921 = vadd.xlane.f32.xlu0 %v3920
        %v3922 = vpop.xlane.xlu0 %3921
        %v3923 = vadd.f32 %v3890, %v3891
        %3924 = vadd.xlane.f32.xlu0 %v3923
        %v3925 = vpop.xlane.xlu0 %3924
        %v3926 = vadd.f32 %v3892, %v3893
        %3927 = vadd.xlane.f32.xlu0 %v3926
        %v3928 = vpop.xlane.xlu0 %3927
        %v3929 = vadd.f32 %v3894, %v3895
        %3930 = vadd.xlane.f32.xlu0 %v3929
        %v3931 = vpop.xlane.xlu0 %3930
        %v3932 = vadd.f32 %v3896, %v3897
        %3933 = vadd.xlane.f32.xlu0 %v3932
        %v3934 = vpop.xlane.xlu0 %3933
        %v3935 = vadd.f32 %v3898, %v3899
        %3936 = vadd.xlane.f32.xlu0 %v3935
        %v3937 = vpop.xlane.xlu0 %3936
        %v3938 = vadd.f32 %v3900, %v3901
        %3939 = vadd.xlane.f32.xlu0 %v3938
        %v3940 = vpop.xlane.xlu0 %3939
        %v3941 = vadd.f32 %v3902, %v3903
        %3942 = vadd.xlane.f32.xlu0 %v3941
        %v3943 = vpop.xlane.xlu0 %3942
        %v3944 = vadd.f32 %v3904, %v3905
        %3945 = vadd.xlane.f32.xlu0 %v3944
        %v3946 = vpop.xlane.xlu0 %3945
        %v3947 = vadd.f32 %v3906, %v3907
        %3948 = vadd.xlane.f32.xlu0 %v3947
        %v3949 = vpop.xlane.xlu0 %3948
        %v3950 = vadd.f32 %v3908, %v3909
        %3951 = vadd.xlane.f32.xlu0 %v3950
        %v3952 = vpop.xlane.xlu0 %3951
        %v3953 = vadd.f32 %v3910, %v3911
        %3954 = vadd.xlane.f32.xlu0 %v3953
        %v3955 = vpop.xlane.xlu0 %3954
        %v3956 = vadd.f32 %v3912, %v3913
        %3957 = vadd.xlane.f32.xlu0 %v3956
        %v3958 = vpop.xlane.xlu0 %3957
        %v3959 = vadd.f32 %v3914, %v3915
        %3960 = vadd.xlane.f32.xlu0 %v3959
        %v3961 = vpop.xlane.xlu0 %3960
        %v3962 = vadd.f32 %v3916, %v3917
        %3963 = vadd.xlane.f32.xlu0 %v3962
        %v3964 = vpop.xlane.xlu0 %3963
        %v3965 = vadd.f32 %v3918, %v3919
        %3966 = vadd.xlane.f32.xlu0 %v3965
        %v3967 = vpop.xlane.xlu0 %3966
        %v3968 = vmul.f32 %v3922, %v363
        %v3969 = vmul.f32 %v3925, %v363
        %v3970 = vmul.f32 %v3928, %v363
        %v3971 = vmul.f32 %v3931, %v363
        %v3972 = vmul.f32 %v3934, %v363
        %v3973 = vmul.f32 %v3937, %v363
        %v3974 = vmul.f32 %v3940, %v363
        %v3975 = vmul.f32 %v3943, %v363
        %v3976 = vmul.f32 %v3946, %v363
        %v3977 = vmul.f32 %v3949, %v363
        %v3978 = vmul.f32 %v3952, %v363
        %v3979 = vmul.f32 %v3955, %v363
        %v3980 = vmul.f32 %v3958, %v363
        %v3981 = vmul.f32 %v3961, %v363
        %v3982 = vmul.f32 %v3964, %v363
        %v3983 = vmul.f32 %v3967, %v363
        %v3984 = vadd.f32 %v3968, 1e-05
        %v3985 = vadd.f32 %v3969, 1e-05
        %v3986 = vadd.f32 %v3970, 1e-05
        %v3987 = vadd.f32 %v3971, 1e-05
        %v3988 = vadd.f32 %v3972, 1e-05
        %v3989 = vadd.f32 %v3973, 1e-05
        %v3990 = vadd.f32 %v3974, 1e-05
        %v3991 = vadd.f32 %v3975, 1e-05
        %v3992 = vadd.f32 %v3976, 1e-05
        %v3993 = vadd.f32 %v3977, 1e-05
        %v3994 = vadd.f32 %v3978, 1e-05
        %v3995 = vadd.f32 %v3979, 1e-05
        %v3996 = vadd.f32 %v3980, 1e-05
        %v3997 = vadd.f32 %v3981, 1e-05
        %v3998 = vadd.f32 %v3982, 1e-05
        %v3999 = vadd.f32 %v3983, 1e-05
        %v4000 = vrsqrt.pop %v3984
        %v4001 = vrsqrt.pop %v3985
        %v4002 = vrsqrt.pop %v3986
        %v4003 = vrsqrt.pop %v3987
        %v4004 = vrsqrt.pop %v3988
        %v4005 = vrsqrt.pop %v3989
        %v4006 = vrsqrt.pop %v3990
        %v4007 = vrsqrt.pop %v3991
        %v4008 = vrsqrt.pop %v3992
        %v4009 = vrsqrt.pop %v3993
        %v4010 = vrsqrt.pop %v3994
        %v4011 = vrsqrt.pop %v3995
        %v4012 = vrsqrt.pop %v3996
        %v4013 = vrsqrt.pop %v3997
        %v4014 = vrsqrt.pop %v3998
        %v4015 = vrsqrt.pop %v3999
        %v4016 = vmul.f32 %v3856, %v4000
        %v4017 = vmul.f32 %v3857, %v4000
        %v4018 = vmul.f32 %v3858, %v4001
        %v4019 = vmul.f32 %v3859, %v4001
        %v4020 = vmul.f32 %v3860, %v4002
        %v4021 = vmul.f32 %v3861, %v4002
        %v4022 = vmul.f32 %v3862, %v4003
        %v4023 = vmul.f32 %v3863, %v4003
        %v4024 = vmul.f32 %v3864, %v4004
        %v4025 = vmul.f32 %v3865, %v4004
        %v4026 = vmul.f32 %v3866, %v4005
        %v4027 = vmul.f32 %v3867, %v4005
        %v4028 = vmul.f32 %v3868, %v4006
        %v4029 = vmul.f32 %v3869, %v4006
        %v4030 = vmul.f32 %v3870, %v4007
        %v4031 = vmul.f32 %v3871, %v4007
        %v4032 = vmul.f32 %v3872, %v4008
        %v4033 = vmul.f32 %v3873, %v4008
        %v4034 = vmul.f32 %v3874, %v4009
        %v4035 = vmul.f32 %v3875, %v4009
        %v4036 = vmul.f32 %v3876, %v4010
        %v4037 = vmul.f32 %v3877, %v4010
        %v4038 = vmul.f32 %v3878, %v4011
        %v4039 = vmul.f32 %v3879, %v4011
        %v4040 = vmul.f32 %v3880, %v4012
        %v4041 = vmul.f32 %v3881, %v4012
        %v4042 = vmul.f32 %v3882, %v4013
        %v4043 = vmul.f32 %v3883, %v4013
        %v4044 = vmul.f32 %v3884, %v4014
        %v4045 = vmul.f32 %v3885, %v4014
        %v4046 = vmul.f32 %v3886, %v4015
        %v4047 = vmul.f32 %v3887, %v4015
        %4048 = vset.pattern.permute.xlu0 4
        %4049 = vperm.xlu0 %4048, %v572
        %v4050 = vpop.permute.xlu0 %4049
        %4052 = vset.pattern.permute.xlu0 4
        %4053 = vperm.xlu0 %4052, %v573
        %v4054 = vpop.permute.xlu0 %4053
        %4056 = vset.pattern.permute.xlu0 4
        %4057 = vperm.xlu0 %4056, %v574
        %v4058 = vpop.permute.xlu0 %4057
        %4060 = vset.pattern.permute.xlu0 4
        %4061 = vperm.xlu0 %4060, %v575
        %v4062 = vpop.permute.xlu0 %4061
        %4064 = vset.pattern.permute.xlu0 4
        %4065 = vperm.xlu0 %4064, %v576
        %v4066 = vpop.permute.xlu0 %4065
        %4068 = vset.pattern.permute.xlu0 4
        %4069 = vperm.xlu0 %4068, %v577
        %v4070 = vpop.permute.xlu0 %4069
        %4072 = vset.pattern.permute.xlu0 4
        %4073 = vperm.xlu0 %4072, %v578
        %v4074 = vpop.permute.xlu0 %4073
        %4076 = vset.pattern.permute.xlu0 4
        %4077 = vperm.xlu0 %4076, %v579
        %v4078 = vpop.permute.xlu0 %4077
        %4080 = vset.pattern.permute.xlu0 4
        %4081 = vperm.xlu0 %4080, %v580
        %v4082 = vpop.permute.xlu0 %4081
        %4084 = vset.pattern.permute.xlu0 4
        %4085 = vperm.xlu0 %4084, %v581
        %v4086 = vpop.permute.xlu0 %4085
        %4088 = vset.pattern.permute.xlu0 4
        %4089 = vperm.xlu0 %4088, %v582
        %v4090 = vpop.permute.xlu0 %4089
        %4092 = vset.pattern.permute.xlu0 4
        %4093 = vperm.xlu0 %4092, %v583
        %v4094 = vpop.permute.xlu0 %4093
        %4096 = vset.pattern.permute.xlu0 4
        %4097 = vperm.xlu0 %4096, %v584
        %v4098 = vpop.permute.xlu0 %4097
        %4100 = vset.pattern.permute.xlu0 4
        %4101 = vperm.xlu0 %4100, %v585
        %v4102 = vpop.permute.xlu0 %4101
        %4104 = vset.pattern.permute.xlu0 4
        %4105 = vperm.xlu0 %4104, %v586
        %v4106 = vpop.permute.xlu0 %4105
        %4108 = vset.pattern.permute.xlu0 4
        %4109 = vperm.xlu0 %4108, %v587
        %v4110 = vpop.permute.xlu0 %4109
        %v4112 = vmul.f32 %v4016, %v4050
        %v4113 = vmul.f32 %v4017, %v4050
        %v4114 = vmul.f32 %v4018, %v4054
        %v4115 = vmul.f32 %v4019, %v4054
        %v4116 = vmul.f32 %v4020, %v4058
        %v4117 = vmul.f32 %v4021, %v4058
        %v4118 = vmul.f32 %v4022, %v4062
        %v4119 = vmul.f32 %v4023, %v4062
        %v4120 = vmul.f32 %v4024, %v4066
        %v4121 = vmul.f32 %v4025, %v4066
        %v4122 = vmul.f32 %v4026, %v4070
        %v4123 = vmul.f32 %v4027, %v4070
        %v4124 = vmul.f32 %v4028, %v4074
        %v4125 = vmul.f32 %v4029, %v4074
        %v4126 = vmul.f32 %v4030, %v4078
        %v4127 = vmul.f32 %v4031, %v4078
        %v4128 = vmul.f32 %v4032, %v4082
        %v4129 = vmul.f32 %v4033, %v4082
        %v4130 = vmul.f32 %v4034, %v4086
        %v4131 = vmul.f32 %v4035, %v4086
        %v4132 = vmul.f32 %v4036, %v4090
        %v4133 = vmul.f32 %v4037, %v4090
        %v4134 = vmul.f32 %v4038, %v4094
        %v4135 = vmul.f32 %v4039, %v4094
        %v4136 = vmul.f32 %v4040, %v4098
        %v4137 = vmul.f32 %v4041, %v4098
        %v4138 = vmul.f32 %v4042, %v4102
        %v4139 = vmul.f32 %v4043, %v4102
        %v4140 = vmul.f32 %v4044, %v4106
        %v4141 = vmul.f32 %v4045, %v4106
        %v4142 = vmul.f32 %v4046, %v4110
        %v4143 = vmul.f32 %v4047, %v4110
        %4144 = vset.pattern.permute.xlu0 5
        %4145 = vperm.xlu0 %4144, %v572
        %v4146 = vpop.permute.xlu0 %4145
        %4148 = vset.pattern.permute.xlu0 5
        %4149 = vperm.xlu0 %4148, %v573
        %v4150 = vpop.permute.xlu0 %4149
        %4152 = vset.pattern.permute.xlu0 5
        %4153 = vperm.xlu0 %4152, %v574
        %v4154 = vpop.permute.xlu0 %4153
        %4156 = vset.pattern.permute.xlu0 5
        %4157 = vperm.xlu0 %4156, %v575
        %v4158 = vpop.permute.xlu0 %4157
        %4160 = vset.pattern.permute.xlu0 5
        %4161 = vperm.xlu0 %4160, %v576
        %v4162 = vpop.permute.xlu0 %4161
        %4164 = vset.pattern.permute.xlu0 5
        %4165 = vperm.xlu0 %4164, %v577
        %v4166 = vpop.permute.xlu0 %4165
        %4168 = vset.pattern.permute.xlu0 5
        %4169 = vperm.xlu0 %4168, %v578
        %v4170 = vpop.permute.xlu0 %4169
        %4172 = vset.pattern.permute.xlu0 5
        %4173 = vperm.xlu0 %4172, %v579
        %v4174 = vpop.permute.xlu0 %4173
        %4176 = vset.pattern.permute.xlu0 5
        %4177 = vperm.xlu0 %4176, %v580
        %v4178 = vpop.permute.xlu0 %4177
        %4180 = vset.pattern.permute.xlu0 5
        %4181 = vperm.xlu0 %4180, %v581
        %v4182 = vpop.permute.xlu0 %4181
        %4184 = vset.pattern.permute.xlu0 5
        %4185 = vperm.xlu0 %4184, %v582
        %v4186 = vpop.permute.xlu0 %4185
        %4188 = vset.pattern.permute.xlu0 5
        %4189 = vperm.xlu0 %4188, %v583
        %v4190 = vpop.permute.xlu0 %4189
        %4192 = vset.pattern.permute.xlu0 5
        %4193 = vperm.xlu0 %4192, %v584
        %v4194 = vpop.permute.xlu0 %4193
        %4196 = vset.pattern.permute.xlu0 5
        %4197 = vperm.xlu0 %4196, %v585
        %v4198 = vpop.permute.xlu0 %4197
        %4200 = vset.pattern.permute.xlu0 5
        %4201 = vperm.xlu0 %4200, %v586
        %v4202 = vpop.permute.xlu0 %4201
        %4204 = vset.pattern.permute.xlu0 5
        %4205 = vperm.xlu0 %4204, %v587
        %v4206 = vpop.permute.xlu0 %4205
        %v4208 = vadd.f32 %v4112, %v4146
        %v4209 = vadd.f32 %v4113, %v4146
        %v4210 = vadd.f32 %v4114, %v4150
        %v4211 = vadd.f32 %v4115, %v4150
        %v4212 = vadd.f32 %v4116, %v4154
        %v4213 = vadd.f32 %v4117, %v4154
        %v4214 = vadd.f32 %v4118, %v4158
        %v4215 = vadd.f32 %v4119, %v4158
        %v4216 = vadd.f32 %v4120, %v4162
        %v4217 = vadd.f32 %v4121, %v4162
        %v4218 = vadd.f32 %v4122, %v4166
        %v4219 = vadd.f32 %v4123, %v4166
        %v4220 = vadd.f32 %v4124, %v4170
        %v4221 = vadd.f32 %v4125, %v4170
        %v4222 = vadd.f32 %v4126, %v4174
        %v4223 = vadd.f32 %v4127, %v4174
        %v4224 = vadd.f32 %v4128, %v4178
        %v4225 = vadd.f32 %v4129, %v4178
        %v4226 = vadd.f32 %v4130, %v4182
        %v4227 = vadd.f32 %v4131, %v4182
        %v4228 = vadd.f32 %v4132, %v4186
        %v4229 = vadd.f32 %v4133, %v4186
        %v4230 = vadd.f32 %v4134, %v4190
        %v4231 = vadd.f32 %v4135, %v4190
        %v4232 = vadd.f32 %v4136, %v4194
        %v4233 = vadd.f32 %v4137, %v4194
        %v4234 = vadd.f32 %v4138, %v4198
        %v4235 = vadd.f32 %v4139, %v4198
        %v4236 = vadd.f32 %v4140, %v4202
        %v4237 = vadd.f32 %v4141, %v4202
        %v4238 = vadd.f32 %v4142, %v4206
        %v4239 = vadd.f32 %v4143, %v4206
        %v4240 = vmax.f32 %v4208, 0.0
        %v4241 = vmax.f32 %v4209, 0.0
        %v4242 = vmax.f32 %v4210, 0.0
        %v4243 = vmax.f32 %v4211, 0.0
        %v4244 = vmax.f32 %v4212, 0.0
        %v4245 = vmax.f32 %v4213, 0.0
        %v4246 = vmax.f32 %v4214, 0.0
        %v4247 = vmax.f32 %v4215, 0.0
        %v4248 = vmax.f32 %v4216, 0.0
        %v4249 = vmax.f32 %v4217, 0.0
        %v4250 = vmax.f32 %v4218, 0.0
        %v4251 = vmax.f32 %v4219, 0.0
        %v4252 = vmax.f32 %v4220, 0.0
        %v4253 = vmax.f32 %v4221, 0.0
        %v4254 = vmax.f32 %v4222, 0.0
        %v4255 = vmax.f32 %v4223, 0.0
        %v4256 = vmax.f32 %v4224, 0.0
        %v4257 = vmax.f32 %v4225, 0.0
        %v4258 = vmax.f32 %v4226, 0.0
        %v4259 = vmax.f32 %v4227, 0.0
        %v4260 = vmax.f32 %v4228, 0.0
        %v4261 = vmax.f32 %v4229, 0.0
        %v4262 = vmax.f32 %v4230, 0.0
        %v4263 = vmax.f32 %v4231, 0.0
        %v4264 = vmax.f32 %v4232, 0.0
        %v4265 = vmax.f32 %v4233, 0.0
        %v4266 = vmax.f32 %v4234, 0.0
        %v4267 = vmax.f32 %v4235, 0.0
        %v4268 = vmax.f32 %v4236, 0.0
        %v4269 = vmax.f32 %v4237, 0.0
        %v4270 = vmax.f32 %v4238, 0.0
        %v4271 = vmax.f32 %v4239, 0.0
        %4272 = vrot.lane.b32.xlu0 %v4240, 17
        %v4273 = vpop.permute.xlu0 %4272
        %4274 = vrot.lane.b32.xlu0 %v4242, 17
        %v4275 = vpop.permute.xlu0 %4274
        %4276 = vrot.lane.b32.xlu0 %v4244, 17
        %v4277 = vpop.permute.xlu0 %4276
        %4278 = vrot.lane.b32.xlu0 %v4246, 17
        %v4279 = vpop.permute.xlu0 %4278
        %4280 = vrot.lane.b32.xlu0 %v4248, 17
        %v4281 = vpop.permute.xlu0 %4280
        %4282 = vrot.lane.b32.xlu0 %v4250, 17
        %v4283 = vpop.permute.xlu0 %4282
        %4284 = vrot.lane.b32.xlu0 %v4252, 17
        %v4285 = vpop.permute.xlu0 %4284
        %4286 = vrot.lane.b32.xlu0 %v4254, 17
        %v4287 = vpop.permute.xlu0 %4286
        %4288 = vrot.lane.b32.xlu0 %v4256, 17
        %v4289 = vpop.permute.xlu0 %4288
        %4290 = vrot.lane.b32.xlu0 %v4258, 17
        %v4291 = vpop.permute.xlu0 %4290
        %4292 = vrot.lane.b32.xlu0 %v4260, 17
        %v4293 = vpop.permute.xlu0 %4292
        %4294 = vrot.lane.b32.xlu0 %v4262, 17
        %v4295 = vpop.permute.xlu0 %4294
        %4296 = vrot.lane.b32.xlu0 %v4264, 17
        %v4297 = vpop.permute.xlu0 %4296
        %4298 = vrot.lane.b32.xlu0 %v4266, 17
        %v4299 = vpop.permute.xlu0 %4298
        %4300 = vrot.lane.b32.xlu0 %v4268, 17
        %v4301 = vpop.permute.xlu0 %4300
        %4302 = vrot.lane.b32.xlu0 %v4270, 17
        %v4303 = vpop.permute.xlu0 %4302
        %4304 = vrot.lane.b32.xlu0 %v4241, 17
        %v4305 = vpop.permute.xlu0 %4304
        %4306 = vrot.lane.b32.xlu0 %v4243, 17
        %v4307 = vpop.permute.xlu0 %4306
        %4308 = vrot.lane.b32.xlu0 %v4245, 17
        %v4309 = vpop.permute.xlu0 %4308
        %4310 = vrot.lane.b32.xlu0 %v4247, 17
        %v4311 = vpop.permute.xlu0 %4310
        %4312 = vrot.lane.b32.xlu0 %v4249, 17
        %v4313 = vpop.permute.xlu0 %4312
        %4314 = vrot.lane.b32.xlu0 %v4251, 17
        %v4315 = vpop.permute.xlu0 %4314
        %4316 = vrot.lane.b32.xlu0 %v4253, 17
        %v4317 = vpop.permute.xlu0 %4316
        %4318 = vrot.lane.b32.xlu0 %v4255, 17
        %v4319 = vpop.permute.xlu0 %4318
        %4320 = vrot.lane.b32.xlu0 %v4257, 17
        %v4321 = vpop.permute.xlu0 %4320
        %4322 = vrot.lane.b32.xlu0 %v4259, 17
        %v4323 = vpop.permute.xlu0 %4322
        %4324 = vrot.lane.b32.xlu0 %v4261, 17
        %v4325 = vpop.permute.xlu0 %4324
        %4326 = vrot.lane.b32.xlu0 %v4263, 17
        %v4327 = vpop.permute.xlu0 %4326
        %4328 = vrot.lane.b32.xlu0 %v4265, 17
        %v4329 = vpop.permute.xlu0 %4328
        %4330 = vrot.lane.b32.xlu0 %v4267, 17
        %v4331 = vpop.permute.xlu0 %4330
        %4332 = vrot.lane.b32.xlu0 %v4269, 17
        %v4333 = vpop.permute.xlu0 %4332
        %4334 = vrot.lane.b32.xlu0 %v4271, 17
        %v4335 = vpop.permute.xlu0 %4334
        %v4336 = vsel %vm1315, %v4273, %v4305
        %v4337 = vsel %vm1315, %v4275, %v4307
        %v4338 = vsel %vm1315, %v4277, %v4309
        %v4339 = vsel %vm1315, %v4279, %v4311
        %v4340 = vsel %vm1315, %v4281, %v4313
        %v4341 = vsel %vm1315, %v4283, %v4315
        %v4342 = vsel %vm1315, %v4285, %v4317
        %v4343 = vsel %vm1315, %v4287, %v4319
        %v4344 = vsel %vm1315, %v4289, %v4321
        %v4345 = vsel %vm1315, %v4291, %v4323
        %v4346 = vsel %vm1315, %v4293, %v4325
        %v4347 = vsel %vm1315, %v4295, %v4327
        %v4348 = vsel %vm1315, %v4297, %v4329
        %v4349 = vsel %vm1315, %v4299, %v4331
        %v4350 = vsel %vm1315, %v4301, %v4333
        %v4351 = vsel %vm1315, %v4303, %v4335
        %v4352 = vsel %vm1315, %v4305, %v4273
        %v4353 = vsel %vm1315, %v4307, %v4275
        %v4354 = vsel %vm1315, %v4309, %v4277
        %v4355 = vsel %vm1315, %v4311, %v4279
        %v4356 = vsel %vm1315, %v4313, %v4281
        %v4357 = vsel %vm1315, %v4315, %v4283
        %v4358 = vsel %vm1315, %v4317, %v4285
        %v4359 = vsel %vm1315, %v4319, %v4287
        %v4360 = vsel %vm1315, %v4321, %v4289
        %v4361 = vsel %vm1315, %v4323, %v4291
        %v4362 = vsel %vm1315, %v4325, %v4293
        %v4363 = vsel %vm1315, %v4327, %v4295
        %v4364 = vsel %vm1315, %v4329, %v4297
        %v4365 = vsel %vm1315, %v4331, %v4299
        %v4366 = vsel %vm1315, %v4333, %v4301
        %v4367 = vsel %vm1315, %v4335, %v4303
        %v4368 = vmul.f32 %v4352, %v1351
        %v4369 = vmul.f32 %v4336, %v1355
        %v4370 = vmul.f32 %v4353, %v1351
        %v4371 = vmul.f32 %v4337, %v1355
        %v4372 = vmul.f32 %v4354, %v1351
        %v4373 = vmul.f32 %v4338, %v1355
        %v4374 = vmul.f32 %v4355, %v1351
        %v4375 = vmul.f32 %v4339, %v1355
        %v4376 = vmul.f32 %v4356, %v1351
        %v4377 = vmul.f32 %v4340, %v1355
        %v4378 = vmul.f32 %v4357, %v1351
        %v4379 = vmul.f32 %v4341, %v1355
        %v4380 = vmul.f32 %v4358, %v1351
        %v4381 = vmul.f32 %v4342, %v1355
        %v4382 = vmul.f32 %v4359, %v1351
        %v4383 = vmul.f32 %v4343, %v1355
        %v4384 = vmul.f32 %v4360, %v1351
        %v4385 = vmul.f32 %v4344, %v1355
        %v4386 = vmul.f32 %v4361, %v1351
        %v4387 = vmul.f32 %v4345, %v1355
        %v4388 = vmul.f32 %v4362, %v1351
        %v4389 = vmul.f32 %v4346, %v1355
        %v4390 = vmul.f32 %v4363, %v1351
        %v4391 = vmul.f32 %v4347, %v1355
        %v4392 = vmul.f32 %v4364, %v1351
        %v4393 = vmul.f32 %v4348, %v1355
        %v4394 = vmul.f32 %v4365, %v1351
        %v4395 = vmul.f32 %v4349, %v1355
        %v4396 = vmul.f32 %v4366, %v1351
        %v4397 = vmul.f32 %v4350, %v1355
        %v4398 = vmul.f32 %v4367, %v1351
        %v4399 = vmul.f32 %v4351, %v1355
        %v4400 = vpack.c.bf16 %v4370, %v4368
        %v4401 = vpack.c.bf16 %v4371, %v4369
        %v4402 = vpack.c.bf16 %v4374, %v4372
        %v4403 = vpack.c.bf16 %v4375, %v4373
        %v4404 = vpack.c.bf16 %v4378, %v4376
        %v4405 = vpack.c.bf16 %v4379, %v4377
        %v4406 = vpack.c.bf16 %v4382, %v4380
        %v4407 = vpack.c.bf16 %v4383, %v4381
        %v4408 = vpack.c.bf16 %v4386, %v4384
        %v4409 = vpack.c.bf16 %v4387, %v4385
        %v4410 = vpack.c.bf16 %v4390, %v4388
        %v4411 = vpack.c.bf16 %v4391, %v4389
        %v4412 = vpack.c.bf16 %v4394, %v4392
        %v4413 = vpack.c.bf16 %v4395, %v4393
        %v4414 = vpack.c.bf16 %v4398, %v4396
        %v4415 = vpack.c.bf16 %v4399, %v4397
        %4416 = vst [vmem:[#allocation2] sm:$0xff] %v4400
        %4417 = vst [vmem:[#allocation2 + $0x8] sm:$0xff] %v4401
        %4418 = vst [vmem:[#allocation2 + $0x10] sm:$0xff] %v4402
        %4419 = vst [vmem:[#allocation2 + $0x18] sm:$0xff] %v4403
        %4420 = vst [vmem:[#allocation2 + $0x20] sm:$0xff] %v4404
        %4421 = vst [vmem:[#allocation2 + $0x28] sm:$0xff] %v4405
        %4422 = vst [vmem:[#allocation2 + $0x30] sm:$0xff] %v4406
        %4423 = vst [vmem:[#allocation2 + $0x38] sm:$0xff] %v4407
        %4424 = vst [vmem:[#allocation2 + $0x40] sm:$0xff] %v4408
        %4425 = vst [vmem:[#allocation2 + $0x48] sm:$0xff] %v4409
        %4426 = vst [vmem:[#allocation2 + $0x50] sm:$0xff] %v4410
        %4427 = vst [vmem:[#allocation2 + $0x58] sm:$0xff] %v4411
        %4428 = vst [vmem:[#allocation2 + $0x60] sm:$0xff] %v4412
        %4429 = vst [vmem:[#allocation2 + $0x68] sm:$0xff] %v4413
        %4430 = vst [vmem:[#allocation2 + $0x70] sm:$0xff] %v4414
        %4431 = vst [vmem:[#allocation2 + $0x78] sm:$0xff] %v4415
        %4432 = vrot.lane.b32.xlu0 %v4240, 16
        %v4433 = vpop.permute.xlu0 %4432
        %4434 = vrot.lane.b32.xlu0 %v4242, 16
        %v4435 = vpop.permute.xlu0 %4434
        %4436 = vrot.lane.b32.xlu0 %v4244, 16
        %v4437 = vpop.permute.xlu0 %4436
        %4438 = vrot.lane.b32.xlu0 %v4246, 16
        %v4439 = vpop.permute.xlu0 %4438
        %4440 = vrot.lane.b32.xlu0 %v4248, 16
        %v4441 = vpop.permute.xlu0 %4440
        %4442 = vrot.lane.b32.xlu0 %v4250, 16
        %v4443 = vpop.permute.xlu0 %4442
        %4444 = vrot.lane.b32.xlu0 %v4252, 16
        %v4445 = vpop.permute.xlu0 %4444
        %4446 = vrot.lane.b32.xlu0 %v4254, 16
        %v4447 = vpop.permute.xlu0 %4446
        %4448 = vrot.lane.b32.xlu0 %v4256, 16
        %v4449 = vpop.permute.xlu0 %4448
        %4450 = vrot.lane.b32.xlu0 %v4258, 16
        %v4451 = vpop.permute.xlu0 %4450
        %4452 = vrot.lane.b32.xlu0 %v4260, 16
        %v4453 = vpop.permute.xlu0 %4452
        %4454 = vrot.lane.b32.xlu0 %v4262, 16
        %v4455 = vpop.permute.xlu0 %4454
        %4456 = vrot.lane.b32.xlu0 %v4264, 16
        %v4457 = vpop.permute.xlu0 %4456
        %4458 = vrot.lane.b32.xlu0 %v4266, 16
        %v4459 = vpop.permute.xlu0 %4458
        %4460 = vrot.lane.b32.xlu0 %v4268, 16
        %v4461 = vpop.permute.xlu0 %4460
        %4462 = vrot.lane.b32.xlu0 %v4270, 16
        %v4463 = vpop.permute.xlu0 %4462
        %4464 = vrot.lane.b32.xlu0 %v4241, 16
        %v4465 = vpop.permute.xlu0 %4464
        %4466 = vrot.lane.b32.xlu0 %v4243, 16
        %v4467 = vpop.permute.xlu0 %4466
        %4468 = vrot.lane.b32.xlu0 %v4245, 16
        %v4469 = vpop.permute.xlu0 %4468
        %4470 = vrot.lane.b32.xlu0 %v4247, 16
        %v4471 = vpop.permute.xlu0 %4470
        %4472 = vrot.lane.b32.xlu0 %v4249, 16
        %v4473 = vpop.permute.xlu0 %4472
        %4474 = vrot.lane.b32.xlu0 %v4251, 16
        %v4475 = vpop.permute.xlu0 %4474
        %4476 = vrot.lane.b32.xlu0 %v4253, 16
        %v4477 = vpop.permute.xlu0 %4476
        %4478 = vrot.lane.b32.xlu0 %v4255, 16
        %v4479 = vpop.permute.xlu0 %4478
        %4480 = vrot.lane.b32.xlu0 %v4257, 16
        %v4481 = vpop.permute.xlu0 %4480
        %4482 = vrot.lane.b32.xlu0 %v4259, 16
        %v4483 = vpop.permute.xlu0 %4482
        %4484 = vrot.lane.b32.xlu0 %v4261, 16
        %v4485 = vpop.permute.xlu0 %4484
        %4486 = vrot.lane.b32.xlu0 %v4263, 16
        %v4487 = vpop.permute.xlu0 %4486
        %4488 = vrot.lane.b32.xlu0 %v4265, 16
        %v4489 = vpop.permute.xlu0 %4488
        %4490 = vrot.lane.b32.xlu0 %v4267, 16
        %v4491 = vpop.permute.xlu0 %4490
        %4492 = vrot.lane.b32.xlu0 %v4269, 16
        %v4493 = vpop.permute.xlu0 %4492
        %4494 = vrot.lane.b32.xlu0 %v4271, 16
        %v4495 = vpop.permute.xlu0 %4494
        %v4496 = vsel %vm1484, %v4433, %v4465
        %v4497 = vsel %vm1484, %v4435, %v4467
        %v4498 = vsel %vm1484, %v4437, %v4469
        %v4499 = vsel %vm1484, %v4439, %v4471
        %v4500 = vsel %vm1484, %v4441, %v4473
        %v4501 = vsel %vm1484, %v4443, %v4475
        %v4502 = vsel %vm1484, %v4445, %v4477
        %v4503 = vsel %vm1484, %v4447, %v4479
        %v4504 = vsel %vm1484, %v4449, %v4481
        %v4505 = vsel %vm1484, %v4451, %v4483
        %v4506 = vsel %vm1484, %v4453, %v4485
        %v4507 = vsel %vm1484, %v4455, %v4487
        %v4508 = vsel %vm1484, %v4457, %v4489
        %v4509 = vsel %vm1484, %v4459, %v4491
        %v4510 = vsel %vm1484, %v4461, %v4493
        %v4511 = vsel %vm1484, %v4463, %v4495
        %v4512 = vsel %vm1484, %v4465, %v4433
        %v4513 = vsel %vm1484, %v4467, %v4435
        %v4514 = vsel %vm1484, %v4469, %v4437
        %v4515 = vsel %vm1484, %v4471, %v4439
        %v4516 = vsel %vm1484, %v4473, %v4441
        %v4517 = vsel %vm1484, %v4475, %v4443
        %v4518 = vsel %vm1484, %v4477, %v4445
        %v4519 = vsel %vm1484, %v4479, %v4447
        %v4520 = vsel %vm1484, %v4481, %v4449
        %v4521 = vsel %vm1484, %v4483, %v4451
        %v4522 = vsel %vm1484, %v4485, %v4453
        %v4523 = vsel %vm1484, %v4487, %v4455
        %v4524 = vsel %vm1484, %v4489, %v4457
        %v4525 = vsel %vm1484, %v4491, %v4459
        %v4526 = vsel %vm1484, %v4493, %v4461
        %v4527 = vsel %vm1484, %v4495, %v4463
        %v4528 = vmul.f32 %v4512, %v1520
        %v4529 = vmul.f32 %v4496, %v1524
        %v4530 = vmul.f32 %v4513, %v1520
        %v4531 = vmul.f32 %v4497, %v1524
        %v4532 = vmul.f32 %v4514, %v1520
        %v4533 = vmul.f32 %v4498, %v1524
        %v4534 = vmul.f32 %v4515, %v1520
        %v4535 = vmul.f32 %v4499, %v1524
        %v4536 = vmul.f32 %v4516, %v1520
        %v4537 = vmul.f32 %v4500, %v1524
        %v4538 = vmul.f32 %v4517, %v1520
        %v4539 = vmul.f32 %v4501, %v1524
        %v4540 = vmul.f32 %v4518, %v1520
        %v4541 = vmul.f32 %v4502, %v1524
        %v4542 = vmul.f32 %v4519, %v1520
        %v4543 = vmul.f32 %v4503, %v1524
        %v4544 = vmul.f32 %v4520, %v1520
        %v4545 = vmul.f32 %v4504, %v1524
        %v4546 = vmul.f32 %v4521, %v1520
        %v4547 = vmul.f32 %v4505, %v1524
        %v4548 = vmul.f32 %v4522, %v1520
        %v4549 = vmul.f32 %v4506, %v1524
        %v4550 = vmul.f32 %v4523, %v1520
        %v4551 = vmul.f32 %v4507, %v1524
        %v4552 = vmul.f32 %v4524, %v1520
        %v4553 = vmul.f32 %v4508, %v1524
        %v4554 = vmul.f32 %v4525, %v1520
        %v4555 = vmul.f32 %v4509, %v1524
        %v4556 = vmul.f32 %v4526, %v1520
        %v4557 = vmul.f32 %v4510, %v1524
        %v4558 = vmul.f32 %v4527, %v1520
        %v4559 = vmul.f32 %v4511, %v1524
        %v4560 = vpack.c.bf16 %v4530, %v4528
        %v4561 = vpack.c.bf16 %v4531, %v4529
        %v4562 = vpack.c.bf16 %v4534, %v4532
        %v4563 = vpack.c.bf16 %v4535, %v4533
        %v4564 = vpack.c.bf16 %v4538, %v4536
        %v4565 = vpack.c.bf16 %v4539, %v4537
        %v4566 = vpack.c.bf16 %v4542, %v4540
        %v4567 = vpack.c.bf16 %v4543, %v4541
        %v4568 = vpack.c.bf16 %v4546, %v4544
        %v4569 = vpack.c.bf16 %v4547, %v4545
        %v4570 = vpack.c.bf16 %v4550, %v4548
        %v4571 = vpack.c.bf16 %v4551, %v4549
        %v4572 = vpack.c.bf16 %v4554, %v4552
        %v4573 = vpack.c.bf16 %v4555, %v4553
        %v4574 = vpack.c.bf16 %v4558, %v4556
        %v4575 = vpack.c.bf16 %v4559, %v4557
        %4576 = vst [vmem:[#allocation2 + $0x80] sm:$0xff] %v4560
        %4577 = vst [vmem:[#allocation2 + $0x88] sm:$0xff] %v4561
        %4578 = vst [vmem:[#allocation2 + $0x90] sm:$0xff] %v4562
        %4579 = vst [vmem:[#allocation2 + $0x98] sm:$0xff] %v4563
        %4580 = vst [vmem:[#allocation2 + $0xa0] sm:$0xff] %v4564
        %4581 = vst [vmem:[#allocation2 + $0xa8] sm:$0xff] %v4565
        %4582 = vst [vmem:[#allocation2 + $0xb0] sm:$0xff] %v4566
        %4583 = vst [vmem:[#allocation2 + $0xb8] sm:$0xff] %v4567
        %4584 = vst [vmem:[#allocation2 + $0xc0] sm:$0xff] %v4568
        %4585 = vst [vmem:[#allocation2 + $0xc8] sm:$0xff] %v4569
        %4586 = vst [vmem:[#allocation2 + $0xd0] sm:$0xff] %v4570
        %4587 = vst [vmem:[#allocation2 + $0xd8] sm:$0xff] %v4571
        %4588 = vst [vmem:[#allocation2 + $0xe0] sm:$0xff] %v4572
        %4589 = vst [vmem:[#allocation2 + $0xe8] sm:$0xff] %v4573
        %4590 = vst [vmem:[#allocation2 + $0xf0] sm:$0xff] %v4574
        %4591 = vst [vmem:[#allocation2 + $0xf8] sm:$0xff] %v4575
        %4592 = vrot.lane.b32.xlu0 %v4240, 15
        %v4593 = vpop.permute.xlu0 %4592
        %4594 = vrot.lane.b32.xlu0 %v4242, 15
        %v4595 = vpop.permute.xlu0 %4594
        %4596 = vrot.lane.b32.xlu0 %v4244, 15
        %v4597 = vpop.permute.xlu0 %4596
        %4598 = vrot.lane.b32.xlu0 %v4246, 15
        %v4599 = vpop.permute.xlu0 %4598
        %4600 = vrot.lane.b32.xlu0 %v4248, 15
        %v4601 = vpop.permute.xlu0 %4600
        %4602 = vrot.lane.b32.xlu0 %v4250, 15
        %v4603 = vpop.permute.xlu0 %4602
        %4604 = vrot.lane.b32.xlu0 %v4252, 15
        %v4605 = vpop.permute.xlu0 %4604
        %4606 = vrot.lane.b32.xlu0 %v4254, 15
        %v4607 = vpop.permute.xlu0 %4606
        %4608 = vrot.lane.b32.xlu0 %v4256, 15
        %v4609 = vpop.permute.xlu0 %4608
        %4610 = vrot.lane.b32.xlu0 %v4258, 15
        %v4611 = vpop.permute.xlu0 %4610
        %4612 = vrot.lane.b32.xlu0 %v4260, 15
        %v4613 = vpop.permute.xlu0 %4612
        %4614 = vrot.lane.b32.xlu0 %v4262, 15
        %v4615 = vpop.permute.xlu0 %4614
        %4616 = vrot.lane.b32.xlu0 %v4264, 15
        %v4617 = vpop.permute.xlu0 %4616
        %4618 = vrot.lane.b32.xlu0 %v4266, 15
        %v4619 = vpop.permute.xlu0 %4618
        %4620 = vrot.lane.b32.xlu0 %v4268, 15
        %v4621 = vpop.permute.xlu0 %4620
        %4622 = vrot.lane.b32.xlu0 %v4270, 15
        %v4623 = vpop.permute.xlu0 %4622
        %4624 = vrot.lane.b32.xlu0 %v4241, 15
        %v4625 = vpop.permute.xlu0 %4624
        %4626 = vrot.lane.b32.xlu0 %v4243, 15
        %v4627 = vpop.permute.xlu0 %4626
        %4628 = vrot.lane.b32.xlu0 %v4245, 15
        %v4629 = vpop.permute.xlu0 %4628
        %4630 = vrot.lane.b32.xlu0 %v4247, 15
        %v4631 = vpop.permute.xlu0 %4630
        %4632 = vrot.lane.b32.xlu0 %v4249, 15
        %v4633 = vpop.permute.xlu0 %4632
        %4634 = vrot.lane.b32.xlu0 %v4251, 15
        %v4635 = vpop.permute.xlu0 %4634
        %4636 = vrot.lane.b32.xlu0 %v4253, 15
        %v4637 = vpop.permute.xlu0 %4636
        %4638 = vrot.lane.b32.xlu0 %v4255, 15
        %v4639 = vpop.permute.xlu0 %4638
        %4640 = vrot.lane.b32.xlu0 %v4257, 15
        %v4641 = vpop.permute.xlu0 %4640
        %4642 = vrot.lane.b32.xlu0 %v4259, 15
        %v4643 = vpop.permute.xlu0 %4642
        %4644 = vrot.lane.b32.xlu0 %v4261, 15
        %v4645 = vpop.permute.xlu0 %4644
        %4646 = vrot.lane.b32.xlu0 %v4263, 15
        %v4647 = vpop.permute.xlu0 %4646
        %4648 = vrot.lane.b32.xlu0 %v4265, 15
        %v4649 = vpop.permute.xlu0 %4648
        %4650 = vrot.lane.b32.xlu0 %v4267, 15
        %v4651 = vpop.permute.xlu0 %4650
        %4652 = vrot.lane.b32.xlu0 %v4269, 15
        %v4653 = vpop.permute.xlu0 %4652
        %4654 = vrot.lane.b32.xlu0 %v4271, 15
        %v4655 = vpop.permute.xlu0 %4654
        %v4656 = vsel %vm1653, %v4593, %v4625
        %v4657 = vsel %vm1653, %v4595, %v4627
        %v4658 = vsel %vm1653, %v4597, %v4629
        %v4659 = vsel %vm1653, %v4599, %v4631
        %v4660 = vsel %vm1653, %v4601, %v4633
        %v4661 = vsel %vm1653, %v4603, %v4635
        %v4662 = vsel %vm1653, %v4605, %v4637
        %v4663 = vsel %vm1653, %v4607, %v4639
        %v4664 = vsel %vm1653, %v4609, %v4641
        %v4665 = vsel %vm1653, %v4611, %v4643
        %v4666 = vsel %vm1653, %v4613, %v4645
        %v4667 = vsel %vm1653, %v4615, %v4647
        %v4668 = vsel %vm1653, %v4617, %v4649
        %v4669 = vsel %vm1653, %v4619, %v4651
        %v4670 = vsel %vm1653, %v4621, %v4653
        %v4671 = vsel %vm1653, %v4623, %v4655
        %v4672 = vsel %vm1653, %v4625, %v4593
        %v4673 = vsel %vm1653, %v4627, %v4595
        %v4674 = vsel %vm1653, %v4629, %v4597
        %v4675 = vsel %vm1653, %v4631, %v4599
        %v4676 = vsel %vm1653, %v4633, %v4601
        %v4677 = vsel %vm1653, %v4635, %v4603
        %v4678 = vsel %vm1653, %v4637, %v4605
        %v4679 = vsel %vm1653, %v4639, %v4607
        %v4680 = vsel %vm1653, %v4641, %v4609
        %v4681 = vsel %vm1653, %v4643, %v4611
        %v4682 = vsel %vm1653, %v4645, %v4613
        %v4683 = vsel %vm1653, %v4647, %v4615
        %v4684 = vsel %vm1653, %v4649, %v4617
        %v4685 = vsel %vm1653, %v4651, %v4619
        %v4686 = vsel %vm1653, %v4653, %v4621
        %v4687 = vsel %vm1653, %v4655, %v4623
        %v4688 = vmul.f32 %v4672, %v1689
        %v4689 = vmul.f32 %v4656, %v1693
        %v4690 = vmul.f32 %v4673, %v1689
        %v4691 = vmul.f32 %v4657, %v1693
        %v4692 = vmul.f32 %v4674, %v1689
        %v4693 = vmul.f32 %v4658, %v1693
        %v4694 = vmul.f32 %v4675, %v1689
        %v4695 = vmul.f32 %v4659, %v1693
        %v4696 = vmul.f32 %v4676, %v1689
        %v4697 = vmul.f32 %v4660, %v1693
        %v4698 = vmul.f32 %v4677, %v1689
        %v4699 = vmul.f32 %v4661, %v1693
        %v4700 = vmul.f32 %v4678, %v1689
        %v4701 = vmul.f32 %v4662, %v1693
        %v4702 = vmul.f32 %v4679, %v1689
        %v4703 = vmul.f32 %v4663, %v1693
        %v4704 = vmul.f32 %v4680, %v1689
        %v4705 = vmul.f32 %v4664, %v1693
        %v4706 = vmul.f32 %v4681, %v1689
        %v4707 = vmul.f32 %v4665, %v1693
        %v4708 = vmul.f32 %v4682, %v1689
        %v4709 = vmul.f32 %v4666, %v1693
        %v4710 = vmul.f32 %v4683, %v1689
        %v4711 = vmul.f32 %v4667, %v1693
        %v4712 = vmul.f32 %v4684, %v1689
        %v4713 = vmul.f32 %v4668, %v1693
        %v4714 = vmul.f32 %v4685, %v1689
        %v4715 = vmul.f32 %v4669, %v1693
        %v4716 = vmul.f32 %v4686, %v1689
        %v4717 = vmul.f32 %v4670, %v1693
        %v4718 = vmul.f32 %v4687, %v1689
        %v4719 = vmul.f32 %v4671, %v1693
        %v4720 = vpack.c.bf16 %v4690, %v4688
        %v4721 = vpack.c.bf16 %v4691, %v4689
        %v4722 = vpack.c.bf16 %v4694, %v4692
        %v4723 = vpack.c.bf16 %v4695, %v4693
        %v4724 = vpack.c.bf16 %v4698, %v4696
        %v4725 = vpack.c.bf16 %v4699, %v4697
        %v4726 = vpack.c.bf16 %v4702, %v4700
        %v4727 = vpack.c.bf16 %v4703, %v4701
        %v4728 = vpack.c.bf16 %v4706, %v4704
        %v4729 = vpack.c.bf16 %v4707, %v4705
        %v4730 = vpack.c.bf16 %v4710, %v4708
        %v4731 = vpack.c.bf16 %v4711, %v4709
        %v4732 = vpack.c.bf16 %v4714, %v4712
        %v4733 = vpack.c.bf16 %v4715, %v4713
        %v4734 = vpack.c.bf16 %v4718, %v4716
        %v4735 = vpack.c.bf16 %v4719, %v4717
        %4736 = vst [vmem:[#allocation2 + $0x100] sm:$0xff] %v4720
        %4737 = vst [vmem:[#allocation2 + $0x108] sm:$0xff] %v4721
        %4738 = vst [vmem:[#allocation2 + $0x110] sm:$0xff] %v4722
        %4739 = vst [vmem:[#allocation2 + $0x118] sm:$0xff] %v4723
        %4740 = vst [vmem:[#allocation2 + $0x120] sm:$0xff] %v4724
        %4741 = vst [vmem:[#allocation2 + $0x128] sm:$0xff] %v4725
        %4742 = vst [vmem:[#allocation2 + $0x130] sm:$0xff] %v4726
        %4743 = vst [vmem:[#allocation2 + $0x138] sm:$0xff] %v4727
        %4744 = vst [vmem:[#allocation2 + $0x140] sm:$0xff] %v4728
        %4745 = vst [vmem:[#allocation2 + $0x148] sm:$0xff] %v4729
        %4746 = vst [vmem:[#allocation2 + $0x150] sm:$0xff] %v4730
        %4747 = vst [vmem:[#allocation2 + $0x158] sm:$0xff] %v4731
        %4748 = vst [vmem:[#allocation2 + $0x160] sm:$0xff] %v4732
        %4749 = vst [vmem:[#allocation2 + $0x168] sm:$0xff] %v4733
        %4750 = vst [vmem:[#allocation2 + $0x170] sm:$0xff] %v4734
        %4751 = vst [vmem:[#allocation2 + $0x178] sm:$0xff] %v4735
        %4752 = vrot.lane.b32.xlu0 %v4240, 1
        %v4753 = vpop.permute.xlu0 %4752
        %4754 = vrot.lane.b32.xlu0 %v4242, 1
        %v4755 = vpop.permute.xlu0 %4754
        %4756 = vrot.lane.b32.xlu0 %v4244, 1
        %v4757 = vpop.permute.xlu0 %4756
        %4758 = vrot.lane.b32.xlu0 %v4246, 1
        %v4759 = vpop.permute.xlu0 %4758
        %4760 = vrot.lane.b32.xlu0 %v4248, 1
        %v4761 = vpop.permute.xlu0 %4760
        %4762 = vrot.lane.b32.xlu0 %v4250, 1
        %v4763 = vpop.permute.xlu0 %4762
        %4764 = vrot.lane.b32.xlu0 %v4252, 1
        %v4765 = vpop.permute.xlu0 %4764
        %4766 = vrot.lane.b32.xlu0 %v4254, 1
        %v4767 = vpop.permute.xlu0 %4766
        %4768 = vrot.lane.b32.xlu0 %v4256, 1
        %v4769 = vpop.permute.xlu0 %4768
        %4770 = vrot.lane.b32.xlu0 %v4258, 1
        %v4771 = vpop.permute.xlu0 %4770
        %4772 = vrot.lane.b32.xlu0 %v4260, 1
        %v4773 = vpop.permute.xlu0 %4772
        %4774 = vrot.lane.b32.xlu0 %v4262, 1
        %v4775 = vpop.permute.xlu0 %4774
        %4776 = vrot.lane.b32.xlu0 %v4264, 1
        %v4777 = vpop.permute.xlu0 %4776
        %4778 = vrot.lane.b32.xlu0 %v4266, 1
        %v4779 = vpop.permute.xlu0 %4778
        %4780 = vrot.lane.b32.xlu0 %v4268, 1
        %v4781 = vpop.permute.xlu0 %4780
        %4782 = vrot.lane.b32.xlu0 %v4270, 1
        %v4783 = vpop.permute.xlu0 %4782
        %4784 = vrot.lane.b32.xlu0 %v4241, 1
        %v4785 = vpop.permute.xlu0 %4784
        %4786 = vrot.lane.b32.xlu0 %v4243, 1
        %v4787 = vpop.permute.xlu0 %4786
        %4788 = vrot.lane.b32.xlu0 %v4245, 1
        %v4789 = vpop.permute.xlu0 %4788
        %4790 = vrot.lane.b32.xlu0 %v4247, 1
        %v4791 = vpop.permute.xlu0 %4790
        %4792 = vrot.lane.b32.xlu0 %v4249, 1
        %v4793 = vpop.permute.xlu0 %4792
        %4794 = vrot.lane.b32.xlu0 %v4251, 1
        %v4795 = vpop.permute.xlu0 %4794
        %4796 = vrot.lane.b32.xlu0 %v4253, 1
        %v4797 = vpop.permute.xlu0 %4796
        %4798 = vrot.lane.b32.xlu0 %v4255, 1
        %v4799 = vpop.permute.xlu0 %4798
        %4800 = vrot.lane.b32.xlu0 %v4257, 1
        %v4801 = vpop.permute.xlu0 %4800
        %4802 = vrot.lane.b32.xlu0 %v4259, 1
        %v4803 = vpop.permute.xlu0 %4802
        %4804 = vrot.lane.b32.xlu0 %v4261, 1
        %v4805 = vpop.permute.xlu0 %4804
        %4806 = vrot.lane.b32.xlu0 %v4263, 1
        %v4807 = vpop.permute.xlu0 %4806
        %4808 = vrot.lane.b32.xlu0 %v4265, 1
        %v4809 = vpop.permute.xlu0 %4808
        %4810 = vrot.lane.b32.xlu0 %v4267, 1
        %v4811 = vpop.permute.xlu0 %4810
        %4812 = vrot.lane.b32.xlu0 %v4269, 1
        %v4813 = vpop.permute.xlu0 %4812
        %4814 = vrot.lane.b32.xlu0 %v4271, 1
        %v4815 = vpop.permute.xlu0 %4814
        %v4816 = vsel %vm1822, %v4753, %v4785
        %v4817 = vsel %vm1822, %v4755, %v4787
        %v4818 = vsel %vm1822, %v4757, %v4789
        %v4819 = vsel %vm1822, %v4759, %v4791
        %v4820 = vsel %vm1822, %v4761, %v4793
        %v4821 = vsel %vm1822, %v4763, %v4795
        %v4822 = vsel %vm1822, %v4765, %v4797
        %v4823 = vsel %vm1822, %v4767, %v4799
        %v4824 = vsel %vm1822, %v4769, %v4801
        %v4825 = vsel %vm1822, %v4771, %v4803
        %v4826 = vsel %vm1822, %v4773, %v4805
        %v4827 = vsel %vm1822, %v4775, %v4807
        %v4828 = vsel %vm1822, %v4777, %v4809
        %v4829 = vsel %vm1822, %v4779, %v4811
        %v4830 = vsel %vm1822, %v4781, %v4813
        %v4831 = vsel %vm1822, %v4783, %v4815
        %v4832 = vsel %vm1822, %v4785, %v4753
        %v4833 = vsel %vm1822, %v4787, %v4755
        %v4834 = vsel %vm1822, %v4789, %v4757
        %v4835 = vsel %vm1822, %v4791, %v4759
        %v4836 = vsel %vm1822, %v4793, %v4761
        %v4837 = vsel %vm1822, %v4795, %v4763
        %v4838 = vsel %vm1822, %v4797, %v4765
        %v4839 = vsel %vm1822, %v4799, %v4767
        %v4840 = vsel %vm1822, %v4801, %v4769
        %v4841 = vsel %vm1822, %v4803, %v4771
        %v4842 = vsel %vm1822, %v4805, %v4773
        %v4843 = vsel %vm1822, %v4807, %v4775
        %v4844 = vsel %vm1822, %v4809, %v4777
        %v4845 = vsel %vm1822, %v4811, %v4779
        %v4846 = vsel %vm1822, %v4813, %v4781
        %v4847 = vsel %vm1822, %v4815, %v4783
        %v4848 = vmul.f32 %v4832, %v1858
        %v4849 = vmul.f32 %v4816, %v1862
        %v4850 = vmul.f32 %v4833, %v1858
        %v4851 = vmul.f32 %v4817, %v1862
        %v4852 = vmul.f32 %v4834, %v1858
        %v4853 = vmul.f32 %v4818, %v1862
        %v4854 = vmul.f32 %v4835, %v1858
        %v4855 = vmul.f32 %v4819, %v1862
        %v4856 = vmul.f32 %v4836, %v1858
        %v4857 = vmul.f32 %v4820, %v1862
        %v4858 = vmul.f32 %v4837, %v1858
        %v4859 = vmul.f32 %v4821, %v1862
        %v4860 = vmul.f32 %v4838, %v1858
        %v4861 = vmul.f32 %v4822, %v1862
        %v4862 = vmul.f32 %v4839, %v1858
        %v4863 = vmul.f32 %v4823, %v1862
        %v4864 = vmul.f32 %v4840, %v1858
        %v4865 = vmul.f32 %v4824, %v1862
        %v4866 = vmul.f32 %v4841, %v1858
        %v4867 = vmul.f32 %v4825, %v1862
        %v4868 = vmul.f32 %v4842, %v1858
        %v4869 = vmul.f32 %v4826, %v1862
        %v4870 = vmul.f32 %v4843, %v1858
        %v4871 = vmul.f32 %v4827, %v1862
        %v4872 = vmul.f32 %v4844, %v1858
        %v4873 = vmul.f32 %v4828, %v1862
        %v4874 = vmul.f32 %v4845, %v1858
        %v4875 = vmul.f32 %v4829, %v1862
        %v4876 = vmul.f32 %v4846, %v1858
        %v4877 = vmul.f32 %v4830, %v1862
        %v4878 = vmul.f32 %v4847, %v1858
        %v4879 = vmul.f32 %v4831, %v1862
        %v4880 = vpack.c.bf16 %v4850, %v4848
        %v4881 = vpack.c.bf16 %v4851, %v4849
        %v4882 = vpack.c.bf16 %v4854, %v4852
        %v4883 = vpack.c.bf16 %v4855, %v4853
        %v4884 = vpack.c.bf16 %v4858, %v4856
        %v4885 = vpack.c.bf16 %v4859, %v4857
        %v4886 = vpack.c.bf16 %v4862, %v4860
        %v4887 = vpack.c.bf16 %v4863, %v4861
        %v4888 = vpack.c.bf16 %v4866, %v4864
        %v4889 = vpack.c.bf16 %v4867, %v4865
        %v4890 = vpack.c.bf16 %v4870, %v4868
        %v4891 = vpack.c.bf16 %v4871, %v4869
        %v4892 = vpack.c.bf16 %v4874, %v4872
        %v4893 = vpack.c.bf16 %v4875, %v4873
        %v4894 = vpack.c.bf16 %v4878, %v4876
        %v4895 = vpack.c.bf16 %v4879, %v4877
        %4896 = vst [vmem:[#allocation2 + $0x180] sm:$0xff] %v4880
        %4897 = vst [vmem:[#allocation2 + $0x188] sm:$0xff] %v4881
        %4898 = vst [vmem:[#allocation2 + $0x190] sm:$0xff] %v4882
        %4899 = vst [vmem:[#allocation2 + $0x198] sm:$0xff] %v4883
        %4900 = vst [vmem:[#allocation2 + $0x1a0] sm:$0xff] %v4884
        %4901 = vst [vmem:[#allocation2 + $0x1a8] sm:$0xff] %v4885
        %4902 = vst [vmem:[#allocation2 + $0x1b0] sm:$0xff] %v4886
        %4903 = vst [vmem:[#allocation2 + $0x1b8] sm:$0xff] %v4887
        %4904 = vst [vmem:[#allocation2 + $0x1c0] sm:$0xff] %v4888
        %4905 = vst [vmem:[#allocation2 + $0x1c8] sm:$0xff] %v4889
        %4906 = vst [vmem:[#allocation2 + $0x1d0] sm:$0xff] %v4890
        %4907 = vst [vmem:[#allocation2 + $0x1d8] sm:$0xff] %v4891
        %4908 = vst [vmem:[#allocation2 + $0x1e0] sm:$0xff] %v4892
        %4909 = vst [vmem:[#allocation2 + $0x1e8] sm:$0xff] %v4893
        %4910 = vst [vmem:[#allocation2 + $0x1f0] sm:$0xff] %v4894
        %4911 = vst [vmem:[#allocation2 + $0x1f8] sm:$0xff] %v4895
        %v4912 = vpack.c.bf16 %v4242, %v4240
        %v4913 = vpack.c.bf16 %v4243, %v4241
        %v4914 = vpack.c.bf16 %v4246, %v4244
        %v4915 = vpack.c.bf16 %v4247, %v4245
        %v4916 = vpack.c.bf16 %v4250, %v4248
        %v4917 = vpack.c.bf16 %v4251, %v4249
        %v4918 = vpack.c.bf16 %v4254, %v4252
        %v4919 = vpack.c.bf16 %v4255, %v4253
        %v4920 = vpack.c.bf16 %v4258, %v4256
        %v4921 = vpack.c.bf16 %v4259, %v4257
        %v4922 = vpack.c.bf16 %v4262, %v4260
        %v4923 = vpack.c.bf16 %v4263, %v4261
        %v4924 = vpack.c.bf16 %v4266, %v4264
        %v4925 = vpack.c.bf16 %v4267, %v4265
        %v4926 = vpack.c.bf16 %v4270, %v4268
        %v4927 = vpack.c.bf16 %v4271, %v4269
        %4928 = vst [vmem:[#allocation2 + $0x200] sm:$0xff] %v4912
        %4929 = vst [vmem:[#allocation2 + $0x208] sm:$0xff] %v4913
        %4930 = vst [vmem:[#allocation2 + $0x210] sm:$0xff] %v4914
        %4931 = vst [vmem:[#allocation2 + $0x218] sm:$0xff] %v4915
        %4932 = vst [vmem:[#allocation2 + $0x220] sm:$0xff] %v4916
        %4933 = vst [vmem:[#allocation2 + $0x228] sm:$0xff] %v4917
        %4934 = vst [vmem:[#allocation2 + $0x230] sm:$0xff] %v4918
        %4935 = vst [vmem:[#allocation2 + $0x238] sm:$0xff] %v4919
        %4936 = vst [vmem:[#allocation2 + $0x240] sm:$0xff] %v4920
        %4937 = vst [vmem:[#allocation2 + $0x248] sm:$0xff] %v4921
        %4938 = vst [vmem:[#allocation2 + $0x250] sm:$0xff] %v4922
        %4939 = vst [vmem:[#allocation2 + $0x258] sm:$0xff] %v4923
        %4940 = vst [vmem:[#allocation2 + $0x260] sm:$0xff] %v4924
        %4941 = vst [vmem:[#allocation2 + $0x268] sm:$0xff] %v4925
        %4942 = vst [vmem:[#allocation2 + $0x270] sm:$0xff] %v4926
        %4943 = vst [vmem:[#allocation2 + $0x278] sm:$0xff] %v4927
        %4944 = vrot.lane.b32.xlu0 %v4240, 127
        %v4945 = vpop.permute.xlu0 %4944
        %4946 = vrot.lane.b32.xlu0 %v4242, 127
        %v4947 = vpop.permute.xlu0 %4946
        %4948 = vrot.lane.b32.xlu0 %v4244, 127
        %v4949 = vpop.permute.xlu0 %4948
        %4950 = vrot.lane.b32.xlu0 %v4246, 127
        %v4951 = vpop.permute.xlu0 %4950
        %4952 = vrot.lane.b32.xlu0 %v4248, 127
        %v4953 = vpop.permute.xlu0 %4952
        %4954 = vrot.lane.b32.xlu0 %v4250, 127
        %v4955 = vpop.permute.xlu0 %4954
        %4956 = vrot.lane.b32.xlu0 %v4252, 127
        %v4957 = vpop.permute.xlu0 %4956
        %4958 = vrot.lane.b32.xlu0 %v4254, 127
        %v4959 = vpop.permute.xlu0 %4958
        %4960 = vrot.lane.b32.xlu0 %v4256, 127
        %v4961 = vpop.permute.xlu0 %4960
        %4962 = vrot.lane.b32.xlu0 %v4258, 127
        %v4963 = vpop.permute.xlu0 %4962
        %4964 = vrot.lane.b32.xlu0 %v4260, 127
        %v4965 = vpop.permute.xlu0 %4964
        %4966 = vrot.lane.b32.xlu0 %v4262, 127
        %v4967 = vpop.permute.xlu0 %4966
        %4968 = vrot.lane.b32.xlu0 %v4264, 127
        %v4969 = vpop.permute.xlu0 %4968
        %4970 = vrot.lane.b32.xlu0 %v4266, 127
        %v4971 = vpop.permute.xlu0 %4970
        %4972 = vrot.lane.b32.xlu0 %v4268, 127
        %v4973 = vpop.permute.xlu0 %4972
        %4974 = vrot.lane.b32.xlu0 %v4270, 127
        %v4975 = vpop.permute.xlu0 %4974
        %4976 = vrot.lane.b32.xlu0 %v4241, 127
        %v4977 = vpop.permute.xlu0 %4976
        %4978 = vrot.lane.b32.xlu0 %v4243, 127
        %v4979 = vpop.permute.xlu0 %4978
        %4980 = vrot.lane.b32.xlu0 %v4245, 127
        %v4981 = vpop.permute.xlu0 %4980
        %4982 = vrot.lane.b32.xlu0 %v4247, 127
        %v4983 = vpop.permute.xlu0 %4982
        %4984 = vrot.lane.b32.xlu0 %v4249, 127
        %v4985 = vpop.permute.xlu0 %4984
        %4986 = vrot.lane.b32.xlu0 %v4251, 127
        %v4987 = vpop.permute.xlu0 %4986
        %4988 = vrot.lane.b32.xlu0 %v4253, 127
        %v4989 = vpop.permute.xlu0 %4988
        %4990 = vrot.lane.b32.xlu0 %v4255, 127
        %v4991 = vpop.permute.xlu0 %4990
        %4992 = vrot.lane.b32.xlu0 %v4257, 127
        %v4993 = vpop.permute.xlu0 %4992
        %4994 = vrot.lane.b32.xlu0 %v4259, 127
        %v4995 = vpop.permute.xlu0 %4994
        %4996 = vrot.lane.b32.xlu0 %v4261, 127
        %v4997 = vpop.permute.xlu0 %4996
        %4998 = vrot.lane.b32.xlu0 %v4263, 127
        %v4999 = vpop.permute.xlu0 %4998
        %5000 = vrot.lane.b32.xlu0 %v4265, 127
        %v5001 = vpop.permute.xlu0 %5000
        %5002 = vrot.lane.b32.xlu0 %v4267, 127
        %v5003 = vpop.permute.xlu0 %5002
        %5004 = vrot.lane.b32.xlu0 %v4269, 127
        %v5005 = vpop.permute.xlu0 %5004
        %5006 = vrot.lane.b32.xlu0 %v4271, 127
        %v5007 = vpop.permute.xlu0 %5006
        %v5008 = vsel %vm2023, %v4945, %v4977
        %v5009 = vsel %vm2023, %v4947, %v4979
        %v5010 = vsel %vm2023, %v4949, %v4981
        %v5011 = vsel %vm2023, %v4951, %v4983
        %v5012 = vsel %vm2023, %v4953, %v4985
        %v5013 = vsel %vm2023, %v4955, %v4987
        %v5014 = vsel %vm2023, %v4957, %v4989
        %v5015 = vsel %vm2023, %v4959, %v4991
        %v5016 = vsel %vm2023, %v4961, %v4993
        %v5017 = vsel %vm2023, %v4963, %v4995
        %v5018 = vsel %vm2023, %v4965, %v4997
        %v5019 = vsel %vm2023, %v4967, %v4999
        %v5020 = vsel %vm2023, %v4969, %v5001
        %v5021 = vsel %vm2023, %v4971, %v5003
        %v5022 = vsel %vm2023, %v4973, %v5005
        %v5023 = vsel %vm2023, %v4975, %v5007
        %v5024 = vsel %vm2023, %v4977, %v4945
        %v5025 = vsel %vm2023, %v4979, %v4947
        %v5026 = vsel %vm2023, %v4981, %v4949
        %v5027 = vsel %vm2023, %v4983, %v4951
        %v5028 = vsel %vm2023, %v4985, %v4953
        %v5029 = vsel %vm2023, %v4987, %v4955
        %v5030 = vsel %vm2023, %v4989, %v4957
        %v5031 = vsel %vm2023, %v4991, %v4959
        %v5032 = vsel %vm2023, %v4993, %v4961
        %v5033 = vsel %vm2023, %v4995, %v4963
        %v5034 = vsel %vm2023, %v4997, %v4965
        %v5035 = vsel %vm2023, %v4999, %v4967
        %v5036 = vsel %vm2023, %v5001, %v4969
        %v5037 = vsel %vm2023, %v5003, %v4971
        %v5038 = vsel %vm2023, %v5005, %v4973
        %v5039 = vsel %vm2023, %v5007, %v4975
        %v5040 = vmul.f32 %v5008, %v2059
        %v5041 = vmul.f32 %v5024, %v2063
        %v5042 = vmul.f32 %v5009, %v2059
        %v5043 = vmul.f32 %v5025, %v2063
        %v5044 = vmul.f32 %v5010, %v2059
        %v5045 = vmul.f32 %v5026, %v2063
        %v5046 = vmul.f32 %v5011, %v2059
        %v5047 = vmul.f32 %v5027, %v2063
        %v5048 = vmul.f32 %v5012, %v2059
        %v5049 = vmul.f32 %v5028, %v2063
        %v5050 = vmul.f32 %v5013, %v2059
        %v5051 = vmul.f32 %v5029, %v2063
        %v5052 = vmul.f32 %v5014, %v2059
        %v5053 = vmul.f32 %v5030, %v2063
        %v5054 = vmul.f32 %v5015, %v2059
        %v5055 = vmul.f32 %v5031, %v2063
        %v5056 = vmul.f32 %v5016, %v2059
        %v5057 = vmul.f32 %v5032, %v2063
        %v5058 = vmul.f32 %v5017, %v2059
        %v5059 = vmul.f32 %v5033, %v2063
        %v5060 = vmul.f32 %v5018, %v2059
        %v5061 = vmul.f32 %v5034, %v2063
        %v5062 = vmul.f32 %v5019, %v2059
        %v5063 = vmul.f32 %v5035, %v2063
        %v5064 = vmul.f32 %v5020, %v2059
        %v5065 = vmul.f32 %v5036, %v2063
        %v5066 = vmul.f32 %v5021, %v2059
        %v5067 = vmul.f32 %v5037, %v2063
        %v5068 = vmul.f32 %v5022, %v2059
        %v5069 = vmul.f32 %v5038, %v2063
        %v5070 = vmul.f32 %v5023, %v2059
        %v5071 = vmul.f32 %v5039, %v2063
        %v5072 = vpack.c.bf16 %v5042, %v5040
        %v5073 = vpack.c.bf16 %v5043, %v5041
        %v5074 = vpack.c.bf16 %v5046, %v5044
        %v5075 = vpack.c.bf16 %v5047, %v5045
        %v5076 = vpack.c.bf16 %v5050, %v5048
        %v5077 = vpack.c.bf16 %v5051, %v5049
        %v5078 = vpack.c.bf16 %v5054, %v5052
        %v5079 = vpack.c.bf16 %v5055, %v5053
        %v5080 = vpack.c.bf16 %v5058, %v5056
        %v5081 = vpack.c.bf16 %v5059, %v5057
        %v5082 = vpack.c.bf16 %v5062, %v5060
        %v5083 = vpack.c.bf16 %v5063, %v5061
        %v5084 = vpack.c.bf16 %v5066, %v5064
        %v5085 = vpack.c.bf16 %v5067, %v5065
        %v5086 = vpack.c.bf16 %v5070, %v5068
        %v5087 = vpack.c.bf16 %v5071, %v5069
        %5088 = vst [vmem:[#allocation2 + $0x280] sm:$0xff] %v5072
        %5089 = vst [vmem:[#allocation2 + $0x288] sm:$0xff] %v5073
        %5090 = vst [vmem:[#allocation2 + $0x290] sm:$0xff] %v5074
        %5091 = vst [vmem:[#allocation2 + $0x298] sm:$0xff] %v5075
        %5092 = vst [vmem:[#allocation2 + $0x2a0] sm:$0xff] %v5076
        %5093 = vst [vmem:[#allocation2 + $0x2a8] sm:$0xff] %v5077
        %5094 = vst [vmem:[#allocation2 + $0x2b0] sm:$0xff] %v5078
        %5095 = vst [vmem:[#allocation2 + $0x2b8] sm:$0xff] %v5079
        %5096 = vst [vmem:[#allocation2 + $0x2c0] sm:$0xff] %v5080
        %5097 = vst [vmem:[#allocation2 + $0x2c8] sm:$0xff] %v5081
        %5098 = vst [vmem:[#allocation2 + $0x2d0] sm:$0xff] %v5082
        %5099 = vst [vmem:[#allocation2 + $0x2d8] sm:$0xff] %v5083
        %5100 = vst [vmem:[#allocation2 + $0x2e0] sm:$0xff] %v5084
        %5101 = vst [vmem:[#allocation2 + $0x2e8] sm:$0xff] %v5085
        %5102 = vst [vmem:[#allocation2 + $0x2f0] sm:$0xff] %v5086
        %5103 = vst [vmem:[#allocation2 + $0x2f8] sm:$0xff] %v5087
        %5104 = vrot.lane.b32.xlu0 %v4240, 113
        %v5105 = vpop.permute.xlu0 %5104
        %5106 = vrot.lane.b32.xlu0 %v4242, 113
        %v5107 = vpop.permute.xlu0 %5106
        %5108 = vrot.lane.b32.xlu0 %v4244, 113
        %v5109 = vpop.permute.xlu0 %5108
        %5110 = vrot.lane.b32.xlu0 %v4246, 113
        %v5111 = vpop.permute.xlu0 %5110
        %5112 = vrot.lane.b32.xlu0 %v4248, 113
        %v5113 = vpop.permute.xlu0 %5112
        %5114 = vrot.lane.b32.xlu0 %v4250, 113
        %v5115 = vpop.permute.xlu0 %5114
        %5116 = vrot.lane.b32.xlu0 %v4252, 113
        %v5117 = vpop.permute.xlu0 %5116
        %5118 = vrot.lane.b32.xlu0 %v4254, 113
        %v5119 = vpop.permute.xlu0 %5118
        %5120 = vrot.lane.b32.xlu0 %v4256, 113
        %v5121 = vpop.permute.xlu0 %5120
        %5122 = vrot.lane.b32.xlu0 %v4258, 113
        %v5123 = vpop.permute.xlu0 %5122
        %5124 = vrot.lane.b32.xlu0 %v4260, 113
        %v5125 = vpop.permute.xlu0 %5124
        %5126 = vrot.lane.b32.xlu0 %v4262, 113
        %v5127 = vpop.permute.xlu0 %5126
        %5128 = vrot.lane.b32.xlu0 %v4264, 113
        %v5129 = vpop.permute.xlu0 %5128
        %5130 = vrot.lane.b32.xlu0 %v4266, 113
        %v5131 = vpop.permute.xlu0 %5130
        %5132 = vrot.lane.b32.xlu0 %v4268, 113
        %v5133 = vpop.permute.xlu0 %5132
        %5134 = vrot.lane.b32.xlu0 %v4270, 113
        %v5135 = vpop.permute.xlu0 %5134
        %5136 = vrot.lane.b32.xlu0 %v4241, 113
        %v5137 = vpop.permute.xlu0 %5136
        %5138 = vrot.lane.b32.xlu0 %v4243, 113
        %v5139 = vpop.permute.xlu0 %5138
        %5140 = vrot.lane.b32.xlu0 %v4245, 113
        %v5141 = vpop.permute.xlu0 %5140
        %5142 = vrot.lane.b32.xlu0 %v4247, 113
        %v5143 = vpop.permute.xlu0 %5142
        %5144 = vrot.lane.b32.xlu0 %v4249, 113
        %v5145 = vpop.permute.xlu0 %5144
        %5146 = vrot.lane.b32.xlu0 %v4251, 113
        %v5147 = vpop.permute.xlu0 %5146
        %5148 = vrot.lane.b32.xlu0 %v4253, 113
        %v5149 = vpop.permute.xlu0 %5148
        %5150 = vrot.lane.b32.xlu0 %v4255, 113
        %v5151 = vpop.permute.xlu0 %5150
        %5152 = vrot.lane.b32.xlu0 %v4257, 113
        %v5153 = vpop.permute.xlu0 %5152
        %5154 = vrot.lane.b32.xlu0 %v4259, 113
        %v5155 = vpop.permute.xlu0 %5154
        %5156 = vrot.lane.b32.xlu0 %v4261, 113
        %v5157 = vpop.permute.xlu0 %5156
        %5158 = vrot.lane.b32.xlu0 %v4263, 113
        %v5159 = vpop.permute.xlu0 %5158
        %5160 = vrot.lane.b32.xlu0 %v4265, 113
        %v5161 = vpop.permute.xlu0 %5160
        %5162 = vrot.lane.b32.xlu0 %v4267, 113
        %v5163 = vpop.permute.xlu0 %5162
        %5164 = vrot.lane.b32.xlu0 %v4269, 113
        %v5165 = vpop.permute.xlu0 %5164
        %5166 = vrot.lane.b32.xlu0 %v4271, 113
        %v5167 = vpop.permute.xlu0 %5166
        %v5168 = vsel %vm2192, %v5105, %v5137
        %v5169 = vsel %vm2192, %v5107, %v5139
        %v5170 = vsel %vm2192, %v5109, %v5141
        %v5171 = vsel %vm2192, %v5111, %v5143
        %v5172 = vsel %vm2192, %v5113, %v5145
        %v5173 = vsel %vm2192, %v5115, %v5147
        %v5174 = vsel %vm2192, %v5117, %v5149
        %v5175 = vsel %vm2192, %v5119, %v5151
        %v5176 = vsel %vm2192, %v5121, %v5153
        %v5177 = vsel %vm2192, %v5123, %v5155
        %v5178 = vsel %vm2192, %v5125, %v5157
        %v5179 = vsel %vm2192, %v5127, %v5159
        %v5180 = vsel %vm2192, %v5129, %v5161
        %v5181 = vsel %vm2192, %v5131, %v5163
        %v5182 = vsel %vm2192, %v5133, %v5165
        %v5183 = vsel %vm2192, %v5135, %v5167
        %v5184 = vsel %vm2192, %v5137, %v5105
        %v5185 = vsel %vm2192, %v5139, %v5107
        %v5186 = vsel %vm2192, %v5141, %v5109
        %v5187 = vsel %vm2192, %v5143, %v5111
        %v5188 = vsel %vm2192, %v5145, %v5113
        %v5189 = vsel %vm2192, %v5147, %v5115
        %v5190 = vsel %vm2192, %v5149, %v5117
        %v5191 = vsel %vm2192, %v5151, %v5119
        %v5192 = vsel %vm2192, %v5153, %v5121
        %v5193 = vsel %vm2192, %v5155, %v5123
        %v5194 = vsel %vm2192, %v5157, %v5125
        %v5195 = vsel %vm2192, %v5159, %v5127
        %v5196 = vsel %vm2192, %v5161, %v5129
        %v5197 = vsel %vm2192, %v5163, %v5131
        %v5198 = vsel %vm2192, %v5165, %v5133
        %v5199 = vsel %vm2192, %v5167, %v5135
        %v5200 = vmul.f32 %v5168, %v2228
        %v5201 = vmul.f32 %v5184, %v2232
        %v5202 = vmul.f32 %v5169, %v2228
        %v5203 = vmul.f32 %v5185, %v2232
        %v5204 = vmul.f32 %v5170, %v2228
        %v5205 = vmul.f32 %v5186, %v2232
        %v5206 = vmul.f32 %v5171, %v2228
        %v5207 = vmul.f32 %v5187, %v2232
        %v5208 = vmul.f32 %v5172, %v2228
        %v5209 = vmul.f32 %v5188, %v2232
        %v5210 = vmul.f32 %v5173, %v2228
        %v5211 = vmul.f32 %v5189, %v2232
        %v5212 = vmul.f32 %v5174, %v2228
        %v5213 = vmul.f32 %v5190, %v2232
        %v5214 = vmul.f32 %v5175, %v2228
        %v5215 = vmul.f32 %v5191, %v2232
        %v5216 = vmul.f32 %v5176, %v2228
        %v5217 = vmul.f32 %v5192, %v2232
        %v5218 = vmul.f32 %v5177, %v2228
        %v5219 = vmul.f32 %v5193, %v2232
        %v5220 = vmul.f32 %v5178, %v2228
        %v5221 = vmul.f32 %v5194, %v2232
        %v5222 = vmul.f32 %v5179, %v2228
        %v5223 = vmul.f32 %v5195, %v2232
        %v5224 = vmul.f32 %v5180, %v2228
        %v5225 = vmul.f32 %v5196, %v2232
        %v5226 = vmul.f32 %v5181, %v2228
        %v5227 = vmul.f32 %v5197, %v2232
        %v5228 = vmul.f32 %v5182, %v2228
        %v5229 = vmul.f32 %v5198, %v2232
        %v5230 = vmul.f32 %v5183, %v2228
        %v5231 = vmul.f32 %v5199, %v2232
        %v5232 = vpack.c.bf16 %v5202, %v5200
        %v5233 = vpack.c.bf16 %v5203, %v5201
        %v5234 = vpack.c.bf16 %v5206, %v5204
        %v5235 = vpack.c.bf16 %v5207, %v5205
        %v5236 = vpack.c.bf16 %v5210, %v5208
        %v5237 = vpack.c.bf16 %v5211, %v5209
        %v5238 = vpack.c.bf16 %v5214, %v5212
        %v5239 = vpack.c.bf16 %v5215, %v5213
        %v5240 = vpack.c.bf16 %v5218, %v5216
        %v5241 = vpack.c.bf16 %v5219, %v5217
        %v5242 = vpack.c.bf16 %v5222, %v5220
        %v5243 = vpack.c.bf16 %v5223, %v5221
        %v5244 = vpack.c.bf16 %v5226, %v5224
        %v5245 = vpack.c.bf16 %v5227, %v5225
        %v5246 = vpack.c.bf16 %v5230, %v5228
        %v5247 = vpack.c.bf16 %v5231, %v5229
        %5248 = vst [vmem:[#allocation2 + $0x300] sm:$0xff] %v5232
        %5249 = vst [vmem:[#allocation2 + $0x308] sm:$0xff] %v5233
        %5250 = vst [vmem:[#allocation2 + $0x310] sm:$0xff] %v5234
        %5251 = vst [vmem:[#allocation2 + $0x318] sm:$0xff] %v5235
        %5252 = vst [vmem:[#allocation2 + $0x320] sm:$0xff] %v5236
        %5253 = vst [vmem:[#allocation2 + $0x328] sm:$0xff] %v5237
        %5254 = vst [vmem:[#allocation2 + $0x330] sm:$0xff] %v5238
        %5255 = vst [vmem:[#allocation2 + $0x338] sm:$0xff] %v5239
        %5256 = vst [vmem:[#allocation2 + $0x340] sm:$0xff] %v5240
        %5257 = vst [vmem:[#allocation2 + $0x348] sm:$0xff] %v5241
        %5258 = vst [vmem:[#allocation2 + $0x350] sm:$0xff] %v5242
        %5259 = vst [vmem:[#allocation2 + $0x358] sm:$0xff] %v5243
        %5260 = vst [vmem:[#allocation2 + $0x360] sm:$0xff] %v5244
        %5261 = vst [vmem:[#allocation2 + $0x368] sm:$0xff] %v5245
        %5262 = vst [vmem:[#allocation2 + $0x370] sm:$0xff] %v5246
        %5263 = vst [vmem:[#allocation2 + $0x378] sm:$0xff] %v5247
        %5264 = vrot.lane.b32.xlu0 %v4240, 112
        %v5265 = vpop.permute.xlu0 %5264
        %5266 = vrot.lane.b32.xlu0 %v4242, 112
        %v5267 = vpop.permute.xlu0 %5266
        %5268 = vrot.lane.b32.xlu0 %v4244, 112
        %v5269 = vpop.permute.xlu0 %5268
        %5270 = vrot.lane.b32.xlu0 %v4246, 112
        %v5271 = vpop.permute.xlu0 %5270
        %5272 = vrot.lane.b32.xlu0 %v4248, 112
        %v5273 = vpop.permute.xlu0 %5272
        %5274 = vrot.lane.b32.xlu0 %v4250, 112
        %v5275 = vpop.permute.xlu0 %5274
        %5276 = vrot.lane.b32.xlu0 %v4252, 112
        %v5277 = vpop.permute.xlu0 %5276
        %5278 = vrot.lane.b32.xlu0 %v4254, 112
        %v5279 = vpop.permute.xlu0 %5278
        %5280 = vrot.lane.b32.xlu0 %v4256, 112
        %v5281 = vpop.permute.xlu0 %5280
        %5282 = vrot.lane.b32.xlu0 %v4258, 112
        %v5283 = vpop.permute.xlu0 %5282
        %5284 = vrot.lane.b32.xlu0 %v4260, 112
        %v5285 = vpop.permute.xlu0 %5284
        %5286 = vrot.lane.b32.xlu0 %v4262, 112
        %v5287 = vpop.permute.xlu0 %5286
        %5288 = vrot.lane.b32.xlu0 %v4264, 112
        %v5289 = vpop.permute.xlu0 %5288
        %5290 = vrot.lane.b32.xlu0 %v4266, 112
        %v5291 = vpop.permute.xlu0 %5290
        %5292 = vrot.lane.b32.xlu0 %v4268, 112
        %v5293 = vpop.permute.xlu0 %5292
        %5294 = vrot.lane.b32.xlu0 %v4270, 112
        %v5295 = vpop.permute.xlu0 %5294
        %5296 = vrot.lane.b32.xlu0 %v4241, 112
        %v5297 = vpop.permute.xlu0 %5296
        %5298 = vrot.lane.b32.xlu0 %v4243, 112
        %v5299 = vpop.permute.xlu0 %5298
        %5300 = vrot.lane.b32.xlu0 %v4245, 112
        %v5301 = vpop.permute.xlu0 %5300
        %5302 = vrot.lane.b32.xlu0 %v4247, 112
        %v5303 = vpop.permute.xlu0 %5302
        %5304 = vrot.lane.b32.xlu0 %v4249, 112
        %v5305 = vpop.permute.xlu0 %5304
        %5306 = vrot.lane.b32.xlu0 %v4251, 112
        %v5307 = vpop.permute.xlu0 %5306
        %5308 = vrot.lane.b32.xlu0 %v4253, 112
        %v5309 = vpop.permute.xlu0 %5308
        %5310 = vrot.lane.b32.xlu0 %v4255, 112
        %v5311 = vpop.permute.xlu0 %5310
        %5312 = vrot.lane.b32.xlu0 %v4257, 112
        %v5313 = vpop.permute.xlu0 %5312
        %5314 = vrot.lane.b32.xlu0 %v4259, 112
        %v5315 = vpop.permute.xlu0 %5314
        %5316 = vrot.lane.b32.xlu0 %v4261, 112
        %v5317 = vpop.permute.xlu0 %5316
        %5318 = vrot.lane.b32.xlu0 %v4263, 112
        %v5319 = vpop.permute.xlu0 %5318
        %5320 = vrot.lane.b32.xlu0 %v4265, 112
        %v5321 = vpop.permute.xlu0 %5320
        %5322 = vrot.lane.b32.xlu0 %v4267, 112
        %v5323 = vpop.permute.xlu0 %5322
        %5324 = vrot.lane.b32.xlu0 %v4269, 112
        %v5325 = vpop.permute.xlu0 %5324
        %5326 = vrot.lane.b32.xlu0 %v4271, 112
        %v5327 = vpop.permute.xlu0 %5326
        %v5328 = vsel %vm2361, %v5265, %v5297
        %v5329 = vsel %vm2361, %v5267, %v5299
        %v5330 = vsel %vm2361, %v5269, %v5301
        %v5331 = vsel %vm2361, %v5271, %v5303
        %v5332 = vsel %vm2361, %v5273, %v5305
        %v5333 = vsel %vm2361, %v5275, %v5307
        %v5334 = vsel %vm2361, %v5277, %v5309
        %v5335 = vsel %vm2361, %v5279, %v5311
        %v5336 = vsel %vm2361, %v5281, %v5313
        %v5337 = vsel %vm2361, %v5283, %v5315
        %v5338 = vsel %vm2361, %v5285, %v5317
        %v5339 = vsel %vm2361, %v5287, %v5319
        %v5340 = vsel %vm2361, %v5289, %v5321
        %v5341 = vsel %vm2361, %v5291, %v5323
        %v5342 = vsel %vm2361, %v5293, %v5325
        %v5343 = vsel %vm2361, %v5295, %v5327
        %v5344 = vsel %vm2361, %v5297, %v5265
        %v5345 = vsel %vm2361, %v5299, %v5267
        %v5346 = vsel %vm2361, %v5301, %v5269
        %v5347 = vsel %vm2361, %v5303, %v5271
        %v5348 = vsel %vm2361, %v5305, %v5273
        %v5349 = vsel %vm2361, %v5307, %v5275
        %v5350 = vsel %vm2361, %v5309, %v5277
        %v5351 = vsel %vm2361, %v5311, %v5279
        %v5352 = vsel %vm2361, %v5313, %v5281
        %v5353 = vsel %vm2361, %v5315, %v5283
        %v5354 = vsel %vm2361, %v5317, %v5285
        %v5355 = vsel %vm2361, %v5319, %v5287
        %v5356 = vsel %vm2361, %v5321, %v5289
        %v5357 = vsel %vm2361, %v5323, %v5291
        %v5358 = vsel %vm2361, %v5325, %v5293
        %v5359 = vsel %vm2361, %v5327, %v5295
        %v5360 = vmul.f32 %v5328, %v2397
        %v5361 = vmul.f32 %v5344, %v2401
        %v5362 = vmul.f32 %v5329, %v2397
        %v5363 = vmul.f32 %v5345, %v2401
        %v5364 = vmul.f32 %v5330, %v2397
        %v5365 = vmul.f32 %v5346, %v2401
        %v5366 = vmul.f32 %v5331, %v2397
        %v5367 = vmul.f32 %v5347, %v2401
        %v5368 = vmul.f32 %v5332, %v2397
        %v5369 = vmul.f32 %v5348, %v2401
        %v5370 = vmul.f32 %v5333, %v2397
        %v5371 = vmul.f32 %v5349, %v2401
        %v5372 = vmul.f32 %v5334, %v2397
        %v5373 = vmul.f32 %v5350, %v2401
        %v5374 = vmul.f32 %v5335, %v2397
        %v5375 = vmul.f32 %v5351, %v2401
        %v5376 = vmul.f32 %v5336, %v2397
        %v5377 = vmul.f32 %v5352, %v2401
        %v5378 = vmul.f32 %v5337, %v2397
        %v5379 = vmul.f32 %v5353, %v2401
        %v5380 = vmul.f32 %v5338, %v2397
        %v5381 = vmul.f32 %v5354, %v2401
        %v5382 = vmul.f32 %v5339, %v2397
        %v5383 = vmul.f32 %v5355, %v2401
        %v5384 = vmul.f32 %v5340, %v2397
        %v5385 = vmul.f32 %v5356, %v2401
        %v5386 = vmul.f32 %v5341, %v2397
        %v5387 = vmul.f32 %v5357, %v2401
        %v5388 = vmul.f32 %v5342, %v2397
        %v5389 = vmul.f32 %v5358, %v2401
        %v5390 = vmul.f32 %v5343, %v2397
        %v5391 = vmul.f32 %v5359, %v2401
        %v5392 = vpack.c.bf16 %v5362, %v5360
        %v5393 = vpack.c.bf16 %v5363, %v5361
        %v5394 = vpack.c.bf16 %v5366, %v5364
        %v5395 = vpack.c.bf16 %v5367, %v5365
        %v5396 = vpack.c.bf16 %v5370, %v5368
        %v5397 = vpack.c.bf16 %v5371, %v5369
        %v5398 = vpack.c.bf16 %v5374, %v5372
        %v5399 = vpack.c.bf16 %v5375, %v5373
        %v5400 = vpack.c.bf16 %v5378, %v5376
        %v5401 = vpack.c.bf16 %v5379, %v5377
        %v5402 = vpack.c.bf16 %v5382, %v5380
        %v5403 = vpack.c.bf16 %v5383, %v5381
        %v5404 = vpack.c.bf16 %v5386, %v5384
        %v5405 = vpack.c.bf16 %v5387, %v5385
        %v5406 = vpack.c.bf16 %v5390, %v5388
        %v5407 = vpack.c.bf16 %v5391, %v5389
        %5408 = vst [vmem:[#allocation2 + $0x380] sm:$0xff] %v5392
        %5409 = vst [vmem:[#allocation2 + $0x388] sm:$0xff] %v5393
        %5410 = vst [vmem:[#allocation2 + $0x390] sm:$0xff] %v5394
        %5411 = vst [vmem:[#allocation2 + $0x398] sm:$0xff] %v5395
        %5412 = vst [vmem:[#allocation2 + $0x3a0] sm:$0xff] %v5396
        %5413 = vst [vmem:[#allocation2 + $0x3a8] sm:$0xff] %v5397
        %5414 = vst [vmem:[#allocation2 + $0x3b0] sm:$0xff] %v5398
        %5415 = vst [vmem:[#allocation2 + $0x3b8] sm:$0xff] %v5399
        %5416 = vst [vmem:[#allocation2 + $0x3c0] sm:$0xff] %v5400
        %5417 = vst [vmem:[#allocation2 + $0x3c8] sm:$0xff] %v5401
        %5418 = vst [vmem:[#allocation2 + $0x3d0] sm:$0xff] %v5402
        %5419 = vst [vmem:[#allocation2 + $0x3d8] sm:$0xff] %v5403
        %5420 = vst [vmem:[#allocation2 + $0x3e0] sm:$0xff] %v5404
        %5421 = vst [vmem:[#allocation2 + $0x3e8] sm:$0xff] %v5405
        %5422 = vst [vmem:[#allocation2 + $0x3f0] sm:$0xff] %v5406
        %5423 = vst [vmem:[#allocation2 + $0x3f8] sm:$0xff] %v5407
        %5424 = vrot.lane.b32.xlu0 %v4240, 111
        %v5425 = vpop.permute.xlu0 %5424
        %5426 = vrot.lane.b32.xlu0 %v4242, 111
        %v5427 = vpop.permute.xlu0 %5426
        %5428 = vrot.lane.b32.xlu0 %v4244, 111
        %v5429 = vpop.permute.xlu0 %5428
        %5430 = vrot.lane.b32.xlu0 %v4246, 111
        %v5431 = vpop.permute.xlu0 %5430
        %5432 = vrot.lane.b32.xlu0 %v4248, 111
        %v5433 = vpop.permute.xlu0 %5432
        %5434 = vrot.lane.b32.xlu0 %v4250, 111
        %v5435 = vpop.permute.xlu0 %5434
        %5436 = vrot.lane.b32.xlu0 %v4252, 111
        %v5437 = vpop.permute.xlu0 %5436
        %5438 = vrot.lane.b32.xlu0 %v4254, 111
        %v5439 = vpop.permute.xlu0 %5438
        %5440 = vrot.lane.b32.xlu0 %v4256, 111
        %v5441 = vpop.permute.xlu0 %5440
        %5442 = vrot.lane.b32.xlu0 %v4258, 111
        %v5443 = vpop.permute.xlu0 %5442
        %5444 = vrot.lane.b32.xlu0 %v4260, 111
        %v5445 = vpop.permute.xlu0 %5444
        %5446 = vrot.lane.b32.xlu0 %v4262, 111
        %v5447 = vpop.permute.xlu0 %5446
        %5448 = vrot.lane.b32.xlu0 %v4264, 111
        %v5449 = vpop.permute.xlu0 %5448
        %5450 = vrot.lane.b32.xlu0 %v4266, 111
        %v5451 = vpop.permute.xlu0 %5450
        %5452 = vrot.lane.b32.xlu0 %v4268, 111
        %v5453 = vpop.permute.xlu0 %5452
        %5454 = vrot.lane.b32.xlu0 %v4270, 111
        %v5455 = vpop.permute.xlu0 %5454
        %5456 = vrot.lane.b32.xlu0 %v4241, 111
        %v5457 = vpop.permute.xlu0 %5456
        %5458 = vrot.lane.b32.xlu0 %v4243, 111
        %v5459 = vpop.permute.xlu0 %5458
        %5460 = vrot.lane.b32.xlu0 %v4245, 111
        %v5461 = vpop.permute.xlu0 %5460
        %5462 = vrot.lane.b32.xlu0 %v4247, 111
        %v5463 = vpop.permute.xlu0 %5462
        %5464 = vrot.lane.b32.xlu0 %v4249, 111
        %v5465 = vpop.permute.xlu0 %5464
        %5466 = vrot.lane.b32.xlu0 %v4251, 111
        %v5467 = vpop.permute.xlu0 %5466
        %5468 = vrot.lane.b32.xlu0 %v4253, 111
        %v5469 = vpop.permute.xlu0 %5468
        %5470 = vrot.lane.b32.xlu0 %v4255, 111
        %v5471 = vpop.permute.xlu0 %5470
        %5472 = vrot.lane.b32.xlu0 %v4257, 111
        %v5473 = vpop.permute.xlu0 %5472
        %5474 = vrot.lane.b32.xlu0 %v4259, 111
        %v5475 = vpop.permute.xlu0 %5474
        %5476 = vrot.lane.b32.xlu0 %v4261, 111
        %v5477 = vpop.permute.xlu0 %5476
        %5478 = vrot.lane.b32.xlu0 %v4263, 111
        %v5479 = vpop.permute.xlu0 %5478
        %5480 = vrot.lane.b32.xlu0 %v4265, 111
        %v5481 = vpop.permute.xlu0 %5480
        %5482 = vrot.lane.b32.xlu0 %v4267, 111
        %v5483 = vpop.permute.xlu0 %5482
        %5484 = vrot.lane.b32.xlu0 %v4269, 111
        %v5485 = vpop.permute.xlu0 %5484
        %5486 = vrot.lane.b32.xlu0 %v4271, 111
        %v5487 = vpop.permute.xlu0 %5486
        %v5488 = vsel %vm2530, %v5425, %v5457
        %v5489 = vsel %vm2530, %v5427, %v5459
        %v5490 = vsel %vm2530, %v5429, %v5461
        %v5491 = vsel %vm2530, %v5431, %v5463
        %v5492 = vsel %vm2530, %v5433, %v5465
        %v5493 = vsel %vm2530, %v5435, %v5467
        %v5494 = vsel %vm2530, %v5437, %v5469
        %v5495 = vsel %vm2530, %v5439, %v5471
        %v5496 = vsel %vm2530, %v5441, %v5473
        %v5497 = vsel %vm2530, %v5443, %v5475
        %v5498 = vsel %vm2530, %v5445, %v5477
        %v5499 = vsel %vm2530, %v5447, %v5479
        %v5500 = vsel %vm2530, %v5449, %v5481
        %v5501 = vsel %vm2530, %v5451, %v5483
        %v5502 = vsel %vm2530, %v5453, %v5485
        %v5503 = vsel %vm2530, %v5455, %v5487
        %v5504 = vsel %vm2530, %v5457, %v5425
        %v5505 = vsel %vm2530, %v5459, %v5427
        %v5506 = vsel %vm2530, %v5461, %v5429
        %v5507 = vsel %vm2530, %v5463, %v5431
        %v5508 = vsel %vm2530, %v5465, %v5433
        %v5509 = vsel %vm2530, %v5467, %v5435
        %v5510 = vsel %vm2530, %v5469, %v5437
        %v5511 = vsel %vm2530, %v5471, %v5439
        %v5512 = vsel %vm2530, %v5473, %v5441
        %v5513 = vsel %vm2530, %v5475, %v5443
        %v5514 = vsel %vm2530, %v5477, %v5445
        %v5515 = vsel %vm2530, %v5479, %v5447
        %v5516 = vsel %vm2530, %v5481, %v5449
        %v5517 = vsel %vm2530, %v5483, %v5451
        %v5518 = vsel %vm2530, %v5485, %v5453
        %v5519 = vsel %vm2530, %v5487, %v5455
        %v5520 = vmul.f32 %v5488, %v2566
        %v5521 = vmul.f32 %v5504, %v2570
        %v5522 = vmul.f32 %v5489, %v2566
        %v5523 = vmul.f32 %v5505, %v2570
        %v5524 = vmul.f32 %v5490, %v2566
        %v5525 = vmul.f32 %v5506, %v2570
        %v5526 = vmul.f32 %v5491, %v2566
        %v5527 = vmul.f32 %v5507, %v2570
        %v5528 = vmul.f32 %v5492, %v2566
        %v5529 = vmul.f32 %v5508, %v2570
        %v5530 = vmul.f32 %v5493, %v2566
        %v5531 = vmul.f32 %v5509, %v2570
        %v5532 = vmul.f32 %v5494, %v2566
        %v5533 = vmul.f32 %v5510, %v2570
        %v5534 = vmul.f32 %v5495, %v2566
        %v5535 = vmul.f32 %v5511, %v2570
        %v5536 = vmul.f32 %v5496, %v2566
        %v5537 = vmul.f32 %v5512, %v2570
        %v5538 = vmul.f32 %v5497, %v2566
        %v5539 = vmul.f32 %v5513, %v2570
        %v5540 = vmul.f32 %v5498, %v2566
        %v5541 = vmul.f32 %v5514, %v2570
        %v5542 = vmul.f32 %v5499, %v2566
        %v5543 = vmul.f32 %v5515, %v2570
        %v5544 = vmul.f32 %v5500, %v2566
        %v5545 = vmul.f32 %v5516, %v2570
        %v5546 = vmul.f32 %v5501, %v2566
        %v5547 = vmul.f32 %v5517, %v2570
        %v5548 = vmul.f32 %v5502, %v2566
        %v5549 = vmul.f32 %v5518, %v2570
        %v5550 = vmul.f32 %v5503, %v2566
        %v5551 = vmul.f32 %v5519, %v2570
        %v5552 = vpack.c.bf16 %v5522, %v5520
        %v5553 = vpack.c.bf16 %v5523, %v5521
        %v5554 = vpack.c.bf16 %v5526, %v5524
        %v5555 = vpack.c.bf16 %v5527, %v5525
        %v5556 = vpack.c.bf16 %v5530, %v5528
        %v5557 = vpack.c.bf16 %v5531, %v5529
        %v5558 = vpack.c.bf16 %v5534, %v5532
        %v5559 = vpack.c.bf16 %v5535, %v5533
        %v5560 = vpack.c.bf16 %v5538, %v5536
        %v5561 = vpack.c.bf16 %v5539, %v5537
        %v5562 = vpack.c.bf16 %v5542, %v5540
        %v5563 = vpack.c.bf16 %v5543, %v5541
        %v5564 = vpack.c.bf16 %v5546, %v5544
        %v5565 = vpack.c.bf16 %v5547, %v5545
        %v5566 = vpack.c.bf16 %v5550, %v5548
        %v5567 = vpack.c.bf16 %v5551, %v5549
        %5568 = vst [vmem:[#allocation2 + $0x400] sm:$0xff] %v5552
        %5569 = vst [vmem:[#allocation2 + $0x408] sm:$0xff] %v5553
        %5570 = vst [vmem:[#allocation2 + $0x410] sm:$0xff] %v5554
        %5571 = vst [vmem:[#allocation2 + $0x418] sm:$0xff] %v5555
        %5572 = vst [vmem:[#allocation2 + $0x420] sm:$0xff] %v5556
        %5573 = vst [vmem:[#allocation2 + $0x428] sm:$0xff] %v5557
        %5574 = vst [vmem:[#allocation2 + $0x430] sm:$0xff] %v5558
        %5575 = vst [vmem:[#allocation2 + $0x438] sm:$0xff] %v5559
        %5576 = vst [vmem:[#allocation2 + $0x440] sm:$0xff] %v5560
        %5577 = vst [vmem:[#allocation2 + $0x448] sm:$0xff] %v5561
        %5578 = vst [vmem:[#allocation2 + $0x450] sm:$0xff] %v5562
        %5579 = vst [vmem:[#allocation2 + $0x458] sm:$0xff] %v5563
        %5580 = vst [vmem:[#allocation2 + $0x460] sm:$0xff] %v5564
        %5581 = vst [vmem:[#allocation2 + $0x468] sm:$0xff] %v5565
        %5582 = vst [vmem:[#allocation2 + $0x470] sm:$0xff] %v5566
        %5583 = vst [vmem:[#allocation2 + $0x478] sm:$0xff] %v5567
        %v5584 = vld [vmem:[%s5] sm:$0xff]
        %v5585 = vld [vmem:[%s5 + $0x8] sm:$0xff]
        %v5586 = vld [vmem:[%s5 + $0x10] sm:$0xff]
        %v5587 = vld [vmem:[%s5 + $0x18] sm:$0xff]
        %v5588 = vld [vmem:[%s5 + $0x20] sm:$0xf]
        %v5589 = vld [vmem:[%s5 + $0x24] sm:$0xff]
        %v5590 = vld [vmem:[%s5 + $0x2c] sm:$0xff]
        %v5591 = vld [vmem:[%s5 + $0x34] sm:$0xff]
        %v5592 = vld [vmem:[%s5 + $0x3c] sm:$0xff]
        %v5593 = vld [vmem:[%s5 + $0x44] sm:$0xf]
        %v5594 = vld [vmem:[%s5 + $0x48] sm:$0xff]
        %v5595 = vld [vmem:[%s5 + $0x50] sm:$0xff]
        %v5596 = vld [vmem:[%s5 + $0x58] sm:$0xff]
        %v5597 = vld [vmem:[%s5 + $0x60] sm:$0xff]
        %v5598 = vld [vmem:[%s5 + $0x68] sm:$0xf]
        %v5599 = vld [vmem:[%s5 + $0x6c] sm:$0xff]
        %v5600 = vld [vmem:[%s5 + $0x74] sm:$0xff]
        %v5601 = vld [vmem:[%s5 + $0x7c] sm:$0xff]
        %v5602 = vld [vmem:[%s5 + $0x84] sm:$0xff]
        %v5603 = vld [vmem:[%s5 + $0x8c] sm:$0xf]
        %v5604 = vld [vmem:[%s5 + $0x90] sm:$0xff]
        %v5605 = vld [vmem:[%s5 + $0x98] sm:$0xff]
        %v5606 = vld [vmem:[%s5 + $0xa0] sm:$0xff]
        %v5607 = vld [vmem:[%s5 + $0xa8] sm:$0xff]
        %v5608 = vld [vmem:[%s5 + $0xb0] sm:$0xf]
        %v5609 = vld [vmem:[%s5 + $0xb4] sm:$0xff]
        %v5610 = vld [vmem:[%s5 + $0xbc] sm:$0xff]
        %v5611 = vld [vmem:[%s5 + $0xc4] sm:$0xff]
        %v5612 = vld [vmem:[%s5 + $0xcc] sm:$0xff]
        %v5613 = vld [vmem:[%s5 + $0xd4] sm:$0xf]
        %v5614 = vld [vmem:[%s5 + $0xd8] sm:$0xff]
        %v5615 = vld [vmem:[%s5 + $0xe0] sm:$0xff]
        %v5616 = vld [vmem:[%s5 + $0xe8] sm:$0xff]
        %v5617 = vld [vmem:[%s5 + $0xf0] sm:$0xff]
        %v5618 = vld [vmem:[%s5 + $0xf8] sm:$0xf]
        %v5619 = vld [vmem:[%s5 + $0xfc] sm:$0xff]
        %v5620 = vld [vmem:[%s5 + $0x104] sm:$0xff]
        %v5621 = vld [vmem:[%s5 + $0x10c] sm:$0xff]
        %v5622 = vld [vmem:[%s5 + $0x114] sm:$0xff]
        %v5623 = vld [vmem:[%s5 + $0x11c] sm:$0xf]
        %v5624 = vld [vmem:[%s5 + $0x120] sm:$0xff]
        %v5625 = vld [vmem:[%s5 + $0x128] sm:$0xff]
        %v5626 = vld [vmem:[%s5 + $0x130] sm:$0xff]
        %v5627 = vld [vmem:[%s5 + $0x138] sm:$0xff]
        %v5628 = vld [vmem:[%s5 + $0x140] sm:$0xf]
        %v5629 = vld [vmem:[%s5 + $0x144] sm:$0xff]
        %v5630 = vld [vmem:[%s5 + $0x14c] sm:$0xff]
        %v5631 = vld [vmem:[%s5 + $0x154] sm:$0xff]
        %v5632 = vld [vmem:[%s5 + $0x15c] sm:$0xff]
        %v5633 = vld [vmem:[%s5 + $0x164] sm:$0xf]
        %v5634 = vld [vmem:[%s5 + $0x168] sm:$0xff]
        %v5635 = vld [vmem:[%s5 + $0x170] sm:$0xff]
        %v5636 = vld [vmem:[%s5 + $0x178] sm:$0xff]
        %v5637 = vld [vmem:[%s5 + $0x180] sm:$0xff]
        %v5638 = vld [vmem:[%s5 + $0x188] sm:$0xf]
        %v5639 = vld [vmem:[%s5 + $0x18c] sm:$0xff]
        %v5640 = vld [vmem:[%s5 + $0x194] sm:$0xff]
        %v5641 = vld [vmem:[%s5 + $0x19c] sm:$0xff]
        %v5642 = vld [vmem:[%s5 + $0x1a4] sm:$0xff]
        %v5643 = vld [vmem:[%s5 + $0x1ac] sm:$0xf]
        %v5644 = vld [vmem:[%s5 + $0x1b0] sm:$0xff]
        %v5645 = vld [vmem:[%s5 + $0x1b8] sm:$0xff]
        %v5646 = vld [vmem:[%s5 + $0x1c0] sm:$0xff]
        %v5647 = vld [vmem:[%s5 + $0x1c8] sm:$0xff]
        %v5648 = vld [vmem:[%s5 + $0x1d0] sm:$0xf]
        %v5649 = vld [vmem:[%s5 + $0x1d4] sm:$0xff]
        %v5650 = vld [vmem:[%s5 + $0x1dc] sm:$0xff]
        %v5651 = vld [vmem:[%s5 + $0x1e4] sm:$0xff]
        %v5652 = vld [vmem:[%s5 + $0x1ec] sm:$0xff]
        %v5653 = vld [vmem:[%s5 + $0x1f4] sm:$0xf]
        %v5654 = vld [vmem:[%s5 + $0x1f8] sm:$0xff]
        %v5655 = vld [vmem:[%s5 + $0x200] sm:$0xff]
        %v5656 = vld [vmem:[%s5 + $0x208] sm:$0xff]
        %v5657 = vld [vmem:[%s5 + $0x210] sm:$0xff]
        %v5658 = vld [vmem:[%s5 + $0x218] sm:$0xf]
        %v5659 = vld [vmem:[%s5 + $0x21c] sm:$0xff]
        %v5660 = vld [vmem:[%s5 + $0x224] sm:$0xff]
        %v5661 = vld [vmem:[%s5 + $0x22c] sm:$0xff]
        %v5662 = vld [vmem:[%s5 + $0x234] sm:$0xff]
        %v5663 = vld [vmem:[%s5 + $0x23c] sm:$0xf]
        %v5664 = vld [vmem:[#allocation2] sm:$0xff]
        %v5665 = vld [vmem:[#allocation2 + $0x8] sm:$0xff]
        %v5666 = vld [vmem:[#allocation2 + $0x10] sm:$0xff]
        %v5667 = vld [vmem:[#allocation2 + $0x18] sm:$0xff]
        %v5668 = vld [vmem:[#allocation2 + $0x20] sm:$0xff]
        %v5669 = vld [vmem:[#allocation2 + $0x28] sm:$0xff]
        %v5670 = vld [vmem:[#allocation2 + $0x30] sm:$0xff]
        %v5671 = vld [vmem:[#allocation2 + $0x38] sm:$0xff]
        %v5672 = vld [vmem:[#allocation2 + $0x40] sm:$0xff]
        %v5673 = vld [vmem:[#allocation2 + $0x48] sm:$0xff]
        %v5674 = vld [vmem:[#allocation2 + $0x50] sm:$0xff]
        %v5675 = vld [vmem:[#allocation2 + $0x58] sm:$0xff]
        %v5676 = vld [vmem:[#allocation2 + $0x60] sm:$0xff]
        %v5677 = vld [vmem:[#allocation2 + $0x68] sm:$0xff]
        %v5678 = vld [vmem:[#allocation2 + $0x70] sm:$0xff]
        %v5679 = vld [vmem:[#allocation2 + $0x78] sm:$0xff]
        %v5680 = vld [vmem:[#allocation2 + $0x80] sm:$0xff]
        %v5681 = vld [vmem:[#allocation2 + $0x88] sm:$0xff]
        %v5682 = vld [vmem:[#allocation2 + $0x90] sm:$0xff]
        %v5683 = vld [vmem:[#allocation2 + $0x98] sm:$0xff]
        %v5684 = vld [vmem:[#allocation2 + $0xa0] sm:$0xff]
        %v5685 = vld [vmem:[#allocation2 + $0xa8] sm:$0xff]
        %v5686 = vld [vmem:[#allocation2 + $0xb0] sm:$0xff]
        %v5687 = vld [vmem:[#allocation2 + $0xb8] sm:$0xff]
        %v5688 = vld [vmem:[#allocation2 + $0xc0] sm:$0xff]
        %v5689 = vld [vmem:[#allocation2 + $0xc8] sm:$0xff]
        %v5690 = vld [vmem:[#allocation2 + $0xd0] sm:$0xff]
        %v5691 = vld [vmem:[#allocation2 + $0xd8] sm:$0xff]
        %v5692 = vld [vmem:[#allocation2 + $0xe0] sm:$0xff]
        %v5693 = vld [vmem:[#allocation2 + $0xe8] sm:$0xff]
        %v5694 = vld [vmem:[#allocation2 + $0xf0] sm:$0xff]
        %v5695 = vld [vmem:[#allocation2 + $0xf8] sm:$0xff]
        %v5696 = vld [vmem:[#allocation2 + $0x100] sm:$0xff]
        %v5697 = vld [vmem:[#allocation2 + $0x108] sm:$0xff]
        %v5698 = vld [vmem:[#allocation2 + $0x110] sm:$0xff]
        %v5699 = vld [vmem:[#allocation2 + $0x118] sm:$0xff]
        %v5700 = vld [vmem:[#allocation2 + $0x120] sm:$0xff]
        %v5701 = vld [vmem:[#allocation2 + $0x128] sm:$0xff]
        %v5702 = vld [vmem:[#allocation2 + $0x130] sm:$0xff]
        %v5703 = vld [vmem:[#allocation2 + $0x138] sm:$0xff]
        %v5704 = vld [vmem:[#allocation2 + $0x140] sm:$0xff]
        %v5705 = vld [vmem:[#allocation2 + $0x148] sm:$0xff]
        %v5706 = vld [vmem:[#allocation2 + $0x150] sm:$0xff]
        %v5707 = vld [vmem:[#allocation2 + $0x158] sm:$0xff]
        %v5708 = vld [vmem:[#allocation2 + $0x160] sm:$0xff]
        %v5709 = vld [vmem:[#allocation2 + $0x168] sm:$0xff]
        %v5710 = vld [vmem:[#allocation2 + $0x170] sm:$0xff]
        %v5711 = vld [vmem:[#allocation2 + $0x178] sm:$0xff]
        %v5712 = vld [vmem:[#allocation2 + $0x180] sm:$0xff]
        %v5713 = vld [vmem:[#allocation2 + $0x188] sm:$0xff]
        %v5714 = vld [vmem:[#allocation2 + $0x190] sm:$0xff]
        %v5715 = vld [vmem:[#allocation2 + $0x198] sm:$0xff]
        %v5716 = vld [vmem:[#allocation2 + $0x1a0] sm:$0xff]
        %v5717 = vld [vmem:[#allocation2 + $0x1a8] sm:$0xff]
        %v5718 = vld [vmem:[#allocation2 + $0x1b0] sm:$0xff]
        %v5719 = vld [vmem:[#allocation2 + $0x1b8] sm:$0xff]
        %v5720 = vld [vmem:[#allocation2 + $0x1c0] sm:$0xff]
        %v5721 = vld [vmem:[#allocation2 + $0x1c8] sm:$0xff]
        %v5722 = vld [vmem:[#allocation2 + $0x1d0] sm:$0xff]
        %v5723 = vld [vmem:[#allocation2 + $0x1d8] sm:$0xff]
        %v5724 = vld [vmem:[#allocation2 + $0x1e0] sm:$0xff]
        %v5725 = vld [vmem:[#allocation2 + $0x1e8] sm:$0xff]
        %v5726 = vld [vmem:[#allocation2 + $0x1f0] sm:$0xff]
        %v5727 = vld [vmem:[#allocation2 + $0x1f8] sm:$0xff]
        %v5728 = vld [vmem:[#allocation2 + $0x200] sm:$0xff]
        %v5729 = vld [vmem:[#allocation2 + $0x208] sm:$0xff]
        %v5730 = vld [vmem:[#allocation2 + $0x210] sm:$0xff]
        %v5731 = vld [vmem:[#allocation2 + $0x218] sm:$0xff]
        %v5732 = vld [vmem:[#allocation2 + $0x220] sm:$0xff]
        %v5733 = vld [vmem:[#allocation2 + $0x228] sm:$0xff]
        %v5734 = vld [vmem:[#allocation2 + $0x230] sm:$0xff]
        %v5735 = vld [vmem:[#allocation2 + $0x238] sm:$0xff]
        %v5736 = vld [vmem:[#allocation2 + $0x240] sm:$0xff]
        %v5737 = vld [vmem:[#allocation2 + $0x248] sm:$0xff]
        %v5738 = vld [vmem:[#allocation2 + $0x250] sm:$0xff]
        %v5739 = vld [vmem:[#allocation2 + $0x258] sm:$0xff]
        %v5740 = vld [vmem:[#allocation2 + $0x260] sm:$0xff]
        %v5741 = vld [vmem:[#allocation2 + $0x268] sm:$0xff]
        %v5742 = vld [vmem:[#allocation2 + $0x270] sm:$0xff]
        %v5743 = vld [vmem:[#allocation2 + $0x278] sm:$0xff]
        %v5744 = vld [vmem:[#allocation2 + $0x280] sm:$0xff]
        %v5745 = vld [vmem:[#allocation2 + $0x288] sm:$0xff]
        %v5746 = vld [vmem:[#allocation2 + $0x290] sm:$0xff]
        %v5747 = vld [vmem:[#allocation2 + $0x298] sm:$0xff]
        %v5748 = vld [vmem:[#allocation2 + $0x2a0] sm:$0xff]
        %v5749 = vld [vmem:[#allocation2 + $0x2a8] sm:$0xff]
        %v5750 = vld [vmem:[#allocation2 + $0x2b0] sm:$0xff]
        %v5751 = vld [vmem:[#allocation2 + $0x2b8] sm:$0xff]
        %v5752 = vld [vmem:[#allocation2 + $0x2c0] sm:$0xff]
        %v5753 = vld [vmem:[#allocation2 + $0x2c8] sm:$0xff]
        %v5754 = vld [vmem:[#allocation2 + $0x2d0] sm:$0xff]
        %v5755 = vld [vmem:[#allocation2 + $0x2d8] sm:$0xff]
        %v5756 = vld [vmem:[#allocation2 + $0x2e0] sm:$0xff]
        %v5757 = vld [vmem:[#allocation2 + $0x2e8] sm:$0xff]
        %v5758 = vld [vmem:[#allocation2 + $0x2f0] sm:$0xff]
        %v5759 = vld [vmem:[#allocation2 + $0x2f8] sm:$0xff]
        %v5760 = vld [vmem:[#allocation2 + $0x300] sm:$0xff]
        %v5761 = vld [vmem:[#allocation2 + $0x308] sm:$0xff]
        %v5762 = vld [vmem:[#allocation2 + $0x310] sm:$0xff]
        %v5763 = vld [vmem:[#allocation2 + $0x318] sm:$0xff]
        %v5764 = vld [vmem:[#allocation2 + $0x320] sm:$0xff]
        %v5765 = vld [vmem:[#allocation2 + $0x328] sm:$0xff]
        %v5766 = vld [vmem:[#allocation2 + $0x330] sm:$0xff]
        %v5767 = vld [vmem:[#allocation2 + $0x338] sm:$0xff]
        %v5768 = vld [vmem:[#allocation2 + $0x340] sm:$0xff]
        %v5769 = vld [vmem:[#allocation2 + $0x348] sm:$0xff]
        %v5770 = vld [vmem:[#allocation2 + $0x350] sm:$0xff]
        %v5771 = vld [vmem:[#allocation2 + $0x358] sm:$0xff]
        %v5772 = vld [vmem:[#allocation2 + $0x360] sm:$0xff]
        %v5773 = vld [vmem:[#allocation2 + $0x368] sm:$0xff]
        %v5774 = vld [vmem:[#allocation2 + $0x370] sm:$0xff]
        %v5775 = vld [vmem:[#allocation2 + $0x378] sm:$0xff]
        %v5776 = vld [vmem:[#allocation2 + $0x380] sm:$0xff]
        %v5777 = vld [vmem:[#allocation2 + $0x388] sm:$0xff]
        %v5778 = vld [vmem:[#allocation2 + $0x390] sm:$0xff]
        %v5779 = vld [vmem:[#allocation2 + $0x398] sm:$0xff]
        %v5780 = vld [vmem:[#allocation2 + $0x3a0] sm:$0xff]
        %v5781 = vld [vmem:[#allocation2 + $0x3a8] sm:$0xff]
        %v5782 = vld [vmem:[#allocation2 + $0x3b0] sm:$0xff]
        %v5783 = vld [vmem:[#allocation2 + $0x3b8] sm:$0xff]
        %v5784 = vld [vmem:[#allocation2 + $0x3c0] sm:$0xff]
        %v5785 = vld [vmem:[#allocation2 + $0x3c8] sm:$0xff]
        %v5786 = vld [vmem:[#allocation2 + $0x3d0] sm:$0xff]
        %v5787 = vld [vmem:[#allocation2 + $0x3d8] sm:$0xff]
        %v5788 = vld [vmem:[#allocation2 + $0x3e0] sm:$0xff]
        %v5789 = vld [vmem:[#allocation2 + $0x3e8] sm:$0xff]
        %v5790 = vld [vmem:[#allocation2 + $0x3f0] sm:$0xff]
        %v5791 = vld [vmem:[#allocation2 + $0x3f8] sm:$0xff]
        %v5792 = vld [vmem:[#allocation2 + $0x400] sm:$0xff]
        %v5793 = vld [vmem:[#allocation2 + $0x408] sm:$0xff]
        %v5794 = vld [vmem:[#allocation2 + $0x410] sm:$0xff]
        %v5795 = vld [vmem:[#allocation2 + $0x418] sm:$0xff]
        %v5796 = vld [vmem:[#allocation2 + $0x420] sm:$0xff]
        %v5797 = vld [vmem:[#allocation2 + $0x428] sm:$0xff]
        %v5798 = vld [vmem:[#allocation2 + $0x430] sm:$0xff]
        %v5799 = vld [vmem:[#allocation2 + $0x438] sm:$0xff]
        %v5800 = vld [vmem:[#allocation2 + $0x440] sm:$0xff]
        %v5801 = vld [vmem:[#allocation2 + $0x448] sm:$0xff]
        %v5802 = vld [vmem:[#allocation2 + $0x450] sm:$0xff]
        %v5803 = vld [vmem:[#allocation2 + $0x458] sm:$0xff]
        %v5804 = vld [vmem:[#allocation2 + $0x460] sm:$0xff]
        %v5805 = vld [vmem:[#allocation2 + $0x468] sm:$0xff]
        %v5806 = vld [vmem:[#allocation2 + $0x470] sm:$0xff]
        %v5807 = vld [vmem:[#allocation2 + $0x478] sm:$0xff]
        %v5888 = vunpack.c.l.b16 %v5584
        %v5889 = vunpack.c.h.b16 %v5584
        %v5890 = vunpack.c.l.b16 %v5585
        %v5891 = vunpack.c.h.b16 %v5585
        %v5892 = vunpack.c.l.b16 %v5586
        %v5893 = vunpack.c.h.b16 %v5586
        %v5894 = vunpack.c.l.b16 %v5587
        %v5895 = vunpack.c.h.b16 %v5587
        %v5896 = vunpack.c.l.b16 %v5588
        %v5897 = vunpack.c.l.b16 %v5589
        %v5898 = vunpack.c.h.b16 %v5589
        %v5899 = vunpack.c.l.b16 %v5590
        %v5900 = vunpack.c.h.b16 %v5590
        %v5901 = vunpack.c.l.b16 %v5591
        %v5902 = vunpack.c.h.b16 %v5591
        %v5903 = vunpack.c.l.b16 %v5592
        %v5904 = vunpack.c.h.b16 %v5592
        %v5905 = vunpack.c.l.b16 %v5593
        %v5906 = vunpack.c.l.b16 %v5594
        %v5907 = vunpack.c.h.b16 %v5594
        %v5908 = vunpack.c.l.b16 %v5595
        %v5909 = vunpack.c.h.b16 %v5595
        %v5910 = vunpack.c.l.b16 %v5596
        %v5911 = vunpack.c.h.b16 %v5596
        %v5912 = vunpack.c.l.b16 %v5597
        %v5913 = vunpack.c.h.b16 %v5597
        %v5914 = vunpack.c.l.b16 %v5598
        %v5915 = vunpack.c.l.b16 %v5599
        %v5916 = vunpack.c.h.b16 %v5599
        %v5917 = vunpack.c.l.b16 %v5600
        %v5918 = vunpack.c.h.b16 %v5600
        %v5919 = vunpack.c.l.b16 %v5601
        %v5920 = vunpack.c.h.b16 %v5601
        %v5921 = vunpack.c.l.b16 %v5602
        %v5922 = vunpack.c.h.b16 %v5602
        %v5923 = vunpack.c.l.b16 %v5603
        %v5924 = vunpack.c.l.b16 %v5604
        %v5925 = vunpack.c.h.b16 %v5604
        %v5926 = vunpack.c.l.b16 %v5605
        %v5927 = vunpack.c.h.b16 %v5605
        %v5928 = vunpack.c.l.b16 %v5606
        %v5929 = vunpack.c.h.b16 %v5606
        %v5930 = vunpack.c.l.b16 %v5607
        %v5931 = vunpack.c.h.b16 %v5607
        %v5932 = vunpack.c.l.b16 %v5608
        %v5933 = vunpack.c.l.b16 %v5609
        %v5934 = vunpack.c.h.b16 %v5609
        %v5935 = vunpack.c.l.b16 %v5610
        %v5936 = vunpack.c.h.b16 %v5610
        %v5937 = vunpack.c.l.b16 %v5611
        %v5938 = vunpack.c.h.b16 %v5611
        %v5939 = vunpack.c.l.b16 %v5612
        %v5940 = vunpack.c.h.b16 %v5612
        %v5941 = vunpack.c.l.b16 %v5613
        %v5942 = vunpack.c.l.b16 %v5614
        %v5943 = vunpack.c.h.b16 %v5614
        %v5944 = vunpack.c.l.b16 %v5615
        %v5945 = vunpack.c.h.b16 %v5615
        %v5946 = vunpack.c.l.b16 %v5616
        %v5947 = vunpack.c.h.b16 %v5616
        %v5948 = vunpack.c.l.b16 %v5617
        %v5949 = vunpack.c.h.b16 %v5617
        %v5950 = vunpack.c.l.b16 %v5618
        %v5951 = vunpack.c.l.b16 %v5619
        %v5952 = vunpack.c.h.b16 %v5619
        %v5953 = vunpack.c.l.b16 %v5620
        %v5954 = vunpack.c.h.b16 %v5620
        %v5955 = vunpack.c.l.b16 %v5621
        %v5956 = vunpack.c.h.b16 %v5621
        %v5957 = vunpack.c.l.b16 %v5622
        %v5958 = vunpack.c.h.b16 %v5622
        %v5959 = vunpack.c.l.b16 %v5623
        %v5960 = vunpack.c.l.b16 %v5624
        %v5961 = vunpack.c.h.b16 %v5624
        %v5962 = vunpack.c.l.b16 %v5625
        %v5963 = vunpack.c.h.b16 %v5625
        %v5964 = vunpack.c.l.b16 %v5626
        %v5965 = vunpack.c.h.b16 %v5626
        %v5966 = vunpack.c.l.b16 %v5627
        %v5967 = vunpack.c.h.b16 %v5627
        %v5968 = vunpack.c.l.b16 %v5628
        %v5969 = vunpack.c.l.b16 %v5629
        %v5970 = vunpack.c.h.b16 %v5629
        %v5971 = vunpack.c.l.b16 %v5630
        %v5972 = vunpack.c.h.b16 %v5630
        %v5973 = vunpack.c.l.b16 %v5631
        %v5974 = vunpack.c.h.b16 %v5631
        %v5975 = vunpack.c.l.b16 %v5632
        %v5976 = vunpack.c.h.b16 %v5632
        %v5977 = vunpack.c.l.b16 %v5633
        %v5978 = vunpack.c.l.b16 %v5634
        %v5979 = vunpack.c.h.b16 %v5634
        %v5980 = vunpack.c.l.b16 %v5635
        %v5981 = vunpack.c.h.b16 %v5635
        %v5982 = vunpack.c.l.b16 %v5636
        %v5983 = vunpack.c.h.b16 %v5636
        %v5984 = vunpack.c.l.b16 %v5637
        %v5985 = vunpack.c.h.b16 %v5637
        %v5986 = vunpack.c.l.b16 %v5638
        %v5987 = vunpack.c.l.b16 %v5639
        %v5988 = vunpack.c.h.b16 %v5639
        %v5989 = vunpack.c.l.b16 %v5640
        %v5990 = vunpack.c.h.b16 %v5640
        %v5991 = vunpack.c.l.b16 %v5641
        %v5992 = vunpack.c.h.b16 %v5641
        %v5993 = vunpack.c.l.b16 %v5642
        %v5994 = vunpack.c.h.b16 %v5642
        %v5995 = vunpack.c.l.b16 %v5643
        %v5996 = vunpack.c.l.b16 %v5644
        %v5997 = vunpack.c.h.b16 %v5644
        %v5998 = vunpack.c.l.b16 %v5645
        %v5999 = vunpack.c.h.b16 %v5645
        %v6000 = vunpack.c.l.b16 %v5646
        %v6001 = vunpack.c.h.b16 %v5646
        %v6002 = vunpack.c.l.b16 %v5647
        %v6003 = vunpack.c.h.b16 %v5647
        %v6004 = vunpack.c.l.b16 %v5648
        %v6005 = vunpack.c.l.b16 %v5649
        %v6006 = vunpack.c.h.b16 %v5649
        %v6007 = vunpack.c.l.b16 %v5650
        %v6008 = vunpack.c.h.b16 %v5650
        %v6009 = vunpack.c.l.b16 %v5651
        %v6010 = vunpack.c.h.b16 %v5651
        %v6011 = vunpack.c.l.b16 %v5652
        %v6012 = vunpack.c.h.b16 %v5652
        %v6013 = vunpack.c.l.b16 %v5653
        %v6014 = vunpack.c.l.b16 %v5654
        %v6015 = vunpack.c.h.b16 %v5654
        %v6016 = vunpack.c.l.b16 %v5655
        %v6017 = vunpack.c.h.b16 %v5655
        %v6018 = vunpack.c.l.b16 %v5656
        %v6019 = vunpack.c.h.b16 %v5656
        %v6020 = vunpack.c.l.b16 %v5657
        %v6021 = vunpack.c.h.b16 %v5657
        %v6022 = vunpack.c.l.b16 %v5658
        %v6023 = vunpack.c.l.b16 %v5659
        %v6024 = vunpack.c.h.b16 %v5659
        %v6025 = vunpack.c.l.b16 %v5660
        %v6026 = vunpack.c.h.b16 %v5660
        %v6027 = vunpack.c.l.b16 %v5661
        %v6028 = vunpack.c.h.b16 %v5661
        %v6029 = vunpack.c.l.b16 %v5662
        %v6030 = vunpack.c.h.b16 %v5662
        %v6031 = vunpack.c.l.b16 %v5663
        %v6032 = vpack.c.b16 %v5897, %v5888
        %v6033 = vpack.c.b16 %v5898, %v5889
        %v6034 = vpack.c.b16 %v5899, %v5890
        %v6035 = vpack.c.b16 %v5900, %v5891
        %v6036 = vpack.c.b16 %v5901, %v5892
        %v6037 = vpack.c.b16 %v5902, %v5893
        %v6038 = vpack.c.b16 %v5903, %v5894
        %v6039 = vpack.c.b16 %v5904, %v5895
        %v6040 = vpack.c.b16 %v5905, %v5896
        %v6041 = vpack.c.b16 %v5915, %v5906
        %v6042 = vpack.c.b16 %v5916, %v5907
        %v6043 = vpack.c.b16 %v5917, %v5908
        %v6044 = vpack.c.b16 %v5918, %v5909
        %v6045 = vpack.c.b16 %v5919, %v5910
        %v6046 = vpack.c.b16 %v5920, %v5911
        %v6047 = vpack.c.b16 %v5921, %v5912
        %v6048 = vpack.c.b16 %v5922, %v5913
        %v6049 = vpack.c.b16 %v5923, %v5914
        %v6050 = vpack.c.b16 %v5933, %v5924
        %v6051 = vpack.c.b16 %v5934, %v5925
        %v6052 = vpack.c.b16 %v5935, %v5926
        %v6053 = vpack.c.b16 %v5936, %v5927
        %v6054 = vpack.c.b16 %v5937, %v5928
        %v6055 = vpack.c.b16 %v5938, %v5929
        %v6056 = vpack.c.b16 %v5939, %v5930
        %v6057 = vpack.c.b16 %v5940, %v5931
        %v6058 = vpack.c.b16 %v5941, %v5932
        %v6059 = vpack.c.b16 %v5951, %v5942
        %v6060 = vpack.c.b16 %v5952, %v5943
        %v6061 = vpack.c.b16 %v5953, %v5944
        %v6062 = vpack.c.b16 %v5954, %v5945
        %v6063 = vpack.c.b16 %v5955, %v5946
        %v6064 = vpack.c.b16 %v5956, %v5947
        %v6065 = vpack.c.b16 %v5957, %v5948
        %v6066 = vpack.c.b16 %v5958, %v5949
        %v6067 = vpack.c.b16 %v5959, %v5950
        %v6068 = vpack.c.b16 %v5969, %v5960
        %v6069 = vpack.c.b16 %v5970, %v5961
        %v6070 = vpack.c.b16 %v5971, %v5962
        %v6071 = vpack.c.b16 %v5972, %v5963
        %v6072 = vpack.c.b16 %v5973, %v5964
        %v6073 = vpack.c.b16 %v5974, %v5965
        %v6074 = vpack.c.b16 %v5975, %v5966
        %v6075 = vpack.c.b16 %v5976, %v5967
        %v6076 = vpack.c.b16 %v5977, %v5968
        %v6077 = vpack.c.b16 %v5987, %v5978
        %v6078 = vpack.c.b16 %v5988, %v5979
        %v6079 = vpack.c.b16 %v5989, %v5980
        %v6080 = vpack.c.b16 %v5990, %v5981
        %v6081 = vpack.c.b16 %v5991, %v5982
        %v6082 = vpack.c.b16 %v5992, %v5983
        %v6083 = vpack.c.b16 %v5993, %v5984
        %v6084 = vpack.c.b16 %v5994, %v5985
        %v6085 = vpack.c.b16 %v5995, %v5986
        %v6086 = vpack.c.b16 %v6005, %v5996
        %v6087 = vpack.c.b16 %v6006, %v5997
        %v6088 = vpack.c.b16 %v6007, %v5998
        %v6089 = vpack.c.b16 %v6008, %v5999
        %v6090 = vpack.c.b16 %v6009, %v6000
        %v6091 = vpack.c.b16 %v6010, %v6001
        %v6092 = vpack.c.b16 %v6011, %v6002
        %v6093 = vpack.c.b16 %v6012, %v6003
        %v6094 = vpack.c.b16 %v6013, %v6004
        %v6095 = vpack.c.b16 %v6023, %v6014
        %v6096 = vpack.c.b16 %v6024, %v6015
        %v6097 = vpack.c.b16 %v6025, %v6016
        %v6098 = vpack.c.b16 %v6026, %v6017
        %v6099 = vpack.c.b16 %v6027, %v6018
        %v6100 = vpack.c.b16 %v6028, %v6019
        %v6101 = vpack.c.b16 %v6029, %v6020
        %v6102 = vpack.c.b16 %v6030, %v6021
        %v6103 = vpack.c.b16 %v6031, %v6022
        %6176 = vmatprep.subr.bf16.mxu0 %v5665
        %6177 = vmatpush1.bf16.msra.mxu0 %v5664
        %6178 = vmatprep.subr.bf16.mxu0 %v5667
        %6179 = vmatpush1.bf16.msra.mxu0 %v5666
        %6180 = vmatprep.subr.bf16.mxu0 %v5669
        %6181 = vmatpush1.bf16.msra.mxu0 %v5668
        %6182 = vmatprep.subr.bf16.mxu0 %v5671
        %6183 = vmatpush1.bf16.msra.mxu0 %v5670
        %6184 = vmatprep.subr.bf16.mxu0 %v5673
        %6185 = vmatpush1.bf16.msra.mxu0 %v5672
        %6186 = vmatprep.subr.bf16.mxu0 %v5675
        %6187 = vmatpush1.bf16.msra.mxu0 %v5674
        %6188 = vmatprep.subr.bf16.mxu0 %v5677
        %6189 = vmatpush1.bf16.msra.mxu0 %v5676
        %6190 = vmatprep.subr.bf16.mxu0 %v5679
        %6191 = vmatpush1.bf16.msra.mxu0 %v5678
        %6192 = vmatprep.subr.bf16.mxu0 %v5681
        %6193 = vmatpush1.bf16.msra.mxu0 %v5680
        %6194 = vmatprep.subr.bf16.mxu0 %v5683
        %6195 = vmatpush1.bf16.msra.mxu0 %v5682
        %6196 = vmatprep.subr.bf16.mxu0 %v5685
        %6197 = vmatpush1.bf16.msra.mxu0 %v5684
        %6198 = vmatprep.subr.bf16.mxu0 %v5687
        %6199 = vmatpush1.bf16.msra.mxu0 %v5686
        %6200 = vmatprep.subr.bf16.mxu0 %v5689
        %6201 = vmatpush1.bf16.msra.mxu0 %v5688
        %6202 = vmatprep.subr.bf16.mxu0 %v5691
        %6203 = vmatpush1.bf16.msra.mxu0 %v5690
        %6204 = vmatprep.subr.bf16.mxu0 %v5693
        %6205 = vmatpush1.bf16.msra.mxu0 %v5692
        %6206 = vmatprep.subr.bf16.mxu0 %v5695
        %6207 = vmatpush1.bf16.msra.mxu0 %v5694
        %6208 = vmatprep.mubr.bf16.mxu0 %v6033
        %6209 = vmatmul.mubr.bf16.gmra.mrb[0].mxu0 %v6032
        %v6210 = vpop.f32.mrb[0].mxu0
        %v6211 = vadd.f32 0.0, %v6210
        %v6212 = vpop.f32.mrb[0].mxu0
        %v6213 = vadd.f32 0.0, %v6212
        %v6214 = vpop.f32.mrb[0].mxu0
        %v6215 = vadd.f32 0.0, %v6214
        %v6216 = vpop.f32.mrb[0].mxu0
        %v6217 = vadd.f32 0.0, %v6216
        %6218 = vmatprep.mubr.bf16.mxu0 %v6042
        %6219 = vmatmul.mubr.bf16.gmra.mrb[0].mxu0 %v6041
        %v6220 = vpop.f32.mrb[0].mxu0
        %v6221 = vadd.f32 0.0, %v6220
        %v6222 = vpop.f32.mrb[0].mxu0
        %v6223 = vadd.f32 0.0, %v6222
        %v6224 = vpop.f32.mrb[0].mxu0
        %v6225 = vadd.f32 0.0, %v6224
        %v6226 = vpop.f32.mrb[0].mxu0
        %v6227 = vadd.f32 0.0, %v6226
        %6228 = vmatprep.mubr.bf16.mxu0 %v6051
        %6229 = vmatmul.mubr.bf16.gmra.mrb[0].mxu0 %v6050
        %v6230 = vpop.f32.mrb[0].mxu0
        %v6231 = vadd.f32 0.0, %v6230
        %v6232 = vpop.f32.mrb[0].mxu0
        %v6233 = vadd.f32 0.0, %v6232
        %v6234 = vpop.f32.mrb[0].mxu0
        %v6235 = vadd.f32 0.0, %v6234
        %v6236 = vpop.f32.mrb[0].mxu0
        %v6237 = vadd.f32 0.0, %v6236
        %6238 = vmatprep.mubr.bf16.mxu0 %v6060
        %6239 = vmatmul.mubr.bf16.gmra.mrb[0].mxu0 %v6059
        %v6240 = vpop.f32.mrb[0].mxu0
        %v6241 = vadd.f32 0.0, %v6240
        %v6242 = vpop.f32.mrb[0].mxu0
        %v6243 = vadd.f32 0.0, %v6242
        %v6244 = vpop.f32.mrb[0].mxu0
        %v6245 = vadd.f32 0.0, %v6244
        %v6246 = vpop.f32.mrb[0].mxu0
        %v6247 = vadd.f32 0.0, %v6246
        %6248 = vmatprep.mubr.bf16.mxu0 %v6069
        %6249 = vmatmul.mubr.bf16.gmra.mrb[0].mxu0 %v6068
        %v6250 = vpop.f32.mrb[0].mxu0
        %v6251 = vadd.f32 0.0, %v6250
        %v6252 = vpop.f32.mrb[0].mxu0
        %v6253 = vadd.f32 0.0, %v6252
        %v6254 = vpop.f32.mrb[0].mxu0
        %v6255 = vadd.f32 0.0, %v6254
        %v6256 = vpop.f32.mrb[0].mxu0
        %v6257 = vadd.f32 0.0, %v6256
        %6258 = vmatprep.mubr.bf16.mxu0 %v6078
        %6259 = vmatmul.mubr.bf16.gmra.mrb[0].mxu0 %v6077
        %v6260 = vpop.f32.mrb[0].mxu0
        %v6261 = vadd.f32 0.0, %v6260
        %v6262 = vpop.f32.mrb[0].mxu0
        %v6263 = vadd.f32 0.0, %v6262
        %v6264 = vpop.f32.mrb[0].mxu0
        %v6265 = vadd.f32 0.0, %v6264
        %v6266 = vpop.f32.mrb[0].mxu0
        %v6267 = vadd.f32 0.0, %v6266
        %6268 = vmatprep.mubr.bf16.mxu0 %v6087
        %6269 = vmatmul.mubr.bf16.gmra.mrb[0].mxu0 %v6086
        %v6270 = vpop.f32.mrb[0].mxu0
        %v6271 = vadd.f32 0.0, %v6270
        %v6272 = vpop.f32.mrb[0].mxu0
        %v6273 = vadd.f32 0.0, %v6272
        %v6274 = vpop.f32.mrb[0].mxu0
        %v6275 = vadd.f32 0.0, %v6274
        %v6276 = vpop.f32.mrb[0].mxu0
        %v6277 = vadd.f32 0.0, %v6276
        %6278 = vmatprep.mubr.bf16.mxu0 %v6096
        %6279 = vmatmul.mubr.bf16.gmra.mrb[0].mxu0 %v6095
        %v6280 = vpop.f32.mrb[0].mxu0
        %v6281 = vadd.f32 0.0, %v6280
        %v6282 = vpop.f32.mrb[0].mxu0
        %v6283 = vadd.f32 0.0, %v6282
        %v6284 = vpop.f32.mrb[0].mxu0
        %v6285 = vadd.f32 0.0, %v6284
        %v6286 = vpop.f32.mrb[0].mxu0
        %v6287 = vadd.f32 0.0, %v6286
        %6288 = vdwg.mxu0
        %6289 = vmatprep.subr.bf16.mxu0 %v5697
        %6290 = vmatpush1.bf16.msra.mxu0 %v5696
        %6291 = vmatprep.subr.bf16.mxu0 %v5699
        %6292 = vmatpush1.bf16.msra.mxu0 %v5698
        %6293 = vmatprep.subr.bf16.mxu0 %v5701
        %6294 = vmatpush1.bf16.msra.mxu0 %v5700
        %6295 = vmatprep.subr.bf16.mxu0 %v5703
        %6296 = vmatpush1.bf16.msra.mxu0 %v5702
        %6297 = vmatprep.subr.bf16.mxu0 %v5705
        %6298 = vmatpush1.bf16.msra.mxu0 %v5704
        %6299 = vmatprep.subr.bf16.mxu0 %v5707
        %6300 = vmatpush1.bf16.msra.mxu0 %v5706
        %6301 = vmatprep.subr.bf16.mxu0 %v5709
        %6302 = vmatpush1.bf16.msra.mxu0 %v5708
        %6303 = vmatprep.subr.bf16.mxu0 %v5711
        %6304 = vmatpush1.bf16.msra.mxu0 %v5710
        %6305 = vmatprep.subr.bf16.mxu0 %v5713
        %6306 = vmatpush1.bf16.msra.mxu0 %v5712
        %6307 = vmatprep.subr.bf16.mxu0 %v5715
        %6308 = vmatpush1.bf16.msra.mxu0 %v5714
        %6309 = vmatprep.subr.bf16.mxu0 %v5717
        %6310 = vmatpush1.bf16.msra.mxu0 %v5716
        %6311 = vmatprep.subr.bf16.mxu0 %v5719
        %6312 = vmatpush1.bf16.msra.mxu0 %v5718
        %6313 = vmatprep.subr.bf16.mxu0 %v5721
        %6314 = vmatpush1.bf16.msra.mxu0 %v5720
        %6315 = vmatprep.subr.bf16.mxu0 %v5723
        %6316 = vmatpush1.bf16.msra.mxu0 %v5722
        %6317 = vmatprep.subr.bf16.mxu0 %v5725
        %6318 = vmatpush1.bf16.msra.mxu0 %v5724
        %6319 = vmatprep.subr.bf16.mxu0 %v5727
        %6320 = vmatpush1.bf16.msra.mxu0 %v5726
        %6321 = vmatprep.mubr.bf16.mxu0 %v6035
        %6322 = vmatmul.mubr.bf16.gmra.mrb[0].mxu0 %v6034
        %v6323 = vpop.f32.mrb[0].mxu0
        %v6324 = vadd.f32 %v6211, %v6323
        %v6325 = vpop.f32.mrb[0].mxu0
        %v6326 = vadd.f32 %v6213, %v6325
        %v6327 = vpop.f32.mrb[0].mxu0
        %v6328 = vadd.f32 %v6215, %v6327
        %v6329 = vpop.f32.mrb[0].mxu0
        %v6330 = vadd.f32 %v6217, %v6329
        %6331 = vmatprep.mubr.bf16.mxu0 %v6044
        %6332 = vmatmul.mubr.bf16.gmra.mrb[0].mxu0 %v6043
        %v6333 = vpop.f32.mrb[0].mxu0
        %v6334 = vadd.f32 %v6221, %v6333
        %v6335 = vpop.f32.mrb[0].mxu0
        %v6336 = vadd.f32 %v6223, %v6335
        %v6337 = vpop.f32.mrb[0].mxu0
        %v6338 = vadd.f32 %v6225, %v6337
        %v6339 = vpop.f32.mrb[0].mxu0
        %v6340 = vadd.f32 %v6227, %v6339
        %6341 = vmatprep.mubr.bf16.mxu0 %v6053
        %6342 = vmatmul.mubr.bf16.gmra.mrb[0].mxu0 %v6052
        %v6343 = vpop.f32.mrb[0].mxu0
        %v6344 = vadd.f32 %v6231, %v6343
        %v6345 = vpop.f32.mrb[0].mxu0
        %v6346 = vadd.f32 %v6233, %v6345
        %v6347 = vpop.f32.mrb[0].mxu0
        %v6348 = vadd.f32 %v6235, %v6347
        %v6349 = vpop.f32.mrb[0].mxu0
        %v6350 = vadd.f32 %v6237, %v6349
        %6351 = vmatprep.mubr.bf16.mxu0 %v6062
        %6352 = vmatmul.mubr.bf16.gmra.mrb[0].mxu0 %v6061
        %v6353 = vpop.f32.mrb[0].mxu0
        %v6354 = vadd.f32 %v6241, %v6353
        %v6355 = vpop.f32.mrb[0].mxu0
        %v6356 = vadd.f32 %v6243, %v6355
        %v6357 = vpop.f32.mrb[0].mxu0
        %v6358 = vadd.f32 %v6245, %v6357
        %v6359 = vpop.f32.mrb[0].mxu0
        %v6360 = vadd.f32 %v6247, %v6359
        %6361 = vmatprep.mubr.bf16.mxu0 %v6071
        %6362 = vmatmul.mubr.bf16.gmra.mrb[0].mxu0 %v6070
        %v6363 = vpop.f32.mrb[0].mxu0
        %v6364 = vadd.f32 %v6251, %v6363
        %v6365 = vpop.f32.mrb[0].mxu0
        %v6366 = vadd.f32 %v6253, %v6365
        %v6367 = vpop.f32.mrb[0].mxu0
        %v6368 = vadd.f32 %v6255, %v6367
        %v6369 = vpop.f32.mrb[0].mxu0
        %v6370 = vadd.f32 %v6257, %v6369
        %6371 = vmatprep.mubr.bf16.mxu0 %v6080
        %6372 = vmatmul.mubr.bf16.gmra.mrb[0].mxu0 %v6079
        %v6373 = vpop.f32.mrb[0].mxu0
        %v6374 = vadd.f32 %v6261, %v6373
        %v6375 = vpop.f32.mrb[0].mxu0
        %v6376 = vadd.f32 %v6263, %v6375
        %v6377 = vpop.f32.mrb[0].mxu0
        %v6378 = vadd.f32 %v6265, %v6377
        %v6379 = vpop.f32.mrb[0].mxu0
        %v6380 = vadd.f32 %v6267, %v6379
        %6381 = vmatprep.mubr.bf16.mxu0 %v6089
        %6382 = vmatmul.mubr.bf16.gmra.mrb[0].mxu0 %v6088
        %v6383 = vpop.f32.mrb[0].mxu0
        %v6384 = vadd.f32 %v6271, %v6383
        %v6385 = vpop.f32.mrb[0].mxu0
        %v6386 = vadd.f32 %v6273, %v6385
        %v6387 = vpop.f32.mrb[0].mxu0
        %v6388 = vadd.f32 %v6275, %v6387
        %v6389 = vpop.f32.mrb[0].mxu0
        %v6390 = vadd.f32 %v6277, %v6389
        %6391 = vmatprep.mubr.bf16.mxu0 %v6098
        %6392 = vmatmul.mubr.bf16.gmra.mrb[0].mxu0 %v6097
        %v6393 = vpop.f32.mrb[0].mxu0
        %v6394 = vadd.f32 %v6281, %v6393
        %v6395 = vpop.f32.mrb[0].mxu0
        %v6396 = vadd.f32 %v6283, %v6395
        %v6397 = vpop.f32.mrb[0].mxu0
        %v6398 = vadd.f32 %v6285, %v6397
        %v6399 = vpop.f32.mrb[0].mxu0
        %v6400 = vadd.f32 %v6287, %v6399
        %6401 = vdwg.mxu0
        %6402 = vmatprep.subr.bf16.mxu0 %v5729
        %6403 = vmatpush1.bf16.msra.mxu0 %v5728
        %6404 = vmatprep.subr.bf16.mxu0 %v5731
        %6405 = vmatpush1.bf16.msra.mxu0 %v5730
        %6406 = vmatprep.subr.bf16.mxu0 %v5733
        %6407 = vmatpush1.bf16.msra.mxu0 %v5732
        %6408 = vmatprep.subr.bf16.mxu0 %v5735
        %6409 = vmatpush1.bf16.msra.mxu0 %v5734
        %6410 = vmatprep.subr.bf16.mxu0 %v5737
        %6411 = vmatpush1.bf16.msra.mxu0 %v5736
        %6412 = vmatprep.subr.bf16.mxu0 %v5739
        %6413 = vmatpush1.bf16.msra.mxu0 %v5738
        %6414 = vmatprep.subr.bf16.mxu0 %v5741
        %6415 = vmatpush1.bf16.msra.mxu0 %v5740
        %6416 = vmatprep.subr.bf16.mxu0 %v5743
        %6417 = vmatpush1.bf16.msra.mxu0 %v5742
        %6418 = vmatprep.subr.bf16.mxu0 %v5745
        %6419 = vmatpush1.bf16.msra.mxu0 %v5744
        %6420 = vmatprep.subr.bf16.mxu0 %v5747
        %6421 = vmatpush1.bf16.msra.mxu0 %v5746
        %6422 = vmatprep.subr.bf16.mxu0 %v5749
        %6423 = vmatpush1.bf16.msra.mxu0 %v5748
        %6424 = vmatprep.subr.bf16.mxu0 %v5751
        %6425 = vmatpush1.bf16.msra.mxu0 %v5750
        %6426 = vmatprep.subr.bf16.mxu0 %v5753
        %6427 = vmatpush1.bf16.msra.mxu0 %v5752
        %6428 = vmatprep.subr.bf16.mxu0 %v5755
        %6429 = vmatpush1.bf16.msra.mxu0 %v5754
        %6430 = vmatprep.subr.bf16.mxu0 %v5757
        %6431 = vmatpush1.bf16.msra.mxu0 %v5756
        %6432 = vmatprep.subr.bf16.mxu0 %v5759
        %6433 = vmatpush1.bf16.msra.mxu0 %v5758
        %6434 = vmatprep.mubr.bf16.mxu0 %v6037
        %6435 = vmatmul.mubr.bf16.gmra.mrb[0].mxu0 %v6036
        %v6436 = vpop.f32.mrb[0].mxu0
        %v6437 = vadd.f32 %v6324, %v6436
        %v6438 = vpop.f32.mrb[0].mxu0
        %v6439 = vadd.f32 %v6326, %v6438
        %v6440 = vpop.f32.mrb[0].mxu0
        %v6441 = vadd.f32 %v6328, %v6440
        %v6442 = vpop.f32.mrb[0].mxu0
        %v6443 = vadd.f32 %v6330, %v6442
        %6444 = vmatprep.mubr.bf16.mxu0 %v6046
        %6445 = vmatmul.mubr.bf16.gmra.mrb[0].mxu0 %v6045
        %v6446 = vpop.f32.mrb[0].mxu0
        %v6447 = vadd.f32 %v6334, %v6446
        %v6448 = vpop.f32.mrb[0].mxu0
        %v6449 = vadd.f32 %v6336, %v6448
        %v6450 = vpop.f32.mrb[0].mxu0
        %v6451 = vadd.f32 %v6338, %v6450
        %v6452 = vpop.f32.mrb[0].mxu0
        %v6453 = vadd.f32 %v6340, %v6452
        %6454 = vmatprep.mubr.bf16.mxu0 %v6055
        %6455 = vmatmul.mubr.bf16.gmra.mrb[0].mxu0 %v6054
        %v6456 = vpop.f32.mrb[0].mxu0
        %v6457 = vadd.f32 %v6344, %v6456
        %v6458 = vpop.f32.mrb[0].mxu0
        %v6459 = vadd.f32 %v6346, %v6458
        %v6460 = vpop.f32.mrb[0].mxu0
        %v6461 = vadd.f32 %v6348, %v6460
        %v6462 = vpop.f32.mrb[0].mxu0
        %v6463 = vadd.f32 %v6350, %v6462
        %6464 = vmatprep.mubr.bf16.mxu0 %v6064
        %6465 = vmatmul.mubr.bf16.gmra.mrb[0].mxu0 %v6063
        %v6466 = vpop.f32.mrb[0].mxu0
        %v6467 = vadd.f32 %v6354, %v6466
        %v6468 = vpop.f32.mrb[0].mxu0
        %v6469 = vadd.f32 %v6356, %v6468
        %v6470 = vpop.f32.mrb[0].mxu0
        %v6471 = vadd.f32 %v6358, %v6470
        %v6472 = vpop.f32.mrb[0].mxu0
        %v6473 = vadd.f32 %v6360, %v6472
        %6474 = vmatprep.mubr.bf16.mxu0 %v6073
        %6475 = vmatmul.mubr.bf16.gmra.mrb[0].mxu0 %v6072
        %v6476 = vpop.f32.mrb[0].mxu0
        %v6477 = vadd.f32 %v6364, %v6476
        %v6478 = vpop.f32.mrb[0].mxu0
        %v6479 = vadd.f32 %v6366, %v6478
        %v6480 = vpop.f32.mrb[0].mxu0
        %v6481 = vadd.f32 %v6368, %v6480
        %v6482 = vpop.f32.mrb[0].mxu0
        %v6483 = vadd.f32 %v6370, %v6482
        %6484 = vmatprep.mubr.bf16.mxu0 %v6082
        %6485 = vmatmul.mubr.bf16.gmra.mrb[0].mxu0 %v6081
        %v6486 = vpop.f32.mrb[0].mxu0
        %v6487 = vadd.f32 %v6374, %v6486
        %v6488 = vpop.f32.mrb[0].mxu0
        %v6489 = vadd.f32 %v6376, %v6488
        %v6490 = vpop.f32.mrb[0].mxu0
        %v6491 = vadd.f32 %v6378, %v6490
        %v6492 = vpop.f32.mrb[0].mxu0
        %v6493 = vadd.f32 %v6380, %v6492
        %6494 = vmatprep.mubr.bf16.mxu0 %v6091
        %6495 = vmatmul.mubr.bf16.gmra.mrb[0].mxu0 %v6090
        %v6496 = vpop.f32.mrb[0].mxu0
        %v6497 = vadd.f32 %v6384, %v6496
        %v6498 = vpop.f32.mrb[0].mxu0
        %v6499 = vadd.f32 %v6386, %v6498
        %v6500 = vpop.f32.mrb[0].mxu0
        %v6501 = vadd.f32 %v6388, %v6500
        %v6502 = vpop.f32.mrb[0].mxu0
        %v6503 = vadd.f32 %v6390, %v6502
        %6504 = vmatprep.mubr.bf16.mxu0 %v6100
        %6505 = vmatmul.mubr.bf16.gmra.mrb[0].mxu0 %v6099
        %v6506 = vpop.f32.mrb[0].mxu0
        %v6507 = vadd.f32 %v6394, %v6506
        %v6508 = vpop.f32.mrb[0].mxu0
        %v6509 = vadd.f32 %v6396, %v6508
        %v6510 = vpop.f32.mrb[0].mxu0
        %v6511 = vadd.f32 %v6398, %v6510
        %v6512 = vpop.f32.mrb[0].mxu0
        %v6513 = vadd.f32 %v6400, %v6512
        %6514 = vdwg.mxu0
        %6515 = vmatprep.subr.bf16.mxu0 %v5761
        %6516 = vmatpush1.bf16.msra.mxu0 %v5760
        %6517 = vmatprep.subr.bf16.mxu0 %v5763
        %6518 = vmatpush1.bf16.msra.mxu0 %v5762
        %6519 = vmatprep.subr.bf16.mxu0 %v5765
        %6520 = vmatpush1.bf16.msra.mxu0 %v5764
        %6521 = vmatprep.subr.bf16.mxu0 %v5767
        %6522 = vmatpush1.bf16.msra.mxu0 %v5766
        %6523 = vmatprep.subr.bf16.mxu0 %v5769
        %6524 = vmatpush1.bf16.msra.mxu0 %v5768
        %6525 = vmatprep.subr.bf16.mxu0 %v5771
        %6526 = vmatpush1.bf16.msra.mxu0 %v5770
        %6527 = vmatprep.subr.bf16.mxu0 %v5773
        %6528 = vmatpush1.bf16.msra.mxu0 %v5772
        %6529 = vmatprep.subr.bf16.mxu0 %v5775
        %6530 = vmatpush1.bf16.msra.mxu0 %v5774
        %6531 = vmatprep.subr.bf16.mxu0 %v5777
        %6532 = vmatpush1.bf16.msra.mxu0 %v5776
        %6533 = vmatprep.subr.bf16.mxu0 %v5779
        %6534 = vmatpush1.bf16.msra.mxu0 %v5778
        %6535 = vmatprep.subr.bf16.mxu0 %v5781
        %6536 = vmatpush1.bf16.msra.mxu0 %v5780
        %6537 = vmatprep.subr.bf16.mxu0 %v5783
        %6538 = vmatpush1.bf16.msra.mxu0 %v5782
        %6539 = vmatprep.subr.bf16.mxu0 %v5785
        %6540 = vmatpush1.bf16.msra.mxu0 %v5784
        %6541 = vmatprep.subr.bf16.mxu0 %v5787
        %6542 = vmatpush1.bf16.msra.mxu0 %v5786
        %6543 = vmatprep.subr.bf16.mxu0 %v5789
        %6544 = vmatpush1.bf16.msra.mxu0 %v5788
        %6545 = vmatprep.subr.bf16.mxu0 %v5791
        %6546 = vmatpush1.bf16.msra.mxu0 %v5790
        %6547 = vmatprep.mubr.bf16.mxu0 %v6039
        %6548 = vmatmul.mubr.bf16.gmra.mrb[0].mxu0 %v6038
        %v6549 = vpop.f32.mrb[0].mxu0
        %v6550 = vadd.f32 %v6437, %v6549
        %v6551 = vpop.f32.mrb[0].mxu0
        %v6552 = vadd.f32 %v6439, %v6551
        %v6553 = vpop.f32.mrb[0].mxu0
        %v6554 = vadd.f32 %v6441, %v6553
        %v6555 = vpop.f32.mrb[0].mxu0
        %v6556 = vadd.f32 %v6443, %v6555
        %6557 = vmatprep.mubr.bf16.mxu0 %v6048
        %6558 = vmatmul.mubr.bf16.gmra.mrb[0].mxu0 %v6047
        %v6559 = vpop.f32.mrb[0].mxu0
        %v6560 = vadd.f32 %v6447, %v6559
        %v6561 = vpop.f32.mrb[0].mxu0
        %v6562 = vadd.f32 %v6449, %v6561
        %v6563 = vpop.f32.mrb[0].mxu0
        %v6564 = vadd.f32 %v6451, %v6563
        %v6565 = vpop.f32.mrb[0].mxu0
        %v6566 = vadd.f32 %v6453, %v6565
        %6567 = vmatprep.mubr.bf16.mxu0 %v6057
        %6568 = vmatmul.mubr.bf16.gmra.mrb[0].mxu0 %v6056
        %v6569 = vpop.f32.mrb[0].mxu0
        %v6570 = vadd.f32 %v6457, %v6569
        %v6571 = vpop.f32.mrb[0].mxu0
        %v6572 = vadd.f32 %v6459, %v6571
        %v6573 = vpop.f32.mrb[0].mxu0
        %v6574 = vadd.f32 %v6461, %v6573
        %v6575 = vpop.f32.mrb[0].mxu0
        %v6576 = vadd.f32 %v6463, %v6575
        %6577 = vmatprep.mubr.bf16.mxu0 %v6066
        %6578 = vmatmul.mubr.bf16.gmra.mrb[0].mxu0 %v6065
        %v6579 = vpop.f32.mrb[0].mxu0
        %v6580 = vadd.f32 %v6467, %v6579
        %v6581 = vpop.f32.mrb[0].mxu0
        %v6582 = vadd.f32 %v6469, %v6581
        %v6583 = vpop.f32.mrb[0].mxu0
        %v6584 = vadd.f32 %v6471, %v6583
        %v6585 = vpop.f32.mrb[0].mxu0
        %v6586 = vadd.f32 %v6473, %v6585
        %6587 = vmatprep.mubr.bf16.mxu0 %v6075
        %6588 = vmatmul.mubr.bf16.gmra.mrb[0].mxu0 %v6074
        %v6589 = vpop.f32.mrb[0].mxu0
        %v6590 = vadd.f32 %v6477, %v6589
        %v6591 = vpop.f32.mrb[0].mxu0
        %v6592 = vadd.f32 %v6479, %v6591
        %v6593 = vpop.f32.mrb[0].mxu0
        %v6594 = vadd.f32 %v6481, %v6593
        %v6595 = vpop.f32.mrb[0].mxu0
        %v6596 = vadd.f32 %v6483, %v6595
        %6597 = vmatprep.mubr.bf16.mxu0 %v6084
        %6598 = vmatmul.mubr.bf16.gmra.mrb[0].mxu0 %v6083
        %v6599 = vpop.f32.mrb[0].mxu0
        %v6600 = vadd.f32 %v6487, %v6599
        %v6601 = vpop.f32.mrb[0].mxu0
        %v6602 = vadd.f32 %v6489, %v6601
        %v6603 = vpop.f32.mrb[0].mxu0
        %v6604 = vadd.f32 %v6491, %v6603
        %v6605 = vpop.f32.mrb[0].mxu0
        %v6606 = vadd.f32 %v6493, %v6605
        %6607 = vmatprep.mubr.bf16.mxu0 %v6093
        %6608 = vmatmul.mubr.bf16.gmra.mrb[0].mxu0 %v6092
        %v6609 = vpop.f32.mrb[0].mxu0
        %v6610 = vadd.f32 %v6497, %v6609
        %v6611 = vpop.f32.mrb[0].mxu0
        %v6612 = vadd.f32 %v6499, %v6611
        %v6613 = vpop.f32.mrb[0].mxu0
        %v6614 = vadd.f32 %v6501, %v6613
        %v6615 = vpop.f32.mrb[0].mxu0
        %v6616 = vadd.f32 %v6503, %v6615
        %6617 = vmatprep.mubr.bf16.mxu0 %v6102
        %6618 = vmatmul.mubr.bf16.gmra.mrb[0].mxu0 %v6101
        %v6619 = vpop.f32.mrb[0].mxu0
        %v6620 = vadd.f32 %v6507, %v6619
        %v6621 = vpop.f32.mrb[0].mxu0
        %v6622 = vadd.f32 %v6509, %v6621
        %v6623 = vpop.f32.mrb[0].mxu0
        %v6624 = vadd.f32 %v6511, %v6623
        %v6625 = vpop.f32.mrb[0].mxu0
        %v6626 = vadd.f32 %v6513, %v6625
        %6627 = vdwg.mxu0
        %6628 = vmatprep.subr.bf16.mxu0 %v5793
        %6629 = vmatpush1.bf16.msra.mxu0 %v5792
        %6630 = vmatprep.subr.bf16.mxu0 %v5795
        %6631 = vmatpush1.bf16.msra.mxu0 %v5794
        %6632 = vmatprep.subr.bf16.mxu0 %v5797
        %6633 = vmatpush1.bf16.msra.mxu0 %v5796
        %6634 = vmatprep.subr.bf16.mxu0 %v5799
        %6635 = vmatpush1.bf16.msra.mxu0 %v5798
        %6636 = vmatprep.subr.bf16.mxu0 %v5801
        %6637 = vmatpush1.bf16.msra.mxu0 %v5800
        %6638 = vmatprep.subr.bf16.mxu0 %v5803
        %6639 = vmatpush1.bf16.msra.mxu0 %v5802
        %6640 = vmatprep.subr.bf16.mxu0 %v5805
        %6641 = vmatpush1.bf16.msra.mxu0 %v5804
        %6642 = vmatprep.subr.bf16.mxu0 %v5807
        %6643 = vmatpush1.bf16.msra.mxu0 %v5806
        %6644 = vmatprep.subr.bf16.mxu0 0
        %6645 = vmatpush1.bf16.msra.mxu0 0
        %6646 = vmatprep.subr.bf16.mxu0 0
        %6647 = vmatpush1.bf16.msra.mxu0 0
        %6648 = vmatprep.subr.bf16.mxu0 0
        %6649 = vmatpush1.bf16.msra.mxu0 0
        %6650 = vmatprep.subr.bf16.mxu0 0
        %6651 = vmatpush1.bf16.msra.mxu0 0
        %6652 = vmatprep.subr.bf16.mxu0 0
        %6653 = vmatpush1.bf16.msra.mxu0 0
        %6654 = vmatprep.subr.bf16.mxu0 0
        %6655 = vmatpush1.bf16.msra.mxu0 0
        %6656 = vmatprep.subr.bf16.mxu0 0
        %6657 = vmatpush1.bf16.msra.mxu0 0
        %6658 = vmatprep.subr.bf16.mxu0 0
        %6659 = vmatpush1.bf16.msra.mxu0 0
        %6660 = vmatprep.mubr.bf16.mxu0 0
        %6661 = vmatmul.mubr.bf16.gmra.mrb[0].mxu0 %v6040
        %v6662 = vpop.f32.mrb[0].mxu0
        %v6663 = vadd.f32 %v6550, %v6662
        %v6664 = vpop.f32.mrb[0].mxu0
        %v6665 = vadd.f32 %v6552, %v6664
        %v6666 = vpop.f32.mrb[0].mxu0
        %v6667 = vadd.f32 %v6554, %v6666
        %v6668 = vpop.f32.mrb[0].mxu0
        %v6669 = vadd.f32 %v6556, %v6668
        %6670 = vmatprep.mubr.bf16.mxu0 0
        %6671 = vmatmul.mubr.bf16.gmra.mrb[0].mxu0 %v6049
        %v6672 = vpop.f32.mrb[0].mxu0
        %v6673 = vadd.f32 %v6560, %v6672
        %v6674 = vpop.f32.mrb[0].mxu0
        %v6675 = vadd.f32 %v6562, %v6674
        %v6676 = vpop.f32.mrb[0].mxu0
        %v6677 = vadd.f32 %v6564, %v6676
        %v6678 = vpop.f32.mrb[0].mxu0
        %v6679 = vadd.f32 %v6566, %v6678
        %6680 = vmatprep.mubr.bf16.mxu0 0
        %6681 = vmatmul.mubr.bf16.gmra.mrb[0].mxu0 %v6058
        %v6682 = vpop.f32.mrb[0].mxu0
        %v6683 = vadd.f32 %v6570, %v6682
        %v6684 = vpop.f32.mrb[0].mxu0
        %v6685 = vadd.f32 %v6572, %v6684
        %v6686 = vpop.f32.mrb[0].mxu0
        %v6687 = vadd.f32 %v6574, %v6686
        %v6688 = vpop.f32.mrb[0].mxu0
        %v6689 = vadd.f32 %v6576, %v6688
        %6690 = vmatprep.mubr.bf16.mxu0 0
        %6691 = vmatmul.mubr.bf16.gmra.mrb[0].mxu0 %v6067
        %v6692 = vpop.f32.mrb[0].mxu0
        %v6693 = vadd.f32 %v6580, %v6692
        %v6694 = vpop.f32.mrb[0].mxu0
        %v6695 = vadd.f32 %v6582, %v6694
        %v6696 = vpop.f32.mrb[0].mxu0
        %v6697 = vadd.f32 %v6584, %v6696
        %v6698 = vpop.f32.mrb[0].mxu0
        %v6699 = vadd.f32 %v6586, %v6698
        %6700 = vmatprep.mubr.bf16.mxu0 0
        %6701 = vmatmul.mubr.bf16.gmra.mrb[0].mxu0 %v6076
        %v6702 = vpop.f32.mrb[0].mxu0
        %v6703 = vadd.f32 %v6590, %v6702
        %v6704 = vpop.f32.mrb[0].mxu0
        %v6705 = vadd.f32 %v6592, %v6704
        %v6706 = vpop.f32.mrb[0].mxu0
        %v6707 = vadd.f32 %v6594, %v6706
        %v6708 = vpop.f32.mrb[0].mxu0
        %v6709 = vadd.f32 %v6596, %v6708
        %6710 = vmatprep.mubr.bf16.mxu0 0
        %6711 = vmatmul.mubr.bf16.gmra.mrb[0].mxu0 %v6085
        %v6712 = vpop.f32.mrb[0].mxu0
        %v6713 = vadd.f32 %v6600, %v6712
        %v6714 = vpop.f32.mrb[0].mxu0
        %v6715 = vadd.f32 %v6602, %v6714
        %v6716 = vpop.f32.mrb[0].mxu0
        %v6717 = vadd.f32 %v6604, %v6716
        %v6718 = vpop.f32.mrb[0].mxu0
        %v6719 = vadd.f32 %v6606, %v6718
        %6720 = vmatprep.mubr.bf16.mxu0 0
        %6721 = vmatmul.mubr.bf16.gmra.mrb[0].mxu0 %v6094
        %v6722 = vpop.f32.mrb[0].mxu0
        %v6723 = vadd.f32 %v6610, %v6722
        %v6724 = vpop.f32.mrb[0].mxu0
        %v6725 = vadd.f32 %v6612, %v6724
        %v6726 = vpop.f32.mrb[0].mxu0
        %v6727 = vadd.f32 %v6614, %v6726
        %v6728 = vpop.f32.mrb[0].mxu0
        %v6729 = vadd.f32 %v6616, %v6728
        %6730 = vmatprep.mubr.bf16.mxu0 0
        %6731 = vmatmul.mubr.bf16.gmra.mrb[0].mxu0 %v6103
        %v6732 = vpop.f32.mrb[0].mxu0
        %v6733 = vadd.f32 %v6620, %v6732
        %v6734 = vpop.f32.mrb[0].mxu0
        %v6735 = vadd.f32 %v6622, %v6734
        %v6736 = vpop.f32.mrb[0].mxu0
        %v6737 = vadd.f32 %v6624, %v6736
        %v6738 = vpop.f32.mrb[0].mxu0
        %v6739 = vadd.f32 %v6626, %v6738
        %6740 = vdwg.mxu0
        %v6741 = vadd.f32 %v283, %v947
        %v6742 = vadd.f32 %v284, %v949
        %v6743 = vadd.f32 %v285, %v951
        %v6744 = vadd.f32 %v286, %v953
        %v6745 = vadd.f32 %v287, %v957
        %v6746 = vadd.f32 %v288, %v959
        %v6747 = vadd.f32 %v289, %v961
        %v6748 = vadd.f32 %v290, %v963
        %v6749 = vadd.f32 %v291, %v967
        %v6750 = vadd.f32 %v292, %v969
        %v6751 = vadd.f32 %v293, %v971
        %v6752 = vadd.f32 %v294, %v973
        %v6753 = vadd.f32 %v295, %v977
        %v6754 = vadd.f32 %v296, %v979
        %v6755 = vadd.f32 %v297, %v981
        %v6756 = vadd.f32 %v298, %v983
        %v6757 = vadd.f32 %v299, %v987
        %v6758 = vadd.f32 %v300, %v989
        %v6759 = vadd.f32 %v301, %v991
        %v6760 = vadd.f32 %v302, %v993
        %v6761 = vadd.f32 %v303, %v997
        %v6762 = vadd.f32 %v304, %v999
        %v6763 = vadd.f32 %v305, %v1001
        %v6764 = vadd.f32 %v306, %v1003
        %v6765 = vadd.f32 %v307, %v1007
        %v6766 = vadd.f32 %v308, %v1009
        %v6767 = vadd.f32 %v309, %v1011
        %v6768 = vadd.f32 %v310, %v1013
        %v6769 = vadd.f32 %v311, %v1017
        %v6770 = vadd.f32 %v312, %v1019
        %v6771 = vadd.f32 %v313, %v1021
        %v6772 = vadd.f32 %v314, %v1023
        %v6773 = vadd.f32 %v6741, %v6663
        %v6774 = vadd.f32 %v6742, %v6665
        %v6775 = vadd.f32 %v6743, %v6667
        %v6776 = vadd.f32 %v6744, %v6669
        %v6777 = vadd.f32 %v6745, %v6673
        %v6778 = vadd.f32 %v6746, %v6675
        %v6779 = vadd.f32 %v6747, %v6677
        %v6780 = vadd.f32 %v6748, %v6679
        %v6781 = vadd.f32 %v6749, %v6683
        %v6782 = vadd.f32 %v6750, %v6685
        %v6783 = vadd.f32 %v6751, %v6687
        %v6784 = vadd.f32 %v6752, %v6689
        %v6785 = vadd.f32 %v6753, %v6693
        %v6786 = vadd.f32 %v6754, %v6695
        %v6787 = vadd.f32 %v6755, %v6697
        %v6788 = vadd.f32 %v6756, %v6699
        %v6789 = vadd.f32 %v6757, %v6703
        %v6790 = vadd.f32 %v6758, %v6705
        %v6791 = vadd.f32 %v6759, %v6707
        %v6792 = vadd.f32 %v6760, %v6709
        %v6793 = vadd.f32 %v6761, %v6713
        %v6794 = vadd.f32 %v6762, %v6715
        %v6795 = vadd.f32 %v6763, %v6717
        %v6796 = vadd.f32 %v6764, %v6719
        %v6797 = vadd.f32 %v6765, %v6723
        %v6798 = vadd.f32 %v6766, %v6725
        %v6799 = vadd.f32 %v6767, %v6727
        %v6800 = vadd.f32 %v6768, %v6729
        %v6801 = vadd.f32 %v6769, %v6733
        %v6802 = vadd.f32 %v6770, %v6735
        %v6803 = vadd.f32 %v6771, %v6737
        %v6804 = vadd.f32 %v6772, %v6739
        %6805 = vst [vmem:[%s281] sm:$0xff] %v6773
        %6806 = vst [vmem:[%s281 + $0x8] sm:$0xff] %v6774
        %6807 = vst [vmem:[%s281 + $0x10] sm:$0xff] %v6775
        %6808 = vst [vmem:[%s281 + $0x18] sm:$0xff] %v6776
        %6809 = vst [vmem:[%s281 + $0x20] sm:$0xff] %v6777
        %6810 = vst [vmem:[%s281 + $0x28] sm:$0xff] %v6778
        %6811 = vst [vmem:[%s281 + $0x30] sm:$0xff] %v6779
        %6812 = vst [vmem:[%s281 + $0x38] sm:$0xff] %v6780
        %6813 = vst [vmem:[%s281 + $0x40] sm:$0xff] %v6781
        %6814 = vst [vmem:[%s281 + $0x48] sm:$0xff] %v6782
        %6815 = vst [vmem:[%s281 + $0x50] sm:$0xff] %v6783
        %6816 = vst [vmem:[%s281 + $0x58] sm:$0xff] %v6784
        %6817 = vst [vmem:[%s281 + $0x60] sm:$0xff] %v6785
        %6818 = vst [vmem:[%s281 + $0x68] sm:$0xff] %v6786
        %6819 = vst [vmem:[%s281 + $0x70] sm:$0xff] %v6787
        %6820 = vst [vmem:[%s281 + $0x78] sm:$0xff] %v6788
        %6821 = vst [vmem:[%s281 + $0x80] sm:$0xff] %v6789
        %6822 = vst [vmem:[%s281 + $0x88] sm:$0xff] %v6790
        %6823 = vst [vmem:[%s281 + $0x90] sm:$0xff] %v6791
        %6824 = vst [vmem:[%s281 + $0x98] sm:$0xff] %v6792
        %6825 = vst [vmem:[%s281 + $0xa0] sm:$0xff] %v6793
        %6826 = vst [vmem:[%s281 + $0xa8] sm:$0xff] %v6794
        %6827 = vst [vmem:[%s281 + $0xb0] sm:$0xff] %v6795
        %6828 = vst [vmem:[%s281 + $0xb8] sm:$0xff] %v6796
        %6829 = vst [vmem:[%s281 + $0xc0] sm:$0xff] %v6797
        %6830 = vst [vmem:[%s281 + $0xc8] sm:$0xff] %v6798
        %6831 = vst [vmem:[%s281 + $0xd0] sm:$0xff] %v6799
        %6832 = vst [vmem:[%s281 + $0xd8] sm:$0xff] %v6800
        %6833 = vst [vmem:[%s281 + $0xe0] sm:$0xff] %v6801
        %6834 = vst [vmem:[%s281 + $0xe8] sm:$0xff] %v6802
        %6835 = vst [vmem:[%s281 + $0xf0] sm:$0xff] %v6803
        %6836 = vst [vmem:[%s281 + $0xf8] sm:$0xff] %v6804
        %p6837 = scmp.lt.s32.totalorder %s19, 1
        %s6838 = scalar_select %p6837, %s19, 1
        %s6839 = smul.addr %s6838, 32
        %s6840 = smul.addr %s6839, 8
        %s6841 = scalar_lea.vmem %s6, %s6840
        // Predicated region
        $region53: #{four_conv_res_block_in.1} parent=43 // pred_check
          %p6842 = pneg %p168
        $region54: #{four_conv_res_block_in.1} parent=43 // pred_check_branch
          %6844 = sbr.rel (%p6842) target = $region56
        $region55: #{four_conv_res_block_in.1} parent=43 // pred_region
          _
        $region56: #{four_conv_res_block_in.1} parent=43 // pred_fallthru
          _
      $region44: #{four_conv_res_block_in.1} parent=5 // pred_fallthru
        _
      %p6845 = scmp.le.s32.totalorder 2, %s14
      // Predicated region
      $region57: #{four_conv_res_block_in.1} parent=5 // pred_check
        %p6846 = pneg %p6845
      $region58: #{four_conv_res_block_in.1} parent=5 // pred_check_branch
        %6848 = sbr.rel (%p6846) target = $region60
      $region59: #{four_conv_res_block_in.1} parent=5 // pred_region
        %s6849 = ssub.s32 %s14, 2
        // Predicated region
        $region61: #{four_conv_res_block_in.1} parent=59 // pred_check
          %p6850 = pneg %p174
        $region62: #{four_conv_res_block_in.1} parent=59 // pred_check_branch
          %6852 = sbr.rel (%p6850) target = $region64
        $region63: #{four_conv_res_block_in.1} parent=59 // pred_region
          %p6853 = scmp.lt.s32.totalorder %s20, 1
          %s6854 = scalar_select %p6853, %s20, 1
          %s6855 = smul.addr %s6854, 32
          %s6856 = smul.addr %s6855, 8
          %s6857 = scalar_lea.vmem %s6, %s6856
        $region64: #{four_conv_res_block_in.1} parent=59 // pred_fallthru
          _
      $region60: #{four_conv_res_block_in.1} parent=5 // pred_fallthru
        _
    $region6: #{four_conv_res_block_in.1} parent=1 // loop_footer
      %s18 = sadd.s32 1, %s14
    $region7: #{four_conv_res_block_in.1} parent=1 // loop_footer_branch
      %13 = sbr.rel target = $region3
    $region8: #{four_conv_res_block_in.1} parent=1 // loop_exit
      _
    %6858 = vsyncpa [#allocation4], 1
    %s6859 = scalar_lea.sflag [#allocation4], 1
    %6860 = vsyncpa %s6859, 1
    %6861 = vsyncpa [#allocation6], 1

</llo_original>
